<compile_context>
chip_gen: v5e
topology: v5e:2x2
jax: 0.10.0
libtpu: 0.0.40
codegen_flags: <defaults>
</compile_context>

<pallas_src>
import math
import functools

import numpy as np
import jax
import jax.numpy as jnp
from jax.experimental import pallas as pl
from jax.experimental.pallas import tpu as pltpu

NUM_ACTIONS = 88
OUT_PAD = 128            # lane-dense padded output width (sliced back to 88)
LN2 = math.log(2.0)
PACK_COLS = 128          # packed parameter slab column width
ROW_ALIGN = 8            # sublane alignment for each packed entry


# --------------------------- in-kernel helpers ------------------------------

def _softplus2(x):
    # matgl SoftPlus2: softplus(x) - log(2), numerically stable (all f32)
    return jnp.maximum(x, 0.0) + jnp.log1p(jnp.exp(-jnp.abs(x))) - LN2


# --------------------------- the fused kernel -------------------------------

def _megnet_fused_kernel(layout,
                         src_oh_r, dst_oh_r, dst_oh_t_r, inv_deg_r,
                         bn_r, be_r, bn_t_r, be_t_r, inv_n_r, inv_e_r,
                         edge_dist_r, node_oh_r, state_feat_r, focus_oh_r,
                         pbuf_r, out_ref):
    pbuf = pbuf_r  # packed parameter slab (rows, 128) f32, resident in VMEM

    def w(entry):
        off, r, c = entry
        return pbuf[off:off + r, 0:c]

    def dense_multi(parts, layer, act):
        """act(sum_i parts[i] @ W[rows_i] + b) -- statically row-sliced W."""
        (w_off, _, dout), b_ent = layer
        y = w(b_ent)                                    # (1, dout) bias row
        off = w_off
        for p in parts:
            k = p.shape[1]
            y = y + jnp.dot(p, pbuf[off:off + k, 0:dout],
                            preferred_element_type=jnp.float32)
            off += k
        return _softplus2(y) if act else y

    def mlp(parts, layers, activate_last):
        n = len(layers)
        x = dense_multi(parts, layers[0], act=(n > 1) or activate_last)
        for i in range(1, n):
            x = dense_multi([x], layers[i], act=(i < n - 1) or activate_last)
        return x

    # graph operators: bf16 for the big 0/1 gather matrices, f32 for the small
    # membership matrices (also used in VPU expressions) and scale vectors.
    src_oh = src_oh_r[...]            # (E, N) bf16, one-hot src gather
    dst_oh = dst_oh_r[...]            # (E, N) bf16, one-hot dst gather
    dst_oh_t = dst_oh_t_r[...]        # (N, E) bf16, scatter-to-dst (unscaled)
    inv_deg = inv_deg_r[...]          # (N, 1) f32, 1/in-degree
    bn, be = bn_r[...], be_r[...]     # (N, G) / (E, G) f32 membership
    bn_t, be_t = bn_t_r[...], be_t_r[...]   # (G, N) / (G, E) f32
    inv_n, inv_e = inv_n_r[...], inv_e_r[...]  # (G, 1) f32 per-graph means

    # --- bond expansion (Gaussian RBF, 1 center@0, width 0.5) fused into edge encoder
    d = edge_dist_r[...]                                        # (E, 1)
    e = mlp([jnp.exp(jnp.float32(-0.5) * d * d)],
            layout["edge_encoder"], activate_last=True)         # (E, 32)

    # --- embedding lookups (one-hot matmuls on the VMEM-resident tables)
    v0 = jnp.dot(node_oh_r[...], w(layout["node_table"]),
                 preferred_element_type=jnp.float32)            # (N, 16)
    v = mlp([v0], layout["node_encoder"], activate_last=True)   # (N, 32)

    focus_feat = jnp.dot(focus_oh_r[...], w(layout["state_table"]),
                         preferred_element_type=jnp.float32)    # (G, 8)
    u = mlp([state_feat_r[...], focus_feat],
            layout["state_encoder"], activate_last=True)        # (G, 32)

    # --- 3 MEGNet blocks (block 0 has no dense pre-MLPs), skip-adds in-kernel
    for blk in layout["blocks"]:
        e_in, v_in, u_in = e, v, u
        if blk["dense_edge"] is not None:
            e = mlp([e], blk["dense_edge"], activate_last=True)
            v = mlp([v], blk["dense_node"], activate_last=True)
            u = mlp([u], blk["dense_state"], activate_last=True)
        u_nodes = jnp.dot(bn, u, preferred_element_type=jnp.float32)  # (N, 32)
        u_edges = jnp.dot(be, u, preferred_element_type=jnp.float32)  # (E, 32)
        v_b = v.astype(jnp.bfloat16)
        vi = jnp.dot(src_oh, v_b, preferred_element_type=jnp.float32)  # (E, 32)
        vj = jnp.dot(dst_oh, v_b, preferred_element_type=jnp.float32)  # (E, 32)
        # TODO(synk): pack [vi|vj|e|u_edges] into one lane-contiguous (E,128)
        # tile and issue a single K=128 matmul once E is large.
        e_new = mlp([vi, vj, e, u_edges], blk["conv_edge"], True)      # (E, 32)
        ve = jnp.dot(dst_oh_t, e_new.astype(jnp.bfloat16),
                     preferred_element_type=jnp.float32) * inv_deg     # (N, 32)
        v_new = mlp([v, ve, u_nodes], blk["conv_node"], True)          # (N, 32)
        ue = jnp.dot(be_t, e_new, preferred_element_type=jnp.float32) * inv_e
        uv = jnp.dot(bn_t, v_new, preferred_element_type=jnp.float32) * inv_n
        u_new = mlp([u, ue, uv], blk["conv_state"], True)              # (G, 32)
        e, v, u = e_new + e_in, v_new + v_in, u_new + u_in

    # --- Set2Set readout (LSTM + segment-softmax attention), fully in-kernel
    def set2set(feat, mem, mem_t, lstm_layout, n_iters=2):
        wih_ent, whh_ent, b_ent = lstm_layout
        wih_off, _, four_h = wih_ent
        whh = w(whh_ent)
        b = w(b_ent)
        g_cnt, d_dim = mem.shape[1], feat.shape[1]
        h = jnp.zeros((g_cnt, d_dim), jnp.float32)
        c = jnp.zeros((g_cnt, d_dim), jnp.float32)
        q = jnp.zeros((g_cnt, d_dim), jnp.float32)
        r = jnp.zeros((g_cnt, d_dim), jnp.float32)
        for _ in range(n_iters):
            # LSTM cell on q_star = [q | r] via row-sliced W_ih (no concat)
            gates = (jnp.dot(q, pbuf[wih_off:wih_off + d_dim, 0:four_h],
                             preferred_element_type=jnp.float32)
                     + jnp.dot(r, pbuf[wih_off + d_dim:wih_off + 2 * d_dim, 0:four_h],
                               preferred_element_type=jnp.float32)
                     + jnp.dot(h, whh, preferred_element_type=jnp.float32) + b)
            gi = jax.nn.sigmoid(gates[:, 0:d_dim])
            gf = jax.nn.sigmoid(gates[:, d_dim:2 * d_dim])
            gg = jnp.tanh(gates[:, 2 * d_dim:3 * d_dim])
            go = jax.nn.sigmoid(gates[:, 3 * d_dim:4 * d_dim])
            c = gf * c + gi * gg
            h = go * jnp.tanh(c)
            q = h
            # segment-softmax attention + weighted readout
            qb = jnp.dot(mem, q, preferred_element_type=jnp.float32)    # (M, D)
            sc = jnp.sum(feat * qb, axis=-1, keepdims=True)             # (M, 1)
            sc_m = sc * mem + (1.0 - mem) * jnp.float32(-1e30)          # (M, G)
            mx = jnp.max(sc_m, axis=0, keepdims=True)                   # (1, G)
            mx_per = jnp.sum(mem * mx, axis=-1, keepdims=True)          # (M, 1)
            p = jnp.exp(sc - mx_per)                                    # (M, 1)
            z = jnp.dot(mem_t, p, preferred_element_type=jnp.float32)   # (G, 1)
            z = jnp.maximum(z, jnp.float32(1e-30))                      # empty-graph guard
            z_per = jnp.dot(mem, z, preferred_element_type=jnp.float32) # (M, 1)
            r = jnp.dot(mem_t, feat * (p / z_per),
                        preferred_element_type=jnp.float32)             # (G, D)
        return q, r

    node_q, node_r = set2set(v, bn, bn_t, layout["node_s2s"], n_iters=2)
    edge_q, edge_r = set2set(e, be, be_t, layout["edge_s2s"], n_iters=2)

    # --- output projection on [node_q|node_r|edge_q|edge_r|u], lane-dense 128-wide
    # dropout is None by default -> skipped
    out_ref[...] = mlp([node_q, node_r, edge_q, edge_r, u],
                       layout["output_proj"], activate_last=False)      # (G, 128)


# ------------------------------ model wrapper --------------------------------

def _pick_vmem_limit():
    """Generation-aware VMEM limit: ~80% of capacity, capped, floored."""
    cap = 64 * 1024 * 1024                      # conservative default (v7x-class)
    try:
        info = pltpu.get_tpu_info()
        cap = int(getattr(info, "vmem_capacity_bytes", cap) or cap)
    except Exception:
        pass
    return max(32 * 1024 * 1024, min(int(cap * 0.8), 100 * 1024 * 1024))


def megnet_rl_forward(layout, packed_params, graph_ops, edge_dist, node_oh,
                      state_feat, focus_oh):
    inputs = (*graph_ops, edge_dist, node_oh, state_feat, focus_oh, packed_params)
    g_cnt = state_feat.shape[0]
    out = pl.pallas_call(
        functools.partial(_megnet_fused_kernel, layout),
        out_shape=jax.ShapeDtypeStruct((g_cnt, OUT_PAD), jnp.float32),
        in_specs=[pl.BlockSpec(memory_space=pltpu.MemorySpace.VMEM)] * len(inputs),
        out_specs=pl.BlockSpec(memory_space=pltpu.MemorySpace.VMEM),
        compiler_params=pltpu.CompilerParams(vmem_limit_bytes=_pick_vmem_limit()),
    )(*inputs)
    return out[:, :NUM_ACTIONS]


# --------------------------- parameter creation ------------------------------

def init_linear(key, din, dout):
    kw, kb = jax.random.split(key)
    bound = 1.0 / math.sqrt(din)
    w = jax.random.uniform(kw, (din, dout), jnp.float32, -bound, bound)
    b = jax.random.uniform(kb, (1, dout), jnp.float32, -bound, bound)
    return w, b


def init_mlp(key, dims):
    keys = jax.random.split(key, len(dims) - 1)
    return [init_linear(k, dims[i], dims[i + 1]) for i, k in enumerate(keys)]


def init_lstm(key, hidden):
    k1, k2, k3 = jax.random.split(key, 3)
    bound = 1.0 / math.sqrt(hidden)
    wih = jax.random.uniform(k1, (2 * hidden, 4 * hidden), jnp.float32, -bound, bound)
    whh = jax.random.uniform(k2, (hidden, 4 * hidden), jnp.float32, -bound, bound)
    b = jax.random.uniform(k3, (1, 4 * hidden), jnp.float32, -bound, bound)  # b_ih + b_hh
    return wih, whh, b


def init_params(key):
    ks = jax.random.split(key, 9)
    dim_node_emb, dim_state_emb = 16, 8
    hin = (64, 32)
    hconv = (64, 64, 32)
    hout = (32, 16)
    p = {}
    p["node_table"] = 0.1 * jax.random.normal(ks[0], (NUM_ACTIONS + 1, dim_node_emb), jnp.float32)
    p["state_table"] = 0.1 * jax.random.normal(ks[1], (21, dim_state_emb), jnp.float32)
    p["edge_encoder"] = init_mlp(ks[2], [1, *hin])
    p["node_encoder"] = init_mlp(ks[3], [dim_node_emb, *hin])
    p["state_encoder"] = init_mlp(ks[4], [2 * dim_state_emb, *hin])

    dim_out = hconv[-1]                    # 32
    blocks = []
    bkeys = jax.random.split(ks[5], 3)
    for bi in range(3):
        bk = jax.random.split(bkeys[bi], 6)
        has_dense = bi > 0
        conv_dim = 32
        edge_in = 2 * conv_dim + conv_dim + conv_dim    # 128
        node_in = dim_out + conv_dim + conv_dim         # 96
        state_in = dim_out + dim_out + conv_dim         # 96
        dims_dense = [dim_out, *hin]                    # [32, 64, 32]
        blocks.append({
            "dense_edge": init_mlp(bk[0], dims_dense) if has_dense else None,
            "dense_node": init_mlp(bk[1], dims_dense) if has_dense else None,
            "dense_state": init_mlp(bk[2], dims_dense) if has_dense else None,
            "conv_edge": init_mlp(bk[3], [edge_in, *hconv]),
            "conv_node": init_mlp(bk[4], [node_in, *hconv]),
            "conv_state": init_mlp(bk[5], [state_in, *hconv]),
        })
    p["blocks"] = blocks
    p["node_s2s"] = init_lstm(ks[6], dim_out)
    p["edge_s2s"] = init_lstm(ks[7], dim_out)
    p["output_proj"] = init_mlp(ks[8], [2 * 2 * dim_out + dim_out, *hout, NUM_ACTIONS])
    return p


# --------------------------- parameter packing --------------------------------

def pack_params(params):
    """Pack every weight/bias/table into one (rows, 128) f32 slab.

    Each entry is padded to 128 columns and its row offset is aligned to 8
    (sublane boundary) so in-kernel static slices are tile-aligned views.
    Returns (packed_buffer, layout) where layout mirrors the param tree with
    (row_offset, rows, cols) Python-int tuples (static at trace time).
    """
    chunks = []
    state = {"rows": 0}

    def add(arr):
        arr = np.asarray(arr, dtype=np.float32)
        r, c = arr.shape
        pr = (-r) % ROW_ALIGN
        padded = np.zeros((r + pr, PACK_COLS), np.float32)
        padded[:r, :c] = arr
        off = state["rows"]
        chunks.append(padded)
        state["rows"] += r + pr
        return (off, r, c)

    def add_mlp(layers):
        return [(add(wt), add(bt)) for (wt, bt) in layers]

    def add_lstm(lstm):
        wih, whh, b = lstm
        return (add(wih), add(whh), add(b))

    layout = {}
    layout["node_table"] = add(params["node_table"])
    layout["state_table"] = add(params["state_table"])
    layout["edge_encoder"] = add_mlp(params["edge_encoder"])
    layout["node_encoder"] = add_mlp(params["node_encoder"])
    layout["state_encoder"] = add_mlp(params["state_encoder"])
    blks = []
    for blk in params["blocks"]:
        blks.append({
            "dense_edge": add_mlp(blk["dense_edge"]) if blk["dense_edge"] is not None else None,
            "dense_node": add_mlp(blk["dense_node"]) if blk["dense_node"] is not None else None,
            "dense_state": add_mlp(blk["dense_state"]) if blk["dense_state"] is not None else None,
            "conv_edge": add_mlp(blk["conv_edge"]),
            "conv_node": add_mlp(blk["conv_node"]),
            "conv_state": add_mlp(blk["conv_state"]),
        })
    layout["blocks"] = blks
    layout["node_s2s"] = add_lstm(params["node_s2s"])
    layout["edge_s2s"] = add_lstm(params["edge_s2s"])

    # lane-dense output: pad the final projection 88 -> 128 columns
    op = [tuple(l) for l in params["output_proj"]]
    w_last = np.asarray(op[-1][0], np.float32)
    b_last = np.asarray(op[-1][1], np.float32)
    pad = OUT_PAD - w_last.shape[1]
    op[-1] = (np.pad(w_last, ((0, 0), (0, pad))), np.pad(b_last, ((0, 0), (0, pad))))
    layout["output_proj"] = add_mlp(op)

    return jnp.asarray(np.concatenate(chunks, axis=0)), layout


# ---------------------------------- main -------------------------------------

if __name__ == "__main__":
    key = jax.random.PRNGKey(0)

    # small batched graph: 2 graphs, 4 nodes each, bidirectional ring edges
    G = 2
    nodes_per_graph = 4
    N = G * nodes_per_graph
    src_list, dst_list, e2g, n2g = [], [], [], []
    for g in range(G):
        off = g * nodes_per_graph
        for i in range(nodes_per_graph):
            j = (i + 1) % nodes_per_graph
            src_list += [off + i, off + j]
            dst_list += [off + j, off + i]
            e2g += [g, g]
        n2g += [g] * nodes_per_graph
    E = len(src_list)

    src = jnp.array(src_list, dtype=jnp.int32)
    dst = jnp.array(dst_list, dtype=jnp.int32)
    edge2graph = jnp.array(e2g, dtype=jnp.int32)
    node2graph = jnp.array(n2g, dtype=jnp.int32)

    # dense graph operators; 0/1 gather matrices in bf16 (exact), scalings in f32
    src_oh = jax.nn.one_hot(src, N, dtype=jnp.float32)              # (E, N)
    dst_oh = jax.nn.one_hot(dst, N, dtype=jnp.float32)              # (E, N)
    bn = jax.nn.one_hot(node2graph, G, dtype=jnp.float32)           # (N, G)
    be = jax.nn.one_hot(edge2graph, G, dtype=jnp.float32)           # (E, G)
    deg_in = dst_oh.sum(axis=0)                                     # (N,)
    inv_deg = jnp.where(deg_in > 0, 1.0 / deg_in, 0.0).reshape(N, 1)
    n_per_g = bn.sum(axis=0)
    e_per_g = be.sum(axis=0)
    inv_n = jnp.where(n_per_g > 0, 1.0 / n_per_g, 0.0).reshape(G, 1)
    inv_e = jnp.where(e_per_g > 0, 1.0 / e_per_g, 0.0).reshape(G, 1)

    graph_ops = (
        src_oh.astype(jnp.bfloat16),        # (E, N) one-hot src gather
        dst_oh.astype(jnp.bfloat16),        # (E, N) one-hot dst gather
        dst_oh.T.astype(jnp.bfloat16),      # (N, E) scatter-to-dst (unscaled)
        inv_deg,                            # (N, 1) 1/in-degree (f32)
        bn, be, bn.T, be.T,                 # f32 membership matrices (small)
        inv_n, inv_e,                       # (G, 1) per-graph mean scalings
    )

    k1, k2, k3, k4, kp = jax.random.split(key, 5)
    edge_dist = jax.random.uniform(k1, (E,), jnp.float32, 1.0, 4.0)      # bond lengths
    node_types = jax.random.randint(k2, (N,), 0, NUM_ACTIONS + 1)        # int node labels
    state_feat = jax.random.normal(k3, (G, 8), jnp.float32)              # state features
    focus = jax.random.randint(k4, (G,), 0, 21)                          # graph.focus labels

    node_oh = jax.nn.one_hot(node_types, NUM_ACTIONS + 1, dtype=jnp.float32)  # (N, 89)
    focus_oh = jax.nn.one_hot(focus, 21, dtype=jnp.float32)                   # (G, 21)

    params = init_params(kp)
    packed, layout = pack_params(params)      # one (rows, 128) f32 slab + static layout

    fwd = jax.jit(functools.partial(megnet_rl_forward, layout))
    out = fwd(packed, graph_ops, edge_dist.reshape(-1, 1), node_oh, state_feat, focus_oh)
    out = jax.block_until_ready(out)
    assert out.shape == (G, NUM_ACTIONS)
    assert bool(jnp.all(jnp.isfinite(out)))
    print("KERNEL_OK")
</pallas_src>

<mosaic_0001>
module attributes {stable_mosaic.version = 11 : i64} {
  func.func @_megnet_fused_kernel(%arg0: memref<16x8xbf16, #tpu.memory_space<vmem>>, %arg1: memref<16x8xbf16, #tpu.memory_space<vmem>>, %arg2: memref<8x16xbf16, #tpu.memory_space<vmem>>, %arg3: memref<8x1xf32, #tpu.memory_space<vmem>>, %arg4: memref<8x2xf32, #tpu.memory_space<vmem>>, %arg5: memref<16x2xf32, #tpu.memory_space<vmem>>, %arg6: memref<2x8xf32, #tpu.memory_space<vmem>>, %arg7: memref<2x16xf32, #tpu.memory_space<vmem>>, %arg8: memref<2x1xf32, #tpu.memory_space<vmem>>, %arg9: memref<2x1xf32, #tpu.memory_space<vmem>>, %arg10: memref<16x1xf32, #tpu.memory_space<vmem>>, %arg11: memref<8x89xf32, #tpu.memory_space<vmem>>, %arg12: memref<2x8xf32, #tpu.memory_space<vmem>>, %arg13: memref<2x21xf32, #tpu.memory_space<vmem>>, %arg14: memref<3840x128xf32, #tpu.memory_space<vmem>>, %arg15: memref<2x128xf32, #tpu.memory_space<vmem>>) attributes {dimension_semantics = [], scalar_prefetch = 0 : i64, scratch_operands = 0 : i64, tpu.core_type = #tpu.core_type<tc>} {
    %c0 = arith.constant 0 : index
    %c0_0 = arith.constant 0 : index
    %0 = vector.load %arg0[%c0, %c0_0] : memref<16x8xbf16, #tpu.memory_space<vmem>>, vector<16x8xbf16>
    %c0_1 = arith.constant 0 : index
    %c0_2 = arith.constant 0 : index
    %1 = vector.load %arg1[%c0_1, %c0_2] : memref<16x8xbf16, #tpu.memory_space<vmem>>, vector<16x8xbf16>
    %c0_3 = arith.constant 0 : index
    %c0_4 = arith.constant 0 : index
    %2 = vector.load %arg2[%c0_3, %c0_4] : memref<8x16xbf16, #tpu.memory_space<vmem>>, vector<8x16xbf16>
    %c0_5 = arith.constant 0 : index
    %c0_6 = arith.constant 0 : index
    %3 = vector.load %arg3[%c0_5, %c0_6] : memref<8x1xf32, #tpu.memory_space<vmem>>, vector<8x1xf32>
    %c0_7 = arith.constant 0 : index
    %c0_8 = arith.constant 0 : index
    %4 = vector.load %arg4[%c0_7, %c0_8] : memref<8x2xf32, #tpu.memory_space<vmem>>, vector<8x2xf32>
    %c0_9 = arith.constant 0 : index
    %c0_10 = arith.constant 0 : index
    %5 = vector.load %arg5[%c0_9, %c0_10] : memref<16x2xf32, #tpu.memory_space<vmem>>, vector<16x2xf32>
    %c0_11 = arith.constant 0 : index
    %c0_12 = arith.constant 0 : index
    %6 = vector.load %arg6[%c0_11, %c0_12] : memref<2x8xf32, #tpu.memory_space<vmem>>, vector<2x8xf32>
    %c0_13 = arith.constant 0 : index
    %c0_14 = arith.constant 0 : index
    %7 = vector.load %arg7[%c0_13, %c0_14] : memref<2x16xf32, #tpu.memory_space<vmem>>, vector<2x16xf32>
    %c0_15 = arith.constant 0 : index
    %c0_16 = arith.constant 0 : index
    %8 = vector.load %arg8[%c0_15, %c0_16] : memref<2x1xf32, #tpu.memory_space<vmem>>, vector<2x1xf32>
    %c0_17 = arith.constant 0 : index
    %c0_18 = arith.constant 0 : index
    %9 = vector.load %arg9[%c0_17, %c0_18] : memref<2x1xf32, #tpu.memory_space<vmem>>, vector<2x1xf32>
    %c0_19 = arith.constant 0 : index
    %c0_20 = arith.constant 0 : index
    %10 = vector.load %arg10[%c0_19, %c0_20] : memref<16x1xf32, #tpu.memory_space<vmem>>, vector<16x1xf32>
    %cst = arith.constant -5.000000e-01 : f32
    %11 = vector.broadcast %cst : f32 to vector<16x1xf32>
    %12 = arith.mulf %11, %10 : vector<16x1xf32>
    %13 = arith.mulf %12, %10 : vector<16x1xf32>
    %14 = math.exp %13 : vector<16x1xf32>
    %c128 = arith.constant 128 : index
    %c0_21 = arith.constant 0 : index
    %15 = vector.load %arg14[%c128, %c0_21] : memref<3840x128xf32, #tpu.memory_space<vmem>>, vector<1x64xf32>
    %c120 = arith.constant 120 : index
    %c0_22 = arith.constant 0 : index
    %16 = vector.load %arg14[%c120, %c0_22] : memref<3840x128xf32, #tpu.memory_space<vmem>>, vector<1x64xf32>
    %cst_23 = arith.constant dense<0.000000e+00> : vector<16x64xf32>
    %17 = tpu.matmul %14, %16, %cst_23 {dimension_numbers = #tpu.dot_dimension_numbers<[1], [0], [0], [1], [0, 0, 1, 1], [], []>} : vector<16x1xf32>, vector<1x64xf32>, vector<16x64xf32> -> vector<16x64xf32>
    %18 = vector.broadcast %15 : vector<1x64xf32> to vector<16x64xf32>
    %19 = arith.addf %18, %17 : vector<16x64xf32>
    %cst_24 = arith.constant 0.000000e+00 : f32
    %20 = vector.broadcast %cst_24 : f32 to vector<16x64xf32>
    %21 = arith.maximumf %19, %20 : vector<16x64xf32>
    %22 = math.absf %19 : vector<16x64xf32>
    %cst_25 = arith.constant 0.000000e+00 : f32
    %23 = vector.broadcast %cst_25 : f32 to vector<16x64xf32>
    %24 = arith.subf %23, %22 : vector<16x64xf32>
    %25 = math.exp %24 : vector<16x64xf32>
    %26 = math.log1p %25 : vector<16x64xf32>
    %27 = arith.addf %21, %26 : vector<16x64xf32>
    %cst_26 = arith.constant 0.693147182 : f32
    %28 = vector.broadcast %cst_26 : f32 to vector<16x64xf32>
    %29 = arith.subf %27, %28 : vector<16x64xf32>
    %c200 = arith.constant 200 : index
    %c0_27 = arith.constant 0 : index
    %30 = vector.load %arg14[%c200, %c0_27] : memref<3840x128xf32, #tpu.memory_space<vmem>>, vector<1x32xf32>
    %c136 = arith.constant 136 : index
    %c0_28 = arith.constant 0 : index
    %31 = vector.load %arg14[%c136, %c0_28] : memref<3840x128xf32, #tpu.memory_space<vmem>>, vector<64x32xf32>
    %cst_29 = arith.constant dense<0.000000e+00> : vector<16x32xf32>
    %32 = tpu.matmul %29, %31, %cst_29 {dimension_numbers = #tpu.dot_dimension_numbers<[1], [0], [0], [1], [0, 0, 1, 1], [], []>} : vector<16x64xf32>, vector<64x32xf32>, vector<16x32xf32> -> vector<16x32xf32>
    %33 = vector.broadcast %30 : vector<1x32xf32> to vector<16x32xf32>
    %34 = arith.addf %33, %32 : vector<16x32xf32>
    %cst_30 = arith.constant 0.000000e+00 : f32
    %35 = vector.broadcast %cst_30 : f32 to vector<16x32xf32>
    %36 = arith.maximumf %34, %35 : vector<16x32xf32>
    %37 = math.absf %34 : vector<16x32xf32>
    %cst_31 = arith.constant 0.000000e+00 : f32
    %38 = vector.broadcast %cst_31 : f32 to vector<16x32xf32>
    %39 = arith.subf %38, %37 : vector<16x32xf32>
    %40 = math.exp %39 : vector<16x32xf32>
    %41 = math.log1p %40 : vector<16x32xf32>
    %42 = arith.addf %36, %41 : vector<16x32xf32>
    %cst_32 = arith.constant 0.693147182 : f32
    %43 = vector.broadcast %cst_32 : f32 to vector<16x32xf32>
    %44 = arith.subf %42, %43 : vector<16x32xf32>
    %c0_33 = arith.constant 0 : index
    %c0_34 = arith.constant 0 : index
    %45 = vector.load %arg11[%c0_33, %c0_34] : memref<8x89xf32, #tpu.memory_space<vmem>>, vector<8x89xf32>
    %c0_35 = arith.constant 0 : index
    %c0_36 = arith.constant 0 : index
    %46 = vector.load %arg14[%c0_35, %c0_36] : memref<3840x128xf32, #tpu.memory_space<vmem>>, vector<89x16xf32>
    %cst_37 = arith.constant dense<0.000000e+00> : vector<8x16xf32>
    %47 = tpu.matmul %45, %46, %cst_37 {dimension_numbers = #tpu.dot_dimension_numbers<[1], [0], [0], [1], [0, 0, 1, 1], [], []>} : vector<8x89xf32>, vector<89x16xf32>, vector<8x16xf32> -> vector<8x16xf32>
    %c224 = arith.constant 224 : index
    %c0_38 = arith.constant 0 : index
    %48 = vector.load %arg14[%c224, %c0_38] : memref<3840x128xf32, #tpu.memory_space<vmem>>, vector<1x64xf32>
    %c208 = arith.constant 208 : index
    %c0_39 = arith.constant 0 : index
    %49 = vector.load %arg14[%c208, %c0_39] : memref<3840x128xf32, #tpu.memory_space<vmem>>, vector<16x64xf32>
    %cst_40 = arith.constant dense<0.000000e+00> : vector<8x64xf32>
    %50 = tpu.matmul %47, %49, %cst_40 {dimension_numbers = #tpu.dot_dimension_numbers<[1], [0], [0], [1], [0, 0, 1, 1], [], []>} : vector<8x16xf32>, vector<16x64xf32>, vector<8x64xf32> -> vector<8x64xf32>
    %51 = vector.broadcast %48 : vector<1x64xf32> to vector<8x64xf32>
    %52 = arith.addf %51, %50 : vector<8x64xf32>
    %cst_41 = arith.constant 0.000000e+00 : f32
    %53 = vector.broadcast %cst_41 : f32 to vector<8x64xf32>
    %54 = arith.maximumf %52, %53 : vector<8x64xf32>
    %55 = math.absf %52 : vector<8x64xf32>
    %cst_42 = arith.constant 0.000000e+00 : f32
    %56 = vector.broadcast %cst_42 : f32 to vector<8x64xf32>
    %57 = arith.subf %56, %55 : vector<8x64xf32>
    %58 = math.exp %57 : vector<8x64xf32>
    %59 = math.log1p %58 : vector<8x64xf32>
    %60 = arith.addf %54, %59 : vector<8x64xf32>
    %cst_43 = arith.constant 0.693147182 : f32
    %61 = vector.broadcast %cst_43 : f32 to vector<8x64xf32>
    %62 = arith.subf %60, %61 : vector<8x64xf32>
    %c296 = arith.constant 296 : index
    %c0_44 = arith.constant 0 : index
    %63 = vector.load %arg14[%c296, %c0_44] : memref<3840x128xf32, #tpu.memory_space<vmem>>, vector<1x32xf32>
    %c232 = arith.constant 232 : index
    %c0_45 = arith.constant 0 : index
    %64 = vector.load %arg14[%c232, %c0_45] : memref<3840x128xf32, #tpu.memory_space<vmem>>, vector<64x32xf32>
    %cst_46 = arith.constant dense<0.000000e+00> : vector<8x32xf32>
    %65 = tpu.matmul %62, %64, %cst_46 {dimension_numbers = #tpu.dot_dimension_numbers<[1], [0], [0], [1], [0, 0, 1, 1], [], []>} : vector<8x64xf32>, vector<64x32xf32>, vector<8x32xf32> -> vector<8x32xf32>
    %66 = vector.broadcast %63 : vector<1x32xf32> to vector<8x32xf32>
    %67 = arith.addf %66, %65 : vector<8x32xf32>
    %cst_47 = arith.constant 0.000000e+00 : f32
    %68 = vector.broadcast %cst_47 : f32 to vector<8x32xf32>
    %69 = arith.maximumf %67, %68 : vector<8x32xf32>
    %70 = math.absf %67 : vector<8x32xf32>
    %cst_48 = arith.constant 0.000000e+00 : f32
    %71 = vector.broadcast %cst_48 : f32 to vector<8x32xf32>
    %72 = arith.subf %71, %70 : vector<8x32xf32>
    %73 = math.exp %72 : vector<8x32xf32>
    %74 = math.log1p %73 : vector<8x32xf32>
    %75 = arith.addf %69, %74 : vector<8x32xf32>
    %cst_49 = arith.constant 0.693147182 : f32
    %76 = vector.broadcast %cst_49 : f32 to vector<8x32xf32>
    %77 = arith.subf %75, %76 : vector<8x32xf32>
    %c0_50 = arith.constant 0 : index
    %c0_51 = arith.constant 0 : index
    %78 = vector.load %arg13[%c0_50, %c0_51] : memref<2x21xf32, #tpu.memory_space<vmem>>, vector<2x21xf32>
    %c96 = arith.constant 96 : index
    %c0_52 = arith.constant 0 : index
    %79 = vector.load %arg14[%c96, %c0_52] : memref<3840x128xf32, #tpu.memory_space<vmem>>, vector<21x8xf32>
    %cst_53 = arith.constant dense<0.000000e+00> : vector<2x8xf32>
    %80 = tpu.matmul %78, %79, %cst_53 {dimension_numbers = #tpu.dot_dimension_numbers<[1], [0], [0], [1], [0, 0, 1, 1], [], []>} : vector<2x21xf32>, vector<21x8xf32>, vector<2x8xf32> -> vector<2x8xf32>
    %c0_54 = arith.constant 0 : index
    %c0_55 = arith.constant 0 : index
    %81 = vector.load %arg12[%c0_54, %c0_55] : memref<2x8xf32, #tpu.memory_space<vmem>>, vector<2x8xf32>
    %c320 = arith.constant 320 : index
    %c0_56 = arith.constant 0 : index
    %82 = vector.load %arg14[%c320, %c0_56] : memref<3840x128xf32, #tpu.memory_space<vmem>>, vector<1x64xf32>
    %c304 = arith.constant 304 : index
    %c0_57 = arith.constant 0 : index
    %83 = vector.load %arg14[%c304, %c0_57] : memref<3840x128xf32, #tpu.memory_space<vmem>>, vector<8x64xf32>
    %cst_58 = arith.constant dense<0.000000e+00> : vector<2x64xf32>
    %84 = tpu.matmul %81, %83, %cst_58 {dimension_numbers = #tpu.dot_dimension_numbers<[1], [0], [0], [1], [0, 0, 1, 1], [], []>} : vector<2x8xf32>, vector<8x64xf32>, vector<2x64xf32> -> vector<2x64xf32>
    %85 = vector.broadcast %82 : vector<1x64xf32> to vector<2x64xf32>
    %86 = arith.addf %85, %84 : vector<2x64xf32>
    %c312 = arith.constant 312 : index
    %c0_59 = arith.constant 0 : index
    %87 = vector.load %arg14[%c312, %c0_59] : memref<3840x128xf32, #tpu.memory_space<vmem>>, vector<8x64xf32>
    %cst_60 = arith.constant dense<0.000000e+00> : vector<2x64xf32>
    %88 = tpu.matmul %80, %87, %cst_60 {dimension_numbers = #tpu.dot_dimension_numbers<[1], [0], [0], [1], [0, 0, 1, 1], [], []>} : vector<2x8xf32>, vector<8x64xf32>, vector<2x64xf32> -> vector<2x64xf32>
    %89 = arith.addf %86, %88 : vector<2x64xf32>
    %cst_61 = arith.constant 0.000000e+00 : f32
    %90 = vector.broadcast %cst_61 : f32 to vector<2x64xf32>
    %91 = arith.maximumf %89, %90 : vector<2x64xf32>
    %92 = math.absf %89 : vector<2x64xf32>
    %cst_62 = arith.constant 0.000000e+00 : f32
    %93 = vector.broadcast %cst_62 : f32 to vector<2x64xf32>
    %94 = arith.subf %93, %92 : vector<2x64xf32>
    %95 = math.exp %94 : vector<2x64xf32>
    %96 = math.log1p %95 : vector<2x64xf32>
    %97 = arith.addf %91, %96 : vector<2x64xf32>
    %cst_63 = arith.constant 0.693147182 : f32
    %98 = vector.broadcast %cst_63 : f32 to vector<2x64xf32>
    %99 = arith.subf %97, %98 : vector<2x64xf32>
    %c392 = arith.constant 392 : index
    %c0_64 = arith.constant 0 : index
    %100 = vector.load %arg14[%c392, %c0_64] : memref<3840x128xf32, #tpu.memory_space<vmem>>, vector<1x32xf32>
    %c328 = arith.constant 328 : index
    %c0_65 = arith.constant 0 : index
    %101 = vector.load %arg14[%c328, %c0_65] : memref<3840x128xf32, #tpu.memory_space<vmem>>, vector<64x32xf32>
    %cst_66 = arith.constant dense<0.000000e+00> : vector<2x32xf32>
    %102 = tpu.matmul %99, %101, %cst_66 {dimension_numbers = #tpu.dot_dimension_numbers<[1], [0], [0], [1], [0, 0, 1, 1], [], []>} : vector<2x64xf32>, vector<64x32xf32>, vector<2x32xf32> -> vector<2x32xf32>
    %103 = vector.broadcast %100 : vector<1x32xf32> to vector<2x32xf32>
    %104 = arith.addf %103, %102 : vector<2x32xf32>
    %cst_67 = arith.constant 0.000000e+00 : f32
    %105 = vector.broadcast %cst_67 : f32 to vector<2x32xf32>
    %106 = arith.maximumf %104, %105 : vector<2x32xf32>
    %107 = math.absf %104 : vector<2x32xf32>
    %cst_68 = arith.constant 0.000000e+00 : f32
    %108 = vector.broadcast %cst_68 : f32 to vector<2x32xf32>
    %109 = arith.subf %108, %107 : vector<2x32xf32>
    %110 = math.exp %109 : vector<2x32xf32>
    %111 = math.log1p %110 : vector<2x32xf32>
    %112 = arith.addf %106, %111 : vector<2x32xf32>
    %cst_69 = arith.constant 0.693147182 : f32
    %113 = vector.broadcast %cst_69 : f32 to vector<2x32xf32>
    %114 = arith.subf %112, %113 : vector<2x32xf32>
    %cst_70 = arith.constant dense<0.000000e+00> : vector<8x32xf32>
    %115 = tpu.matmul %4, %114, %cst_70 {dimension_numbers = #tpu.dot_dimension_numbers<[1], [0], [0], [1], [0, 0, 1, 1], [], []>} : vector<8x2xf32>, vector<2x32xf32>, vector<8x32xf32> -> vector<8x32xf32>
    %cst_71 = arith.constant dense<0.000000e+00> : vector<16x32xf32>
    %116 = tpu.matmul %5, %114, %cst_71 {dimension_numbers = #tpu.dot_dimension_numbers<[1], [0], [0], [1], [0, 0, 1, 1], [], []>} : vector<16x2xf32>, vector<2x32xf32>, vector<16x32xf32> -> vector<16x32xf32>
    %117 = arith.truncf %77 : vector<8x32xf32> to vector<8x32xbf16>
    %cst_72 = arith.constant dense<0.000000e+00> : vector<16x32xf32>
    %118 = tpu.matmul %0, %117, %cst_72 {dimension_numbers = #tpu.dot_dimension_numbers<[1], [0], [0], [1], [0, 0, 1, 1], [], []>} : vector<16x8xbf16>, vector<8x32xbf16>, vector<16x32xf32> -> vector<16x32xf32>
    %cst_73 = arith.constant dense<0.000000e+00> : vector<16x32xf32>
    %119 = tpu.matmul %1, %117, %cst_73 {dimension_numbers = #tpu.dot_dimension_numbers<[1], [0], [0], [1], [0, 0, 1, 1], [], []>} : vector<16x8xbf16>, vector<8x32xbf16>, vector<16x32xf32> -> vector<16x32xf32>
    %c528 = arith.constant 528 : index
    %c0_74 = arith.constant 0 : index
    %120 = vector.load %arg14[%c528, %c0_74] : memref<3840x128xf32, #tpu.memory_space<vmem>>, vector<1x64xf32>
    %c400 = arith.constant 400 : index
    %c0_75 = arith.constant 0 : index
    %121 = vector.load %arg14[%c400, %c0_75] : memref<3840x128xf32, #tpu.memory_space<vmem>>, vector<32x64xf32>
    %cst_76 = arith.constant dense<0.000000e+00> : vector<16x64xf32>
    %122 = tpu.matmul %118, %121, %cst_76 {dimension_numbers = #tpu.dot_dimension_numbers<[1], [0], [0], [1], [0, 0, 1, 1], [], []>} : vector<16x32xf32>, vector<32x64xf32>, vector<16x64xf32> -> vector<16x64xf32>
    %123 = vector.broadcast %120 : vector<1x64xf32> to vector<16x64xf32>
    %124 = arith.addf %123, %122 : vector<16x64xf32>
    %c432 = arith.constant 432 : index
    %c0_77 = arith.constant 0 : index
    %125 = vector.load %arg14[%c432, %c0_77] : memref<3840x128xf32, #tpu.memory_space<vmem>>, vector<32x64xf32>
    %cst_78 = arith.constant dense<0.000000e+00> : vector<16x64xf32>
    %126 = tpu.matmul %119, %125, %cst_78 {dimension_numbers = #tpu.dot_dimension_numbers<[1], [0], [0], [1], [0, 0, 1, 1], [], []>} : vector<16x32xf32>, vector<32x64xf32>, vector<16x64xf32> -> vector<16x64xf32>
    %127 = arith.addf %124, %126 : vector<16x64xf32>
    %c464 = arith.constant 464 : index
    %c0_79 = arith.constant 0 : index
    %128 = vector.load %arg14[%c464, %c0_79] : memref<3840x128xf32, #tpu.memory_space<vmem>>, vector<32x64xf32>
    %cst_80 = arith.constant dense<0.000000e+00> : vector<16x64xf32>
    %129 = tpu.matmul %44, %128, %cst_80 {dimension_numbers = #tpu.dot_dimension_numbers<[1], [0], [0], [1], [0, 0, 1, 1], [], []>} : vector<16x32xf32>, vector<32x64xf32>, vector<16x64xf32> -> vector<16x64xf32>
    %130 = arith.addf %127, %129 : vector<16x64xf32>
    %c496 = arith.constant 496 : index
    %c0_81 = arith.constant 0 : index
    %131 = vector.load %arg14[%c496, %c0_81] : memref<3840x128xf32, #tpu.memory_space<vmem>>, vector<32x64xf32>
    %cst_82 = arith.constant dense<0.000000e+00> : vector<16x64xf32>
    %132 = tpu.matmul %116, %131, %cst_82 {dimension_numbers = #tpu.dot_dimension_numbers<[1], [0], [0], [1], [0, 0, 1, 1], [], []>} : vector<16x32xf32>, vector<32x64xf32>, vector<16x64xf32> -> vector<16x64xf32>
    %133 = arith.addf %130, %132 : vector<16x64xf32>
    %cst_83 = arith.constant 0.000000e+00 : f32
    %134 = vector.broadcast %cst_83 : f32 to vector<16x64xf32>
    %135 = arith.maximumf %133, %134 : vector<16x64xf32>
    %136 = math.absf %133 : vector<16x64xf32>
    %cst_84 = arith.constant 0.000000e+00 : f32
    %137 = vector.broadcast %cst_84 : f32 to vector<16x64xf32>
    %138 = arith.subf %137, %136 : vector<16x64xf32>
    %139 = math.exp %138 : vector<16x64xf32>
    %140 = math.log1p %139 : vector<16x64xf32>
    %141 = arith.addf %135, %140 : vector<16x64xf32>
    %cst_85 = arith.constant 0.693147182 : f32
    %142 = vector.broadcast %cst_85 : f32 to vector<16x64xf32>
    %143 = arith.subf %141, %142 : vector<16x64xf32>
    %c600 = arith.constant 600 : index
    %c0_86 = arith.constant 0 : index
    %144 = vector.load %arg14[%c600, %c0_86] : memref<3840x128xf32, #tpu.memory_space<vmem>>, vector<1x64xf32>
    %c536 = arith.constant 536 : index
    %c0_87 = arith.constant 0 : index
    %145 = vector.load %arg14[%c536, %c0_87] : memref<3840x128xf32, #tpu.memory_space<vmem>>, vector<64x64xf32>
    %cst_88 = arith.constant dense<0.000000e+00> : vector<16x64xf32>
    %146 = tpu.matmul %143, %145, %cst_88 {dimension_numbers = #tpu.dot_dimension_numbers<[1], [0], [0], [1], [0, 0, 1, 1], [], []>} : vector<16x64xf32>, vector<64x64xf32>, vector<16x64xf32> -> vector<16x64xf32>
    %147 = vector.broadcast %144 : vector<1x64xf32> to vector<16x64xf32>
    %148 = arith.addf %147, %146 : vector<16x64xf32>
    %cst_89 = arith.constant 0.000000e+00 : f32
    %149 = vector.broadcast %cst_89 : f32 to vector<16x64xf32>
    %150 = arith.maximumf %148, %149 : vector<16x64xf32>
    %151 = math.absf %148 : vector<16x64xf32>
    %cst_90 = arith.constant 0.000000e+00 : f32
    %152 = vector.broadcast %cst_90 : f32 to vector<16x64xf32>
    %153 = arith.subf %152, %151 : vector<16x64xf32>
    %154 = math.exp %153 : vector<16x64xf32>
    %155 = math.log1p %154 : vector<16x64xf32>
    %156 = arith.addf %150, %155 : vector<16x64xf32>
    %cst_91 = arith.constant 0.693147182 : f32
    %157 = vector.broadcast %cst_91 : f32 to vector<16x64xf32>
    %158 = arith.subf %156, %157 : vector<16x64xf32>
    %c672 = arith.constant 672 : index
    %c0_92 = arith.constant 0 : index
    %159 = vector.load %arg14[%c672, %c0_92] : memref<3840x128xf32, #tpu.memory_space<vmem>>, vector<1x32xf32>
    %c608 = arith.constant 608 : index
    %c0_93 = arith.constant 0 : index
    %160 = vector.load %arg14[%c608, %c0_93] : memref<3840x128xf32, #tpu.memory_space<vmem>>, vector<64x32xf32>
    %cst_94 = arith.constant dense<0.000000e+00> : vector<16x32xf32>
    %161 = tpu.matmul %158, %160, %cst_94 {dimension_numbers = #tpu.dot_dimension_numbers<[1], [0], [0], [1], [0, 0, 1, 1], [], []>} : vector<16x64xf32>, vector<64x32xf32>, vector<16x32xf32> -> vector<16x32xf32>
    %162 = vector.broadcast %159 : vector<1x32xf32> to vector<16x32xf32>
    %163 = arith.addf %162, %161 : vector<16x32xf32>
    %cst_95 = arith.constant 0.000000e+00 : f32
    %164 = vector.broadcast %cst_95 : f32 to vector<16x32xf32>
    %165 = arith.maximumf %163, %164 : vector<16x32xf32>
    %166 = math.absf %163 : vector<16x32xf32>
    %cst_96 = arith.constant 0.000000e+00 : f32
    %167 = vector.broadcast %cst_96 : f32 to vector<16x32xf32>
    %168 = arith.subf %167, %166 : vector<16x32xf32>
    %169 = math.exp %168 : vector<16x32xf32>
    %170 = math.log1p %169 : vector<16x32xf32>
    %171 = arith.addf %165, %170 : vector<16x32xf32>
    %cst_97 = arith.constant 0.693147182 : f32
    %172 = vector.broadcast %cst_97 : f32 to vector<16x32xf32>
    %173 = arith.subf %171, %172 : vector<16x32xf32>
    %174 = arith.truncf %173 : vector<16x32xf32> to vector<16x32xbf16>
    %cst_98 = arith.constant dense<0.000000e+00> : vector<8x32xf32>
    %175 = tpu.matmul %2, %174, %cst_98 {dimension_numbers = #tpu.dot_dimension_numbers<[1], [0], [0], [1], [0, 0, 1, 1], [], []>} : vector<8x16xbf16>, vector<16x32xbf16>, vector<8x32xf32> -> vector<8x32xf32>
    %176 = vector.broadcast %3 : vector<8x1xf32> to vector<8x32xf32>
    %177 = arith.mulf %175, %176 : vector<8x32xf32>
    %c776 = arith.constant 776 : index
    %c0_99 = arith.constant 0 : index
    %178 = vector.load %arg14[%c776, %c0_99] : memref<3840x128xf32, #tpu.memory_space<vmem>>, vector<1x64xf32>
    %c680 = arith.constant 680 : index
    %c0_100 = arith.constant 0 : index
    %179 = vector.load %arg14[%c680, %c0_100] : memref<3840x128xf32, #tpu.memory_space<vmem>>, vector<32x64xf32>
    %cst_101 = arith.constant dense<0.000000e+00> : vector<8x64xf32>
    %180 = tpu.matmul %77, %179, %cst_101 {dimension_numbers = #tpu.dot_dimension_numbers<[1], [0], [0], [1], [0, 0, 1, 1], [], []>} : vector<8x32xf32>, vector<32x64xf32>, vector<8x64xf32> -> vector<8x64xf32>
    %181 = vector.broadcast %178 : vector<1x64xf32> to vector<8x64xf32>
    %182 = arith.addf %181, %180 : vector<8x64xf32>
    %c712 = arith.constant 712 : index
    %c0_102 = arith.constant 0 : index
    %183 = vector.load %arg14[%c712, %c0_102] : memref<3840x128xf32, #tpu.memory_space<vmem>>, vector<32x64xf32>
    %cst_103 = arith.constant dense<0.000000e+00> : vector<8x64xf32>
    %184 = tpu.matmul %177, %183, %cst_103 {dimension_numbers = #tpu.dot_dimension_numbers<[1], [0], [0], [1], [0, 0, 1, 1], [], []>} : vector<8x32xf32>, vector<32x64xf32>, vector<8x64xf32> -> vector<8x64xf32>
    %185 = arith.addf %182, %184 : vector<8x64xf32>
    %c744 = arith.constant 744 : index
    %c0_104 = arith.constant 0 : index
    %186 = vector.load %arg14[%c744, %c0_104] : memref<3840x128xf32, #tpu.memory_space<vmem>>, vector<32x64xf32>
    %cst_105 = arith.constant dense<0.000000e+00> : vector<8x64xf32>
    %187 = tpu.matmul %115, %186, %cst_105 {dimension_numbers = #tpu.dot_dimension_numbers<[1], [0], [0], [1], [0, 0, 1, 1], [], []>} : vector<8x32xf32>, vector<32x64xf32>, vector<8x64xf32> -> vector<8x64xf32>
    %188 = arith.addf %185, %187 : vector<8x64xf32>
    %cst_106 = arith.constant 0.000000e+00 : f32
    %189 = vector.broadcast %cst_106 : f32 to vector<8x64xf32>
    %190 = arith.maximumf %188, %189 : vector<8x64xf32>
    %191 = math.absf %188 : vector<8x64xf32>
    %cst_107 = arith.constant 0.000000e+00 : f32
    %192 = vector.broadcast %cst_107 : f32 to vector<8x64xf32>
    %193 = arith.subf %192, %191 : vector<8x64xf32>
    %194 = math.exp %193 : vector<8x64xf32>
    %195 = math.log1p %194 : vector<8x64xf32>
    %196 = arith.addf %190, %195 : vector<8x64xf32>
    %cst_108 = arith.constant 0.693147182 : f32
    %197 = vector.broadcast %cst_108 : f32 to vector<8x64xf32>
    %198 = arith.subf %196, %197 : vector<8x64xf32>
    %c848 = arith.constant 848 : index
    %c0_109 = arith.constant 0 : index
    %199 = vector.load %arg14[%c848, %c0_109] : memref<3840x128xf32, #tpu.memory_space<vmem>>, vector<1x64xf32>
    %c784 = arith.constant 784 : index
    %c0_110 = arith.constant 0 : index
    %200 = vector.load %arg14[%c784, %c0_110] : memref<3840x128xf32, #tpu.memory_space<vmem>>, vector<64x64xf32>
    %cst_111 = arith.constant dense<0.000000e+00> : vector<8x64xf32>
    %201 = tpu.matmul %198, %200, %cst_111 {dimension_numbers = #tpu.dot_dimension_numbers<[1], [0], [0], [1], [0, 0, 1, 1], [], []>} : vector<8x64xf32>, vector<64x64xf32>, vector<8x64xf32> -> vector<8x64xf32>
    %202 = vector.broadcast %199 : vector<1x64xf32> to vector<8x64xf32>
    %203 = arith.addf %202, %201 : vector<8x64xf32>
    %cst_112 = arith.constant 0.000000e+00 : f32
    %204 = vector.broadcast %cst_112 : f32 to vector<8x64xf32>
    %205 = arith.maximumf %203, %204 : vector<8x64xf32>
    %206 = math.absf %203 : vector<8x64xf32>
    %cst_113 = arith.constant 0.000000e+00 : f32
    %207 = vector.broadcast %cst_113 : f32 to vector<8x64xf32>
    %208 = arith.subf %207, %206 : vector<8x64xf32>
    %209 = math.exp %208 : vector<8x64xf32>
    %210 = math.log1p %209 : vector<8x64xf32>
    %211 = arith.addf %205, %210 : vector<8x64xf32>
    %cst_114 = arith.constant 0.693147182 : f32
    %212 = vector.broadcast %cst_114 : f32 to vector<8x64xf32>
    %213 = arith.subf %211, %212 : vector<8x64xf32>
    %c920 = arith.constant 920 : index
    %c0_115 = arith.constant 0 : index
    %214 = vector.load %arg14[%c920, %c0_115] : memref<3840x128xf32, #tpu.memory_space<vmem>>, vector<1x32xf32>
    %c856 = arith.constant 856 : index
    %c0_116 = arith.constant 0 : index
    %215 = vector.load %arg14[%c856, %c0_116] : memref<3840x128xf32, #tpu.memory_space<vmem>>, vector<64x32xf32>
    %cst_117 = arith.constant dense<0.000000e+00> : vector<8x32xf32>
    %216 = tpu.matmul %213, %215, %cst_117 {dimension_numbers = #tpu.dot_dimension_numbers<[1], [0], [0], [1], [0, 0, 1, 1], [], []>} : vector<8x64xf32>, vector<64x32xf32>, vector<8x32xf32> -> vector<8x32xf32>
    %217 = vector.broadcast %214 : vector<1x32xf32> to vector<8x32xf32>
    %218 = arith.addf %217, %216 : vector<8x32xf32>
    %cst_118 = arith.constant 0.000000e+00 : f32
    %219 = vector.broadcast %cst_118 : f32 to vector<8x32xf32>
    %220 = arith.maximumf %218, %219 : vector<8x32xf32>
    %221 = math.absf %218 : vector<8x32xf32>
    %cst_119 = arith.constant 0.000000e+00 : f32
    %222 = vector.broadcast %cst_119 : f32 to vector<8x32xf32>
    %223 = arith.subf %222, %221 : vector<8x32xf32>
    %224 = math.exp %223 : vector<8x32xf32>
    %225 = math.log1p %224 : vector<8x32xf32>
    %226 = arith.addf %220, %225 : vector<8x32xf32>
    %cst_120 = arith.constant 0.693147182 : f32
    %227 = vector.broadcast %cst_120 : f32 to vector<8x32xf32>
    %228 = arith.subf %226, %227 : vector<8x32xf32>
    %cst_121 = arith.constant dense<0.000000e+00> : vector<2x32xf32>
    %229 = tpu.matmul %7, %173, %cst_121 {dimension_numbers = #tpu.dot_dimension_numbers<[1], [0], [0], [1], [0, 0, 1, 1], [], []>} : vector<2x16xf32>, vector<16x32xf32>, vector<2x32xf32> -> vector<2x32xf32>
    %230 = vector.broadcast %9 : vector<2x1xf32> to vector<2x32xf32>
    %231 = arith.mulf %229, %230 : vector<2x32xf32>
    %cst_122 = arith.constant dense<0.000000e+00> : vector<2x32xf32>
    %232 = tpu.matmul %6, %228, %cst_122 {dimension_numbers = #tpu.dot_dimension_numbers<[1], [0], [0], [1], [0, 0, 1, 1], [], []>} : vector<2x8xf32>, vector<8x32xf32>, vector<2x32xf32> -> vector<2x32xf32>
    %233 = vector.broadcast %8 : vector<2x1xf32> to vector<2x32xf32>
    %234 = arith.mulf %232, %233 : vector<2x32xf32>
    %c1024 = arith.constant 1024 : index
    %c0_123 = arith.constant 0 : index
    %235 = vector.load %arg14[%c1024, %c0_123] : memref<3840x128xf32, #tpu.memory_space<vmem>>, vector<1x64xf32>
    %c928 = arith.constant 928 : index
    %c0_124 = arith.constant 0 : index
    %236 = vector.load %arg14[%c928, %c0_124] : memref<3840x128xf32, #tpu.memory_space<vmem>>, vector<32x64xf32>
    %cst_125 = arith.constant dense<0.000000e+00> : vector<2x64xf32>
    %237 = tpu.matmul %114, %236, %cst_125 {dimension_numbers = #tpu.dot_dimension_numbers<[1], [0], [0], [1], [0, 0, 1, 1], [], []>} : vector<2x32xf32>, vector<32x64xf32>, vector<2x64xf32> -> vector<2x64xf32>
    %238 = vector.broadcast %235 : vector<1x64xf32> to vector<2x64xf32>
    %239 = arith.addf %238, %237 : vector<2x64xf32>
    %c960 = arith.constant 960 : index
    %c0_126 = arith.constant 0 : index
    %240 = vector.load %arg14[%c960, %c0_126] : memref<3840x128xf32, #tpu.memory_space<vmem>>, vector<32x64xf32>
    %cst_127 = arith.constant dense<0.000000e+00> : vector<2x64xf32>
    %241 = tpu.matmul %231, %240, %cst_127 {dimension_numbers = #tpu.dot_dimension_numbers<[1], [0], [0], [1], [0, 0, 1, 1], [], []>} : vector<2x32xf32>, vector<32x64xf32>, vector<2x64xf32> -> vector<2x64xf32>
    %242 = arith.addf %239, %241 : vector<2x64xf32>
    %c992 = arith.constant 992 : index
    %c0_128 = arith.constant 0 : index
    %243 = vector.load %arg14[%c992, %c0_128] : memref<3840x128xf32, #tpu.memory_space<vmem>>, vector<32x64xf32>
    %cst_129 = arith.constant dense<0.000000e+00> : vector<2x64xf32>
    %244 = tpu.matmul %234, %243, %cst_129 {dimension_numbers = #tpu.dot_dimension_numbers<[1], [0], [0], [1], [0, 0, 1, 1], [], []>} : vector<2x32xf32>, vector<32x64xf32>, vector<2x64xf32> -> vector<2x64xf32>
    %245 = arith.addf %242, %244 : vector<2x64xf32>
    %cst_130 = arith.constant 0.000000e+00 : f32
    %246 = vector.broadcast %cst_130 : f32 to vector<2x64xf32>
    %247 = arith.maximumf %245, %246 : vector<2x64xf32>
    %248 = math.absf %245 : vector<2x64xf32>
    %cst_131 = arith.constant 0.000000e+00 : f32
    %249 = vector.broadcast %cst_131 : f32 to vector<2x64xf32>
    %250 = arith.subf %249, %248 : vector<2x64xf32>
    %251 = math.exp %250 : vector<2x64xf32>
    %252 = math.log1p %251 : vector<2x64xf32>
    %253 = arith.addf %247, %252 : vector<2x64xf32>
    %cst_132 = arith.constant 0.693147182 : f32
    %254 = vector.broadcast %cst_132 : f32 to vector<2x64xf32>
    %255 = arith.subf %253, %254 : vector<2x64xf32>
    %c1096 = arith.constant 1096 : index
    %c0_133 = arith.constant 0 : index
    %256 = vector.load %arg14[%c1096, %c0_133] : memref<3840x128xf32, #tpu.memory_space<vmem>>, vector<1x64xf32>
    %c1032 = arith.constant 1032 : index
    %c0_134 = arith.constant 0 : index
    %257 = vector.load %arg14[%c1032, %c0_134] : memref<3840x128xf32, #tpu.memory_space<vmem>>, vector<64x64xf32>
    %cst_135 = arith.constant dense<0.000000e+00> : vector<2x64xf32>
    %258 = tpu.matmul %255, %257, %cst_135 {dimension_numbers = #tpu.dot_dimension_numbers<[1], [0], [0], [1], [0, 0, 1, 1], [], []>} : vector<2x64xf32>, vector<64x64xf32>, vector<2x64xf32> -> vector<2x64xf32>
    %259 = vector.broadcast %256 : vector<1x64xf32> to vector<2x64xf32>
    %260 = arith.addf %259, %258 : vector<2x64xf32>
    %cst_136 = arith.constant 0.000000e+00 : f32
    %261 = vector.broadcast %cst_136 : f32 to vector<2x64xf32>
    %262 = arith.maximumf %260, %261 : vector<2x64xf32>
    %263 = math.absf %260 : vector<2x64xf32>
    %cst_137 = arith.constant 0.000000e+00 : f32
    %264 = vector.broadcast %cst_137 : f32 to vector<2x64xf32>
    %265 = arith.subf %264, %263 : vector<2x64xf32>
    %266 = math.exp %265 : vector<2x64xf32>
    %267 = math.log1p %266 : vector<2x64xf32>
    %268 = arith.addf %262, %267 : vector<2x64xf32>
    %cst_138 = arith.constant 0.693147182 : f32
    %269 = vector.broadcast %cst_138 : f32 to vector<2x64xf32>
    %270 = arith.subf %268, %269 : vector<2x64xf32>
    %c1168 = arith.constant 1168 : index
    %c0_139 = arith.constant 0 : index
    %271 = vector.load %arg14[%c1168, %c0_139] : memref<3840x128xf32, #tpu.memory_space<vmem>>, vector<1x32xf32>
    %c1104 = arith.constant 1104 : index
    %c0_140 = arith.constant 0 : index
    %272 = vector.load %arg14[%c1104, %c0_140] : memref<3840x128xf32, #tpu.memory_space<vmem>>, vector<64x32xf32>
    %cst_141 = arith.constant dense<0.000000e+00> : vector<2x32xf32>
    %273 = tpu.matmul %270, %272, %cst_141 {dimension_numbers = #tpu.dot_dimension_numbers<[1], [0], [0], [1], [0, 0, 1, 1], [], []>} : vector<2x64xf32>, vector<64x32xf32>, vector<2x32xf32> -> vector<2x32xf32>
    %274 = vector.broadcast %271 : vector<1x32xf32> to vector<2x32xf32>
    %275 = arith.addf %274, %273 : vector<2x32xf32>
    %cst_142 = arith.constant 0.000000e+00 : f32
    %276 = vector.broadcast %cst_142 : f32 to vector<2x32xf32>
    %277 = arith.maximumf %275, %276 : vector<2x32xf32>
    %278 = math.absf %275 : vector<2x32xf32>
    %cst_143 = arith.constant 0.000000e+00 : f32
    %279 = vector.broadcast %cst_143 : f32 to vector<2x32xf32>
    %280 = arith.subf %279, %278 : vector<2x32xf32>
    %281 = math.exp %280 : vector<2x32xf32>
    %282 = math.log1p %281 : vector<2x32xf32>
    %283 = arith.addf %277, %282 : vector<2x32xf32>
    %cst_144 = arith.constant 0.693147182 : f32
    %284 = vector.broadcast %cst_144 : f32 to vector<2x32xf32>
    %285 = arith.subf %283, %284 : vector<2x32xf32>
    %286 = arith.addf %173, %44 : vector<16x32xf32>
    %287 = arith.addf %228, %77 : vector<8x32xf32>
    %288 = arith.addf %285, %114 : vector<2x32xf32>
    %c1208 = arith.constant 1208 : index
    %c0_145 = arith.constant 0 : index
    %289 = vector.load %arg14[%c1208, %c0_145] : memref<3840x128xf32, #tpu.memory_space<vmem>>, vector<1x64xf32>
    %c1176 = arith.constant 1176 : index
    %c0_146 = arith.constant 0 : index
    %290 = vector.load %arg14[%c1176, %c0_146] : memref<3840x128xf32, #tpu.memory_space<vmem>>, vector<32x64xf32>
    %cst_147 = arith.constant dense<0.000000e+00> : vector<16x64xf32>
    %291 = tpu.matmul %286, %290, %cst_147 {dimension_numbers = #tpu.dot_dimension_numbers<[1], [0], [0], [1], [0, 0, 1, 1], [], []>} : vector<16x32xf32>, vector<32x64xf32>, vector<16x64xf32> -> vector<16x64xf32>
    %292 = vector.broadcast %289 : vector<1x64xf32> to vector<16x64xf32>
    %293 = arith.addf %292, %291 : vector<16x64xf32>
    %cst_148 = arith.constant 0.000000e+00 : f32
    %294 = vector.broadcast %cst_148 : f32 to vector<16x64xf32>
    %295 = arith.maximumf %293, %294 : vector<16x64xf32>
    %296 = math.absf %293 : vector<16x64xf32>
    %cst_149 = arith.constant 0.000000e+00 : f32
    %297 = vector.broadcast %cst_149 : f32 to vector<16x64xf32>
    %298 = arith.subf %297, %296 : vector<16x64xf32>
    %299 = math.exp %298 : vector<16x64xf32>
    %300 = math.log1p %299 : vector<16x64xf32>
    %301 = arith.addf %295, %300 : vector<16x64xf32>
    %cst_150 = arith.constant 0.693147182 : f32
    %302 = vector.broadcast %cst_150 : f32 to vector<16x64xf32>
    %303 = arith.subf %301, %302 : vector<16x64xf32>
    %c1280 = arith.constant 1280 : index
    %c0_151 = arith.constant 0 : index
    %304 = vector.load %arg14[%c1280, %c0_151] : memref<3840x128xf32, #tpu.memory_space<vmem>>, vector<1x32xf32>
    %c1216 = arith.constant 1216 : index
    %c0_152 = arith.constant 0 : index
    %305 = vector.load %arg14[%c1216, %c0_152] : memref<3840x128xf32, #tpu.memory_space<vmem>>, vector<64x32xf32>
    %cst_153 = arith.constant dense<0.000000e+00> : vector<16x32xf32>
    %306 = tpu.matmul %303, %305, %cst_153 {dimension_numbers = #tpu.dot_dimension_numbers<[1], [0], [0], [1], [0, 0, 1, 1], [], []>} : vector<16x64xf32>, vector<64x32xf32>, vector<16x32xf32> -> vector<16x32xf32>
    %307 = vector.broadcast %304 : vector<1x32xf32> to vector<16x32xf32>
    %308 = arith.addf %307, %306 : vector<16x32xf32>
    %cst_154 = arith.constant 0.000000e+00 : f32
    %309 = vector.broadcast %cst_154 : f32 to vector<16x32xf32>
    %310 = arith.maximumf %308, %309 : vector<16x32xf32>
    %311 = math.absf %308 : vector<16x32xf32>
    %cst_155 = arith.constant 0.000000e+00 : f32
    %312 = vector.broadcast %cst_155 : f32 to vector<16x32xf32>
    %313 = arith.subf %312, %311 : vector<16x32xf32>
    %314 = math.exp %313 : vector<16x32xf32>
    %315 = math.log1p %314 : vector<16x32xf32>
    %316 = arith.addf %310, %315 : vector<16x32xf32>
    %cst_156 = arith.constant 0.693147182 : f32
    %317 = vector.broadcast %cst_156 : f32 to vector<16x32xf32>
    %318 = arith.subf %316, %317 : vector<16x32xf32>
    %c1320 = arith.constant 1320 : index
    %c0_157 = arith.constant 0 : index
    %319 = vector.load %arg14[%c1320, %c0_157] : memref<3840x128xf32, #tpu.memory_space<vmem>>, vector<1x64xf32>
    %c1288 = arith.constant 1288 : index
    %c0_158 = arith.constant 0 : index
    %320 = vector.load %arg14[%c1288, %c0_158] : memref<3840x128xf32, #tpu.memory_space<vmem>>, vector<32x64xf32>
    %cst_159 = arith.constant dense<0.000000e+00> : vector<8x64xf32>
    %321 = tpu.matmul %287, %320, %cst_159 {dimension_numbers = #tpu.dot_dimension_numbers<[1], [0], [0], [1], [0, 0, 1, 1], [], []>} : vector<8x32xf32>, vector<32x64xf32>, vector<8x64xf32> -> vector<8x64xf32>
    %322 = vector.broadcast %319 : vector<1x64xf32> to vector<8x64xf32>
    %323 = arith.addf %322, %321 : vector<8x64xf32>
    %cst_160 = arith.constant 0.000000e+00 : f32
    %324 = vector.broadcast %cst_160 : f32 to vector<8x64xf32>
    %325 = arith.maximumf %323, %324 : vector<8x64xf32>
    %326 = math.absf %323 : vector<8x64xf32>
    %cst_161 = arith.constant 0.000000e+00 : f32
    %327 = vector.broadcast %cst_161 : f32 to vector<8x64xf32>
    %328 = arith.subf %327, %326 : vector<8x64xf32>
    %329 = math.exp %328 : vector<8x64xf32>
    %330 = math.log1p %329 : vector<8x64xf32>
    %331 = arith.addf %325, %330 : vector<8x64xf32>
    %cst_162 = arith.constant 0.693147182 : f32
    %332 = vector.broadcast %cst_162 : f32 to vector<8x64xf32>
    %333 = arith.subf %331, %332 : vector<8x64xf32>
    %c1392 = arith.constant 1392 : index
    %c0_163 = arith.constant 0 : index
    %334 = vector.load %arg14[%c1392, %c0_163] : memref<3840x128xf32, #tpu.memory_space<vmem>>, vector<1x32xf32>
    %c1328 = arith.constant 1328 : index
    %c0_164 = arith.constant 0 : index
    %335 = vector.load %arg14[%c1328, %c0_164] : memref<3840x128xf32, #tpu.memory_space<vmem>>, vector<64x32xf32>
    %cst_165 = arith.constant dense<0.000000e+00> : vector<8x32xf32>
    %336 = tpu.matmul %333, %335, %cst_165 {dimension_numbers = #tpu.dot_dimension_numbers<[1], [0], [0], [1], [0, 0, 1, 1], [], []>} : vector<8x64xf32>, vector<64x32xf32>, vector<8x32xf32> -> vector<8x32xf32>
    %337 = vector.broadcast %334 : vector<1x32xf32> to vector<8x32xf32>
    %338 = arith.addf %337, %336 : vector<8x32xf32>
    %cst_166 = arith.constant 0.000000e+00 : f32
    %339 = vector.broadcast %cst_166 : f32 to vector<8x32xf32>
    %340 = arith.maximumf %338, %339 : vector<8x32xf32>
    %341 = math.absf %338 : vector<8x32xf32>
    %cst_167 = arith.constant 0.000000e+00 : f32
    %342 = vector.broadcast %cst_167 : f32 to vector<8x32xf32>
    %343 = arith.subf %342, %341 : vector<8x32xf32>
    %344 = math.exp %343 : vector<8x32xf32>
    %345 = math.log1p %344 : vector<8x32xf32>
    %346 = arith.addf %340, %345 : vector<8x32xf32>
    %cst_168 = arith.constant 0.693147182 : f32
    %347 = vector.broadcast %cst_168 : f32 to vector<8x32xf32>
    %348 = arith.subf %346, %347 : vector<8x32xf32>
    %c1432 = arith.constant 1432 : index
    %c0_169 = arith.constant 0 : index
    %349 = vector.load %arg14[%c1432, %c0_169] : memref<3840x128xf32, #tpu.memory_space<vmem>>, vector<1x64xf32>
    %c1400 = arith.constant 1400 : index
    %c0_170 = arith.constant 0 : index
    %350 = vector.load %arg14[%c1400, %c0_170] : memref<3840x128xf32, #tpu.memory_space<vmem>>, vector<32x64xf32>
    %cst_171 = arith.constant dense<0.000000e+00> : vector<2x64xf32>
    %351 = tpu.matmul %288, %350, %cst_171 {dimension_numbers = #tpu.dot_dimension_numbers<[1], [0], [0], [1], [0, 0, 1, 1], [], []>} : vector<2x32xf32>, vector<32x64xf32>, vector<2x64xf32> -> vector<2x64xf32>
    %352 = vector.broadcast %349 : vector<1x64xf32> to vector<2x64xf32>
    %353 = arith.addf %352, %351 : vector<2x64xf32>
    %cst_172 = arith.constant 0.000000e+00 : f32
    %354 = vector.broadcast %cst_172 : f32 to vector<2x64xf32>
    %355 = arith.maximumf %353, %354 : vector<2x64xf32>
    %356 = math.absf %353 : vector<2x64xf32>
    %cst_173 = arith.constant 0.000000e+00 : f32
    %357 = vector.broadcast %cst_173 : f32 to vector<2x64xf32>
    %358 = arith.subf %357, %356 : vector<2x64xf32>
    %359 = math.exp %358 : vector<2x64xf32>
    %360 = math.log1p %359 : vector<2x64xf32>
    %361 = arith.addf %355, %360 : vector<2x64xf32>
    %cst_174 = arith.constant 0.693147182 : f32
    %362 = vector.broadcast %cst_174 : f32 to vector<2x64xf32>
    %363 = arith.subf %361, %362 : vector<2x64xf32>
    %c1504 = arith.constant 1504 : index
    %c0_175 = arith.constant 0 : index
    %364 = vector.load %arg14[%c1504, %c0_175] : memref<3840x128xf32, #tpu.memory_space<vmem>>, vector<1x32xf32>
    %c1440 = arith.constant 1440 : index
    %c0_176 = arith.constant 0 : index
    %365 = vector.load %arg14[%c1440, %c0_176] : memref<3840x128xf32, #tpu.memory_space<vmem>>, vector<64x32xf32>
    %cst_177 = arith.constant dense<0.000000e+00> : vector<2x32xf32>
    %366 = tpu.matmul %363, %365, %cst_177 {dimension_numbers = #tpu.dot_dimension_numbers<[1], [0], [0], [1], [0, 0, 1, 1], [], []>} : vector<2x64xf32>, vector<64x32xf32>, vector<2x32xf32> -> vector<2x32xf32>
    %367 = vector.broadcast %364 : vector<1x32xf32> to vector<2x32xf32>
    %368 = arith.addf %367, %366 : vector<2x32xf32>
    %cst_178 = arith.constant 0.000000e+00 : f32
    %369 = vector.broadcast %cst_178 : f32 to vector<2x32xf32>
    %370 = arith.maximumf %368, %369 : vector<2x32xf32>
    %371 = math.absf %368 : vector<2x32xf32>
    %cst_179 = arith.constant 0.000000e+00 : f32
    %372 = vector.broadcast %cst_179 : f32 to vector<2x32xf32>
    %373 = arith.subf %372, %371 : vector<2x32xf32>
    %374 = math.exp %373 : vector<2x32xf32>
    %375 = math.log1p %374 : vector<2x32xf32>
    %376 = arith.addf %370, %375 : vector<2x32xf32>
    %cst_180 = arith.constant 0.693147182 : f32
    %377 = vector.broadcast %cst_180 : f32 to vector<2x32xf32>
    %378 = arith.subf %376, %377 : vector<2x32xf32>
    %cst_181 = arith.constant dense<0.000000e+00> : vector<8x32xf32>
    %379 = tpu.matmul %4, %378, %cst_181 {dimension_numbers = #tpu.dot_dimension_numbers<[1], [0], [0], [1], [0, 0, 1, 1], [], []>} : vector<8x2xf32>, vector<2x32xf32>, vector<8x32xf32> -> vector<8x32xf32>
    %cst_182 = arith.constant dense<0.000000e+00> : vector<16x32xf32>
    %380 = tpu.matmul %5, %378, %cst_182 {dimension_numbers = #tpu.dot_dimension_numbers<[1], [0], [0], [1], [0, 0, 1, 1], [], []>} : vector<16x2xf32>, vector<2x32xf32>, vector<16x32xf32> -> vector<16x32xf32>
    %381 = arith.truncf %348 : vector<8x32xf32> to vector<8x32xbf16>
    %cst_183 = arith.constant dense<0.000000e+00> : vector<16x32xf32>
    %382 = tpu.matmul %0, %381, %cst_183 {dimension_numbers = #tpu.dot_dimension_numbers<[1], [0], [0], [1], [0, 0, 1, 1], [], []>} : vector<16x8xbf16>, vector<8x32xbf16>, vector<16x32xf32> -> vector<16x32xf32>
    %cst_184 = arith.constant dense<0.000000e+00> : vector<16x32xf32>
    %383 = tpu.matmul %1, %381, %cst_184 {dimension_numbers = #tpu.dot_dimension_numbers<[1], [0], [0], [1], [0, 0, 1, 1], [], []>} : vector<16x8xbf16>, vector<8x32xbf16>, vector<16x32xf32> -> vector<16x32xf32>
    %c1640 = arith.constant 1640 : index
    %c0_185 = arith.constant 0 : index
    %384 = vector.load %arg14[%c1640, %c0_185] : memref<3840x128xf32, #tpu.memory_space<vmem>>, vector<1x64xf32>
    %c1512 = arith.constant 1512 : index
    %c0_186 = arith.constant 0 : index
    %385 = vector.load %arg14[%c1512, %c0_186] : memref<3840x128xf32, #tpu.memory_space<vmem>>, vector<32x64xf32>
    %cst_187 = arith.constant dense<0.000000e+00> : vector<16x64xf32>
    %386 = tpu.matmul %382, %385, %cst_187 {dimension_numbers = #tpu.dot_dimension_numbers<[1], [0], [0], [1], [0, 0, 1, 1], [], []>} : vector<16x32xf32>, vector<32x64xf32>, vector<16x64xf32> -> vector<16x64xf32>
    %387 = vector.broadcast %384 : vector<1x64xf32> to vector<16x64xf32>
    %388 = arith.addf %387, %386 : vector<16x64xf32>
    %c1544 = arith.constant 1544 : index
    %c0_188 = arith.constant 0 : index
    %389 = vector.load %arg14[%c1544, %c0_188] : memref<3840x128xf32, #tpu.memory_space<vmem>>, vector<32x64xf32>
    %cst_189 = arith.constant dense<0.000000e+00> : vector<16x64xf32>
    %390 = tpu.matmul %383, %389, %cst_189 {dimension_numbers = #tpu.dot_dimension_numbers<[1], [0], [0], [1], [0, 0, 1, 1], [], []>} : vector<16x32xf32>, vector<32x64xf32>, vector<16x64xf32> -> vector<16x64xf32>
    %391 = arith.addf %388, %390 : vector<16x64xf32>
    %c1576 = arith.constant 1576 : index
    %c0_190 = arith.constant 0 : index
    %392 = vector.load %arg14[%c1576, %c0_190] : memref<3840x128xf32, #tpu.memory_space<vmem>>, vector<32x64xf32>
    %cst_191 = arith.constant dense<0.000000e+00> : vector<16x64xf32>
    %393 = tpu.matmul %318, %392, %cst_191 {dimension_numbers = #tpu.dot_dimension_numbers<[1], [0], [0], [1], [0, 0, 1, 1], [], []>} : vector<16x32xf32>, vector<32x64xf32>, vector<16x64xf32> -> vector<16x64xf32>
    %394 = arith.addf %391, %393 : vector<16x64xf32>
    %c1608 = arith.constant 1608 : index
    %c0_192 = arith.constant 0 : index
    %395 = vector.load %arg14[%c1608, %c0_192] : memref<3840x128xf32, #tpu.memory_space<vmem>>, vector<32x64xf32>
    %cst_193 = arith.constant dense<0.000000e+00> : vector<16x64xf32>
    %396 = tpu.matmul %380, %395, %cst_193 {dimension_numbers = #tpu.dot_dimension_numbers<[1], [0], [0], [1], [0, 0, 1, 1], [], []>} : vector<16x32xf32>, vector<32x64xf32>, vector<16x64xf32> -> vector<16x64xf32>
    %397 = arith.addf %394, %396 : vector<16x64xf32>
    %cst_194 = arith.constant 0.000000e+00 : f32
    %398 = vector.broadcast %cst_194 : f32 to vector<16x64xf32>
    %399 = arith.maximumf %397, %398 : vector<16x64xf32>
    %400 = math.absf %397 : vector<16x64xf32>
    %cst_195 = arith.constant 0.000000e+00 : f32
    %401 = vector.broadcast %cst_195 : f32 to vector<16x64xf32>
    %402 = arith.subf %401, %400 : vector<16x64xf32>
    %403 = math.exp %402 : vector<16x64xf32>
    %404 = math.log1p %403 : vector<16x64xf32>
    %405 = arith.addf %399, %404 : vector<16x64xf32>
    %cst_196 = arith.constant 0.693147182 : f32
    %406 = vector.broadcast %cst_196 : f32 to vector<16x64xf32>
    %407 = arith.subf %405, %406 : vector<16x64xf32>
    %c1712 = arith.constant 1712 : index
    %c0_197 = arith.constant 0 : index
    %408 = vector.load %arg14[%c1712, %c0_197] : memref<3840x128xf32, #tpu.memory_space<vmem>>, vector<1x64xf32>
    %c1648 = arith.constant 1648 : index
    %c0_198 = arith.constant 0 : index
    %409 = vector.load %arg14[%c1648, %c0_198] : memref<3840x128xf32, #tpu.memory_space<vmem>>, vector<64x64xf32>
    %cst_199 = arith.constant dense<0.000000e+00> : vector<16x64xf32>
    %410 = tpu.matmul %407, %409, %cst_199 {dimension_numbers = #tpu.dot_dimension_numbers<[1], [0], [0], [1], [0, 0, 1, 1], [], []>} : vector<16x64xf32>, vector<64x64xf32>, vector<16x64xf32> -> vector<16x64xf32>
    %411 = vector.broadcast %408 : vector<1x64xf32> to vector<16x64xf32>
    %412 = arith.addf %411, %410 : vector<16x64xf32>
    %cst_200 = arith.constant 0.000000e+00 : f32
    %413 = vector.broadcast %cst_200 : f32 to vector<16x64xf32>
    %414 = arith.maximumf %412, %413 : vector<16x64xf32>
    %415 = math.absf %412 : vector<16x64xf32>
    %cst_201 = arith.constant 0.000000e+00 : f32
    %416 = vector.broadcast %cst_201 : f32 to vector<16x64xf32>
    %417 = arith.subf %416, %415 : vector<16x64xf32>
    %418 = math.exp %417 : vector<16x64xf32>
    %419 = math.log1p %418 : vector<16x64xf32>
    %420 = arith.addf %414, %419 : vector<16x64xf32>
    %cst_202 = arith.constant 0.693147182 : f32
    %421 = vector.broadcast %cst_202 : f32 to vector<16x64xf32>
    %422 = arith.subf %420, %421 : vector<16x64xf32>
    %c1784 = arith.constant 1784 : index
    %c0_203 = arith.constant 0 : index
    %423 = vector.load %arg14[%c1784, %c0_203] : memref<3840x128xf32, #tpu.memory_space<vmem>>, vector<1x32xf32>
    %c1720 = arith.constant 1720 : index
    %c0_204 = arith.constant 0 : index
    %424 = vector.load %arg14[%c1720, %c0_204] : memref<3840x128xf32, #tpu.memory_space<vmem>>, vector<64x32xf32>
    %cst_205 = arith.constant dense<0.000000e+00> : vector<16x32xf32>
    %425 = tpu.matmul %422, %424, %cst_205 {dimension_numbers = #tpu.dot_dimension_numbers<[1], [0], [0], [1], [0, 0, 1, 1], [], []>} : vector<16x64xf32>, vector<64x32xf32>, vector<16x32xf32> -> vector<16x32xf32>
    %426 = vector.broadcast %423 : vector<1x32xf32> to vector<16x32xf32>
    %427 = arith.addf %426, %425 : vector<16x32xf32>
    %cst_206 = arith.constant 0.000000e+00 : f32
    %428 = vector.broadcast %cst_206 : f32 to vector<16x32xf32>
    %429 = arith.maximumf %427, %428 : vector<16x32xf32>
    %430 = math.absf %427 : vector<16x32xf32>
    %cst_207 = arith.constant 0.000000e+00 : f32
    %431 = vector.broadcast %cst_207 : f32 to vector<16x32xf32>
    %432 = arith.subf %431, %430 : vector<16x32xf32>
    %433 = math.exp %432 : vector<16x32xf32>
    %434 = math.log1p %433 : vector<16x32xf32>
    %435 = arith.addf %429, %434 : vector<16x32xf32>
    %cst_208 = arith.constant 0.693147182 : f32
    %436 = vector.broadcast %cst_208 : f32 to vector<16x32xf32>
    %437 = arith.subf %435, %436 : vector<16x32xf32>
    %438 = arith.truncf %437 : vector<16x32xf32> to vector<16x32xbf16>
    %cst_209 = arith.constant dense<0.000000e+00> : vector<8x32xf32>
    %439 = tpu.matmul %2, %438, %cst_209 {dimension_numbers = #tpu.dot_dimension_numbers<[1], [0], [0], [1], [0, 0, 1, 1], [], []>} : vector<8x16xbf16>, vector<16x32xbf16>, vector<8x32xf32> -> vector<8x32xf32>
    %440 = vector.broadcast %3 : vector<8x1xf32> to vector<8x32xf32>
    %441 = arith.mulf %439, %440 : vector<8x32xf32>
    %c1888 = arith.constant 1888 : index
    %c0_210 = arith.constant 0 : index
    %442 = vector.load %arg14[%c1888, %c0_210] : memref<3840x128xf32, #tpu.memory_space<vmem>>, vector<1x64xf32>
    %c1792 = arith.constant 1792 : index
    %c0_211 = arith.constant 0 : index
    %443 = vector.load %arg14[%c1792, %c0_211] : memref<3840x128xf32, #tpu.memory_space<vmem>>, vector<32x64xf32>
    %cst_212 = arith.constant dense<0.000000e+00> : vector<8x64xf32>
    %444 = tpu.matmul %348, %443, %cst_212 {dimension_numbers = #tpu.dot_dimension_numbers<[1], [0], [0], [1], [0, 0, 1, 1], [], []>} : vector<8x32xf32>, vector<32x64xf32>, vector<8x64xf32> -> vector<8x64xf32>
    %445 = vector.broadcast %442 : vector<1x64xf32> to vector<8x64xf32>
    %446 = arith.addf %445, %444 : vector<8x64xf32>
    %c1824 = arith.constant 1824 : index
    %c0_213 = arith.constant 0 : index
    %447 = vector.load %arg14[%c1824, %c0_213] : memref<3840x128xf32, #tpu.memory_space<vmem>>, vector<32x64xf32>
    %cst_214 = arith.constant dense<0.000000e+00> : vector<8x64xf32>
    %448 = tpu.matmul %441, %447, %cst_214 {dimension_numbers = #tpu.dot_dimension_numbers<[1], [0], [0], [1], [0, 0, 1, 1], [], []>} : vector<8x32xf32>, vector<32x64xf32>, vector<8x64xf32> -> vector<8x64xf32>
    %449 = arith.addf %446, %448 : vector<8x64xf32>
    %c1856 = arith.constant 1856 : index
    %c0_215 = arith.constant 0 : index
    %450 = vector.load %arg14[%c1856, %c0_215] : memref<3840x128xf32, #tpu.memory_space<vmem>>, vector<32x64xf32>
    %cst_216 = arith.constant dense<0.000000e+00> : vector<8x64xf32>
    %451 = tpu.matmul %379, %450, %cst_216 {dimension_numbers = #tpu.dot_dimension_numbers<[1], [0], [0], [1], [0, 0, 1, 1], [], []>} : vector<8x32xf32>, vector<32x64xf32>, vector<8x64xf32> -> vector<8x64xf32>
    %452 = arith.addf %449, %451 : vector<8x64xf32>
    %cst_217 = arith.constant 0.000000e+00 : f32
    %453 = vector.broadcast %cst_217 : f32 to vector<8x64xf32>
    %454 = arith.maximumf %452, %453 : vector<8x64xf32>
    %455 = math.absf %452 : vector<8x64xf32>
    %cst_218 = arith.constant 0.000000e+00 : f32
    %456 = vector.broadcast %cst_218 : f32 to vector<8x64xf32>
    %457 = arith.subf %456, %455 : vector<8x64xf32>
    %458 = math.exp %457 : vector<8x64xf32>
    %459 = math.log1p %458 : vector<8x64xf32>
    %460 = arith.addf %454, %459 : vector<8x64xf32>
    %cst_219 = arith.constant 0.693147182 : f32
    %461 = vector.broadcast %cst_219 : f32 to vector<8x64xf32>
    %462 = arith.subf %460, %461 : vector<8x64xf32>
    %c1960 = arith.constant 1960 : index
    %c0_220 = arith.constant 0 : index
    %463 = vector.load %arg14[%c1960, %c0_220] : memref<3840x128xf32, #tpu.memory_space<vmem>>, vector<1x64xf32>
    %c1896 = arith.constant 1896 : index
    %c0_221 = arith.constant 0 : index
    %464 = vector.load %arg14[%c1896, %c0_221] : memref<3840x128xf32, #tpu.memory_space<vmem>>, vector<64x64xf32>
    %cst_222 = arith.constant dense<0.000000e+00> : vector<8x64xf32>
    %465 = tpu.matmul %462, %464, %cst_222 {dimension_numbers = #tpu.dot_dimension_numbers<[1], [0], [0], [1], [0, 0, 1, 1], [], []>} : vector<8x64xf32>, vector<64x64xf32>, vector<8x64xf32> -> vector<8x64xf32>
    %466 = vector.broadcast %463 : vector<1x64xf32> to vector<8x64xf32>
    %467 = arith.addf %466, %465 : vector<8x64xf32>
    %cst_223 = arith.constant 0.000000e+00 : f32
    %468 = vector.broadcast %cst_223 : f32 to vector<8x64xf32>
    %469 = arith.maximumf %467, %468 : vector<8x64xf32>
    %470 = math.absf %467 : vector<8x64xf32>
    %cst_224 = arith.constant 0.000000e+00 : f32
    %471 = vector.broadcast %cst_224 : f32 to vector<8x64xf32>
    %472 = arith.subf %471, %470 : vector<8x64xf32>
    %473 = math.exp %472 : vector<8x64xf32>
    %474 = math.log1p %473 : vector<8x64xf32>
    %475 = arith.addf %469, %474 : vector<8x64xf32>
    %cst_225 = arith.constant 0.693147182 : f32
    %476 = vector.broadcast %cst_225 : f32 to vector<8x64xf32>
    %477 = arith.subf %475, %476 : vector<8x64xf32>
    %c2032 = arith.constant 2032 : index
    %c0_226 = arith.constant 0 : index
    %478 = vector.load %arg14[%c2032, %c0_226] : memref<3840x128xf32, #tpu.memory_space<vmem>>, vector<1x32xf32>
    %c1968 = arith.constant 1968 : index
    %c0_227 = arith.constant 0 : index
    %479 = vector.load %arg14[%c1968, %c0_227] : memref<3840x128xf32, #tpu.memory_space<vmem>>, vector<64x32xf32>
    %cst_228 = arith.constant dense<0.000000e+00> : vector<8x32xf32>
    %480 = tpu.matmul %477, %479, %cst_228 {dimension_numbers = #tpu.dot_dimension_numbers<[1], [0], [0], [1], [0, 0, 1, 1], [], []>} : vector<8x64xf32>, vector<64x32xf32>, vector<8x32xf32> -> vector<8x32xf32>
    %481 = vector.broadcast %478 : vector<1x32xf32> to vector<8x32xf32>
    %482 = arith.addf %481, %480 : vector<8x32xf32>
    %cst_229 = arith.constant 0.000000e+00 : f32
    %483 = vector.broadcast %cst_229 : f32 to vector<8x32xf32>
    %484 = arith.maximumf %482, %483 : vector<8x32xf32>
    %485 = math.absf %482 : vector<8x32xf32>
    %cst_230 = arith.constant 0.000000e+00 : f32
    %486 = vector.broadcast %cst_230 : f32 to vector<8x32xf32>
    %487 = arith.subf %486, %485 : vector<8x32xf32>
    %488 = math.exp %487 : vector<8x32xf32>
    %489 = math.log1p %488 : vector<8x32xf32>
    %490 = arith.addf %484, %489 : vector<8x32xf32>
    %cst_231 = arith.constant 0.693147182 : f32
    %491 = vector.broadcast %cst_231 : f32 to vector<8x32xf32>
    %492 = arith.subf %490, %491 : vector<8x32xf32>
    %cst_232 = arith.constant dense<0.000000e+00> : vector<2x32xf32>
    %493 = tpu.matmul %7, %437, %cst_232 {dimension_numbers = #tpu.dot_dimension_numbers<[1], [0], [0], [1], [0, 0, 1, 1], [], []>} : vector<2x16xf32>, vector<16x32xf32>, vector<2x32xf32> -> vector<2x32xf32>
    %494 = vector.broadcast %9 : vector<2x1xf32> to vector<2x32xf32>
    %495 = arith.mulf %493, %494 : vector<2x32xf32>
    %cst_233 = arith.constant dense<0.000000e+00> : vector<2x32xf32>
    %496 = tpu.matmul %6, %492, %cst_233 {dimension_numbers = #tpu.dot_dimension_numbers<[1], [0], [0], [1], [0, 0, 1, 1], [], []>} : vector<2x8xf32>, vector<8x32xf32>, vector<2x32xf32> -> vector<2x32xf32>
    %497 = vector.broadcast %8 : vector<2x1xf32> to vector<2x32xf32>
    %498 = arith.mulf %496, %497 : vector<2x32xf32>
    %c2136 = arith.constant 2136 : index
    %c0_234 = arith.constant 0 : index
    %499 = vector.load %arg14[%c2136, %c0_234] : memref<3840x128xf32, #tpu.memory_space<vmem>>, vector<1x64xf32>
    %c2040 = arith.constant 2040 : index
    %c0_235 = arith.constant 0 : index
    %500 = vector.load %arg14[%c2040, %c0_235] : memref<3840x128xf32, #tpu.memory_space<vmem>>, vector<32x64xf32>
    %cst_236 = arith.constant dense<0.000000e+00> : vector<2x64xf32>
    %501 = tpu.matmul %378, %500, %cst_236 {dimension_numbers = #tpu.dot_dimension_numbers<[1], [0], [0], [1], [0, 0, 1, 1], [], []>} : vector<2x32xf32>, vector<32x64xf32>, vector<2x64xf32> -> vector<2x64xf32>
    %502 = vector.broadcast %499 : vector<1x64xf32> to vector<2x64xf32>
    %503 = arith.addf %502, %501 : vector<2x64xf32>
    %c2072 = arith.constant 2072 : index
    %c0_237 = arith.constant 0 : index
    %504 = vector.load %arg14[%c2072, %c0_237] : memref<3840x128xf32, #tpu.memory_space<vmem>>, vector<32x64xf32>
    %cst_238 = arith.constant dense<0.000000e+00> : vector<2x64xf32>
    %505 = tpu.matmul %495, %504, %cst_238 {dimension_numbers = #tpu.dot_dimension_numbers<[1], [0], [0], [1], [0, 0, 1, 1], [], []>} : vector<2x32xf32>, vector<32x64xf32>, vector<2x64xf32> -> vector<2x64xf32>
    %506 = arith.addf %503, %505 : vector<2x64xf32>
    %c2104 = arith.constant 2104 : index
    %c0_239 = arith.constant 0 : index
    %507 = vector.load %arg14[%c2104, %c0_239] : memref<3840x128xf32, #tpu.memory_space<vmem>>, vector<32x64xf32>
    %cst_240 = arith.constant dense<0.000000e+00> : vector<2x64xf32>
    %508 = tpu.matmul %498, %507, %cst_240 {dimension_numbers = #tpu.dot_dimension_numbers<[1], [0], [0], [1], [0, 0, 1, 1], [], []>} : vector<2x32xf32>, vector<32x64xf32>, vector<2x64xf32> -> vector<2x64xf32>
    %509 = arith.addf %506, %508 : vector<2x64xf32>
    %cst_241 = arith.constant 0.000000e+00 : f32
    %510 = vector.broadcast %cst_241 : f32 to vector<2x64xf32>
    %511 = arith.maximumf %509, %510 : vector<2x64xf32>
    %512 = math.absf %509 : vector<2x64xf32>
    %cst_242 = arith.constant 0.000000e+00 : f32
    %513 = vector.broadcast %cst_242 : f32 to vector<2x64xf32>
    %514 = arith.subf %513, %512 : vector<2x64xf32>
    %515 = math.exp %514 : vector<2x64xf32>
    %516 = math.log1p %515 : vector<2x64xf32>
    %517 = arith.addf %511, %516 : vector<2x64xf32>
    %cst_243 = arith.constant 0.693147182 : f32
    %518 = vector.broadcast %cst_243 : f32 to vector<2x64xf32>
    %519 = arith.subf %517, %518 : vector<2x64xf32>
    %c2208 = arith.constant 2208 : index
    %c0_244 = arith.constant 0 : index
    %520 = vector.load %arg14[%c2208, %c0_244] : memref<3840x128xf32, #tpu.memory_space<vmem>>, vector<1x64xf32>
    %c2144 = arith.constant 2144 : index
    %c0_245 = arith.constant 0 : index
    %521 = vector.load %arg14[%c2144, %c0_245] : memref<3840x128xf32, #tpu.memory_space<vmem>>, vector<64x64xf32>
    %cst_246 = arith.constant dense<0.000000e+00> : vector<2x64xf32>
    %522 = tpu.matmul %519, %521, %cst_246 {dimension_numbers = #tpu.dot_dimension_numbers<[1], [0], [0], [1], [0, 0, 1, 1], [], []>} : vector<2x64xf32>, vector<64x64xf32>, vector<2x64xf32> -> vector<2x64xf32>
    %523 = vector.broadcast %520 : vector<1x64xf32> to vector<2x64xf32>
    %524 = arith.addf %523, %522 : vector<2x64xf32>
    %cst_247 = arith.constant 0.000000e+00 : f32
    %525 = vector.broadcast %cst_247 : f32 to vector<2x64xf32>
    %526 = arith.maximumf %524, %525 : vector<2x64xf32>
    %527 = math.absf %524 : vector<2x64xf32>
    %cst_248 = arith.constant 0.000000e+00 : f32
    %528 = vector.broadcast %cst_248 : f32 to vector<2x64xf32>
    %529 = arith.subf %528, %527 : vector<2x64xf32>
    %530 = math.exp %529 : vector<2x64xf32>
    %531 = math.log1p %530 : vector<2x64xf32>
    %532 = arith.addf %526, %531 : vector<2x64xf32>
    %cst_249 = arith.constant 0.693147182 : f32
    %533 = vector.broadcast %cst_249 : f32 to vector<2x64xf32>
    %534 = arith.subf %532, %533 : vector<2x64xf32>
    %c2280 = arith.constant 2280 : index
    %c0_250 = arith.constant 0 : index
    %535 = vector.load %arg14[%c2280, %c0_250] : memref<3840x128xf32, #tpu.memory_space<vmem>>, vector<1x32xf32>
    %c2216 = arith.constant 2216 : index
    %c0_251 = arith.constant 0 : index
    %536 = vector.load %arg14[%c2216, %c0_251] : memref<3840x128xf32, #tpu.memory_space<vmem>>, vector<64x32xf32>
    %cst_252 = arith.constant dense<0.000000e+00> : vector<2x32xf32>
    %537 = tpu.matmul %534, %536, %cst_252 {dimension_numbers = #tpu.dot_dimension_numbers<[1], [0], [0], [1], [0, 0, 1, 1], [], []>} : vector<2x64xf32>, vector<64x32xf32>, vector<2x32xf32> -> vector<2x32xf32>
    %538 = vector.broadcast %535 : vector<1x32xf32> to vector<2x32xf32>
    %539 = arith.addf %538, %537 : vector<2x32xf32>
    %cst_253 = arith.constant 0.000000e+00 : f32
    %540 = vector.broadcast %cst_253 : f32 to vector<2x32xf32>
    %541 = arith.maximumf %539, %540 : vector<2x32xf32>
    %542 = math.absf %539 : vector<2x32xf32>
    %cst_254 = arith.constant 0.000000e+00 : f32
    %543 = vector.broadcast %cst_254 : f32 to vector<2x32xf32>
    %544 = arith.subf %543, %542 : vector<2x32xf32>
    %545 = math.exp %544 : vector<2x32xf32>
    %546 = math.log1p %545 : vector<2x32xf32>
    %547 = arith.addf %541, %546 : vector<2x32xf32>
    %cst_255 = arith.constant 0.693147182 : f32
    %548 = vector.broadcast %cst_255 : f32 to vector<2x32xf32>
    %549 = arith.subf %547, %548 : vector<2x32xf32>
    %550 = arith.addf %437, %286 : vector<16x32xf32>
    %551 = arith.addf %492, %287 : vector<8x32xf32>
    %552 = arith.addf %549, %288 : vector<2x32xf32>
    %c2320 = arith.constant 2320 : index
    %c0_256 = arith.constant 0 : index
    %553 = vector.load %arg14[%c2320, %c0_256] : memref<3840x128xf32, #tpu.memory_space<vmem>>, vector<1x64xf32>
    %c2288 = arith.constant 2288 : index
    %c0_257 = arith.constant 0 : index
    %554 = vector.load %arg14[%c2288, %c0_257] : memref<3840x128xf32, #tpu.memory_space<vmem>>, vector<32x64xf32>
    %cst_258 = arith.constant dense<0.000000e+00> : vector<16x64xf32>
    %555 = tpu.matmul %550, %554, %cst_258 {dimension_numbers = #tpu.dot_dimension_numbers<[1], [0], [0], [1], [0, 0, 1, 1], [], []>} : vector<16x32xf32>, vector<32x64xf32>, vector<16x64xf32> -> vector<16x64xf32>
    %556 = vector.broadcast %553 : vector<1x64xf32> to vector<16x64xf32>
    %557 = arith.addf %556, %555 : vector<16x64xf32>
    %cst_259 = arith.constant 0.000000e+00 : f32
    %558 = vector.broadcast %cst_259 : f32 to vector<16x64xf32>
    %559 = arith.maximumf %557, %558 : vector<16x64xf32>
    %560 = math.absf %557 : vector<16x64xf32>
    %cst_260 = arith.constant 0.000000e+00 : f32
    %561 = vector.broadcast %cst_260 : f32 to vector<16x64xf32>
    %562 = arith.subf %561, %560 : vector<16x64xf32>
    %563 = math.exp %562 : vector<16x64xf32>
    %564 = math.log1p %563 : vector<16x64xf32>
    %565 = arith.addf %559, %564 : vector<16x64xf32>
    %cst_261 = arith.constant 0.693147182 : f32
    %566 = vector.broadcast %cst_261 : f32 to vector<16x64xf32>
    %567 = arith.subf %565, %566 : vector<16x64xf32>
    %c2392 = arith.constant 2392 : index
    %c0_262 = arith.constant 0 : index
    %568 = vector.load %arg14[%c2392, %c0_262] : memref<3840x128xf32, #tpu.memory_space<vmem>>, vector<1x32xf32>
    %c2328 = arith.constant 2328 : index
    %c0_263 = arith.constant 0 : index
    %569 = vector.load %arg14[%c2328, %c0_263] : memref<3840x128xf32, #tpu.memory_space<vmem>>, vector<64x32xf32>
    %cst_264 = arith.constant dense<0.000000e+00> : vector<16x32xf32>
    %570 = tpu.matmul %567, %569, %cst_264 {dimension_numbers = #tpu.dot_dimension_numbers<[1], [0], [0], [1], [0, 0, 1, 1], [], []>} : vector<16x64xf32>, vector<64x32xf32>, vector<16x32xf32> -> vector<16x32xf32>
    %571 = vector.broadcast %568 : vector<1x32xf32> to vector<16x32xf32>
    %572 = arith.addf %571, %570 : vector<16x32xf32>
    %cst_265 = arith.constant 0.000000e+00 : f32
    %573 = vector.broadcast %cst_265 : f32 to vector<16x32xf32>
    %574 = arith.maximumf %572, %573 : vector<16x32xf32>
    %575 = math.absf %572 : vector<16x32xf32>
    %cst_266 = arith.constant 0.000000e+00 : f32
    %576 = vector.broadcast %cst_266 : f32 to vector<16x32xf32>
    %577 = arith.subf %576, %575 : vector<16x32xf32>
    %578 = math.exp %577 : vector<16x32xf32>
    %579 = math.log1p %578 : vector<16x32xf32>
    %580 = arith.addf %574, %579 : vector<16x32xf32>
    %cst_267 = arith.constant 0.693147182 : f32
    %581 = vector.broadcast %cst_267 : f32 to vector<16x32xf32>
    %582 = arith.subf %580, %581 : vector<16x32xf32>
    %c2432 = arith.constant 2432 : index
    %c0_268 = arith.constant 0 : index
    %583 = vector.load %arg14[%c2432, %c0_268] : memref<3840x128xf32, #tpu.memory_space<vmem>>, vector<1x64xf32>
    %c2400 = arith.constant 2400 : index
    %c0_269 = arith.constant 0 : index
    %584 = vector.load %arg14[%c2400, %c0_269] : memref<3840x128xf32, #tpu.memory_space<vmem>>, vector<32x64xf32>
    %cst_270 = arith.constant dense<0.000000e+00> : vector<8x64xf32>
    %585 = tpu.matmul %551, %584, %cst_270 {dimension_numbers = #tpu.dot_dimension_numbers<[1], [0], [0], [1], [0, 0, 1, 1], [], []>} : vector<8x32xf32>, vector<32x64xf32>, vector<8x64xf32> -> vector<8x64xf32>
    %586 = vector.broadcast %583 : vector<1x64xf32> to vector<8x64xf32>
    %587 = arith.addf %586, %585 : vector<8x64xf32>
    %cst_271 = arith.constant 0.000000e+00 : f32
    %588 = vector.broadcast %cst_271 : f32 to vector<8x64xf32>
    %589 = arith.maximumf %587, %588 : vector<8x64xf32>
    %590 = math.absf %587 : vector<8x64xf32>
    %cst_272 = arith.constant 0.000000e+00 : f32
    %591 = vector.broadcast %cst_272 : f32 to vector<8x64xf32>
    %592 = arith.subf %591, %590 : vector<8x64xf32>
    %593 = math.exp %592 : vector<8x64xf32>
    %594 = math.log1p %593 : vector<8x64xf32>
    %595 = arith.addf %589, %594 : vector<8x64xf32>
    %cst_273 = arith.constant 0.693147182 : f32
    %596 = vector.broadcast %cst_273 : f32 to vector<8x64xf32>
    %597 = arith.subf %595, %596 : vector<8x64xf32>
    %c2504 = arith.constant 2504 : index
    %c0_274 = arith.constant 0 : index
    %598 = vector.load %arg14[%c2504, %c0_274] : memref<3840x128xf32, #tpu.memory_space<vmem>>, vector<1x32xf32>
    %c2440 = arith.constant 2440 : index
    %c0_275 = arith.constant 0 : index
    %599 = vector.load %arg14[%c2440, %c0_275] : memref<3840x128xf32, #tpu.memory_space<vmem>>, vector<64x32xf32>
    %cst_276 = arith.constant dense<0.000000e+00> : vector<8x32xf32>
    %600 = tpu.matmul %597, %599, %cst_276 {dimension_numbers = #tpu.dot_dimension_numbers<[1], [0], [0], [1], [0, 0, 1, 1], [], []>} : vector<8x64xf32>, vector<64x32xf32>, vector<8x32xf32> -> vector<8x32xf32>
    %601 = vector.broadcast %598 : vector<1x32xf32> to vector<8x32xf32>
    %602 = arith.addf %601, %600 : vector<8x32xf32>
    %cst_277 = arith.constant 0.000000e+00 : f32
    %603 = vector.broadcast %cst_277 : f32 to vector<8x32xf32>
    %604 = arith.maximumf %602, %603 : vector<8x32xf32>
    %605 = math.absf %602 : vector<8x32xf32>
    %cst_278 = arith.constant 0.000000e+00 : f32
    %606 = vector.broadcast %cst_278 : f32 to vector<8x32xf32>
    %607 = arith.subf %606, %605 : vector<8x32xf32>
    %608 = math.exp %607 : vector<8x32xf32>
    %609 = math.log1p %608 : vector<8x32xf32>
    %610 = arith.addf %604, %609 : vector<8x32xf32>
    %cst_279 = arith.constant 0.693147182 : f32
    %611 = vector.broadcast %cst_279 : f32 to vector<8x32xf32>
    %612 = arith.subf %610, %611 : vector<8x32xf32>
    %c2544 = arith.constant 2544 : index
    %c0_280 = arith.constant 0 : index
    %613 = vector.load %arg14[%c2544, %c0_280] : memref<3840x128xf32, #tpu.memory_space<vmem>>, vector<1x64xf32>
    %c2512 = arith.constant 2512 : index
    %c0_281 = arith.constant 0 : index
    %614 = vector.load %arg14[%c2512, %c0_281] : memref<3840x128xf32, #tpu.memory_space<vmem>>, vector<32x64xf32>
    %cst_282 = arith.constant dense<0.000000e+00> : vector<2x64xf32>
    %615 = tpu.matmul %552, %614, %cst_282 {dimension_numbers = #tpu.dot_dimension_numbers<[1], [0], [0], [1], [0, 0, 1, 1], [], []>} : vector<2x32xf32>, vector<32x64xf32>, vector<2x64xf32> -> vector<2x64xf32>
    %616 = vector.broadcast %613 : vector<1x64xf32> to vector<2x64xf32>
    %617 = arith.addf %616, %615 : vector<2x64xf32>
    %cst_283 = arith.constant 0.000000e+00 : f32
    %618 = vector.broadcast %cst_283 : f32 to vector<2x64xf32>
    %619 = arith.maximumf %617, %618 : vector<2x64xf32>
    %620 = math.absf %617 : vector<2x64xf32>
    %cst_284 = arith.constant 0.000000e+00 : f32
    %621 = vector.broadcast %cst_284 : f32 to vector<2x64xf32>
    %622 = arith.subf %621, %620 : vector<2x64xf32>
    %623 = math.exp %622 : vector<2x64xf32>
    %624 = math.log1p %623 : vector<2x64xf32>
    %625 = arith.addf %619, %624 : vector<2x64xf32>
    %cst_285 = arith.constant 0.693147182 : f32
    %626 = vector.broadcast %cst_285 : f32 to vector<2x64xf32>
    %627 = arith.subf %625, %626 : vector<2x64xf32>
    %c2616 = arith.constant 2616 : index
    %c0_286 = arith.constant 0 : index
    %628 = vector.load %arg14[%c2616, %c0_286] : memref<3840x128xf32, #tpu.memory_space<vmem>>, vector<1x32xf32>
    %c2552 = arith.constant 2552 : index
    %c0_287 = arith.constant 0 : index
    %629 = vector.load %arg14[%c2552, %c0_287] : memref<3840x128xf32, #tpu.memory_space<vmem>>, vector<64x32xf32>
    %cst_288 = arith.constant dense<0.000000e+00> : vector<2x32xf32>
    %630 = tpu.matmul %627, %629, %cst_288 {dimension_numbers = #tpu.dot_dimension_numbers<[1], [0], [0], [1], [0, 0, 1, 1], [], []>} : vector<2x64xf32>, vector<64x32xf32>, vector<2x32xf32> -> vector<2x32xf32>
    %631 = vector.broadcast %628 : vector<1x32xf32> to vector<2x32xf32>
    %632 = arith.addf %631, %630 : vector<2x32xf32>
    %cst_289 = arith.constant 0.000000e+00 : f32
    %633 = vector.broadcast %cst_289 : f32 to vector<2x32xf32>
    %634 = arith.maximumf %632, %633 : vector<2x32xf32>
    %635 = math.absf %632 : vector<2x32xf32>
    %cst_290 = arith.constant 0.000000e+00 : f32
    %636 = vector.broadcast %cst_290 : f32 to vector<2x32xf32>
    %637 = arith.subf %636, %635 : vector<2x32xf32>
    %638 = math.exp %637 : vector<2x32xf32>
    %639 = math.log1p %638 : vector<2x32xf32>
    %640 = arith.addf %634, %639 : vector<2x32xf32>
    %cst_291 = arith.constant 0.693147182 : f32
    %641 = vector.broadcast %cst_291 : f32 to vector<2x32xf32>
    %642 = arith.subf %640, %641 : vector<2x32xf32>
    %cst_292 = arith.constant dense<0.000000e+00> : vector<8x32xf32>
    %643 = tpu.matmul %4, %642, %cst_292 {dimension_numbers = #tpu.dot_dimension_numbers<[1], [0], [0], [1], [0, 0, 1, 1], [], []>} : vector<8x2xf32>, vector<2x32xf32>, vector<8x32xf32> -> vector<8x32xf32>
    %cst_293 = arith.constant dense<0.000000e+00> : vector<16x32xf32>
    %644 = tpu.matmul %5, %642, %cst_293 {dimension_numbers = #tpu.dot_dimension_numbers<[1], [0], [0], [1], [0, 0, 1, 1], [], []>} : vector<16x2xf32>, vector<2x32xf32>, vector<16x32xf32> -> vector<16x32xf32>
    %645 = arith.truncf %612 : vector<8x32xf32> to vector<8x32xbf16>
    %cst_294 = arith.constant dense<0.000000e+00> : vector<16x32xf32>
    %646 = tpu.matmul %0, %645, %cst_294 {dimension_numbers = #tpu.dot_dimension_numbers<[1], [0], [0], [1], [0, 0, 1, 1], [], []>} : vector<16x8xbf16>, vector<8x32xbf16>, vector<16x32xf32> -> vector<16x32xf32>
    %cst_295 = arith.constant dense<0.000000e+00> : vector<16x32xf32>
    %647 = tpu.matmul %1, %645, %cst_295 {dimension_numbers = #tpu.dot_dimension_numbers<[1], [0], [0], [1], [0, 0, 1, 1], [], []>} : vector<16x8xbf16>, vector<8x32xbf16>, vector<16x32xf32> -> vector<16x32xf32>
    %c2752 = arith.constant 2752 : index
    %c0_296 = arith.constant 0 : index
    %648 = vector.load %arg14[%c2752, %c0_296] : memref<3840x128xf32, #tpu.memory_space<vmem>>, vector<1x64xf32>
    %c2624 = arith.constant 2624 : index
    %c0_297 = arith.constant 0 : index
    %649 = vector.load %arg14[%c2624, %c0_297] : memref<3840x128xf32, #tpu.memory_space<vmem>>, vector<32x64xf32>
    %cst_298 = arith.constant dense<0.000000e+00> : vector<16x64xf32>
    %650 = tpu.matmul %646, %649, %cst_298 {dimension_numbers = #tpu.dot_dimension_numbers<[1], [0], [0], [1], [0, 0, 1, 1], [], []>} : vector<16x32xf32>, vector<32x64xf32>, vector<16x64xf32> -> vector<16x64xf32>
    %651 = vector.broadcast %648 : vector<1x64xf32> to vector<16x64xf32>
    %652 = arith.addf %651, %650 : vector<16x64xf32>
    %c2656 = arith.constant 2656 : index
    %c0_299 = arith.constant 0 : index
    %653 = vector.load %arg14[%c2656, %c0_299] : memref<3840x128xf32, #tpu.memory_space<vmem>>, vector<32x64xf32>
    %cst_300 = arith.constant dense<0.000000e+00> : vector<16x64xf32>
    %654 = tpu.matmul %647, %653, %cst_300 {dimension_numbers = #tpu.dot_dimension_numbers<[1], [0], [0], [1], [0, 0, 1, 1], [], []>} : vector<16x32xf32>, vector<32x64xf32>, vector<16x64xf32> -> vector<16x64xf32>
    %655 = arith.addf %652, %654 : vector<16x64xf32>
    %c2688 = arith.constant 2688 : index
    %c0_301 = arith.constant 0 : index
    %656 = vector.load %arg14[%c2688, %c0_301] : memref<3840x128xf32, #tpu.memory_space<vmem>>, vector<32x64xf32>
    %cst_302 = arith.constant dense<0.000000e+00> : vector<16x64xf32>
    %657 = tpu.matmul %582, %656, %cst_302 {dimension_numbers = #tpu.dot_dimension_numbers<[1], [0], [0], [1], [0, 0, 1, 1], [], []>} : vector<16x32xf32>, vector<32x64xf32>, vector<16x64xf32> -> vector<16x64xf32>
    %658 = arith.addf %655, %657 : vector<16x64xf32>
    %c2720 = arith.constant 2720 : index
    %c0_303 = arith.constant 0 : index
    %659 = vector.load %arg14[%c2720, %c0_303] : memref<3840x128xf32, #tpu.memory_space<vmem>>, vector<32x64xf32>
    %cst_304 = arith.constant dense<0.000000e+00> : vector<16x64xf32>
    %660 = tpu.matmul %644, %659, %cst_304 {dimension_numbers = #tpu.dot_dimension_numbers<[1], [0], [0], [1], [0, 0, 1, 1], [], []>} : vector<16x32xf32>, vector<32x64xf32>, vector<16x64xf32> -> vector<16x64xf32>
    %661 = arith.addf %658, %660 : vector<16x64xf32>
    %cst_305 = arith.constant 0.000000e+00 : f32
    %662 = vector.broadcast %cst_305 : f32 to vector<16x64xf32>
    %663 = arith.maximumf %661, %662 : vector<16x64xf32>
    %664 = math.absf %661 : vector<16x64xf32>
    %cst_306 = arith.constant 0.000000e+00 : f32
    %665 = vector.broadcast %cst_306 : f32 to vector<16x64xf32>
    %666 = arith.subf %665, %664 : vector<16x64xf32>
    %667 = math.exp %666 : vector<16x64xf32>
    %668 = math.log1p %667 : vector<16x64xf32>
    %669 = arith.addf %663, %668 : vector<16x64xf32>
    %cst_307 = arith.constant 0.693147182 : f32
    %670 = vector.broadcast %cst_307 : f32 to vector<16x64xf32>
    %671 = arith.subf %669, %670 : vector<16x64xf32>
    %c2824 = arith.constant 2824 : index
    %c0_308 = arith.constant 0 : index
    %672 = vector.load %arg14[%c2824, %c0_308] : memref<3840x128xf32, #tpu.memory_space<vmem>>, vector<1x64xf32>
    %c2760 = arith.constant 2760 : index
    %c0_309 = arith.constant 0 : index
    %673 = vector.load %arg14[%c2760, %c0_309] : memref<3840x128xf32, #tpu.memory_space<vmem>>, vector<64x64xf32>
    %cst_310 = arith.constant dense<0.000000e+00> : vector<16x64xf32>
    %674 = tpu.matmul %671, %673, %cst_310 {dimension_numbers = #tpu.dot_dimension_numbers<[1], [0], [0], [1], [0, 0, 1, 1], [], []>} : vector<16x64xf32>, vector<64x64xf32>, vector<16x64xf32> -> vector<16x64xf32>
    %675 = vector.broadcast %672 : vector<1x64xf32> to vector<16x64xf32>
    %676 = arith.addf %675, %674 : vector<16x64xf32>
    %cst_311 = arith.constant 0.000000e+00 : f32
    %677 = vector.broadcast %cst_311 : f32 to vector<16x64xf32>
    %678 = arith.maximumf %676, %677 : vector<16x64xf32>
    %679 = math.absf %676 : vector<16x64xf32>
    %cst_312 = arith.constant 0.000000e+00 : f32
    %680 = vector.broadcast %cst_312 : f32 to vector<16x64xf32>
    %681 = arith.subf %680, %679 : vector<16x64xf32>
    %682 = math.exp %681 : vector<16x64xf32>
    %683 = math.log1p %682 : vector<16x64xf32>
    %684 = arith.addf %678, %683 : vector<16x64xf32>
    %cst_313 = arith.constant 0.693147182 : f32
    %685 = vector.broadcast %cst_313 : f32 to vector<16x64xf32>
    %686 = arith.subf %684, %685 : vector<16x64xf32>
    %c2896 = arith.constant 2896 : index
    %c0_314 = arith.constant 0 : index
    %687 = vector.load %arg14[%c2896, %c0_314] : memref<3840x128xf32, #tpu.memory_space<vmem>>, vector<1x32xf32>
    %c2832 = arith.constant 2832 : index
    %c0_315 = arith.constant 0 : index
    %688 = vector.load %arg14[%c2832, %c0_315] : memref<3840x128xf32, #tpu.memory_space<vmem>>, vector<64x32xf32>
    %cst_316 = arith.constant dense<0.000000e+00> : vector<16x32xf32>
    %689 = tpu.matmul %686, %688, %cst_316 {dimension_numbers = #tpu.dot_dimension_numbers<[1], [0], [0], [1], [0, 0, 1, 1], [], []>} : vector<16x64xf32>, vector<64x32xf32>, vector<16x32xf32> -> vector<16x32xf32>
    %690 = vector.broadcast %687 : vector<1x32xf32> to vector<16x32xf32>
    %691 = arith.addf %690, %689 : vector<16x32xf32>
    %cst_317 = arith.constant 0.000000e+00 : f32
    %692 = vector.broadcast %cst_317 : f32 to vector<16x32xf32>
    %693 = arith.maximumf %691, %692 : vector<16x32xf32>
    %694 = math.absf %691 : vector<16x32xf32>
    %cst_318 = arith.constant 0.000000e+00 : f32
    %695 = vector.broadcast %cst_318 : f32 to vector<16x32xf32>
    %696 = arith.subf %695, %694 : vector<16x32xf32>
    %697 = math.exp %696 : vector<16x32xf32>
    %698 = math.log1p %697 : vector<16x32xf32>
    %699 = arith.addf %693, %698 : vector<16x32xf32>
    %cst_319 = arith.constant 0.693147182 : f32
    %700 = vector.broadcast %cst_319 : f32 to vector<16x32xf32>
    %701 = arith.subf %699, %700 : vector<16x32xf32>
    %702 = arith.truncf %701 : vector<16x32xf32> to vector<16x32xbf16>
    %cst_320 = arith.constant dense<0.000000e+00> : vector<8x32xf32>
    %703 = tpu.matmul %2, %702, %cst_320 {dimension_numbers = #tpu.dot_dimension_numbers<[1], [0], [0], [1], [0, 0, 1, 1], [], []>} : vector<8x16xbf16>, vector<16x32xbf16>, vector<8x32xf32> -> vector<8x32xf32>
    %704 = vector.broadcast %3 : vector<8x1xf32> to vector<8x32xf32>
    %705 = arith.mulf %703, %704 : vector<8x32xf32>
    %c3000 = arith.constant 3000 : index
    %c0_321 = arith.constant 0 : index
    %706 = vector.load %arg14[%c3000, %c0_321] : memref<3840x128xf32, #tpu.memory_space<vmem>>, vector<1x64xf32>
    %c2904 = arith.constant 2904 : index
    %c0_322 = arith.constant 0 : index
    %707 = vector.load %arg14[%c2904, %c0_322] : memref<3840x128xf32, #tpu.memory_space<vmem>>, vector<32x64xf32>
    %cst_323 = arith.constant dense<0.000000e+00> : vector<8x64xf32>
    %708 = tpu.matmul %612, %707, %cst_323 {dimension_numbers = #tpu.dot_dimension_numbers<[1], [0], [0], [1], [0, 0, 1, 1], [], []>} : vector<8x32xf32>, vector<32x64xf32>, vector<8x64xf32> -> vector<8x64xf32>
    %709 = vector.broadcast %706 : vector<1x64xf32> to vector<8x64xf32>
    %710 = arith.addf %709, %708 : vector<8x64xf32>
    %c2936 = arith.constant 2936 : index
    %c0_324 = arith.constant 0 : index
    %711 = vector.load %arg14[%c2936, %c0_324] : memref<3840x128xf32, #tpu.memory_space<vmem>>, vector<32x64xf32>
    %cst_325 = arith.constant dense<0.000000e+00> : vector<8x64xf32>
    %712 = tpu.matmul %705, %711, %cst_325 {dimension_numbers = #tpu.dot_dimension_numbers<[1], [0], [0], [1], [0, 0, 1, 1], [], []>} : vector<8x32xf32>, vector<32x64xf32>, vector<8x64xf32> -> vector<8x64xf32>
    %713 = arith.addf %710, %712 : vector<8x64xf32>
    %c2968 = arith.constant 2968 : index
    %c0_326 = arith.constant 0 : index
    %714 = vector.load %arg14[%c2968, %c0_326] : memref<3840x128xf32, #tpu.memory_space<vmem>>, vector<32x64xf32>
    %cst_327 = arith.constant dense<0.000000e+00> : vector<8x64xf32>
    %715 = tpu.matmul %643, %714, %cst_327 {dimension_numbers = #tpu.dot_dimension_numbers<[1], [0], [0], [1], [0, 0, 1, 1], [], []>} : vector<8x32xf32>, vector<32x64xf32>, vector<8x64xf32> -> vector<8x64xf32>
    %716 = arith.addf %713, %715 : vector<8x64xf32>
    %cst_328 = arith.constant 0.000000e+00 : f32
    %717 = vector.broadcast %cst_328 : f32 to vector<8x64xf32>
    %718 = arith.maximumf %716, %717 : vector<8x64xf32>
    %719 = math.absf %716 : vector<8x64xf32>
    %cst_329 = arith.constant 0.000000e+00 : f32
    %720 = vector.broadcast %cst_329 : f32 to vector<8x64xf32>
    %721 = arith.subf %720, %719 : vector<8x64xf32>
    %722 = math.exp %721 : vector<8x64xf32>
    %723 = math.log1p %722 : vector<8x64xf32>
    %724 = arith.addf %718, %723 : vector<8x64xf32>
    %cst_330 = arith.constant 0.693147182 : f32
    %725 = vector.broadcast %cst_330 : f32 to vector<8x64xf32>
    %726 = arith.subf %724, %725 : vector<8x64xf32>
    %c3072 = arith.constant 3072 : index
    %c0_331 = arith.constant 0 : index
    %727 = vector.load %arg14[%c3072, %c0_331] : memref<3840x128xf32, #tpu.memory_space<vmem>>, vector<1x64xf32>
    %c3008 = arith.constant 3008 : index
    %c0_332 = arith.constant 0 : index
    %728 = vector.load %arg14[%c3008, %c0_332] : memref<3840x128xf32, #tpu.memory_space<vmem>>, vector<64x64xf32>
    %cst_333 = arith.constant dense<0.000000e+00> : vector<8x64xf32>
    %729 = tpu.matmul %726, %728, %cst_333 {dimension_numbers = #tpu.dot_dimension_numbers<[1], [0], [0], [1], [0, 0, 1, 1], [], []>} : vector<8x64xf32>, vector<64x64xf32>, vector<8x64xf32> -> vector<8x64xf32>
    %730 = vector.broadcast %727 : vector<1x64xf32> to vector<8x64xf32>
    %731 = arith.addf %730, %729 : vector<8x64xf32>
    %cst_334 = arith.constant 0.000000e+00 : f32
    %732 = vector.broadcast %cst_334 : f32 to vector<8x64xf32>
    %733 = arith.maximumf %731, %732 : vector<8x64xf32>
    %734 = math.absf %731 : vector<8x64xf32>
    %cst_335 = arith.constant 0.000000e+00 : f32
    %735 = vector.broadcast %cst_335 : f32 to vector<8x64xf32>
    %736 = arith.subf %735, %734 : vector<8x64xf32>
    %737 = math.exp %736 : vector<8x64xf32>
    %738 = math.log1p %737 : vector<8x64xf32>
    %739 = arith.addf %733, %738 : vector<8x64xf32>
    %cst_336 = arith.constant 0.693147182 : f32
    %740 = vector.broadcast %cst_336 : f32 to vector<8x64xf32>
    %741 = arith.subf %739, %740 : vector<8x64xf32>
    %c3144 = arith.constant 3144 : index
    %c0_337 = arith.constant 0 : index
    %742 = vector.load %arg14[%c3144, %c0_337] : memref<3840x128xf32, #tpu.memory_space<vmem>>, vector<1x32xf32>
    %c3080 = arith.constant 3080 : index
    %c0_338 = arith.constant 0 : index
    %743 = vector.load %arg14[%c3080, %c0_338] : memref<3840x128xf32, #tpu.memory_space<vmem>>, vector<64x32xf32>
    %cst_339 = arith.constant dense<0.000000e+00> : vector<8x32xf32>
    %744 = tpu.matmul %741, %743, %cst_339 {dimension_numbers = #tpu.dot_dimension_numbers<[1], [0], [0], [1], [0, 0, 1, 1], [], []>} : vector<8x64xf32>, vector<64x32xf32>, vector<8x32xf32> -> vector<8x32xf32>
    %745 = vector.broadcast %742 : vector<1x32xf32> to vector<8x32xf32>
    %746 = arith.addf %745, %744 : vector<8x32xf32>
    %cst_340 = arith.constant 0.000000e+00 : f32
    %747 = vector.broadcast %cst_340 : f32 to vector<8x32xf32>
    %748 = arith.maximumf %746, %747 : vector<8x32xf32>
    %749 = math.absf %746 : vector<8x32xf32>
    %cst_341 = arith.constant 0.000000e+00 : f32
    %750 = vector.broadcast %cst_341 : f32 to vector<8x32xf32>
    %751 = arith.subf %750, %749 : vector<8x32xf32>
    %752 = math.exp %751 : vector<8x32xf32>
    %753 = math.log1p %752 : vector<8x32xf32>
    %754 = arith.addf %748, %753 : vector<8x32xf32>
    %cst_342 = arith.constant 0.693147182 : f32
    %755 = vector.broadcast %cst_342 : f32 to vector<8x32xf32>
    %756 = arith.subf %754, %755 : vector<8x32xf32>
    %cst_343 = arith.constant dense<0.000000e+00> : vector<2x32xf32>
    %757 = tpu.matmul %7, %701, %cst_343 {dimension_numbers = #tpu.dot_dimension_numbers<[1], [0], [0], [1], [0, 0, 1, 1], [], []>} : vector<2x16xf32>, vector<16x32xf32>, vector<2x32xf32> -> vector<2x32xf32>
    %758 = vector.broadcast %9 : vector<2x1xf32> to vector<2x32xf32>
    %759 = arith.mulf %757, %758 : vector<2x32xf32>
    %cst_344 = arith.constant dense<0.000000e+00> : vector<2x32xf32>
    %760 = tpu.matmul %6, %756, %cst_344 {dimension_numbers = #tpu.dot_dimension_numbers<[1], [0], [0], [1], [0, 0, 1, 1], [], []>} : vector<2x8xf32>, vector<8x32xf32>, vector<2x32xf32> -> vector<2x32xf32>
    %761 = vector.broadcast %8 : vector<2x1xf32> to vector<2x32xf32>
    %762 = arith.mulf %760, %761 : vector<2x32xf32>
    %c3248 = arith.constant 3248 : index
    %c0_345 = arith.constant 0 : index
    %763 = vector.load %arg14[%c3248, %c0_345] : memref<3840x128xf32, #tpu.memory_space<vmem>>, vector<1x64xf32>
    %c3152 = arith.constant 3152 : index
    %c0_346 = arith.constant 0 : index
    %764 = vector.load %arg14[%c3152, %c0_346] : memref<3840x128xf32, #tpu.memory_space<vmem>>, vector<32x64xf32>
    %cst_347 = arith.constant dense<0.000000e+00> : vector<2x64xf32>
    %765 = tpu.matmul %642, %764, %cst_347 {dimension_numbers = #tpu.dot_dimension_numbers<[1], [0], [0], [1], [0, 0, 1, 1], [], []>} : vector<2x32xf32>, vector<32x64xf32>, vector<2x64xf32> -> vector<2x64xf32>
    %766 = vector.broadcast %763 : vector<1x64xf32> to vector<2x64xf32>
    %767 = arith.addf %766, %765 : vector<2x64xf32>
    %c3184 = arith.constant 3184 : index
    %c0_348 = arith.constant 0 : index
    %768 = vector.load %arg14[%c3184, %c0_348] : memref<3840x128xf32, #tpu.memory_space<vmem>>, vector<32x64xf32>
    %cst_349 = arith.constant dense<0.000000e+00> : vector<2x64xf32>
    %769 = tpu.matmul %759, %768, %cst_349 {dimension_numbers = #tpu.dot_dimension_numbers<[1], [0], [0], [1], [0, 0, 1, 1], [], []>} : vector<2x32xf32>, vector<32x64xf32>, vector<2x64xf32> -> vector<2x64xf32>
    %770 = arith.addf %767, %769 : vector<2x64xf32>
    %c3216 = arith.constant 3216 : index
    %c0_350 = arith.constant 0 : index
    %771 = vector.load %arg14[%c3216, %c0_350] : memref<3840x128xf32, #tpu.memory_space<vmem>>, vector<32x64xf32>
    %cst_351 = arith.constant dense<0.000000e+00> : vector<2x64xf32>
    %772 = tpu.matmul %762, %771, %cst_351 {dimension_numbers = #tpu.dot_dimension_numbers<[1], [0], [0], [1], [0, 0, 1, 1], [], []>} : vector<2x32xf32>, vector<32x64xf32>, vector<2x64xf32> -> vector<2x64xf32>
    %773 = arith.addf %770, %772 : vector<2x64xf32>
    %cst_352 = arith.constant 0.000000e+00 : f32
    %774 = vector.broadcast %cst_352 : f32 to vector<2x64xf32>
    %775 = arith.maximumf %773, %774 : vector<2x64xf32>
    %776 = math.absf %773 : vector<2x64xf32>
    %cst_353 = arith.constant 0.000000e+00 : f32
    %777 = vector.broadcast %cst_353 : f32 to vector<2x64xf32>
    %778 = arith.subf %777, %776 : vector<2x64xf32>
    %779 = math.exp %778 : vector<2x64xf32>
    %780 = math.log1p %779 : vector<2x64xf32>
    %781 = arith.addf %775, %780 : vector<2x64xf32>
    %cst_354 = arith.constant 0.693147182 : f32
    %782 = vector.broadcast %cst_354 : f32 to vector<2x64xf32>
    %783 = arith.subf %781, %782 : vector<2x64xf32>
    %c3320 = arith.constant 3320 : index
    %c0_355 = arith.constant 0 : index
    %784 = vector.load %arg14[%c3320, %c0_355] : memref<3840x128xf32, #tpu.memory_space<vmem>>, vector<1x64xf32>
    %c3256 = arith.constant 3256 : index
    %c0_356 = arith.constant 0 : index
    %785 = vector.load %arg14[%c3256, %c0_356] : memref<3840x128xf32, #tpu.memory_space<vmem>>, vector<64x64xf32>
    %cst_357 = arith.constant dense<0.000000e+00> : vector<2x64xf32>
    %786 = tpu.matmul %783, %785, %cst_357 {dimension_numbers = #tpu.dot_dimension_numbers<[1], [0], [0], [1], [0, 0, 1, 1], [], []>} : vector<2x64xf32>, vector<64x64xf32>, vector<2x64xf32> -> vector<2x64xf32>
    %787 = vector.broadcast %784 : vector<1x64xf32> to vector<2x64xf32>
    %788 = arith.addf %787, %786 : vector<2x64xf32>
    %cst_358 = arith.constant 0.000000e+00 : f32
    %789 = vector.broadcast %cst_358 : f32 to vector<2x64xf32>
    %790 = arith.maximumf %788, %789 : vector<2x64xf32>
    %791 = math.absf %788 : vector<2x64xf32>
    %cst_359 = arith.constant 0.000000e+00 : f32
    %792 = vector.broadcast %cst_359 : f32 to vector<2x64xf32>
    %793 = arith.subf %792, %791 : vector<2x64xf32>
    %794 = math.exp %793 : vector<2x64xf32>
    %795 = math.log1p %794 : vector<2x64xf32>
    %796 = arith.addf %790, %795 : vector<2x64xf32>
    %cst_360 = arith.constant 0.693147182 : f32
    %797 = vector.broadcast %cst_360 : f32 to vector<2x64xf32>
    %798 = arith.subf %796, %797 : vector<2x64xf32>
    %c3392 = arith.constant 3392 : index
    %c0_361 = arith.constant 0 : index
    %799 = vector.load %arg14[%c3392, %c0_361] : memref<3840x128xf32, #tpu.memory_space<vmem>>, vector<1x32xf32>
    %c3328 = arith.constant 3328 : index
    %c0_362 = arith.constant 0 : index
    %800 = vector.load %arg14[%c3328, %c0_362] : memref<3840x128xf32, #tpu.memory_space<vmem>>, vector<64x32xf32>
    %cst_363 = arith.constant dense<0.000000e+00> : vector<2x32xf32>
    %801 = tpu.matmul %798, %800, %cst_363 {dimension_numbers = #tpu.dot_dimension_numbers<[1], [0], [0], [1], [0, 0, 1, 1], [], []>} : vector<2x64xf32>, vector<64x32xf32>, vector<2x32xf32> -> vector<2x32xf32>
    %802 = vector.broadcast %799 : vector<1x32xf32> to vector<2x32xf32>
    %803 = arith.addf %802, %801 : vector<2x32xf32>
    %cst_364 = arith.constant 0.000000e+00 : f32
    %804 = vector.broadcast %cst_364 : f32 to vector<2x32xf32>
    %805 = arith.maximumf %803, %804 : vector<2x32xf32>
    %806 = math.absf %803 : vector<2x32xf32>
    %cst_365 = arith.constant 0.000000e+00 : f32
    %807 = vector.broadcast %cst_365 : f32 to vector<2x32xf32>
    %808 = arith.subf %807, %806 : vector<2x32xf32>
    %809 = math.exp %808 : vector<2x32xf32>
    %810 = math.log1p %809 : vector<2x32xf32>
    %811 = arith.addf %805, %810 : vector<2x32xf32>
    %cst_366 = arith.constant 0.693147182 : f32
    %812 = vector.broadcast %cst_366 : f32 to vector<2x32xf32>
    %813 = arith.subf %811, %812 : vector<2x32xf32>
    %814 = arith.addf %701, %550 : vector<16x32xf32>
    %815 = arith.addf %756, %551 : vector<8x32xf32>
    %816 = arith.addf %813, %552 : vector<2x32xf32>
    %c3464 = arith.constant 3464 : index
    %c0_367 = arith.constant 0 : index
    %817 = vector.load %arg14[%c3464, %c0_367] : memref<3840x128xf32, #tpu.memory_space<vmem>>, vector<32x128xf32>
    %c3496 = arith.constant 3496 : index
    %c0_368 = arith.constant 0 : index
    %818 = vector.load %arg14[%c3496, %c0_368] : memref<3840x128xf32, #tpu.memory_space<vmem>>, vector<1x128xf32>
    %cst_369 = arith.constant 0.000000e+00 : f32
    %819 = vector.broadcast %cst_369 : f32 to vector<2x32xf32>
    %cst_370 = arith.constant 0.000000e+00 : f32
    %820 = vector.broadcast %cst_370 : f32 to vector<2x32xf32>
    %cst_371 = arith.constant 0.000000e+00 : f32
    %821 = vector.broadcast %cst_371 : f32 to vector<2x32xf32>
    %cst_372 = arith.constant 0.000000e+00 : f32
    %822 = vector.broadcast %cst_372 : f32 to vector<2x32xf32>
    %c3400 = arith.constant 3400 : index
    %c0_373 = arith.constant 0 : index
    %823 = vector.load %arg14[%c3400, %c0_373] : memref<3840x128xf32, #tpu.memory_space<vmem>>, vector<32x128xf32>
    %cst_374 = arith.constant dense<0.000000e+00> : vector<2x128xf32>
    %824 = tpu.matmul %821, %823, %cst_374 {dimension_numbers = #tpu.dot_dimension_numbers<[1], [0], [0], [1], [0, 0, 1, 1], [], []>} : vector<2x32xf32>, vector<32x128xf32>, vector<2x128xf32> -> vector<2x128xf32>
    %c3432 = arith.constant 3432 : index
    %c0_375 = arith.constant 0 : index
    %825 = vector.load %arg14[%c3432, %c0_375] : memref<3840x128xf32, #tpu.memory_space<vmem>>, vector<32x128xf32>
    %cst_376 = arith.constant dense<0.000000e+00> : vector<2x128xf32>
    %826 = tpu.matmul %822, %825, %cst_376 {dimension_numbers = #tpu.dot_dimension_numbers<[1], [0], [0], [1], [0, 0, 1, 1], [], []>} : vector<2x32xf32>, vector<32x128xf32>, vector<2x128xf32> -> vector<2x128xf32>
    %827 = arith.addf %824, %826 : vector<2x128xf32>
    %cst_377 = arith.constant dense<0.000000e+00> : vector<2x128xf32>
    %828 = tpu.matmul %819, %817, %cst_377 {dimension_numbers = #tpu.dot_dimension_numbers<[1], [0], [0], [1], [0, 0, 1, 1], [], []>} : vector<2x32xf32>, vector<32x128xf32>, vector<2x128xf32> -> vector<2x128xf32>
    %829 = arith.addf %827, %828 : vector<2x128xf32>
    %830 = vector.broadcast %818 : vector<1x128xf32> to vector<2x128xf32>
    %831 = arith.addf %829, %830 : vector<2x128xf32>
    %832 = vector.extract_strided_slice %831 {offsets = [0, 0], sizes = [2, 32], strides = [1, 1]} : vector<2x128xf32> to vector<2x32xf32>
    %833 = arith.negf %832 : vector<2x32xf32>
    %834 = math.exp %833 : vector<2x32xf32>
    %cst_378 = arith.constant 1.000000e+00 : f32
    %835 = vector.broadcast %cst_378 : f32 to vector<2x32xf32>
    %836 = arith.addf %835, %834 : vector<2x32xf32>
    %837 = arith.divf %835, %836 : vector<2x32xf32>
    %838 = vector.extract_strided_slice %831 {offsets = [0, 32], sizes = [2, 32], strides = [1, 1]} : vector<2x128xf32> to vector<2x32xf32>
    %839 = arith.negf %838 : vector<2x32xf32>
    %840 = math.exp %839 : vector<2x32xf32>
    %cst_379 = arith.constant 1.000000e+00 : f32
    %841 = vector.broadcast %cst_379 : f32 to vector<2x32xf32>
    %842 = arith.addf %841, %840 : vector<2x32xf32>
    %843 = arith.divf %841, %842 : vector<2x32xf32>
    %844 = vector.extract_strided_slice %831 {offsets = [0, 64], sizes = [2, 32], strides = [1, 1]} : vector<2x128xf32> to vector<2x32xf32>
    %845 = math.tanh %844 : vector<2x32xf32>
    %846 = vector.extract_strided_slice %831 {offsets = [0, 96], sizes = [2, 32], strides = [1, 1]} : vector<2x128xf32> to vector<2x32xf32>
    %847 = arith.negf %846 : vector<2x32xf32>
    %848 = math.exp %847 : vector<2x32xf32>
    %cst_380 = arith.constant 1.000000e+00 : f32
    %849 = vector.broadcast %cst_380 : f32 to vector<2x32xf32>
    %850 = arith.addf %849, %848 : vector<2x32xf32>
    %851 = arith.divf %849, %850 : vector<2x32xf32>
    %852 = arith.mulf %843, %820 : vector<2x32xf32>
    %853 = arith.mulf %837, %845 : vector<2x32xf32>
    %854 = arith.addf %852, %853 : vector<2x32xf32>
    %855 = math.tanh %854 : vector<2x32xf32>
    %856 = arith.mulf %851, %855 : vector<2x32xf32>
    %cst_381 = arith.constant dense<0.000000e+00> : vector<8x32xf32>
    %857 = tpu.matmul %4, %856, %cst_381 {dimension_numbers = #tpu.dot_dimension_numbers<[1], [0], [0], [1], [0, 0, 1, 1], [], []>} : vector<8x2xf32>, vector<2x32xf32>, vector<8x32xf32> -> vector<8x32xf32>
    %858 = arith.mulf %815, %857 : vector<8x32xf32>
    %cst_382 = arith.constant dense<0.000000e+00> : vector<8xf32>
    %859 = vector.multi_reduction <add>, %858, %cst_382 [1] : vector<8x32xf32> to vector<8xf32>
    %860 = vector.shape_cast %859 : vector<8xf32> to vector<8x1xf32>
    %861 = vector.broadcast %860 : vector<8x1xf32> to vector<8x2xf32>
    %862 = arith.mulf %861, %4 : vector<8x2xf32>
    %cst_383 = arith.constant 1.000000e+00 : f32
    %863 = vector.broadcast %cst_383 : f32 to vector<8x2xf32>
    %864 = arith.subf %863, %4 : vector<8x2xf32>
    %cst_384 = arith.constant -1.000000e+30 : f32
    %865 = vector.broadcast %cst_384 : f32 to vector<8x2xf32>
    %866 = arith.mulf %864, %865 : vector<8x2xf32>
    %867 = arith.addf %862, %866 : vector<8x2xf32>
    %cst_385 = arith.constant dense<0xFF800000> : vector<2xf32>
    %868 = vector.multi_reduction <maximumf>, %867, %cst_385 [0] : vector<8x2xf32> to vector<2xf32>
    %869 = vector.shape_cast %868 : vector<2xf32> to vector<1x2xf32>
    %870 = vector.broadcast %869 : vector<1x2xf32> to vector<8x2xf32>
    %871 = arith.mulf %4, %870 : vector<8x2xf32>
    %cst_386 = arith.constant dense<0.000000e+00> : vector<8xf32>
    %872 = vector.multi_reduction <add>, %871, %cst_386 [1] : vector<8x2xf32> to vector<8xf32>
    %873 = vector.shape_cast %872 : vector<8xf32> to vector<8x1xf32>
    %874 = arith.subf %860, %873 : vector<8x1xf32>
    %875 = math.exp %874 : vector<8x1xf32>
    %cst_387 = arith.constant dense<0.000000e+00> : vector<2x1xf32>
    %876 = tpu.matmul %6, %875, %cst_387 {dimension_numbers = #tpu.dot_dimension_numbers<[1], [0], [0], [1], [0, 0, 1, 1], [], []>} : vector<2x8xf32>, vector<8x1xf32>, vector<2x1xf32> -> vector<2x1xf32>
    %cst_388 = arith.constant 1.000000e-30 : f32
    %877 = vector.broadcast %cst_388 : f32 to vector<2x1xf32>
    %878 = arith.maximumf %876, %877 : vector<2x1xf32>
    %cst_389 = arith.constant dense<0.000000e+00> : vector<8x1xf32>
    %879 = tpu.matmul %4, %878, %cst_389 {dimension_numbers = #tpu.dot_dimension_numbers<[1], [0], [0], [1], [0, 0, 1, 1], [], []>} : vector<8x2xf32>, vector<2x1xf32>, vector<8x1xf32> -> vector<8x1xf32>
    %880 = arith.divf %875, %879 : vector<8x1xf32>
    %881 = vector.broadcast %880 : vector<8x1xf32> to vector<8x32xf32>
    %882 = arith.mulf %815, %881 : vector<8x32xf32>
    %cst_390 = arith.constant dense<0.000000e+00> : vector<2x32xf32>
    %883 = tpu.matmul %6, %882, %cst_390 {dimension_numbers = #tpu.dot_dimension_numbers<[1], [0], [0], [1], [0, 0, 1, 1], [], []>} : vector<2x8xf32>, vector<8x32xf32>, vector<2x32xf32> -> vector<2x32xf32>
    %c3400_391 = arith.constant 3400 : index
    %c0_392 = arith.constant 0 : index
    %884 = vector.load %arg14[%c3400_391, %c0_392] : memref<3840x128xf32, #tpu.memory_space<vmem>>, vector<32x128xf32>
    %cst_393 = arith.constant dense<0.000000e+00> : vector<2x128xf32>
    %885 = tpu.matmul %856, %884, %cst_393 {dimension_numbers = #tpu.dot_dimension_numbers<[1], [0], [0], [1], [0, 0, 1, 1], [], []>} : vector<2x32xf32>, vector<32x128xf32>, vector<2x128xf32> -> vector<2x128xf32>
    %c3432_394 = arith.constant 3432 : index
    %c0_395 = arith.constant 0 : index
    %886 = vector.load %arg14[%c3432_394, %c0_395] : memref<3840x128xf32, #tpu.memory_space<vmem>>, vector<32x128xf32>
    %cst_396 = arith.constant dense<0.000000e+00> : vector<2x128xf32>
    %887 = tpu.matmul %883, %886, %cst_396 {dimension_numbers = #tpu.dot_dimension_numbers<[1], [0], [0], [1], [0, 0, 1, 1], [], []>} : vector<2x32xf32>, vector<32x128xf32>, vector<2x128xf32> -> vector<2x128xf32>
    %888 = arith.addf %885, %887 : vector<2x128xf32>
    %cst_397 = arith.constant dense<0.000000e+00> : vector<2x128xf32>
    %889 = tpu.matmul %856, %817, %cst_397 {dimension_numbers = #tpu.dot_dimension_numbers<[1], [0], [0], [1], [0, 0, 1, 1], [], []>} : vector<2x32xf32>, vector<32x128xf32>, vector<2x128xf32> -> vector<2x128xf32>
    %890 = arith.addf %888, %889 : vector<2x128xf32>
    %891 = vector.broadcast %818 : vector<1x128xf32> to vector<2x128xf32>
    %892 = arith.addf %890, %891 : vector<2x128xf32>
    %893 = vector.extract_strided_slice %892 {offsets = [0, 0], sizes = [2, 32], strides = [1, 1]} : vector<2x128xf32> to vector<2x32xf32>
    %894 = arith.negf %893 : vector<2x32xf32>
    %895 = math.exp %894 : vector<2x32xf32>
    %cst_398 = arith.constant 1.000000e+00 : f32
    %896 = vector.broadcast %cst_398 : f32 to vector<2x32xf32>
    %897 = arith.addf %896, %895 : vector<2x32xf32>
    %898 = arith.divf %896, %897 : vector<2x32xf32>
    %899 = vector.extract_strided_slice %892 {offsets = [0, 32], sizes = [2, 32], strides = [1, 1]} : vector<2x128xf32> to vector<2x32xf32>
    %900 = arith.negf %899 : vector<2x32xf32>
    %901 = math.exp %900 : vector<2x32xf32>
    %cst_399 = arith.constant 1.000000e+00 : f32
    %902 = vector.broadcast %cst_399 : f32 to vector<2x32xf32>
    %903 = arith.addf %902, %901 : vector<2x32xf32>
    %904 = arith.divf %902, %903 : vector<2x32xf32>
    %905 = vector.extract_strided_slice %892 {offsets = [0, 64], sizes = [2, 32], strides = [1, 1]} : vector<2x128xf32> to vector<2x32xf32>
    %906 = math.tanh %905 : vector<2x32xf32>
    %907 = vector.extract_strided_slice %892 {offsets = [0, 96], sizes = [2, 32], strides = [1, 1]} : vector<2x128xf32> to vector<2x32xf32>
    %908 = arith.negf %907 : vector<2x32xf32>
    %909 = math.exp %908 : vector<2x32xf32>
    %cst_400 = arith.constant 1.000000e+00 : f32
    %910 = vector.broadcast %cst_400 : f32 to vector<2x32xf32>
    %911 = arith.addf %910, %909 : vector<2x32xf32>
    %912 = arith.divf %910, %911 : vector<2x32xf32>
    %913 = arith.mulf %904, %854 : vector<2x32xf32>
    %914 = arith.mulf %898, %906 : vector<2x32xf32>
    %915 = arith.addf %913, %914 : vector<2x32xf32>
    %916 = math.tanh %915 : vector<2x32xf32>
    %917 = arith.mulf %912, %916 : vector<2x32xf32>
    %cst_401 = arith.constant dense<0.000000e+00> : vector<8x32xf32>
    %918 = tpu.matmul %4, %917, %cst_401 {dimension_numbers = #tpu.dot_dimension_numbers<[1], [0], [0], [1], [0, 0, 1, 1], [], []>} : vector<8x2xf32>, vector<2x32xf32>, vector<8x32xf32> -> vector<8x32xf32>
    %919 = arith.mulf %815, %918 : vector<8x32xf32>
    %cst_402 = arith.constant dense<0.000000e+00> : vector<8xf32>
    %920 = vector.multi_reduction <add>, %919, %cst_402 [1] : vector<8x32xf32> to vector<8xf32>
    %921 = vector.shape_cast %920 : vector<8xf32> to vector<8x1xf32>
    %922 = vector.broadcast %921 : vector<8x1xf32> to vector<8x2xf32>
    %923 = arith.mulf %922, %4 : vector<8x2xf32>
    %cst_403 = arith.constant 1.000000e+00 : f32
    %924 = vector.broadcast %cst_403 : f32 to vector<8x2xf32>
    %925 = arith.subf %924, %4 : vector<8x2xf32>
    %cst_404 = arith.constant -1.000000e+30 : f32
    %926 = vector.broadcast %cst_404 : f32 to vector<8x2xf32>
    %927 = arith.mulf %925, %926 : vector<8x2xf32>
    %928 = arith.addf %923, %927 : vector<8x2xf32>
    %cst_405 = arith.constant dense<0xFF800000> : vector<2xf32>
    %929 = vector.multi_reduction <maximumf>, %928, %cst_405 [0] : vector<8x2xf32> to vector<2xf32>
    %930 = vector.shape_cast %929 : vector<2xf32> to vector<1x2xf32>
    %931 = vector.broadcast %930 : vector<1x2xf32> to vector<8x2xf32>
    %932 = arith.mulf %4, %931 : vector<8x2xf32>
    %cst_406 = arith.constant dense<0.000000e+00> : vector<8xf32>
    %933 = vector.multi_reduction <add>, %932, %cst_406 [1] : vector<8x2xf32> to vector<8xf32>
    %934 = vector.shape_cast %933 : vector<8xf32> to vector<8x1xf32>
    %935 = arith.subf %921, %934 : vector<8x1xf32>
    %936 = math.exp %935 : vector<8x1xf32>
    %cst_407 = arith.constant dense<0.000000e+00> : vector<2x1xf32>
    %937 = tpu.matmul %6, %936, %cst_407 {dimension_numbers = #tpu.dot_dimension_numbers<[1], [0], [0], [1], [0, 0, 1, 1], [], []>} : vector<2x8xf32>, vector<8x1xf32>, vector<2x1xf32> -> vector<2x1xf32>
    %cst_408 = arith.constant 1.000000e-30 : f32
    %938 = vector.broadcast %cst_408 : f32 to vector<2x1xf32>
    %939 = arith.maximumf %937, %938 : vector<2x1xf32>
    %cst_409 = arith.constant dense<0.000000e+00> : vector<8x1xf32>
    %940 = tpu.matmul %4, %939, %cst_409 {dimension_numbers = #tpu.dot_dimension_numbers<[1], [0], [0], [1], [0, 0, 1, 1], [], []>} : vector<8x2xf32>, vector<2x1xf32>, vector<8x1xf32> -> vector<8x1xf32>
    %941 = arith.divf %936, %940 : vector<8x1xf32>
    %942 = vector.broadcast %941 : vector<8x1xf32> to vector<8x32xf32>
    %943 = arith.mulf %815, %942 : vector<8x32xf32>
    %cst_410 = arith.constant dense<0.000000e+00> : vector<2x32xf32>
    %944 = tpu.matmul %6, %943, %cst_410 {dimension_numbers = #tpu.dot_dimension_numbers<[1], [0], [0], [1], [0, 0, 1, 1], [], []>} : vector<2x8xf32>, vector<8x32xf32>, vector<2x32xf32> -> vector<2x32xf32>
    %c3568 = arith.constant 3568 : index
    %c0_411 = arith.constant 0 : index
    %945 = vector.load %arg14[%c3568, %c0_411] : memref<3840x128xf32, #tpu.memory_space<vmem>>, vector<32x128xf32>
    %c3600 = arith.constant 3600 : index
    %c0_412 = arith.constant 0 : index
    %946 = vector.load %arg14[%c3600, %c0_412] : memref<3840x128xf32, #tpu.memory_space<vmem>>, vector<1x128xf32>
    %cst_413 = arith.constant 0.000000e+00 : f32
    %947 = vector.broadcast %cst_413 : f32 to vector<2x32xf32>
    %cst_414 = arith.constant 0.000000e+00 : f32
    %948 = vector.broadcast %cst_414 : f32 to vector<2x32xf32>
    %cst_415 = arith.constant 0.000000e+00 : f32
    %949 = vector.broadcast %cst_415 : f32 to vector<2x32xf32>
    %cst_416 = arith.constant 0.000000e+00 : f32
    %950 = vector.broadcast %cst_416 : f32 to vector<2x32xf32>
    %c3504 = arith.constant 3504 : index
    %c0_417 = arith.constant 0 : index
    %951 = vector.load %arg14[%c3504, %c0_417] : memref<3840x128xf32, #tpu.memory_space<vmem>>, vector<32x128xf32>
    %cst_418 = arith.constant dense<0.000000e+00> : vector<2x128xf32>
    %952 = tpu.matmul %949, %951, %cst_418 {dimension_numbers = #tpu.dot_dimension_numbers<[1], [0], [0], [1], [0, 0, 1, 1], [], []>} : vector<2x32xf32>, vector<32x128xf32>, vector<2x128xf32> -> vector<2x128xf32>
    %c3536 = arith.constant 3536 : index
    %c0_419 = arith.constant 0 : index
    %953 = vector.load %arg14[%c3536, %c0_419] : memref<3840x128xf32, #tpu.memory_space<vmem>>, vector<32x128xf32>
    %cst_420 = arith.constant dense<0.000000e+00> : vector<2x128xf32>
    %954 = tpu.matmul %950, %953, %cst_420 {dimension_numbers = #tpu.dot_dimension_numbers<[1], [0], [0], [1], [0, 0, 1, 1], [], []>} : vector<2x32xf32>, vector<32x128xf32>, vector<2x128xf32> -> vector<2x128xf32>
    %955 = arith.addf %952, %954 : vector<2x128xf32>
    %cst_421 = arith.constant dense<0.000000e+00> : vector<2x128xf32>
    %956 = tpu.matmul %947, %945, %cst_421 {dimension_numbers = #tpu.dot_dimension_numbers<[1], [0], [0], [1], [0, 0, 1, 1], [], []>} : vector<2x32xf32>, vector<32x128xf32>, vector<2x128xf32> -> vector<2x128xf32>
    %957 = arith.addf %955, %956 : vector<2x128xf32>
    %958 = vector.broadcast %946 : vector<1x128xf32> to vector<2x128xf32>
    %959 = arith.addf %957, %958 : vector<2x128xf32>
    %960 = vector.extract_strided_slice %959 {offsets = [0, 0], sizes = [2, 32], strides = [1, 1]} : vector<2x128xf32> to vector<2x32xf32>
    %961 = arith.negf %960 : vector<2x32xf32>
    %962 = math.exp %961 : vector<2x32xf32>
    %cst_422 = arith.constant 1.000000e+00 : f32
    %963 = vector.broadcast %cst_422 : f32 to vector<2x32xf32>
    %964 = arith.addf %963, %962 : vector<2x32xf32>
    %965 = arith.divf %963, %964 : vector<2x32xf32>
    %966 = vector.extract_strided_slice %959 {offsets = [0, 32], sizes = [2, 32], strides = [1, 1]} : vector<2x128xf32> to vector<2x32xf32>
    %967 = arith.negf %966 : vector<2x32xf32>
    %968 = math.exp %967 : vector<2x32xf32>
    %cst_423 = arith.constant 1.000000e+00 : f32
    %969 = vector.broadcast %cst_423 : f32 to vector<2x32xf32>
    %970 = arith.addf %969, %968 : vector<2x32xf32>
    %971 = arith.divf %969, %970 : vector<2x32xf32>
    %972 = vector.extract_strided_slice %959 {offsets = [0, 64], sizes = [2, 32], strides = [1, 1]} : vector<2x128xf32> to vector<2x32xf32>
    %973 = math.tanh %972 : vector<2x32xf32>
    %974 = vector.extract_strided_slice %959 {offsets = [0, 96], sizes = [2, 32], strides = [1, 1]} : vector<2x128xf32> to vector<2x32xf32>
    %975 = arith.negf %974 : vector<2x32xf32>
    %976 = math.exp %975 : vector<2x32xf32>
    %cst_424 = arith.constant 1.000000e+00 : f32
    %977 = vector.broadcast %cst_424 : f32 to vector<2x32xf32>
    %978 = arith.addf %977, %976 : vector<2x32xf32>
    %979 = arith.divf %977, %978 : vector<2x32xf32>
    %980 = arith.mulf %971, %948 : vector<2x32xf32>
    %981 = arith.mulf %965, %973 : vector<2x32xf32>
    %982 = arith.addf %980, %981 : vector<2x32xf32>
    %983 = math.tanh %982 : vector<2x32xf32>
    %984 = arith.mulf %979, %983 : vector<2x32xf32>
    %cst_425 = arith.constant dense<0.000000e+00> : vector<16x32xf32>
    %985 = tpu.matmul %5, %984, %cst_425 {dimension_numbers = #tpu.dot_dimension_numbers<[1], [0], [0], [1], [0, 0, 1, 1], [], []>} : vector<16x2xf32>, vector<2x32xf32>, vector<16x32xf32> -> vector<16x32xf32>
    %986 = arith.mulf %814, %985 : vector<16x32xf32>
    %cst_426 = arith.constant dense<0.000000e+00> : vector<16xf32>
    %987 = vector.multi_reduction <add>, %986, %cst_426 [1] : vector<16x32xf32> to vector<16xf32>
    %988 = vector.shape_cast %987 : vector<16xf32> to vector<16x1xf32>
    %989 = vector.broadcast %988 : vector<16x1xf32> to vector<16x2xf32>
    %990 = arith.mulf %989, %5 : vector<16x2xf32>
    %cst_427 = arith.constant 1.000000e+00 : f32
    %991 = vector.broadcast %cst_427 : f32 to vector<16x2xf32>
    %992 = arith.subf %991, %5 : vector<16x2xf32>
    %cst_428 = arith.constant -1.000000e+30 : f32
    %993 = vector.broadcast %cst_428 : f32 to vector<16x2xf32>
    %994 = arith.mulf %992, %993 : vector<16x2xf32>
    %995 = arith.addf %990, %994 : vector<16x2xf32>
    %cst_429 = arith.constant dense<0xFF800000> : vector<2xf32>
    %996 = vector.multi_reduction <maximumf>, %995, %cst_429 [0] : vector<16x2xf32> to vector<2xf32>
    %997 = vector.shape_cast %996 : vector<2xf32> to vector<1x2xf32>
    %998 = vector.broadcast %997 : vector<1x2xf32> to vector<16x2xf32>
    %999 = arith.mulf %5, %998 : vector<16x2xf32>
    %cst_430 = arith.constant dense<0.000000e+00> : vector<16xf32>
    %1000 = vector.multi_reduction <add>, %999, %cst_430 [1] : vector<16x2xf32> to vector<16xf32>
    %1001 = vector.shape_cast %1000 : vector<16xf32> to vector<16x1xf32>
    %1002 = arith.subf %988, %1001 : vector<16x1xf32>
    %1003 = math.exp %1002 : vector<16x1xf32>
    %cst_431 = arith.constant dense<0.000000e+00> : vector<2x1xf32>
    %1004 = tpu.matmul %7, %1003, %cst_431 {dimension_numbers = #tpu.dot_dimension_numbers<[1], [0], [0], [1], [0, 0, 1, 1], [], []>} : vector<2x16xf32>, vector<16x1xf32>, vector<2x1xf32> -> vector<2x1xf32>
    %cst_432 = arith.constant 1.000000e-30 : f32
    %1005 = vector.broadcast %cst_432 : f32 to vector<2x1xf32>
    %1006 = arith.maximumf %1004, %1005 : vector<2x1xf32>
    %cst_433 = arith.constant dense<0.000000e+00> : vector<16x1xf32>
    %1007 = tpu.matmul %5, %1006, %cst_433 {dimension_numbers = #tpu.dot_dimension_numbers<[1], [0], [0], [1], [0, 0, 1, 1], [], []>} : vector<16x2xf32>, vector<2x1xf32>, vector<16x1xf32> -> vector<16x1xf32>
    %1008 = arith.divf %1003, %1007 : vector<16x1xf32>
    %1009 = vector.broadcast %1008 : vector<16x1xf32> to vector<16x32xf32>
    %1010 = arith.mulf %814, %1009 : vector<16x32xf32>
    %cst_434 = arith.constant dense<0.000000e+00> : vector<2x32xf32>
    %1011 = tpu.matmul %7, %1010, %cst_434 {dimension_numbers = #tpu.dot_dimension_numbers<[1], [0], [0], [1], [0, 0, 1, 1], [], []>} : vector<2x16xf32>, vector<16x32xf32>, vector<2x32xf32> -> vector<2x32xf32>
    %c3504_435 = arith.constant 3504 : index
    %c0_436 = arith.constant 0 : index
    %1012 = vector.load %arg14[%c3504_435, %c0_436] : memref<3840x128xf32, #tpu.memory_space<vmem>>, vector<32x128xf32>
    %cst_437 = arith.constant dense<0.000000e+00> : vector<2x128xf32>
    %1013 = tpu.matmul %984, %1012, %cst_437 {dimension_numbers = #tpu.dot_dimension_numbers<[1], [0], [0], [1], [0, 0, 1, 1], [], []>} : vector<2x32xf32>, vector<32x128xf32>, vector<2x128xf32> -> vector<2x128xf32>
    %c3536_438 = arith.constant 3536 : index
    %c0_439 = arith.constant 0 : index
    %1014 = vector.load %arg14[%c3536_438, %c0_439] : memref<3840x128xf32, #tpu.memory_space<vmem>>, vector<32x128xf32>
    %cst_440 = arith.constant dense<0.000000e+00> : vector<2x128xf32>
    %1015 = tpu.matmul %1011, %1014, %cst_440 {dimension_numbers = #tpu.dot_dimension_numbers<[1], [0], [0], [1], [0, 0, 1, 1], [], []>} : vector<2x32xf32>, vector<32x128xf32>, vector<2x128xf32> -> vector<2x128xf32>
    %1016 = arith.addf %1013, %1015 : vector<2x128xf32>
    %cst_441 = arith.constant dense<0.000000e+00> : vector<2x128xf32>
    %1017 = tpu.matmul %984, %945, %cst_441 {dimension_numbers = #tpu.dot_dimension_numbers<[1], [0], [0], [1], [0, 0, 1, 1], [], []>} : vector<2x32xf32>, vector<32x128xf32>, vector<2x128xf32> -> vector<2x128xf32>
    %1018 = arith.addf %1016, %1017 : vector<2x128xf32>
    %1019 = vector.broadcast %946 : vector<1x128xf32> to vector<2x128xf32>
    %1020 = arith.addf %1018, %1019 : vector<2x128xf32>
    %1021 = vector.extract_strided_slice %1020 {offsets = [0, 0], sizes = [2, 32], strides = [1, 1]} : vector<2x128xf32> to vector<2x32xf32>
    %1022 = arith.negf %1021 : vector<2x32xf32>
    %1023 = math.exp %1022 : vector<2x32xf32>
    %cst_442 = arith.constant 1.000000e+00 : f32
    %1024 = vector.broadcast %cst_442 : f32 to vector<2x32xf32>
    %1025 = arith.addf %1024, %1023 : vector<2x32xf32>
    %1026 = arith.divf %1024, %1025 : vector<2x32xf32>
    %1027 = vector.extract_strided_slice %1020 {offsets = [0, 32], sizes = [2, 32], strides = [1, 1]} : vector<2x128xf32> to vector<2x32xf32>
    %1028 = arith.negf %1027 : vector<2x32xf32>
    %1029 = math.exp %1028 : vector<2x32xf32>
    %cst_443 = arith.constant 1.000000e+00 : f32
    %1030 = vector.broadcast %cst_443 : f32 to vector<2x32xf32>
    %1031 = arith.addf %1030, %1029 : vector<2x32xf32>
    %1032 = arith.divf %1030, %1031 : vector<2x32xf32>
    %1033 = vector.extract_strided_slice %1020 {offsets = [0, 64], sizes = [2, 32], strides = [1, 1]} : vector<2x128xf32> to vector<2x32xf32>
    %1034 = math.tanh %1033 : vector<2x32xf32>
    %1035 = vector.extract_strided_slice %1020 {offsets = [0, 96], sizes = [2, 32], strides = [1, 1]} : vector<2x128xf32> to vector<2x32xf32>
    %1036 = arith.negf %1035 : vector<2x32xf32>
    %1037 = math.exp %1036 : vector<2x32xf32>
    %cst_444 = arith.constant 1.000000e+00 : f32
    %1038 = vector.broadcast %cst_444 : f32 to vector<2x32xf32>
    %1039 = arith.addf %1038, %1037 : vector<2x32xf32>
    %1040 = arith.divf %1038, %1039 : vector<2x32xf32>
    %1041 = arith.mulf %1032, %982 : vector<2x32xf32>
    %1042 = arith.mulf %1026, %1034 : vector<2x32xf32>
    %1043 = arith.addf %1041, %1042 : vector<2x32xf32>
    %1044 = math.tanh %1043 : vector<2x32xf32>
    %1045 = arith.mulf %1040, %1044 : vector<2x32xf32>
    %cst_445 = arith.constant dense<0.000000e+00> : vector<16x32xf32>
    %1046 = tpu.matmul %5, %1045, %cst_445 {dimension_numbers = #tpu.dot_dimension_numbers<[1], [0], [0], [1], [0, 0, 1, 1], [], []>} : vector<16x2xf32>, vector<2x32xf32>, vector<16x32xf32> -> vector<16x32xf32>
    %1047 = arith.mulf %814, %1046 : vector<16x32xf32>
    %cst_446 = arith.constant dense<0.000000e+00> : vector<16xf32>
    %1048 = vector.multi_reduction <add>, %1047, %cst_446 [1] : vector<16x32xf32> to vector<16xf32>
    %1049 = vector.shape_cast %1048 : vector<16xf32> to vector<16x1xf32>
    %1050 = vector.broadcast %1049 : vector<16x1xf32> to vector<16x2xf32>
    %1051 = arith.mulf %1050, %5 : vector<16x2xf32>
    %cst_447 = arith.constant 1.000000e+00 : f32
    %1052 = vector.broadcast %cst_447 : f32 to vector<16x2xf32>
    %1053 = arith.subf %1052, %5 : vector<16x2xf32>
    %cst_448 = arith.constant -1.000000e+30 : f32
    %1054 = vector.broadcast %cst_448 : f32 to vector<16x2xf32>
    %1055 = arith.mulf %1053, %1054 : vector<16x2xf32>
    %1056 = arith.addf %1051, %1055 : vector<16x2xf32>
    %cst_449 = arith.constant dense<0xFF800000> : vector<2xf32>
    %1057 = vector.multi_reduction <maximumf>, %1056, %cst_449 [0] : vector<16x2xf32> to vector<2xf32>
    %1058 = vector.shape_cast %1057 : vector<2xf32> to vector<1x2xf32>
    %1059 = vector.broadcast %1058 : vector<1x2xf32> to vector<16x2xf32>
    %1060 = arith.mulf %5, %1059 : vector<16x2xf32>
    %cst_450 = arith.constant dense<0.000000e+00> : vector<16xf32>
    %1061 = vector.multi_reduction <add>, %1060, %cst_450 [1] : vector<16x2xf32> to vector<16xf32>
    %1062 = vector.shape_cast %1061 : vector<16xf32> to vector<16x1xf32>
    %1063 = arith.subf %1049, %1062 : vector<16x1xf32>
    %1064 = math.exp %1063 : vector<16x1xf32>
    %cst_451 = arith.constant dense<0.000000e+00> : vector<2x1xf32>
    %1065 = tpu.matmul %7, %1064, %cst_451 {dimension_numbers = #tpu.dot_dimension_numbers<[1], [0], [0], [1], [0, 0, 1, 1], [], []>} : vector<2x16xf32>, vector<16x1xf32>, vector<2x1xf32> -> vector<2x1xf32>
    %cst_452 = arith.constant 1.000000e-30 : f32
    %1066 = vector.broadcast %cst_452 : f32 to vector<2x1xf32>
    %1067 = arith.maximumf %1065, %1066 : vector<2x1xf32>
    %cst_453 = arith.constant dense<0.000000e+00> : vector<16x1xf32>
    %1068 = tpu.matmul %5, %1067, %cst_453 {dimension_numbers = #tpu.dot_dimension_numbers<[1], [0], [0], [1], [0, 0, 1, 1], [], []>} : vector<16x2xf32>, vector<2x1xf32>, vector<16x1xf32> -> vector<16x1xf32>
    %1069 = arith.divf %1064, %1068 : vector<16x1xf32>
    %1070 = vector.broadcast %1069 : vector<16x1xf32> to vector<16x32xf32>
    %1071 = arith.mulf %814, %1070 : vector<16x32xf32>
    %cst_454 = arith.constant dense<0.000000e+00> : vector<2x32xf32>
    %1072 = tpu.matmul %7, %1071, %cst_454 {dimension_numbers = #tpu.dot_dimension_numbers<[1], [0], [0], [1], [0, 0, 1, 1], [], []>} : vector<2x16xf32>, vector<16x32xf32>, vector<2x32xf32> -> vector<2x32xf32>
    %c3768 = arith.constant 3768 : index
    %c0_455 = arith.constant 0 : index
    %1073 = vector.load %arg14[%c3768, %c0_455] : memref<3840x128xf32, #tpu.memory_space<vmem>>, vector<1x32xf32>
    %c3608 = arith.constant 3608 : index
    %c0_456 = arith.constant 0 : index
    %1074 = vector.load %arg14[%c3608, %c0_456] : memref<3840x128xf32, #tpu.memory_space<vmem>>, vector<32x32xf32>
    %cst_457 = arith.constant dense<0.000000e+00> : vector<2x32xf32>
    %1075 = tpu.matmul %917, %1074, %cst_457 {dimension_numbers = #tpu.dot_dimension_numbers<[1], [0], [0], [1], [0, 0, 1, 1], [], []>} : vector<2x32xf32>, vector<32x32xf32>, vector<2x32xf32> -> vector<2x32xf32>
    %1076 = vector.broadcast %1073 : vector<1x32xf32> to vector<2x32xf32>
    %1077 = arith.addf %1076, %1075 : vector<2x32xf32>
    %c3640 = arith.constant 3640 : index
    %c0_458 = arith.constant 0 : index
    %1078 = vector.load %arg14[%c3640, %c0_458] : memref<3840x128xf32, #tpu.memory_space<vmem>>, vector<32x32xf32>
    %cst_459 = arith.constant dense<0.000000e+00> : vector<2x32xf32>
    %1079 = tpu.matmul %944, %1078, %cst_459 {dimension_numbers = #tpu.dot_dimension_numbers<[1], [0], [0], [1], [0, 0, 1, 1], [], []>} : vector<2x32xf32>, vector<32x32xf32>, vector<2x32xf32> -> vector<2x32xf32>
    %1080 = arith.addf %1077, %1079 : vector<2x32xf32>
    %c3672 = arith.constant 3672 : index
    %c0_460 = arith.constant 0 : index
    %1081 = vector.load %arg14[%c3672, %c0_460] : memref<3840x128xf32, #tpu.memory_space<vmem>>, vector<32x32xf32>
    %cst_461 = arith.constant dense<0.000000e+00> : vector<2x32xf32>
    %1082 = tpu.matmul %1045, %1081, %cst_461 {dimension_numbers = #tpu.dot_dimension_numbers<[1], [0], [0], [1], [0, 0, 1, 1], [], []>} : vector<2x32xf32>, vector<32x32xf32>, vector<2x32xf32> -> vector<2x32xf32>
    %1083 = arith.addf %1080, %1082 : vector<2x32xf32>
    %c3704 = arith.constant 3704 : index
    %c0_462 = arith.constant 0 : index
    %1084 = vector.load %arg14[%c3704, %c0_462] : memref<3840x128xf32, #tpu.memory_space<vmem>>, vector<32x32xf32>
    %cst_463 = arith.constant dense<0.000000e+00> : vector<2x32xf32>
    %1085 = tpu.matmul %1072, %1084, %cst_463 {dimension_numbers = #tpu.dot_dimension_numbers<[1], [0], [0], [1], [0, 0, 1, 1], [], []>} : vector<2x32xf32>, vector<32x32xf32>, vector<2x32xf32> -> vector<2x32xf32>
    %1086 = arith.addf %1083, %1085 : vector<2x32xf32>
    %c3736 = arith.constant 3736 : index
    %c0_464 = arith.constant 0 : index
    %1087 = vector.load %arg14[%c3736, %c0_464] : memref<3840x128xf32, #tpu.memory_space<vmem>>, vector<32x32xf32>
    %cst_465 = arith.constant dense<0.000000e+00> : vector<2x32xf32>
    %1088 = tpu.matmul %816, %1087, %cst_465 {dimension_numbers = #tpu.dot_dimension_numbers<[1], [0], [0], [1], [0, 0, 1, 1], [], []>} : vector<2x32xf32>, vector<32x32xf32>, vector<2x32xf32> -> vector<2x32xf32>
    %1089 = arith.addf %1086, %1088 : vector<2x32xf32>
    %cst_466 = arith.constant 0.000000e+00 : f32
    %1090 = vector.broadcast %cst_466 : f32 to vector<2x32xf32>
    %1091 = arith.maximumf %1089, %1090 : vector<2x32xf32>
    %1092 = math.absf %1089 : vector<2x32xf32>
    %cst_467 = arith.constant 0.000000e+00 : f32
    %1093 = vector.broadcast %cst_467 : f32 to vector<2x32xf32>
    %1094 = arith.subf %1093, %1092 : vector<2x32xf32>
    %1095 = math.exp %1094 : vector<2x32xf32>
    %1096 = math.log1p %1095 : vector<2x32xf32>
    %1097 = arith.addf %1091, %1096 : vector<2x32xf32>
    %cst_468 = arith.constant 0.693147182 : f32
    %1098 = vector.broadcast %cst_468 : f32 to vector<2x32xf32>
    %1099 = arith.subf %1097, %1098 : vector<2x32xf32>
    %c3808 = arith.constant 3808 : index
    %c0_469 = arith.constant 0 : index
    %1100 = vector.load %arg14[%c3808, %c0_469] : memref<3840x128xf32, #tpu.memory_space<vmem>>, vector<1x16xf32>
    %c3776 = arith.constant 3776 : index
    %c0_470 = arith.constant 0 : index
    %1101 = vector.load %arg14[%c3776, %c0_470] : memref<3840x128xf32, #tpu.memory_space<vmem>>, vector<32x16xf32>
    %cst_471 = arith.constant dense<0.000000e+00> : vector<2x16xf32>
    %1102 = tpu.matmul %1099, %1101, %cst_471 {dimension_numbers = #tpu.dot_dimension_numbers<[1], [0], [0], [1], [0, 0, 1, 1], [], []>} : vector<2x32xf32>, vector<32x16xf32>, vector<2x16xf32> -> vector<2x16xf32>
    %1103 = vector.broadcast %1100 : vector<1x16xf32> to vector<2x16xf32>
    %1104 = arith.addf %1103, %1102 : vector<2x16xf32>
    %cst_472 = arith.constant 0.000000e+00 : f32
    %1105 = vector.broadcast %cst_472 : f32 to vector<2x16xf32>
    %1106 = arith.maximumf %1104, %1105 : vector<2x16xf32>
    %1107 = math.absf %1104 : vector<2x16xf32>
    %cst_473 = arith.constant 0.000000e+00 : f32
    %1108 = vector.broadcast %cst_473 : f32 to vector<2x16xf32>
    %1109 = arith.subf %1108, %1107 : vector<2x16xf32>
    %1110 = math.exp %1109 : vector<2x16xf32>
    %1111 = math.log1p %1110 : vector<2x16xf32>
    %1112 = arith.addf %1106, %1111 : vector<2x16xf32>
    %cst_474 = arith.constant 0.693147182 : f32
    %1113 = vector.broadcast %cst_474 : f32 to vector<2x16xf32>
    %1114 = arith.subf %1112, %1113 : vector<2x16xf32>
    %c3832 = arith.constant 3832 : index
    %c0_475 = arith.constant 0 : index
    %1115 = vector.load %arg14[%c3832, %c0_475] : memref<3840x128xf32, #tpu.memory_space<vmem>>, vector<1x128xf32>
    %c3816 = arith.constant 3816 : index
    %c0_476 = arith.constant 0 : index
    %1116 = vector.load %arg14[%c3816, %c0_476] : memref<3840x128xf32, #tpu.memory_space<vmem>>, vector<16x128xf32>
    %cst_477 = arith.constant dense<0.000000e+00> : vector<2x128xf32>
    %1117 = tpu.matmul %1114, %1116, %cst_477 {dimension_numbers = #tpu.dot_dimension_numbers<[1], [0], [0], [1], [0, 0, 1, 1], [], []>} : vector<2x16xf32>, vector<16x128xf32>, vector<2x128xf32> -> vector<2x128xf32>
    %1118 = vector.broadcast %1115 : vector<1x128xf32> to vector<2x128xf32>
    %1119 = arith.addf %1118, %1117 : vector<2x128xf32>
    %c0_478 = arith.constant 0 : index
    %c0_479 = arith.constant 0 : index
    %1120 = vector.load %arg15[%c0_478, %c0_479] : memref<2x128xf32, #tpu.memory_space<vmem>>, vector<2x128xf32>
    tpu.vector_store %arg15[%c0_478, %c0_479], %1119 {strides = array<i32>} : memref<2x128xf32, #tpu.memory_space<vmem>>, vector<2x128xf32>,
    return
  }
}

</mosaic_0001>

<llo_original>
// kernel: megnet_rl_forward.1
$region0: #{megnet_rl_forward.1}
  #allocation0 [shape = 'u32[]', space=smem, size = 0x4, offset = 0x4, fixed_abs, tag = 'smem constant byte address 0x4 - core index']
  #allocation1 [shape = 'u32[72,128]{1,0:T(1,128)}', space=vmem, size = 0x9000, scoped, tag = 'internal scratch']
  %s0 = inlined_call_operand.vmem [shape: bf16[16,8], index: 0, kind: input, shape index: {}]
  %s1 = inlined_call_operand.vmem [shape: bf16[16,8], index: 1, kind: input, shape index: {}]
  %s2 = inlined_call_operand.hbm [shape: bf16[8,16], index: 2, kind: input, shape index: {}]
  %s3 = inlined_call_operand.vmem [shape: f32[8,1], index: 3, kind: input, shape index: {}]
  %s4 = inlined_call_operand.vmem [shape: f32[8,2], index: 4, kind: input, shape index: {}]
  %s5 = inlined_call_operand.vmem [shape: f32[16,2], index: 5, kind: input, shape index: {}]
  %s6 = inlined_call_operand.hbm [shape: f32[2,8], index: 6, kind: input, shape index: {}]
  %s7 = inlined_call_operand.hbm [shape: f32[2,16], index: 7, kind: input, shape index: {}]
  %s8 = inlined_call_operand.vmem [shape: f32[2,1], index: 8, kind: input, shape index: {}]
  %s9 = inlined_call_operand.vmem [shape: f32[2,1], index: 9, kind: input, shape index: {}]
  %s10 = inlined_call_operand.vmem [shape: f32[16,1], index: 10, kind: input, shape index: {}]
  %s11 = inlined_call_operand.hbm [shape: f32[8,89], index: 11, kind: input, shape index: {}]
  %s12 = inlined_call_operand.hbm [shape: f32[2,8], index: 12, kind: input, shape index: {}]
  %s13 = inlined_call_operand.hbm [shape: f32[2,21], index: 13, kind: input, shape index: {}]
  %s14 = inlined_call_operand.hbm [shape: f32[3840,128], index: 14, kind: input, shape index: {}]
  %s15 = inlined_call_operand.hbm [shape: f32[2,128], index: 15, kind: output, shape index: {}]
  %s16 = sld [smem:[#allocation0]]
  $region98: #{megnet_rl_forward.1} parent=0
    _
  %s18 = ssub.s32 1, %s16
  %s19 = scalar_select 0, %s18, %s16
  $region1: #{megnet_rl_forward.1} parent=0
    #allocation2 [shape = 'u8[2048]{0}', space=vmem, size = 0x800, scoped, tag = 'input window, operand 2, single buffered']
    #allocation3 [shape = 's32[1]{0}', space=sflag, size = 0x4, scoped, tag = 'scoped memory for megnet_rl_forward.1']
    #allocation4 [shape = 's32[1]{0}', space=sflag, size = 0x4, scoped, tag = 'scoped memory for megnet_rl_forward.1']
    #allocation5 [shape = 'u8[1024]{0}', space=vmem, size = 0x400, scoped, tag = 'input window, operand 6, single buffered']
    #allocation6 [shape = 's32[1]{0}', space=sflag, size = 0x4, scoped, tag = 'scoped memory for megnet_rl_forward.1']
    #allocation7 [shape = 'u8[1024]{0}', space=vmem, size = 0x400, scoped, tag = 'input window, operand 7, single buffered']
    #allocation8 [shape = 'u8[4096]{0}', space=vmem, size = 0x1000, scoped, tag = 'input window, operand 11, single buffered']
    #allocation9 [shape = 's32[1]{0}', space=sflag, size = 0x4, scoped, tag = 'scoped memory for megnet_rl_forward.1']
    #allocation10 [shape = 'u8[1024]{0}', space=vmem, size = 0x400, scoped, tag = 'input window, operand 12, single buffered']
    #allocation11 [shape = 'u8[1024]{0}', space=vmem, size = 0x400, scoped, tag = 'input window, operand 13, single buffered']
    #allocation12 [shape = 's32[1]{0}', space=sflag, size = 0x4, scoped, tag = 'scoped memory for megnet_rl_forward.1']
    #allocation13 [shape = 'u8[1966080]{0}', space=vmem, size = 0x1e0000, scoped, tag = 'input window, operand 14, single buffered']
    #allocation14 [shape = 'u8[1024]{0}', space=vmem, size = 0x400, scoped, tag = 'output window, operand 0, single buffered']
    %20 = vsyncpa [#allocation3], 0
    %21 = vsyncpa [#allocation6], 0
    %22 = vsyncpa [#allocation9], 0
    %23 = vsyncpa [#allocation12], 0
    %24 = vsyncpa [#allocation4], 0
    // Predicated region
    $region2: #{megnet_rl_forward.1} parent=1 // pred_check
      _
    $region3: #{megnet_rl_forward.1} parent=1 // pred_check_branch
      %26 = sbr.rel (0) target = $region5
    $region4: #{megnet_rl_forward.1} parent=1 // pred_region
      _
    $region5: #{megnet_rl_forward.1} parent=1 // pred_fallthru
      _
    // Predicated region
    $region6: #{megnet_rl_forward.1} parent=1 // pred_check
      _
    $region7: #{megnet_rl_forward.1} parent=1 // pred_check_branch
      %28 = sbr.rel (0) target = $region9
    $region8: #{megnet_rl_forward.1} parent=1 // pred_region
      _
    $region9: #{megnet_rl_forward.1} parent=1 // pred_fallthru
      _
    // Predicated region
    $region10: #{megnet_rl_forward.1} parent=1 // pred_check
      _
    $region11: #{megnet_rl_forward.1} parent=1 // pred_check_branch
      %30 = sbr.rel (0) target = $region13
    $region12: #{megnet_rl_forward.1} parent=1 // pred_region
      %32 = vsyncadd [#allocation3], 0
      %s34 = sshll.u32 %s2, 4
      %s35 = int_to_ptr.hbm [resolvable:$true] %s34
      %s36 = sshll.u32 [#allocation2], 4
      %s37 = int_to_ptr.vmem [resolvable:$true] %s36
      %39 = dma.hbm_to_vmem [thread:$0]  %s35, 64, %s37, [#allocation3]
    $region13: #{megnet_rl_forward.1} parent=1 // pred_fallthru
      _
    // Predicated region
    $region14: #{megnet_rl_forward.1} parent=1 // pred_check
      _
    $region15: #{megnet_rl_forward.1} parent=1 // pred_check_branch
      %41 = sbr.rel (0) target = $region17
    $region16: #{megnet_rl_forward.1} parent=1 // pred_region
      _
    $region17: #{megnet_rl_forward.1} parent=1 // pred_fallthru
      _
    // Predicated region
    $region18: #{megnet_rl_forward.1} parent=1 // pred_check
      _
    $region19: #{megnet_rl_forward.1} parent=1 // pred_check_branch
      %43 = sbr.rel (0) target = $region21
    $region20: #{megnet_rl_forward.1} parent=1 // pred_region
      _
    $region21: #{megnet_rl_forward.1} parent=1 // pred_fallthru
      _
    // Predicated region
    $region22: #{megnet_rl_forward.1} parent=1 // pred_check
      _
    $region23: #{megnet_rl_forward.1} parent=1 // pred_check_branch
      %45 = sbr.rel (0) target = $region25
    $region24: #{megnet_rl_forward.1} parent=1 // pred_region
      _
    $region25: #{megnet_rl_forward.1} parent=1 // pred_fallthru
      _
    // Predicated region
    $region26: #{megnet_rl_forward.1} parent=1 // pred_check
      _
    $region27: #{megnet_rl_forward.1} parent=1 // pred_check_branch
      %47 = sbr.rel (0) target = $region29
    $region28: #{megnet_rl_forward.1} parent=1 // pred_region
      %49 = vsyncadd [#allocation6], 0
      %s51 = sshll.u32 %s6, 4
      %s52 = int_to_ptr.hbm [resolvable:$true] %s51
      %s53 = sshll.u32 [#allocation5], 4
      %s54 = int_to_ptr.vmem [resolvable:$true] %s53
      %56 = dma.hbm_to_vmem [thread:$0]  %s52, 32, %s54, [#allocation6]
    $region29: #{megnet_rl_forward.1} parent=1 // pred_fallthru
      _
    // Predicated region
    $region30: #{megnet_rl_forward.1} parent=1 // pred_check
      _
    $region31: #{megnet_rl_forward.1} parent=1 // pred_check_branch
      %58 = sbr.rel (0) target = $region33
    $region32: #{megnet_rl_forward.1} parent=1 // pred_region
      %60 = vsyncadd [#allocation6], 0
      %s62 = sshll.u32 %s7, 4
      %s63 = int_to_ptr.hbm [resolvable:$true] %s62
      %s64 = sshll.u32 [#allocation7], 4
      %s65 = int_to_ptr.vmem [resolvable:$true] %s64
      %67 = dma.hbm_to_vmem [thread:$0]  %s63, 32, %s65, [#allocation6]
    $region33: #{megnet_rl_forward.1} parent=1 // pred_fallthru
      _
    // Predicated region
    $region34: #{megnet_rl_forward.1} parent=1 // pred_check
      _
    $region35: #{megnet_rl_forward.1} parent=1 // pred_check_branch
      %69 = sbr.rel (0) target = $region37
    $region36: #{megnet_rl_forward.1} parent=1 // pred_region
      _
    $region37: #{megnet_rl_forward.1} parent=1 // pred_fallthru
      _
    // Predicated region
    $region38: #{megnet_rl_forward.1} parent=1 // pred_check
      _
    $region39: #{megnet_rl_forward.1} parent=1 // pred_check_branch
      %71 = sbr.rel (0) target = $region41
    $region40: #{megnet_rl_forward.1} parent=1 // pred_region
      _
    $region41: #{megnet_rl_forward.1} parent=1 // pred_fallthru
      _
    // Predicated region
    $region42: #{megnet_rl_forward.1} parent=1 // pred_check
      _
    $region43: #{megnet_rl_forward.1} parent=1 // pred_check_branch
      %73 = sbr.rel (0) target = $region45
    $region44: #{megnet_rl_forward.1} parent=1 // pred_region
      _
    $region45: #{megnet_rl_forward.1} parent=1 // pred_fallthru
      _
    // Predicated region
    $region46: #{megnet_rl_forward.1} parent=1 // pred_check
      _
    $region47: #{megnet_rl_forward.1} parent=1 // pred_check_branch
      %75 = sbr.rel (0) target = $region49
    $region48: #{megnet_rl_forward.1} parent=1 // pred_region
      %77 = vsyncadd [#allocation9], 0
      %s79 = sshll.u32 %s11, 4
      %s80 = int_to_ptr.hbm [resolvable:$true] %s79
      %s81 = sshll.u32 [#allocation8], 4
      %s82 = int_to_ptr.vmem [resolvable:$true] %s81
      %84 = dma.hbm_to_vmem [thread:$0]  %s80, 128, %s82, [#allocation9]
    $region49: #{megnet_rl_forward.1} parent=1 // pred_fallthru
      _
    // Predicated region
    $region50: #{megnet_rl_forward.1} parent=1 // pred_check
      _
    $region51: #{megnet_rl_forward.1} parent=1 // pred_check_branch
      %86 = sbr.rel (0) target = $region53
    $region52: #{megnet_rl_forward.1} parent=1 // pred_region
      %88 = vsyncadd [#allocation9], 0
      %s90 = sshll.u32 %s12, 4
      %s91 = int_to_ptr.hbm [resolvable:$true] %s90
      %s92 = sshll.u32 [#allocation10], 4
      %s93 = int_to_ptr.vmem [resolvable:$true] %s92
      %95 = dma.hbm_to_vmem [thread:$0]  %s91, 32, %s93, [#allocation9]
    $region53: #{megnet_rl_forward.1} parent=1 // pred_fallthru
      _
    // Predicated region
    $region54: #{megnet_rl_forward.1} parent=1 // pred_check
      _
    $region55: #{megnet_rl_forward.1} parent=1 // pred_check_branch
      %97 = sbr.rel (0) target = $region57
    $region56: #{megnet_rl_forward.1} parent=1 // pred_region
      %99 = vsyncadd [#allocation12], 0
      %s101 = sshll.u32 %s13, 4
      %s102 = int_to_ptr.hbm [resolvable:$true] %s101
      %s103 = sshll.u32 [#allocation11], 4
      %s104 = int_to_ptr.vmem [resolvable:$true] %s103
      %106 = dma.hbm_to_vmem [thread:$0]  %s102, 32, %s104, [#allocation12]
    $region57: #{megnet_rl_forward.1} parent=1 // pred_fallthru
      _
    // Predicated region
    $region58: #{megnet_rl_forward.1} parent=1 // pred_check
      _
    $region59: #{megnet_rl_forward.1} parent=1 // pred_check_branch
      %108 = sbr.rel (0) target = $region61
    $region60: #{megnet_rl_forward.1} parent=1 // pred_region
      %110 = vsyncadd [#allocation12], 0
      %s111 = sshll.u32 %s14, 4
      %s112 = int_to_ptr.hbm [resolvable:$true] %s111
      %s113 = sshll.u32 [#allocation13], 4
      %s114 = int_to_ptr.vmem [resolvable:$true] %s113
      %119 = dma.hbm_to_vmem [thread:$0]  %s112, 61440, %s114, [#allocation12], 128, 128, 8
    $region61: #{megnet_rl_forward.1} parent=1 // pred_fallthru
      _
    // Predicated region
    $region62: #{megnet_rl_forward.1} parent=1 // pred_check
      _
    $region63: #{megnet_rl_forward.1} parent=1 // pred_check_branch
      %121 = sbr.rel (0) target = $region65
    $region64: #{megnet_rl_forward.1} parent=1 // pred_region
      %123 = dma.done [#allocation3], 64
    $region65: #{megnet_rl_forward.1} parent=1 // pred_fallthru
      _
    // Predicated region
    $region66: #{megnet_rl_forward.1} parent=1 // pred_check
      _
    $region67: #{megnet_rl_forward.1} parent=1 // pred_check_branch
      %125 = sbr.rel (0) target = $region69
    $region68: #{megnet_rl_forward.1} parent=1 // pred_region
      %127 = dma.done [#allocation6], 32
    $region69: #{megnet_rl_forward.1} parent=1 // pred_fallthru
      _
    // Predicated region
    $region70: #{megnet_rl_forward.1} parent=1 // pred_check
      _
    $region71: #{megnet_rl_forward.1} parent=1 // pred_check_branch
      %129 = sbr.rel (0) target = $region73
    $region72: #{megnet_rl_forward.1} parent=1 // pred_region
      %131 = dma.done [#allocation6], 32
    $region73: #{megnet_rl_forward.1} parent=1 // pred_fallthru
      _
    // Predicated region
    $region74: #{megnet_rl_forward.1} parent=1 // pred_check
      _
    $region75: #{megnet_rl_forward.1} parent=1 // pred_check_branch
      %133 = sbr.rel (0) target = $region77
    $region76: #{megnet_rl_forward.1} parent=1 // pred_region
      %135 = dma.done [#allocation9], 128
    $region77: #{megnet_rl_forward.1} parent=1 // pred_fallthru
      _
    // Predicated region
    $region78: #{megnet_rl_forward.1} parent=1 // pred_check
      _
    $region79: #{megnet_rl_forward.1} parent=1 // pred_check_branch
      %137 = sbr.rel (0) target = $region81
    $region80: #{megnet_rl_forward.1} parent=1 // pred_region
      %139 = dma.done [#allocation9], 32
    $region81: #{megnet_rl_forward.1} parent=1 // pred_fallthru
      _
    // Predicated region
    $region82: #{megnet_rl_forward.1} parent=1 // pred_check
      _
    $region83: #{megnet_rl_forward.1} parent=1 // pred_check_branch
      %141 = sbr.rel (0) target = $region85
    $region84: #{megnet_rl_forward.1} parent=1 // pred_region
      %143 = dma.done [#allocation12], 32
    $region85: #{megnet_rl_forward.1} parent=1 // pred_fallthru
      _
    // Predicated region
    $region86: #{megnet_rl_forward.1} parent=1 // pred_check
      _
    $region87: #{megnet_rl_forward.1} parent=1 // pred_check_branch
      %145 = sbr.rel (0) target = $region89
    $region88: #{megnet_rl_forward.1} parent=1 // pred_region
      %147 = dma.done [#allocation12], 61440
    $region89: #{megnet_rl_forward.1} parent=1 // pred_fallthru
      _
    %v149 = vld [vmem:[%s0] sm:$0xf]
    %v150 = vld [vmem:[%s0 + $0x4] sm:$0xf]
    %v151 = vld [vmem:[%s1] sm:$0xf]
    %v152 = vld [vmem:[%s1 + $0x4] sm:$0xf]
    %v153 = vld [vmem:[#allocation2] sm:$0xf]
    %v154 = vld [vmem:[%s3] sm:$0xff]
    %v155 = vld [vmem:[%s4] sm:$0xff]
    %v156 = vld [vmem:[%s5] sm:$0xff]
    %v157 = vld [vmem:[%s5 + $0x8] sm:$0xff]
    %v158 = vld [vmem:[#allocation5] sm:$0x3]
    %v159 = vld [vmem:[#allocation7] sm:$0x3]
    %v160 = vld [vmem:[%s8] sm:$0x3]
    %v161 = vld [vmem:[%s9] sm:$0x3]
    %v162 = vld [vmem:[%s10] sm:$0xff]
    %v163 = vld [vmem:[%s10 + $0x8] sm:$0xff]
    %v164 = vmul.f32 %v162, -0.5
    %v165 = vmul.f32 %v163, -0.5
    %v166 = vmul.f32 %v164, %v162
    %v167 = vmul.f32 %v165, %v163
    %v168 = vmul.f32 %v166, 1.442695
    %v169 = vpow.pop %v168
    %v170 = vmul.f32 %v167, 1.442695
    %v171 = vpow.pop %v170
    %v172 = vld [vmem:[#allocation13 + $0x80] sm:$0x1]
    %v173 = vld [vmem:[#allocation13 + $0x78] sm:$0x1]
    %vm174 = vcmask 7168
    %v176 = vsel %vm174, %v169, 0
    %v179 = vsel %vm174, %v171, 0
    %vm181 = vcmask 1040384
    %v183 = vsel %vm181, %v173, 0
    %185 = vmatpush.msra.mxu0 0.0
    %186 = vmatpush.msra.mxu0 0.0
    %187 = vmatpush.msra.mxu0 0.0
    %188 = vmatpush.msra.mxu0 0.0
    %189 = vmatpush.msra.mxu0 0.0
    %190 = vmatpush.msra.mxu0 0.0
    %191 = vmatpush.msra.mxu0 0.0
    %192 = vmatpush.msra.mxu0 0.0
    %193 = vmatpush.msra.mxu0 0.0
    %194 = vmatpush.msra.mxu0 0.0
    %195 = vmatpush.msra.mxu0 0.0
    %196 = vmatpush.msra.mxu0 0.0
    %197 = vmatpush.msra.mxu0 0.0
    %198 = vmatpush.msra.mxu0 0.0
    %199 = vmatpush.msra.mxu0 0.0
    %200 = vmatpush.msra.mxu0 %v183
    %201 = vmatmul.f32.gmra.mxu0 %v176
    %v202 = vpop.f32.mrf.mxu0
    %v203 = vadd.f32 0.0, %v202
    %204 = vmatmul.f32.gmra.mxu0 %v179
    %v205 = vpop.f32.mrf.mxu0
    %v206 = vadd.f32 0.0, %v205
    %207 = vdwg.mxu0
    %v208 = vperm.slane %v172, 0
    %v209 = vadd.f32 %v208, %v203
    %v210 = vadd.f32 %v208, %v206
    %v211 = vmax.f32 %v209, 0.0
    %v212 = vmax.f32 %v210, 0.0
    %v213 = vand.u32 2147483647, %v209
    %v214 = vand.u32 2147483647, %v210
    %v215 = vsub.f32 0.0, %v213
    %v216 = vsub.f32 0.0, %v214
    %v217 = vmul.f32 %v215, 1.442695
    %v218 = vpow.pop %v217
    %v219 = vmul.f32 %v216, 1.442695
    %v220 = vpow.pop %v219
    %v221 = vadd.f32 %v218, 1.0
    %v222 = vlog2.pop %v221
    %v223 = vmul.f32 %v222, 0.6931472
    %v224 = vmul.f32 -0.5, %v218
    %v225 = vadd.f32 %v224, 1.0
    %v226 = vmul.f32 %v225, %v218
    %v227 = vand.u32 2147483647, %v218
    %vm228 = vcmp.lt.f32.partialorder %v227, 0.0004427343
    %v229 = vsel %vm228, %v226, %v223
    %v230 = vadd.f32 %v220, 1.0
    %v231 = vlog2.pop %v230
    %v232 = vmul.f32 %v231, 0.6931472
    %v233 = vmul.f32 -0.5, %v220
    %v234 = vadd.f32 %v233, 1.0
    %v235 = vmul.f32 %v234, %v220
    %v236 = vand.u32 2147483647, %v220
    %vm237 = vcmp.lt.f32.partialorder %v236, 0.0004427343
    %v238 = vsel %vm237, %v235, %v232
    %v239 = vadd.f32 %v211, %v229
    %v240 = vadd.f32 %v212, %v238
    %v241 = vsub.f32 %v239, 0.6931472
    %v242 = vsub.f32 %v240, 0.6931472
    %v243 = vld [vmem:[#allocation13 + $0xc8] sm:$0x1]
    %v244 = vld [vmem:[#allocation13 + $0x88] sm:$0xff]
    %v245 = vld [vmem:[#allocation13 + $0x90] sm:$0xff]
    %v246 = vld [vmem:[#allocation13 + $0x98] sm:$0xff]
    %v247 = vld [vmem:[#allocation13 + $0xa0] sm:$0xff]
    %v248 = vld [vmem:[#allocation13 + $0xa8] sm:$0xff]
    %v249 = vld [vmem:[#allocation13 + $0xb0] sm:$0xff]
    %v250 = vld [vmem:[#allocation13 + $0xb8] sm:$0xff]
    %v251 = vld [vmem:[#allocation13 + $0xc0] sm:$0xff]
    %vm252 = vcmask 523264
    %v254 = vsel %vm252, %v241, 0
    %v257 = vsel %vm252, %v242, 0
    %259 = vmatpush.msra.mxu0 0.0
    %260 = vmatpush.msra.mxu0 0.0
    %261 = vmatpush.msra.mxu0 0.0
    %262 = vmatpush.msra.mxu0 0.0
    %263 = vmatpush.msra.mxu0 0.0
    %264 = vmatpush.msra.mxu0 0.0
    %265 = vmatpush.msra.mxu0 0.0
    %266 = vmatpush.msra.mxu0 0.0
    %267 = vmatpush.msra.mxu0 %v251
    %268 = vmatpush.msra.mxu0 %v250
    %269 = vmatpush.msra.mxu0 %v249
    %270 = vmatpush.msra.mxu0 %v248
    %271 = vmatpush.msra.mxu0 %v247
    %272 = vmatpush.msra.mxu0 %v246
    %273 = vmatpush.msra.mxu0 %v245
    %274 = vmatpush.msra.mxu0 %v244
    %275 = vmatmul.f32.gmra.mxu0 %v254
    %v276 = vpop.f32.mrf.mxu0
    %v277 = vadd.f32 0.0, %v276
    %278 = vmatmul.f32.gmra.mxu0 %v257
    %v279 = vpop.f32.mrf.mxu0
    %v280 = vadd.f32 0.0, %v279
    %281 = vdwg.mxu0
    %v282 = vperm.slane %v243, 0
    %v283 = vadd.f32 %v282, %v277
    %v284 = vadd.f32 %v282, %v280
    %v285 = vmax.f32 %v283, 0.0
    %v286 = vmax.f32 %v284, 0.0
    %v287 = vand.u32 2147483647, %v283
    %v288 = vand.u32 2147483647, %v284
    %v289 = vsub.f32 0.0, %v287
    %v290 = vsub.f32 0.0, %v288
    %v291 = vmul.f32 %v289, 1.442695
    %v292 = vpow.pop %v291
    %v293 = vmul.f32 %v290, 1.442695
    %v294 = vpow.pop %v293
    %v295 = vadd.f32 %v292, 1.0
    %v296 = vlog2.pop %v295
    %v297 = vmul.f32 %v296, 0.6931472
    %v298 = vmul.f32 -0.5, %v292
    %v299 = vadd.f32 %v298, 1.0
    %v300 = vmul.f32 %v299, %v292
    %v301 = vand.u32 2147483647, %v292
    %vm302 = vcmp.lt.f32.partialorder %v301, 0.0004427343
    %v303 = vsel %vm302, %v300, %v297
    %v304 = vadd.f32 %v294, 1.0
    %v305 = vlog2.pop %v304
    %v306 = vmul.f32 %v305, 0.6931472
    %v307 = vmul.f32 -0.5, %v294
    %v308 = vadd.f32 %v307, 1.0
    %v309 = vmul.f32 %v308, %v294
    %v310 = vand.u32 2147483647, %v294
    %vm311 = vcmp.lt.f32.partialorder %v310, 0.0004427343
    %v312 = vsel %vm311, %v309, %v306
    %v313 = vadd.f32 %v285, %v303
    %v314 = vadd.f32 %v286, %v312
    %v315 = vsub.f32 %v313, 0.6931472
    %v316 = vsub.f32 %v314, 0.6931472
    %v317 = vld [vmem:[#allocation8] sm:$0xff]
    %v318 = vld [vmem:[#allocation13] sm:$0xff]
    %v319 = vld [vmem:[#allocation13 + $0x8] sm:$0xff]
    %v320 = vld [vmem:[#allocation13 + $0x10] sm:$0xff]
    %v321 = vld [vmem:[#allocation13 + $0x18] sm:$0xff]
    %v322 = vld [vmem:[#allocation13 + $0x20] sm:$0xff]
    %v323 = vld [vmem:[#allocation13 + $0x28] sm:$0xff]
    %v324 = vld [vmem:[#allocation13 + $0x30] sm:$0xff]
    %v325 = vld [vmem:[#allocation13 + $0x38] sm:$0xff]
    %v326 = vld [vmem:[#allocation13 + $0x40] sm:$0xff]
    %v327 = vld [vmem:[#allocation13 + $0x48] sm:$0xff]
    %v328 = vld [vmem:[#allocation13 + $0x50] sm:$0xff]
    %v329 = vld [vmem:[#allocation13 + $0x58] sm:$0x1]
    %vm330 = vcmask 728064
    %v332 = vsel %vm330, %v317, 0
    %v335 = vsel %vm181, %v329, 0
    %337 = vmatpush.msra.mxu0 0.0
    %338 = vmatpush.msra.mxu0 0.0
    %339 = vmatpush.msra.mxu0 0.0
    %340 = vmatpush.msra.mxu0 0.0
    %341 = vmatpush.msra.mxu0 %v335
    %342 = vmatpush.msra.mxu0 %v328
    %343 = vmatpush.msra.mxu0 %v327
    %344 = vmatpush.msra.mxu0 %v326
    %345 = vmatpush.msra.mxu0 %v325
    %346 = vmatpush.msra.mxu0 %v324
    %347 = vmatpush.msra.mxu0 %v323
    %348 = vmatpush.msra.mxu0 %v322
    %349 = vmatpush.msra.mxu0 %v321
    %350 = vmatpush.msra.mxu0 %v320
    %351 = vmatpush.msra.mxu0 %v319
    %352 = vmatpush.msra.mxu0 %v318
    %353 = vmatmul.f32.gmra.mxu0 %v332
    %v354 = vpop.f32.mrf.mxu0
    %v355 = vadd.f32 0.0, %v354
    %356 = vdwg.mxu0
    %v357 = vld [vmem:[#allocation13 + $0xe0] sm:$0x1]
    %v358 = vld [vmem:[#allocation13 + $0xd0] sm:$0xff]
    %v359 = vld [vmem:[#allocation13 + $0xd8] sm:$0xff]
    %vm360 = vcmask 130048
    %v362 = vsel %vm360, %v355, 0
    %364 = vmatpush.msra.mxu0 0.0
    %365 = vmatpush.msra.mxu0 0.0
    %366 = vmatpush.msra.mxu0 0.0
    %367 = vmatpush.msra.mxu0 0.0
    %368 = vmatpush.msra.mxu0 0.0
    %369 = vmatpush.msra.mxu0 0.0
    %370 = vmatpush.msra.mxu0 0.0
    %371 = vmatpush.msra.mxu0 0.0
    %372 = vmatpush.msra.mxu0 0.0
    %373 = vmatpush.msra.mxu0 0.0
    %374 = vmatpush.msra.mxu0 0.0
    %375 = vmatpush.msra.mxu0 0.0
    %376 = vmatpush.msra.mxu0 0.0
    %377 = vmatpush.msra.mxu0 0.0
    %378 = vmatpush.msra.mxu0 %v359
    %379 = vmatpush.msra.mxu0 %v358
    %380 = vmatmul.f32.gmra.mxu0 %v362
    %v381 = vpop.f32.mrf.mxu0
    %v382 = vadd.f32 0.0, %v381
    %383 = vdwg.mxu0
    %v384 = vperm.slane %v357, 0
    %v385 = vadd.f32 %v384, %v382
    %v386 = vmax.f32 %v385, 0.0
    %v387 = vand.u32 2147483647, %v385
    %v388 = vsub.f32 0.0, %v387
    %v389 = vmul.f32 %v388, 1.442695
    %v390 = vpow.pop %v389
    %v391 = vadd.f32 %v390, 1.0
    %v392 = vlog2.pop %v391
    %v393 = vmul.f32 %v392, 0.6931472
    %v394 = vmul.f32 -0.5, %v390
    %v395 = vadd.f32 %v394, 1.0
    %v396 = vmul.f32 %v395, %v390
    %v397 = vand.u32 2147483647, %v390
    %vm398 = vcmp.lt.f32.partialorder %v397, 0.0004427343
    %v399 = vsel %vm398, %v396, %v393
    %v400 = vadd.f32 %v386, %v399
    %v401 = vsub.f32 %v400, 0.6931472
    %v402 = vld [vmem:[#allocation13 + $0x128] sm:$0x1]
    %v403 = vld [vmem:[#allocation13 + $0xe8] sm:$0xff]
    %v404 = vld [vmem:[#allocation13 + $0xf0] sm:$0xff]
    %v405 = vld [vmem:[#allocation13 + $0xf8] sm:$0xff]
    %v406 = vld [vmem:[#allocation13 + $0x100] sm:$0xff]
    %v407 = vld [vmem:[#allocation13 + $0x108] sm:$0xff]
    %v408 = vld [vmem:[#allocation13 + $0x110] sm:$0xff]
    %v409 = vld [vmem:[#allocation13 + $0x118] sm:$0xff]
    %v410 = vld [vmem:[#allocation13 + $0x120] sm:$0xff]
    %v412 = vsel %vm252, %v401, 0
    %414 = vmatpush.msra.mxu0 0.0
    %415 = vmatpush.msra.mxu0 0.0
    %416 = vmatpush.msra.mxu0 0.0
    %417 = vmatpush.msra.mxu0 0.0
    %418 = vmatpush.msra.mxu0 0.0
    %419 = vmatpush.msra.mxu0 0.0
    %420 = vmatpush.msra.mxu0 0.0
    %421 = vmatpush.msra.mxu0 0.0
    %422 = vmatpush.msra.mxu0 %v410
    %423 = vmatpush.msra.mxu0 %v409
    %424 = vmatpush.msra.mxu0 %v408
    %425 = vmatpush.msra.mxu0 %v407
    %426 = vmatpush.msra.mxu0 %v406
    %427 = vmatpush.msra.mxu0 %v405
    %428 = vmatpush.msra.mxu0 %v404
    %429 = vmatpush.msra.mxu0 %v403
    %430 = vmatmul.f32.gmra.mxu0 %v412
    %v431 = vpop.f32.mrf.mxu0
    %v432 = vadd.f32 0.0, %v431
    %433 = vdwg.mxu0
    %v434 = vperm.slane %v402, 0
    %v435 = vadd.f32 %v434, %v432
    %v436 = vmax.f32 %v435, 0.0
    %v437 = vand.u32 2147483647, %v435
    %v438 = vsub.f32 0.0, %v437
    %v439 = vmul.f32 %v438, 1.442695
    %v440 = vpow.pop %v439
    %v441 = vadd.f32 %v440, 1.0
    %v442 = vlog2.pop %v441
    %v443 = vmul.f32 %v442, 0.6931472
    %v444 = vmul.f32 -0.5, %v440
    %v445 = vadd.f32 %v444, 1.0
    %v446 = vmul.f32 %v445, %v440
    %v447 = vand.u32 2147483647, %v440
    %vm448 = vcmp.lt.f32.partialorder %v447, 0.0004427343
    %v449 = vsel %vm448, %v446, %v443
    %v450 = vadd.f32 %v436, %v449
    %v451 = vsub.f32 %v450, 0.6931472
    %v452 = vld [vmem:[#allocation11] sm:$0x3]
    %v453 = vld [vmem:[#allocation13 + $0x60] sm:$0xff]
    %v454 = vld [vmem:[#allocation13 + $0x68] sm:$0xff]
    %v455 = vld [vmem:[#allocation13 + $0x70] sm:$0x1f]
    %vm456 = vcmask 171008
    %v458 = vsel %vm456, %v452, 0
    %vm460 = vcmask 1044480
    %v462 = vsel %vm460, %v455, 0
    %464 = vmatpush.msra.mxu0 0.0
    %465 = vmatpush.msra.mxu0 0.0
    %466 = vmatpush.msra.mxu0 0.0
    %467 = vmatpush.msra.mxu0 0.0
    %468 = vmatpush.msra.mxu0 0.0
    %469 = vmatpush.msra.mxu0 0.0
    %470 = vmatpush.msra.mxu0 0.0
    %471 = vmatpush.msra.mxu0 0.0
    %472 = vmatpush.msra.mxu0 0.0
    %473 = vmatpush.msra.mxu0 0.0
    %474 = vmatpush.msra.mxu0 0.0
    %475 = vmatpush.msra.mxu0 0.0
    %476 = vmatpush.msra.mxu0 0.0
    %477 = vmatpush.msra.mxu0 %v462
    %478 = vmatpush.msra.mxu0 %v454
    %479 = vmatpush.msra.mxu0 %v453
    %480 = vmatmul.f32.gmra.mxu0 %v458
    %v481 = vpop.f32.mrf.mxu0
    %v482 = vadd.f32 0.0, %v481
    %483 = vdwg.mxu0
    %v484 = vld [vmem:[#allocation10] sm:$0x3]
    %v485 = vld [vmem:[#allocation13 + $0x140] sm:$0x1]
    %v486 = vld [vmem:[#allocation13 + $0x130] sm:$0xff]
    %vm487 = vcmask 64512
    %v489 = vsel %vm487, %v484, 0
    %491 = vmatpush.msra.mxu0 0.0
    %492 = vmatpush.msra.mxu0 0.0
    %493 = vmatpush.msra.mxu0 0.0
    %494 = vmatpush.msra.mxu0 0.0
    %495 = vmatpush.msra.mxu0 0.0
    %496 = vmatpush.msra.mxu0 0.0
    %497 = vmatpush.msra.mxu0 0.0
    %498 = vmatpush.msra.mxu0 0.0
    %499 = vmatpush.msra.mxu0 0.0
    %500 = vmatpush.msra.mxu0 0.0
    %501 = vmatpush.msra.mxu0 0.0
    %502 = vmatpush.msra.mxu0 0.0
    %503 = vmatpush.msra.mxu0 0.0
    %504 = vmatpush.msra.mxu0 0.0
    %505 = vmatpush.msra.mxu0 0.0
    %506 = vmatpush.msra.mxu0 %v486
    %507 = vmatmul.f32.gmra.mxu0 %v489
    %v508 = vpop.f32.mrf.mxu0
    %v509 = vadd.f32 0.0, %v508
    %510 = vdwg.mxu0
    %v511 = vperm.slane %v485, 0
    %v512 = vadd.f32 %v511, %v509
    %v513 = vld [vmem:[#allocation13 + $0x138] sm:$0xff]
    %v515 = vsel %vm487, %v482, 0
    %517 = vmatpush.msra.mxu0 0.0
    %518 = vmatpush.msra.mxu0 0.0
    %519 = vmatpush.msra.mxu0 0.0
    %520 = vmatpush.msra.mxu0 0.0
    %521 = vmatpush.msra.mxu0 0.0
    %522 = vmatpush.msra.mxu0 0.0
    %523 = vmatpush.msra.mxu0 0.0
    %524 = vmatpush.msra.mxu0 0.0
    %525 = vmatpush.msra.mxu0 0.0
    %526 = vmatpush.msra.mxu0 0.0
    %527 = vmatpush.msra.mxu0 0.0
    %528 = vmatpush.msra.mxu0 0.0
    %529 = vmatpush.msra.mxu0 0.0
    %530 = vmatpush.msra.mxu0 0.0
    %531 = vmatpush.msra.mxu0 0.0
    %532 = vmatpush.msra.mxu0 %v513
    %533 = vmatmul.f32.gmra.mxu0 %v515
    %v534 = vpop.f32.mrf.mxu0
    %v535 = vadd.f32 0.0, %v534
    %536 = vdwg.mxu0
    %v537 = vadd.f32 %v512, %v535
    %v538 = vmax.f32 %v537, 0.0
    %v539 = vand.u32 2147483647, %v537
    %v540 = vsub.f32 0.0, %v539
    %v541 = vmul.f32 %v540, 1.442695
    %v542 = vpow.pop %v541
    %v543 = vadd.f32 %v542, 1.0
    %v544 = vlog2.pop %v543
    %v545 = vmul.f32 %v544, 0.6931472
    %v546 = vmul.f32 -0.5, %v542
    %v547 = vadd.f32 %v546, 1.0
    %v548 = vmul.f32 %v547, %v542
    %v549 = vand.u32 2147483647, %v542
    %vm550 = vcmp.lt.f32.partialorder %v549, 0.0004427343
    %v551 = vsel %vm550, %v548, %v545
    %v552 = vadd.f32 %v538, %v551
    %v553 = vsub.f32 %v552, 0.6931472
    %v554 = vld [vmem:[#allocation13 + $0x188] sm:$0x1]
    %v555 = vld [vmem:[#allocation13 + $0x148] sm:$0xff]
    %v556 = vld [vmem:[#allocation13 + $0x150] sm:$0xff]
    %v557 = vld [vmem:[#allocation13 + $0x158] sm:$0xff]
    %v558 = vld [vmem:[#allocation13 + $0x160] sm:$0xff]
    %v559 = vld [vmem:[#allocation13 + $0x168] sm:$0xff]
    %v560 = vld [vmem:[#allocation13 + $0x170] sm:$0xff]
    %v561 = vld [vmem:[#allocation13 + $0x178] sm:$0xff]
    %v562 = vld [vmem:[#allocation13 + $0x180] sm:$0xff]
    %v564 = vsel %vm252, %v553, 0
    %566 = vmatpush.msra.mxu0 0.0
    %567 = vmatpush.msra.mxu0 0.0
    %568 = vmatpush.msra.mxu0 0.0
    %569 = vmatpush.msra.mxu0 0.0
    %570 = vmatpush.msra.mxu0 0.0
    %571 = vmatpush.msra.mxu0 0.0
    %572 = vmatpush.msra.mxu0 0.0
    %573 = vmatpush.msra.mxu0 0.0
    %574 = vmatpush.msra.mxu0 %v562
    %575 = vmatpush.msra.mxu0 %v561
    %576 = vmatpush.msra.mxu0 %v560
    %577 = vmatpush.msra.mxu0 %v559
    %578 = vmatpush.msra.mxu0 %v558
    %579 = vmatpush.msra.mxu0 %v557
    %580 = vmatpush.msra.mxu0 %v556
    %581 = vmatpush.msra.mxu0 %v555
    %582 = vmatmul.f32.gmra.mxu0 %v564
    %v583 = vpop.f32.mrf.mxu0
    %v584 = vadd.f32 0.0, %v583
    %585 = vdwg.mxu0
    %v586 = vperm.slane %v554, 0
    %v587 = vadd.f32 %v586, %v584
    %v588 = vmax.f32 %v587, 0.0
    %v589 = vand.u32 2147483647, %v587
    %v590 = vsub.f32 0.0, %v589
    %v591 = vmul.f32 %v590, 1.442695
    %v592 = vpow.pop %v591
    %v593 = vadd.f32 %v592, 1.0
    %v594 = vlog2.pop %v593
    %v595 = vmul.f32 %v594, 0.6931472
    %v596 = vmul.f32 -0.5, %v592
    %v597 = vadd.f32 %v596, 1.0
    %v598 = vmul.f32 %v597, %v592
    %v599 = vand.u32 2147483647, %v592
    %vm600 = vcmp.lt.f32.partialorder %v599, 0.0004427343
    %v601 = vsel %vm600, %v598, %v595
    %v602 = vadd.f32 %v588, %v601
    %v603 = vsub.f32 %v602, 0.6931472
    %vm604 = vcmask 15360
    %v606 = vsel %vm604, %v155, 0
    %vm608 = vcmask 1041408
    %v610 = vsel %vm608, %v603, 0
    %612 = vmatpush.msra.mxu0 0.0
    %613 = vmatpush.msra.mxu0 0.0
    %614 = vmatpush.msra.mxu0 0.0
    %615 = vmatpush.msra.mxu0 0.0
    %616 = vmatpush.msra.mxu0 0.0
    %617 = vmatpush.msra.mxu0 0.0
    %618 = vmatpush.msra.mxu0 0.0
    %619 = vmatpush.msra.mxu0 0.0
    %620 = vmatpush.msra.mxu0 0.0
    %621 = vmatpush.msra.mxu0 0.0
    %622 = vmatpush.msra.mxu0 0.0
    %623 = vmatpush.msra.mxu0 0.0
    %624 = vmatpush.msra.mxu0 0.0
    %625 = vmatpush.msra.mxu0 0.0
    %626 = vmatpush.msra.mxu0 0.0
    %627 = vmatpush.msra.mxu0 %v610
    %628 = vmatmul.f32.gmra.mxu0 %v606
    %v629 = vpop.f32.mrf.mxu0
    %v630 = vadd.f32 0.0, %v629
    %631 = vdwg.mxu0
    %v633 = vsel %vm604, %v156, 0
    %v636 = vsel %vm604, %v157, 0
    %638 = vmatpush.msra.mxu0 0.0
    %639 = vmatpush.msra.mxu0 0.0
    %640 = vmatpush.msra.mxu0 0.0
    %641 = vmatpush.msra.mxu0 0.0
    %642 = vmatpush.msra.mxu0 0.0
    %643 = vmatpush.msra.mxu0 0.0
    %644 = vmatpush.msra.mxu0 0.0
    %645 = vmatpush.msra.mxu0 0.0
    %646 = vmatpush.msra.mxu0 0.0
    %647 = vmatpush.msra.mxu0 0.0
    %648 = vmatpush.msra.mxu0 0.0
    %649 = vmatpush.msra.mxu0 0.0
    %650 = vmatpush.msra.mxu0 0.0
    %651 = vmatpush.msra.mxu0 0.0
    %652 = vmatpush.msra.mxu0 0.0
    %653 = vmatpush.msra.mxu0 %v610
    %654 = vmatmul.f32.gmra.mxu0 %v633
    %v655 = vpop.f32.mrf.mxu0
    %v656 = vadd.f32 0.0, %v655
    %657 = vmatmul.f32.gmra.mxu0 %v636
    %v658 = vpop.f32.mrf.mxu0
    %v659 = vadd.f32 0.0, %v658
    %660 = vdwg.mxu0
    %v661 = vpack.c.bf16 %v451, %v451
    %v664 = vunpack.c.l.b16 %v149
    %v665 = vunpack.c.l.b16 %v150
    %v666 = vpack.c.b16 %v665, %v664
    %v668 = vsel %vm487, %v666, 0
    %vm670 = vcmask 1043456
    %v672 = vsel %vm670, %v661, 0
    %674 = vmatpush.bf16.msra.mxu0 0
    %675 = vmatpush.bf16.msra.mxu0 0
    %676 = vmatpush.bf16.msra.mxu0 0
    %677 = vmatpush.bf16.msra.mxu0 0
    %678 = vmatpush.bf16.msra.mxu0 0
    %679 = vmatpush.bf16.msra.mxu0 0
    %680 = vmatpush.bf16.msra.mxu0 0
    %681 = vmatpush.bf16.msra.mxu0 %v672
    %682 = vmatmul.bf16.gmra.mxu0 %v668
    %v683 = vpop.f32.mrf.mxu0
    %v684 = vadd.f32 0.0, %v683
    %v685 = vpop.f32.mrf.mxu0
    %v686 = vadd.f32 0.0, %v685
    %687 = vdwg.mxu0
    %v690 = vunpack.c.l.b16 %v151
    %v691 = vunpack.c.l.b16 %v152
    %v692 = vpack.c.b16 %v691, %v690
    %v694 = vsel %vm487, %v692, 0
    %696 = vmatpush.bf16.msra.mxu0 0
    %697 = vmatpush.bf16.msra.mxu0 0
    %698 = vmatpush.bf16.msra.mxu0 0
    %699 = vmatpush.bf16.msra.mxu0 0
    %700 = vmatpush.bf16.msra.mxu0 0
    %701 = vmatpush.bf16.msra.mxu0 0
    %702 = vmatpush.bf16.msra.mxu0 0
    %703 = vmatpush.bf16.msra.mxu0 %v672
    %704 = vmatmul.bf16.gmra.mxu0 %v694
    %v705 = vpop.f32.mrf.mxu0
    %v706 = vadd.f32 0.0, %v705
    %v707 = vpop.f32.mrf.mxu0
    %v708 = vadd.f32 0.0, %v707
    %709 = vdwg.mxu0
    %v710 = vld [vmem:[#allocation13 + $0x210] sm:$0x1]
    %v711 = vld [vmem:[#allocation13 + $0x190] sm:$0xff]
    %v712 = vld [vmem:[#allocation13 + $0x198] sm:$0xff]
    %v713 = vld [vmem:[#allocation13 + $0x1a0] sm:$0xff]
    %v714 = vld [vmem:[#allocation13 + $0x1a8] sm:$0xff]
    %vm715 = vcmask 261120
    %v717 = vsel %vm715, %v684, 0
    %v720 = vsel %vm715, %v686, 0
    %722 = vmatpush.msra.mxu0 0.0
    %723 = vmatpush.msra.mxu0 0.0
    %724 = vmatpush.msra.mxu0 0.0
    %725 = vmatpush.msra.mxu0 0.0
    %726 = vmatpush.msra.mxu0 0.0
    %727 = vmatpush.msra.mxu0 0.0
    %728 = vmatpush.msra.mxu0 0.0
    %729 = vmatpush.msra.mxu0 0.0
    %730 = vmatpush.msra.mxu0 0.0
    %731 = vmatpush.msra.mxu0 0.0
    %732 = vmatpush.msra.mxu0 0.0
    %733 = vmatpush.msra.mxu0 0.0
    %734 = vmatpush.msra.mxu0 %v714
    %735 = vmatpush.msra.mxu0 %v713
    %736 = vmatpush.msra.mxu0 %v712
    %737 = vmatpush.msra.mxu0 %v711
    %738 = vmatmul.f32.gmra.mxu0 %v717
    %v739 = vpop.f32.mrf.mxu0
    %v740 = vadd.f32 0.0, %v739
    %741 = vmatmul.f32.gmra.mxu0 %v720
    %v742 = vpop.f32.mrf.mxu0
    %v743 = vadd.f32 0.0, %v742
    %744 = vdwg.mxu0
    %v745 = vperm.slane %v710, 0
    %v746 = vadd.f32 %v745, %v740
    %v747 = vadd.f32 %v745, %v743
    %v748 = vld [vmem:[#allocation13 + $0x1b0] sm:$0xff]
    %v749 = vld [vmem:[#allocation13 + $0x1b8] sm:$0xff]
    %v750 = vld [vmem:[#allocation13 + $0x1c0] sm:$0xff]
    %v751 = vld [vmem:[#allocation13 + $0x1c8] sm:$0xff]
    %v753 = vsel %vm715, %v706, 0
    %v756 = vsel %vm715, %v708, 0
    %758 = vmatpush.msra.mxu0 0.0
    %759 = vmatpush.msra.mxu0 0.0
    %760 = vmatpush.msra.mxu0 0.0
    %761 = vmatpush.msra.mxu0 0.0
    %762 = vmatpush.msra.mxu0 0.0
    %763 = vmatpush.msra.mxu0 0.0
    %764 = vmatpush.msra.mxu0 0.0
    %765 = vmatpush.msra.mxu0 0.0
    %766 = vmatpush.msra.mxu0 0.0
    %767 = vmatpush.msra.mxu0 0.0
    %768 = vmatpush.msra.mxu0 0.0
    %769 = vmatpush.msra.mxu0 0.0
    %770 = vmatpush.msra.mxu0 %v751
    %771 = vmatpush.msra.mxu0 %v750
    %772 = vmatpush.msra.mxu0 %v749
    %773 = vmatpush.msra.mxu0 %v748
    %774 = vmatmul.f32.gmra.mxu0 %v753
    %v775 = vpop.f32.mrf.mxu0
    %v776 = vadd.f32 0.0, %v775
    %777 = vmatmul.f32.gmra.mxu0 %v756
    %v778 = vpop.f32.mrf.mxu0
    %v779 = vadd.f32 0.0, %v778
    %780 = vdwg.mxu0
    %v781 = vadd.f32 %v746, %v776
    %v782 = vadd.f32 %v747, %v779
    %v783 = vld [vmem:[#allocation13 + $0x1d0] sm:$0xff]
    %v784 = vld [vmem:[#allocation13 + $0x1d8] sm:$0xff]
    %v785 = vld [vmem:[#allocation13 + $0x1e0] sm:$0xff]
    %v786 = vld [vmem:[#allocation13 + $0x1e8] sm:$0xff]
    %v788 = vsel %vm715, %v315, 0
    %v791 = vsel %vm715, %v316, 0
    %793 = vmatpush.msra.mxu0 0.0
    %794 = vmatpush.msra.mxu0 0.0
    %795 = vmatpush.msra.mxu0 0.0
    %796 = vmatpush.msra.mxu0 0.0
    %797 = vmatpush.msra.mxu0 0.0
    %798 = vmatpush.msra.mxu0 0.0
    %799 = vmatpush.msra.mxu0 0.0
    %800 = vmatpush.msra.mxu0 0.0
    %801 = vmatpush.msra.mxu0 0.0
    %802 = vmatpush.msra.mxu0 0.0
    %803 = vmatpush.msra.mxu0 0.0
    %804 = vmatpush.msra.mxu0 0.0
    %805 = vmatpush.msra.mxu0 %v786
    %806 = vmatpush.msra.mxu0 %v785
    %807 = vmatpush.msra.mxu0 %v784
    %808 = vmatpush.msra.mxu0 %v783
    %809 = vmatmul.f32.gmra.mxu0 %v788
    %v810 = vpop.f32.mrf.mxu0
    %v811 = vadd.f32 0.0, %v810
    %812 = vmatmul.f32.gmra.mxu0 %v791
    %v813 = vpop.f32.mrf.mxu0
    %v814 = vadd.f32 0.0, %v813
    %815 = vdwg.mxu0
    %v816 = vadd.f32 %v781, %v811
    %v817 = vadd.f32 %v782, %v814
    %v818 = vld [vmem:[#allocation13 + $0x1f0] sm:$0xff]
    %v819 = vld [vmem:[#allocation13 + $0x1f8] sm:$0xff]
    %v820 = vld [vmem:[#allocation13 + $0x200] sm:$0xff]
    %v821 = vld [vmem:[#allocation13 + $0x208] sm:$0xff]
    %v823 = vsel %vm715, %v656, 0
    %v826 = vsel %vm715, %v659, 0
    %828 = vmatpush.msra.mxu0 0.0
    %829 = vmatpush.msra.mxu0 0.0
    %830 = vmatpush.msra.mxu0 0.0
    %831 = vmatpush.msra.mxu0 0.0
    %832 = vmatpush.msra.mxu0 0.0
    %833 = vmatpush.msra.mxu0 0.0
    %834 = vmatpush.msra.mxu0 0.0
    %835 = vmatpush.msra.mxu0 0.0
    %836 = vmatpush.msra.mxu0 0.0
    %837 = vmatpush.msra.mxu0 0.0
    %838 = vmatpush.msra.mxu0 0.0
    %839 = vmatpush.msra.mxu0 0.0
    %840 = vmatpush.msra.mxu0 %v821
    %841 = vmatpush.msra.mxu0 %v820
    %842 = vmatpush.msra.mxu0 %v819
    %843 = vmatpush.msra.mxu0 %v818
    %844 = vmatmul.f32.gmra.mxu0 %v823
    %v845 = vpop.f32.mrf.mxu0
    %v846 = vadd.f32 0.0, %v845
    %847 = vmatmul.f32.gmra.mxu0 %v826
    %v848 = vpop.f32.mrf.mxu0
    %v849 = vadd.f32 0.0, %v848
    %850 = vdwg.mxu0
    %v851 = vadd.f32 %v816, %v846
    %v852 = vadd.f32 %v817, %v849
    %v853 = vmax.f32 %v851, 0.0
    %v854 = vmax.f32 %v852, 0.0
    %v855 = vand.u32 2147483647, %v851
    %v856 = vand.u32 2147483647, %v852
    %v857 = vsub.f32 0.0, %v855
    %v858 = vsub.f32 0.0, %v856
    %v859 = vmul.f32 %v857, 1.442695
    %v860 = vpow.pop %v859
    %v861 = vmul.f32 %v858, 1.442695
    %v862 = vpow.pop %v861
    %v863 = vadd.f32 %v860, 1.0
    %v864 = vlog2.pop %v863
    %v865 = vmul.f32 %v864, 0.6931472
    %v866 = vmul.f32 -0.5, %v860
    %v867 = vadd.f32 %v866, 1.0
    %v868 = vmul.f32 %v867, %v860
    %v869 = vand.u32 2147483647, %v860
    %vm870 = vcmp.lt.f32.partialorder %v869, 0.0004427343
    %v871 = vsel %vm870, %v868, %v865
    %v872 = vadd.f32 %v862, 1.0
    %v873 = vlog2.pop %v872
    %v874 = vmul.f32 %v873, 0.6931472
    %v875 = vmul.f32 -0.5, %v862
    %v876 = vadd.f32 %v875, 1.0
    %v877 = vmul.f32 %v876, %v862
    %v878 = vand.u32 2147483647, %v862
    %vm879 = vcmp.lt.f32.partialorder %v878, 0.0004427343
    %v880 = vsel %vm879, %v877, %v874
    %v881 = vadd.f32 %v853, %v871
    %v882 = vadd.f32 %v854, %v880
    %v883 = vsub.f32 %v881, 0.6931472
    %v884 = vsub.f32 %v882, 0.6931472
    %v885 = vld [vmem:[#allocation13 + $0x258] sm:$0x1]
    %v886 = vld [vmem:[#allocation13 + $0x218] sm:$0xff]
    %v887 = vld [vmem:[#allocation13 + $0x220] sm:$0xff]
    %v888 = vld [vmem:[#allocation13 + $0x228] sm:$0xff]
    %v889 = vld [vmem:[#allocation13 + $0x230] sm:$0xff]
    %v890 = vld [vmem:[#allocation13 + $0x238] sm:$0xff]
    %v891 = vld [vmem:[#allocation13 + $0x240] sm:$0xff]
    %v892 = vld [vmem:[#allocation13 + $0x248] sm:$0xff]
    %v893 = vld [vmem:[#allocation13 + $0x250] sm:$0xff]
    %v895 = vsel %vm252, %v883, 0
    %v898 = vsel %vm252, %v884, 0
    %900 = vmatpush.msra.mxu0 0.0
    %901 = vmatpush.msra.mxu0 0.0
    %902 = vmatpush.msra.mxu0 0.0
    %903 = vmatpush.msra.mxu0 0.0
    %904 = vmatpush.msra.mxu0 0.0
    %905 = vmatpush.msra.mxu0 0.0
    %906 = vmatpush.msra.mxu0 0.0
    %907 = vmatpush.msra.mxu0 0.0
    %908 = vmatpush.msra.mxu0 %v893
    %909 = vmatpush.msra.mxu0 %v892
    %910 = vmatpush.msra.mxu0 %v891
    %911 = vmatpush.msra.mxu0 %v890
    %912 = vmatpush.msra.mxu0 %v889
    %913 = vmatpush.msra.mxu0 %v888
    %914 = vmatpush.msra.mxu0 %v887
    %915 = vmatpush.msra.mxu0 %v886
    %916 = vmatmul.f32.gmra.mxu0 %v895
    %v917 = vpop.f32.mrf.mxu0
    %v918 = vadd.f32 0.0, %v917
    %919 = vmatmul.f32.gmra.mxu0 %v898
    %v920 = vpop.f32.mrf.mxu0
    %v921 = vadd.f32 0.0, %v920
    %922 = vdwg.mxu0
    %v923 = vperm.slane %v885, 0
    %v924 = vadd.f32 %v923, %v918
    %v925 = vadd.f32 %v923, %v921
    %v926 = vmax.f32 %v924, 0.0
    %v927 = vmax.f32 %v925, 0.0
    %v928 = vand.u32 2147483647, %v924
    %v929 = vand.u32 2147483647, %v925
    %v930 = vsub.f32 0.0, %v928
    %v931 = vsub.f32 0.0, %v929
    %v932 = vmul.f32 %v930, 1.442695
    %v933 = vpow.pop %v932
    %v934 = vmul.f32 %v931, 1.442695
    %v935 = vpow.pop %v934
    %v936 = vadd.f32 %v933, 1.0
    %v937 = vlog2.pop %v936
    %v938 = vmul.f32 %v937, 0.6931472
    %v939 = vmul.f32 -0.5, %v933
    %v940 = vadd.f32 %v939, 1.0
    %v941 = vmul.f32 %v940, %v933
    %v942 = vand.u32 2147483647, %v933
    %vm943 = vcmp.lt.f32.partialorder %v942, 0.0004427343
    %v944 = vsel %vm943, %v941, %v938
    %v945 = vadd.f32 %v935, 1.0
    %v946 = vlog2.pop %v945
    %v947 = vmul.f32 %v946, 0.6931472
    %v948 = vmul.f32 -0.5, %v935
    %v949 = vadd.f32 %v948, 1.0
    %v950 = vmul.f32 %v949, %v935
    %v951 = vand.u32 2147483647, %v935
    %vm952 = vcmp.lt.f32.partialorder %v951, 0.0004427343
    %v953 = vsel %vm952, %v950, %v947
    %v954 = vadd.f32 %v926, %v944
    %v955 = vadd.f32 %v927, %v953
    %v956 = vsub.f32 %v954, 0.6931472
    %v957 = vsub.f32 %v955, 0.6931472
    %v958 = vld [vmem:[#allocation13 + $0x2a0] sm:$0x1]
    %v959 = vld [vmem:[#allocation13 + $0x260] sm:$0xff]
    %v960 = vld [vmem:[#allocation13 + $0x268] sm:$0xff]
    %v961 = vld [vmem:[#allocation13 + $0x270] sm:$0xff]
    %v962 = vld [vmem:[#allocation13 + $0x278] sm:$0xff]
    %v963 = vld [vmem:[#allocation13 + $0x280] sm:$0xff]
    %v964 = vld [vmem:[#allocation13 + $0x288] sm:$0xff]
    %v965 = vld [vmem:[#allocation13 + $0x290] sm:$0xff]
    %v966 = vld [vmem:[#allocation13 + $0x298] sm:$0xff]
    %v968 = vsel %vm252, %v956, 0
    %v971 = vsel %vm252, %v957, 0
    %973 = vmatpush.msra.mxu0 0.0
    %974 = vmatpush.msra.mxu0 0.0
    %975 = vmatpush.msra.mxu0 0.0
    %976 = vmatpush.msra.mxu0 0.0
    %977 = vmatpush.msra.mxu0 0.0
    %978 = vmatpush.msra.mxu0 0.0
    %979 = vmatpush.msra.mxu0 0.0
    %980 = vmatpush.msra.mxu0 0.0
    %981 = vmatpush.msra.mxu0 %v966
    %982 = vmatpush.msra.mxu0 %v965
    %983 = vmatpush.msra.mxu0 %v964
    %984 = vmatpush.msra.mxu0 %v963
    %985 = vmatpush.msra.mxu0 %v962
    %986 = vmatpush.msra.mxu0 %v961
    %987 = vmatpush.msra.mxu0 %v960
    %988 = vmatpush.msra.mxu0 %v959
    %989 = vmatmul.f32.gmra.mxu0 %v968
    %v990 = vpop.f32.mrf.mxu0
    %v991 = vadd.f32 0.0, %v990
    %992 = vmatmul.f32.gmra.mxu0 %v971
    %v993 = vpop.f32.mrf.mxu0
    %v994 = vadd.f32 0.0, %v993
    %995 = vdwg.mxu0
    %v996 = vperm.slane %v958, 0
    %v997 = vadd.f32 %v996, %v991
    %v998 = vadd.f32 %v996, %v994
    %v999 = vmax.f32 %v997, 0.0
    %v1000 = vmax.f32 %v998, 0.0
    %v1001 = vand.u32 2147483647, %v997
    %v1002 = vand.u32 2147483647, %v998
    %v1003 = vsub.f32 0.0, %v1001
    %v1004 = vsub.f32 0.0, %v1002
    %v1005 = vmul.f32 %v1003, 1.442695
    %v1006 = vpow.pop %v1005
    %v1007 = vmul.f32 %v1004, 1.442695
    %v1008 = vpow.pop %v1007
    %v1009 = vadd.f32 %v1006, 1.0
    %v1010 = vlog2.pop %v1009
    %v1011 = vmul.f32 %v1010, 0.6931472
    %v1012 = vmul.f32 -0.5, %v1006
    %v1013 = vadd.f32 %v1012, 1.0
    %v1014 = vmul.f32 %v1013, %v1006
    %v1015 = vand.u32 2147483647, %v1006
    %vm1016 = vcmp.lt.f32.partialorder %v1015, 0.0004427343
    %v1017 = vsel %vm1016, %v1014, %v1011
    %v1018 = vadd.f32 %v1008, 1.0
    %v1019 = vlog2.pop %v1018
    %v1020 = vmul.f32 %v1019, 0.6931472
    %v1021 = vmul.f32 -0.5, %v1008
    %v1022 = vadd.f32 %v1021, 1.0
    %v1023 = vmul.f32 %v1022, %v1008
    %v1024 = vand.u32 2147483647, %v1008
    %vm1025 = vcmp.lt.f32.partialorder %v1024, 0.0004427343
    %v1026 = vsel %vm1025, %v1023, %v1020
    %v1027 = vadd.f32 %v999, %v1017
    %v1028 = vadd.f32 %v1000, %v1026
    %v1029 = vsub.f32 %v1027, 0.6931472
    %v1030 = vsub.f32 %v1028, 0.6931472
    %v1031 = vpack.c.bf16 %v1030, %v1029
    %v1033 = vsel %vm360, %v153, 0
    %1035 = vmatpush.bf16.msra.mxu0 0
    %1036 = vmatpush.bf16.msra.mxu0 0
    %1037 = vmatpush.bf16.msra.mxu0 0
    %1038 = vmatpush.bf16.msra.mxu0 0
    %1039 = vmatpush.bf16.msra.mxu0 0
    %1040 = vmatpush.bf16.msra.mxu0 0
    %1041 = vmatpush.bf16.msra.mxu0 0
    %1042 = vmatpush.bf16.msra.mxu0 %v1031
    %1043 = vmatmul.bf16.gmra.mxu0 %v1033
    %v1044 = vpop.f32.mrf.mxu0
    %v1045 = vadd.f32 0.0, %v1044
    %v1046 = vpop.f32.mrf.mxu0
    %1047 = vdwg.mxu0
    %1049 = vset.pattern.permute.xlu0 0
    %1050 = vperm.xlu0 %1049, %v154
    %v1051 = vpop.permute.xlu0 %1050
    %v1053 = vmul.f32 %v1045, %v1051
    %v1054 = vld [vmem:[#allocation13 + $0x308] sm:$0x1]
    %v1055 = vld [vmem:[#allocation13 + $0x2a8] sm:$0xff]
    %v1056 = vld [vmem:[#allocation13 + $0x2b0] sm:$0xff]
    %v1057 = vld [vmem:[#allocation13 + $0x2b8] sm:$0xff]
    %v1058 = vld [vmem:[#allocation13 + $0x2c0] sm:$0xff]
    %v1060 = vsel %vm715, %v451, 0
    %1062 = vmatpush.msra.mxu0 0.0
    %1063 = vmatpush.msra.mxu0 0.0
    %1064 = vmatpush.msra.mxu0 0.0
    %1065 = vmatpush.msra.mxu0 0.0
    %1066 = vmatpush.msra.mxu0 0.0
    %1067 = vmatpush.msra.mxu0 0.0
    %1068 = vmatpush.msra.mxu0 0.0
    %1069 = vmatpush.msra.mxu0 0.0
    %1070 = vmatpush.msra.mxu0 0.0
    %1071 = vmatpush.msra.mxu0 0.0
    %1072 = vmatpush.msra.mxu0 0.0
    %1073 = vmatpush.msra.mxu0 0.0
    %1074 = vmatpush.msra.mxu0 %v1058
    %1075 = vmatpush.msra.mxu0 %v1057
    %1076 = vmatpush.msra.mxu0 %v1056
    %1077 = vmatpush.msra.mxu0 %v1055
    %1078 = vmatmul.f32.gmra.mxu0 %v1060
    %v1079 = vpop.f32.mrf.mxu0
    %v1080 = vadd.f32 0.0, %v1079
    %1081 = vdwg.mxu0
    %v1082 = vperm.slane %v1054, 0
    %v1083 = vadd.f32 %v1082, %v1080
    %v1084 = vld [vmem:[#allocation13 + $0x2c8] sm:$0xff]
    %v1085 = vld [vmem:[#allocation13 + $0x2d0] sm:$0xff]
    %v1086 = vld [vmem:[#allocation13 + $0x2d8] sm:$0xff]
    %v1087 = vld [vmem:[#allocation13 + $0x2e0] sm:$0xff]
    %v1089 = vsel %vm715, %v1053, 0
    %1091 = vmatpush.msra.mxu0 0.0
    %1092 = vmatpush.msra.mxu0 0.0
    %1093 = vmatpush.msra.mxu0 0.0
    %1094 = vmatpush.msra.mxu0 0.0
    %1095 = vmatpush.msra.mxu0 0.0
    %1096 = vmatpush.msra.mxu0 0.0
    %1097 = vmatpush.msra.mxu0 0.0
    %1098 = vmatpush.msra.mxu0 0.0
    %1099 = vmatpush.msra.mxu0 0.0
    %1100 = vmatpush.msra.mxu0 0.0
    %1101 = vmatpush.msra.mxu0 0.0
    %1102 = vmatpush.msra.mxu0 0.0
    %1103 = vmatpush.msra.mxu0 %v1087
    %1104 = vmatpush.msra.mxu0 %v1086
    %1105 = vmatpush.msra.mxu0 %v1085
    %1106 = vmatpush.msra.mxu0 %v1084
    %1107 = vmatmul.f32.gmra.mxu0 %v1089
    %v1108 = vpop.f32.mrf.mxu0
    %v1109 = vadd.f32 0.0, %v1108
    %1110 = vdwg.mxu0
    %v1111 = vadd.f32 %v1083, %v1109
    %v1112 = vld [vmem:[#allocation13 + $0x2e8] sm:$0xff]
    %v1113 = vld [vmem:[#allocation13 + $0x2f0] sm:$0xff]
    %v1114 = vld [vmem:[#allocation13 + $0x2f8] sm:$0xff]
    %v1115 = vld [vmem:[#allocation13 + $0x300] sm:$0xff]
    %v1117 = vsel %vm715, %v630, 0
    %1119 = vmatpush.msra.mxu0 0.0
    %1120 = vmatpush.msra.mxu0 0.0
    %1121 = vmatpush.msra.mxu0 0.0
    %1122 = vmatpush.msra.mxu0 0.0
    %1123 = vmatpush.msra.mxu0 0.0
    %1124 = vmatpush.msra.mxu0 0.0
    %1125 = vmatpush.msra.mxu0 0.0
    %1126 = vmatpush.msra.mxu0 0.0
    %1127 = vmatpush.msra.mxu0 0.0
    %1128 = vmatpush.msra.mxu0 0.0
    %1129 = vmatpush.msra.mxu0 0.0
    %1130 = vmatpush.msra.mxu0 0.0
    %1131 = vmatpush.msra.mxu0 %v1115
    %1132 = vmatpush.msra.mxu0 %v1114
    %1133 = vmatpush.msra.mxu0 %v1113
    %1134 = vmatpush.msra.mxu0 %v1112
    %1135 = vmatmul.f32.gmra.mxu0 %v1117
    %v1136 = vpop.f32.mrf.mxu0
    %v1137 = vadd.f32 0.0, %v1136
    %1138 = vdwg.mxu0
    %v1139 = vadd.f32 %v1111, %v1137
    %v1140 = vmax.f32 %v1139, 0.0
    %v1141 = vand.u32 2147483647, %v1139
    %v1142 = vsub.f32 0.0, %v1141
    %v1143 = vmul.f32 %v1142, 1.442695
    %v1144 = vpow.pop %v1143
    %v1145 = vadd.f32 %v1144, 1.0
    %v1146 = vlog2.pop %v1145
    %v1147 = vmul.f32 %v1146, 0.6931472
    %v1148 = vmul.f32 -0.5, %v1144
    %v1149 = vadd.f32 %v1148, 1.0
    %v1150 = vmul.f32 %v1149, %v1144
    %v1151 = vand.u32 2147483647, %v1144
    %vm1152 = vcmp.lt.f32.partialorder %v1151, 0.0004427343
    %v1153 = vsel %vm1152, %v1150, %v1147
    %v1154 = vadd.f32 %v1140, %v1153
    %v1155 = vsub.f32 %v1154, 0.6931472
    %v1156 = vld [vmem:[#allocation13 + $0x350] sm:$0x1]
    %v1157 = vld [vmem:[#allocation13 + $0x310] sm:$0xff]
    %v1158 = vld [vmem:[#allocation13 + $0x318] sm:$0xff]
    %v1159 = vld [vmem:[#allocation13 + $0x320] sm:$0xff]
    %v1160 = vld [vmem:[#allocation13 + $0x328] sm:$0xff]
    %v1161 = vld [vmem:[#allocation13 + $0x330] sm:$0xff]
    %v1162 = vld [vmem:[#allocation13 + $0x338] sm:$0xff]
    %v1163 = vld [vmem:[#allocation13 + $0x340] sm:$0xff]
    %v1164 = vld [vmem:[#allocation13 + $0x348] sm:$0xff]
    %v1166 = vsel %vm252, %v1155, 0
    %1168 = vmatpush.msra.mxu0 0.0
    %1169 = vmatpush.msra.mxu0 0.0
    %1170 = vmatpush.msra.mxu0 0.0
    %1171 = vmatpush.msra.mxu0 0.0
    %1172 = vmatpush.msra.mxu0 0.0
    %1173 = vmatpush.msra.mxu0 0.0
    %1174 = vmatpush.msra.mxu0 0.0
    %1175 = vmatpush.msra.mxu0 0.0
    %1176 = vmatpush.msra.mxu0 %v1164
    %1177 = vmatpush.msra.mxu0 %v1163
    %1178 = vmatpush.msra.mxu0 %v1162
    %1179 = vmatpush.msra.mxu0 %v1161
    %1180 = vmatpush.msra.mxu0 %v1160
    %1181 = vmatpush.msra.mxu0 %v1159
    %1182 = vmatpush.msra.mxu0 %v1158
    %1183 = vmatpush.msra.mxu0 %v1157
    %1184 = vmatmul.f32.gmra.mxu0 %v1166
    %v1185 = vpop.f32.mrf.mxu0
    %v1186 = vadd.f32 0.0, %v1185
    %1187 = vdwg.mxu0
    %v1188 = vperm.slane %v1156, 0
    %v1189 = vadd.f32 %v1188, %v1186
    %v1190 = vmax.f32 %v1189, 0.0
    %v1191 = vand.u32 2147483647, %v1189
    %v1192 = vsub.f32 0.0, %v1191
    %v1193 = vmul.f32 %v1192, 1.442695
    %v1194 = vpow.pop %v1193
    %v1195 = vadd.f32 %v1194, 1.0
    %v1196 = vlog2.pop %v1195
    %v1197 = vmul.f32 %v1196, 0.6931472
    %v1198 = vmul.f32 -0.5, %v1194
    %v1199 = vadd.f32 %v1198, 1.0
    %v1200 = vmul.f32 %v1199, %v1194
    %v1201 = vand.u32 2147483647, %v1194
    %vm1202 = vcmp.lt.f32.partialorder %v1201, 0.0004427343
    %v1203 = vsel %vm1202, %v1200, %v1197
    %v1204 = vadd.f32 %v1190, %v1203
    %v1205 = vsub.f32 %v1204, 0.6931472
    %v1206 = vld [vmem:[#allocation13 + $0x398] sm:$0x1]
    %v1207 = vld [vmem:[#allocation13 + $0x358] sm:$0xff]
    %v1208 = vld [vmem:[#allocation13 + $0x360] sm:$0xff]
    %v1209 = vld [vmem:[#allocation13 + $0x368] sm:$0xff]
    %v1210 = vld [vmem:[#allocation13 + $0x370] sm:$0xff]
    %v1211 = vld [vmem:[#allocation13 + $0x378] sm:$0xff]
    %v1212 = vld [vmem:[#allocation13 + $0x380] sm:$0xff]
    %v1213 = vld [vmem:[#allocation13 + $0x388] sm:$0xff]
    %v1214 = vld [vmem:[#allocation13 + $0x390] sm:$0xff]
    %v1216 = vsel %vm252, %v1205, 0
    %1218 = vmatpush.msra.mxu0 0.0
    %1219 = vmatpush.msra.mxu0 0.0
    %1220 = vmatpush.msra.mxu0 0.0
    %1221 = vmatpush.msra.mxu0 0.0
    %1222 = vmatpush.msra.mxu0 0.0
    %1223 = vmatpush.msra.mxu0 0.0
    %1224 = vmatpush.msra.mxu0 0.0
    %1225 = vmatpush.msra.mxu0 0.0
    %1226 = vmatpush.msra.mxu0 %v1214
    %1227 = vmatpush.msra.mxu0 %v1213
    %1228 = vmatpush.msra.mxu0 %v1212
    %1229 = vmatpush.msra.mxu0 %v1211
    %1230 = vmatpush.msra.mxu0 %v1210
    %1231 = vmatpush.msra.mxu0 %v1209
    %1232 = vmatpush.msra.mxu0 %v1208
    %1233 = vmatpush.msra.mxu0 %v1207
    %1234 = vmatmul.f32.gmra.mxu0 %v1216
    %v1235 = vpop.f32.mrf.mxu0
    %v1236 = vadd.f32 0.0, %v1235
    %1237 = vdwg.mxu0
    %v1238 = vperm.slane %v1206, 0
    %v1239 = vadd.f32 %v1238, %v1236
    %v1240 = vmax.f32 %v1239, 0.0
    %v1241 = vand.u32 2147483647, %v1239
    %v1242 = vsub.f32 0.0, %v1241
    %v1243 = vmul.f32 %v1242, 1.442695
    %v1244 = vpow.pop %v1243
    %v1245 = vadd.f32 %v1244, 1.0
    %v1246 = vlog2.pop %v1245
    %v1247 = vmul.f32 %v1246, 0.6931472
    %v1248 = vmul.f32 -0.5, %v1244
    %v1249 = vadd.f32 %v1248, 1.0
    %v1250 = vmul.f32 %v1249, %v1244
    %v1251 = vand.u32 2147483647, %v1244
    %vm1252 = vcmp.lt.f32.partialorder %v1251, 0.0004427343
    %v1253 = vsel %vm1252, %v1250, %v1247
    %v1254 = vadd.f32 %v1240, %v1253
    %v1255 = vsub.f32 %v1254, 0.6931472
    %v1257 = vsel %vm360, %v159, 0
    %1259 = vmatpush.msra.mxu0 0.0
    %1260 = vmatpush.msra.mxu0 0.0
    %1261 = vmatpush.msra.mxu0 0.0
    %1262 = vmatpush.msra.mxu0 0.0
    %1263 = vmatpush.msra.mxu0 0.0
    %1264 = vmatpush.msra.mxu0 0.0
    %1265 = vmatpush.msra.mxu0 0.0
    %1266 = vmatpush.msra.mxu0 0.0
    %1267 = vmatpush.msra.mxu0 0.0
    %1268 = vmatpush.msra.mxu0 0.0
    %1269 = vmatpush.msra.mxu0 0.0
    %1270 = vmatpush.msra.mxu0 0.0
    %1271 = vmatpush.msra.mxu0 0.0
    %1272 = vmatpush.msra.mxu0 0.0
    %1273 = vmatpush.msra.mxu0 %v1030
    %1274 = vmatpush.msra.mxu0 %v1029
    %1275 = vmatmul.f32.gmra.mxu0 %v1257
    %v1276 = vpop.f32.mrf.mxu0
    %v1277 = vadd.f32 0.0, %v1276
    %1278 = vdwg.mxu0
    %1280 = vset.pattern.permute.xlu0 0
    %1281 = vperm.xlu0 %1280, %v161
    %v1282 = vpop.permute.xlu0 %1281
    %v1284 = vmul.f32 %v1277, %v1282
    %v1286 = vsel %vm487, %v158, 0
    %1288 = vmatpush.msra.mxu0 0.0
    %1289 = vmatpush.msra.mxu0 0.0
    %1290 = vmatpush.msra.mxu0 0.0
    %1291 = vmatpush.msra.mxu0 0.0
    %1292 = vmatpush.msra.mxu0 0.0
    %1293 = vmatpush.msra.mxu0 0.0
    %1294 = vmatpush.msra.mxu0 0.0
    %1295 = vmatpush.msra.mxu0 0.0
    %1296 = vmatpush.msra.mxu0 0.0
    %1297 = vmatpush.msra.mxu0 0.0
    %1298 = vmatpush.msra.mxu0 0.0
    %1299 = vmatpush.msra.mxu0 0.0
    %1300 = vmatpush.msra.mxu0 0.0
    %1301 = vmatpush.msra.mxu0 0.0
    %1302 = vmatpush.msra.mxu0 0.0
    %1303 = vmatpush.msra.mxu0 %v1255
    %1304 = vmatmul.f32.gmra.mxu0 %v1286
    %v1305 = vpop.f32.mrf.mxu0
    %v1306 = vadd.f32 0.0, %v1305
    %1307 = vdwg.mxu0
    %1309 = vset.pattern.permute.xlu0 0
    %1310 = vperm.xlu0 %1309, %v160
    %v1311 = vpop.permute.xlu0 %1310
    %v1313 = vmul.f32 %v1306, %v1311
    %v1314 = vld [vmem:[#allocation13 + $0x400] sm:$0x1]
    %v1315 = vld [vmem:[#allocation13 + $0x3a0] sm:$0xff]
    %v1316 = vld [vmem:[#allocation13 + $0x3a8] sm:$0xff]
    %v1317 = vld [vmem:[#allocation13 + $0x3b0] sm:$0xff]
    %v1318 = vld [vmem:[#allocation13 + $0x3b8] sm:$0xff]
    %v1319 = vsel %vm715, %v603, 0
    %1321 = vmatpush.msra.mxu0 0.0
    %1322 = vmatpush.msra.mxu0 0.0
    %1323 = vmatpush.msra.mxu0 0.0
    %1324 = vmatpush.msra.mxu0 0.0
    %1325 = vmatpush.msra.mxu0 0.0
    %1326 = vmatpush.msra.mxu0 0.0
    %1327 = vmatpush.msra.mxu0 0.0
    %1328 = vmatpush.msra.mxu0 0.0
    %1329 = vmatpush.msra.mxu0 0.0
    %1330 = vmatpush.msra.mxu0 0.0
    %1331 = vmatpush.msra.mxu0 0.0
    %1332 = vmatpush.msra.mxu0 0.0
    %1333 = vmatpush.msra.mxu0 %v1318
    %1334 = vmatpush.msra.mxu0 %v1317
    %1335 = vmatpush.msra.mxu0 %v1316
    %1336 = vmatpush.msra.mxu0 %v1315
    %1337 = vmatmul.f32.gmra.mxu0 %v1319
    %v1338 = vpop.f32.mrf.mxu0
    %v1339 = vadd.f32 0.0, %v1338
    %1340 = vdwg.mxu0
    %v1341 = vperm.slane %v1314, 0
    %v1342 = vadd.f32 %v1341, %v1339
    %v1343 = vld [vmem:[#allocation13 + $0x3c0] sm:$0xff]
    %v1344 = vld [vmem:[#allocation13 + $0x3c8] sm:$0xff]
    %v1345 = vld [vmem:[#allocation13 + $0x3d0] sm:$0xff]
    %v1346 = vld [vmem:[#allocation13 + $0x3d8] sm:$0xff]
    %v1348 = vsel %vm715, %v1284, 0
    %1350 = vmatpush.msra.mxu0 0.0
    %1351 = vmatpush.msra.mxu0 0.0
    %1352 = vmatpush.msra.mxu0 0.0
    %1353 = vmatpush.msra.mxu0 0.0
    %1354 = vmatpush.msra.mxu0 0.0
    %1355 = vmatpush.msra.mxu0 0.0
    %1356 = vmatpush.msra.mxu0 0.0
    %1357 = vmatpush.msra.mxu0 0.0
    %1358 = vmatpush.msra.mxu0 0.0
    %1359 = vmatpush.msra.mxu0 0.0
    %1360 = vmatpush.msra.mxu0 0.0
    %1361 = vmatpush.msra.mxu0 0.0
    %1362 = vmatpush.msra.mxu0 %v1346
    %1363 = vmatpush.msra.mxu0 %v1345
    %1364 = vmatpush.msra.mxu0 %v1344
    %1365 = vmatpush.msra.mxu0 %v1343
    %1366 = vmatmul.f32.gmra.mxu0 %v1348
    %v1367 = vpop.f32.mrf.mxu0
    %v1368 = vadd.f32 0.0, %v1367
    %1369 = vdwg.mxu0
    %v1370 = vadd.f32 %v1342, %v1368
    %v1371 = vld [vmem:[#allocation13 + $0x3e0] sm:$0xff]
    %v1372 = vld [vmem:[#allocation13 + $0x3e8] sm:$0xff]
    %v1373 = vld [vmem:[#allocation13 + $0x3f0] sm:$0xff]
    %v1374 = vld [vmem:[#allocation13 + $0x3f8] sm:$0xff]
    %v1376 = vsel %vm715, %v1313, 0
    %1378 = vmatpush.msra.mxu0 0.0
    %1379 = vmatpush.msra.mxu0 0.0
    %1380 = vmatpush.msra.mxu0 0.0
    %1381 = vmatpush.msra.mxu0 0.0
    %1382 = vmatpush.msra.mxu0 0.0
    %1383 = vmatpush.msra.mxu0 0.0
    %1384 = vmatpush.msra.mxu0 0.0
    %1385 = vmatpush.msra.mxu0 0.0
    %1386 = vmatpush.msra.mxu0 0.0
    %1387 = vmatpush.msra.mxu0 0.0
    %1388 = vmatpush.msra.mxu0 0.0
    %1389 = vmatpush.msra.mxu0 0.0
    %1390 = vmatpush.msra.mxu0 %v1374
    %1391 = vmatpush.msra.mxu0 %v1373
    %1392 = vmatpush.msra.mxu0 %v1372
    %1393 = vmatpush.msra.mxu0 %v1371
    %1394 = vmatmul.f32.gmra.mxu0 %v1376
    %v1395 = vpop.f32.mrf.mxu0
    %v1396 = vadd.f32 0.0, %v1395
    %1397 = vdwg.mxu0
    %v1398 = vadd.f32 %v1370, %v1396
    %v1399 = vmax.f32 %v1398, 0.0
    %v1400 = vand.u32 2147483647, %v1398
    %v1401 = vsub.f32 0.0, %v1400
    %v1402 = vmul.f32 %v1401, 1.442695
    %v1403 = vpow.pop %v1402
    %v1404 = vadd.f32 %v1403, 1.0
    %v1405 = vlog2.pop %v1404
    %v1406 = vmul.f32 %v1405, 0.6931472
    %v1407 = vmul.f32 -0.5, %v1403
    %v1408 = vadd.f32 %v1407, 1.0
    %v1409 = vmul.f32 %v1408, %v1403
    %v1410 = vand.u32 2147483647, %v1403
    %vm1411 = vcmp.lt.f32.partialorder %v1410, 0.0004427343
    %v1412 = vsel %vm1411, %v1409, %v1406
    %v1413 = vadd.f32 %v1399, %v1412
    %v1414 = vsub.f32 %v1413, 0.6931472
    %v1415 = vld [vmem:[#allocation13 + $0x448] sm:$0x1]
    %v1416 = vld [vmem:[#allocation13 + $0x408] sm:$0xff]
    %v1417 = vld [vmem:[#allocation13 + $0x410] sm:$0xff]
    %v1418 = vld [vmem:[#allocation13 + $0x418] sm:$0xff]
    %v1419 = vld [vmem:[#allocation13 + $0x420] sm:$0xff]
    %v1420 = vld [vmem:[#allocation13 + $0x428] sm:$0xff]
    %v1421 = vld [vmem:[#allocation13 + $0x430] sm:$0xff]
    %v1422 = vld [vmem:[#allocation13 + $0x438] sm:$0xff]
    %v1423 = vld [vmem:[#allocation13 + $0x440] sm:$0xff]
    %v1425 = vsel %vm252, %v1414, 0
    %1427 = vmatpush.msra.mxu0 0.0
    %1428 = vmatpush.msra.mxu0 0.0
    %1429 = vmatpush.msra.mxu0 0.0
    %1430 = vmatpush.msra.mxu0 0.0
    %1431 = vmatpush.msra.mxu0 0.0
    %1432 = vmatpush.msra.mxu0 0.0
    %1433 = vmatpush.msra.mxu0 0.0
    %1434 = vmatpush.msra.mxu0 0.0
    %1435 = vmatpush.msra.mxu0 %v1423
    %1436 = vmatpush.msra.mxu0 %v1422
    %1437 = vmatpush.msra.mxu0 %v1421
    %1438 = vmatpush.msra.mxu0 %v1420
    %1439 = vmatpush.msra.mxu0 %v1419
    %1440 = vmatpush.msra.mxu0 %v1418
    %1441 = vmatpush.msra.mxu0 %v1417
    %1442 = vmatpush.msra.mxu0 %v1416
    %1443 = vmatmul.f32.gmra.mxu0 %v1425
    %v1444 = vpop.f32.mrf.mxu0
    %v1445 = vadd.f32 0.0, %v1444
    %1446 = vdwg.mxu0
    %v1447 = vperm.slane %v1415, 0
    %v1448 = vadd.f32 %v1447, %v1445
    %v1449 = vmax.f32 %v1448, 0.0
    %v1450 = vand.u32 2147483647, %v1448
    %v1451 = vsub.f32 0.0, %v1450
    %v1452 = vmul.f32 %v1451, 1.442695
    %v1453 = vpow.pop %v1452
    %v1454 = vadd.f32 %v1453, 1.0
    %v1455 = vlog2.pop %v1454
    %v1456 = vmul.f32 %v1455, 0.6931472
    %v1457 = vmul.f32 -0.5, %v1453
    %v1458 = vadd.f32 %v1457, 1.0
    %v1459 = vmul.f32 %v1458, %v1453
    %v1460 = vand.u32 2147483647, %v1453
    %vm1461 = vcmp.lt.f32.partialorder %v1460, 0.0004427343
    %v1462 = vsel %vm1461, %v1459, %v1456
    %v1463 = vadd.f32 %v1449, %v1462
    %v1464 = vsub.f32 %v1463, 0.6931472
    %v1465 = vld [vmem:[#allocation13 + $0x490] sm:$0x1]
    %v1466 = vld [vmem:[#allocation13 + $0x450] sm:$0xff]
    %v1467 = vld [vmem:[#allocation13 + $0x458] sm:$0xff]
    %v1468 = vld [vmem:[#allocation13 + $0x460] sm:$0xff]
    %v1469 = vld [vmem:[#allocation13 + $0x468] sm:$0xff]
    %v1470 = vld [vmem:[#allocation13 + $0x470] sm:$0xff]
    %v1471 = vld [vmem:[#allocation13 + $0x478] sm:$0xff]
    %v1472 = vld [vmem:[#allocation13 + $0x480] sm:$0xff]
    %v1473 = vld [vmem:[#allocation13 + $0x488] sm:$0xff]
    %v1475 = vsel %vm252, %v1464, 0
    %1477 = vmatpush.msra.mxu0 0.0
    %1478 = vmatpush.msra.mxu0 0.0
    %1479 = vmatpush.msra.mxu0 0.0
    %1480 = vmatpush.msra.mxu0 0.0
    %1481 = vmatpush.msra.mxu0 0.0
    %1482 = vmatpush.msra.mxu0 0.0
    %1483 = vmatpush.msra.mxu0 0.0
    %1484 = vmatpush.msra.mxu0 0.0
    %1485 = vmatpush.msra.mxu0 %v1473
    %1486 = vmatpush.msra.mxu0 %v1472
    %1487 = vmatpush.msra.mxu0 %v1471
    %1488 = vmatpush.msra.mxu0 %v1470
    %1489 = vmatpush.msra.mxu0 %v1469
    %1490 = vmatpush.msra.mxu0 %v1468
    %1491 = vmatpush.msra.mxu0 %v1467
    %1492 = vmatpush.msra.mxu0 %v1466
    %1493 = vmatmul.f32.gmra.mxu0 %v1475
    %v1494 = vpop.f32.mrf.mxu0
    %v1495 = vadd.f32 0.0, %v1494
    %1496 = vdwg.mxu0
    %v1497 = vperm.slane %v1465, 0
    %v1498 = vadd.f32 %v1497, %v1495
    %v1499 = vmax.f32 %v1498, 0.0
    %v1500 = vand.u32 2147483647, %v1498
    %v1501 = vsub.f32 0.0, %v1500
    %v1502 = vmul.f32 %v1501, 1.442695
    %v1503 = vpow.pop %v1502
    %v1504 = vadd.f32 %v1503, 1.0
    %v1505 = vlog2.pop %v1504
    %v1506 = vmul.f32 %v1505, 0.6931472
    %v1507 = vmul.f32 -0.5, %v1503
    %v1508 = vadd.f32 %v1507, 1.0
    %v1509 = vmul.f32 %v1508, %v1503
    %v1510 = vand.u32 2147483647, %v1503
    %vm1511 = vcmp.lt.f32.partialorder %v1510, 0.0004427343
    %v1512 = vsel %vm1511, %v1509, %v1506
    %v1513 = vadd.f32 %v1499, %v1512
    %v1514 = vsub.f32 %v1513, 0.6931472
    %v1515 = vadd.f32 %v1029, %v315
    %v1516 = vadd.f32 %v1030, %v316
    %v1517 = vadd.f32 %v1255, %v451
    %v1518 = vadd.f32 %v1514, %v603
    %v1519 = vld [vmem:[#allocation13 + $0x4b8] sm:$0x1]
    %v1520 = vld [vmem:[#allocation13 + $0x498] sm:$0xff]
    %v1521 = vld [vmem:[#allocation13 + $0x4a0] sm:$0xff]
    %v1522 = vld [vmem:[#allocation13 + $0x4a8] sm:$0xff]
    %v1523 = vld [vmem:[#allocation13 + $0x4b0] sm:$0xff]
    %v1525 = vsel %vm715, %v1515, 0
    %v1528 = vsel %vm715, %v1516, 0
    %1530 = vmatpush.msra.mxu0 0.0
    %1531 = vmatpush.msra.mxu0 0.0
    %1532 = vmatpush.msra.mxu0 0.0
    %1533 = vmatpush.msra.mxu0 0.0
    %1534 = vmatpush.msra.mxu0 0.0
    %1535 = vmatpush.msra.mxu0 0.0
    %1536 = vmatpush.msra.mxu0 0.0
    %1537 = vmatpush.msra.mxu0 0.0
    %1538 = vmatpush.msra.mxu0 0.0
    %1539 = vmatpush.msra.mxu0 0.0
    %1540 = vmatpush.msra.mxu0 0.0
    %1541 = vmatpush.msra.mxu0 0.0
    %1542 = vmatpush.msra.mxu0 %v1523
    %1543 = vmatpush.msra.mxu0 %v1522
    %1544 = vmatpush.msra.mxu0 %v1521
    %1545 = vmatpush.msra.mxu0 %v1520
    %1546 = vmatmul.f32.gmra.mxu0 %v1525
    %v1547 = vpop.f32.mrf.mxu0
    %v1548 = vadd.f32 0.0, %v1547
    %1549 = vmatmul.f32.gmra.mxu0 %v1528
    %v1550 = vpop.f32.mrf.mxu0
    %v1551 = vadd.f32 0.0, %v1550
    %1552 = vdwg.mxu0
    %v1553 = vperm.slane %v1519, 0
    %v1554 = vadd.f32 %v1553, %v1548
    %v1555 = vadd.f32 %v1553, %v1551
    %v1556 = vmax.f32 %v1554, 0.0
    %v1557 = vmax.f32 %v1555, 0.0
    %v1558 = vand.u32 2147483647, %v1554
    %v1559 = vand.u32 2147483647, %v1555
    %v1560 = vsub.f32 0.0, %v1558
    %v1561 = vsub.f32 0.0, %v1559
    %v1562 = vmul.f32 %v1560, 1.442695
    %v1563 = vpow.pop %v1562
    %v1564 = vmul.f32 %v1561, 1.442695
    %v1565 = vpow.pop %v1564
    %v1566 = vadd.f32 %v1563, 1.0
    %v1567 = vlog2.pop %v1566
    %v1568 = vmul.f32 %v1567, 0.6931472
    %v1569 = vmul.f32 -0.5, %v1563
    %v1570 = vadd.f32 %v1569, 1.0
    %v1571 = vmul.f32 %v1570, %v1563
    %v1572 = vand.u32 2147483647, %v1563
    %vm1573 = vcmp.lt.f32.partialorder %v1572, 0.0004427343
    %v1574 = vsel %vm1573, %v1571, %v1568
    %v1575 = vadd.f32 %v1565, 1.0
    %v1576 = vlog2.pop %v1575
    %v1577 = vmul.f32 %v1576, 0.6931472
    %v1578 = vmul.f32 -0.5, %v1565
    %v1579 = vadd.f32 %v1578, 1.0
    %v1580 = vmul.f32 %v1579, %v1565
    %v1581 = vand.u32 2147483647, %v1565
    %vm1582 = vcmp.lt.f32.partialorder %v1581, 0.0004427343
    %v1583 = vsel %vm1582, %v1580, %v1577
    %v1584 = vadd.f32 %v1556, %v1574
    %v1585 = vadd.f32 %v1557, %v1583
    %v1586 = vsub.f32 %v1584, 0.6931472
    %v1587 = vsub.f32 %v1585, 0.6931472
    %v1588 = vld [vmem:[#allocation13 + $0x500] sm:$0x1]
    %v1589 = vld [vmem:[#allocation13 + $0x4c0] sm:$0xff]
    %v1590 = vld [vmem:[#allocation13 + $0x4c8] sm:$0xff]
    %v1591 = vld [vmem:[#allocation13 + $0x4d0] sm:$0xff]
    %v1592 = vld [vmem:[#allocation13 + $0x4d8] sm:$0xff]
    %v1593 = vld [vmem:[#allocation13 + $0x4e0] sm:$0xff]
    %v1594 = vld [vmem:[#allocation13 + $0x4e8] sm:$0xff]
    %v1595 = vld [vmem:[#allocation13 + $0x4f0] sm:$0xff]
    %v1596 = vld [vmem:[#allocation13 + $0x4f8] sm:$0xff]
    %v1598 = vsel %vm252, %v1586, 0
    %v1601 = vsel %vm252, %v1587, 0
    %1603 = vmatpush.msra.mxu0 0.0
    %1604 = vmatpush.msra.mxu0 0.0
    %1605 = vmatpush.msra.mxu0 0.0
    %1606 = vmatpush.msra.mxu0 0.0
    %1607 = vmatpush.msra.mxu0 0.0
    %1608 = vmatpush.msra.mxu0 0.0
    %1609 = vmatpush.msra.mxu0 0.0
    %1610 = vmatpush.msra.mxu0 0.0
    %1611 = vmatpush.msra.mxu0 %v1596
    %1612 = vmatpush.msra.mxu0 %v1595
    %1613 = vmatpush.msra.mxu0 %v1594
    %1614 = vmatpush.msra.mxu0 %v1593
    %1615 = vmatpush.msra.mxu0 %v1592
    %1616 = vmatpush.msra.mxu0 %v1591
    %1617 = vmatpush.msra.mxu0 %v1590
    %1618 = vmatpush.msra.mxu0 %v1589
    %1619 = vmatmul.f32.gmra.mxu0 %v1598
    %v1620 = vpop.f32.mrf.mxu0
    %v1621 = vadd.f32 0.0, %v1620
    %1622 = vmatmul.f32.gmra.mxu0 %v1601
    %v1623 = vpop.f32.mrf.mxu0
    %v1624 = vadd.f32 0.0, %v1623
    %1625 = vdwg.mxu0
    %v1626 = vperm.slane %v1588, 0
    %v1627 = vadd.f32 %v1626, %v1621
    %v1628 = vadd.f32 %v1626, %v1624
    %v1629 = vmax.f32 %v1627, 0.0
    %v1630 = vmax.f32 %v1628, 0.0
    %v1631 = vand.u32 2147483647, %v1627
    %v1632 = vand.u32 2147483647, %v1628
    %v1633 = vsub.f32 0.0, %v1631
    %v1634 = vsub.f32 0.0, %v1632
    %v1635 = vmul.f32 %v1633, 1.442695
    %v1636 = vpow.pop %v1635
    %v1637 = vmul.f32 %v1634, 1.442695
    %v1638 = vpow.pop %v1637
    %v1639 = vadd.f32 %v1636, 1.0
    %v1640 = vlog2.pop %v1639
    %v1641 = vmul.f32 %v1640, 0.6931472
    %v1642 = vmul.f32 -0.5, %v1636
    %v1643 = vadd.f32 %v1642, 1.0
    %v1644 = vmul.f32 %v1643, %v1636
    %v1645 = vand.u32 2147483647, %v1636
    %vm1646 = vcmp.lt.f32.partialorder %v1645, 0.0004427343
    %v1647 = vsel %vm1646, %v1644, %v1641
    %v1648 = vadd.f32 %v1638, 1.0
    %v1649 = vlog2.pop %v1648
    %v1650 = vmul.f32 %v1649, 0.6931472
    %v1651 = vmul.f32 -0.5, %v1638
    %v1652 = vadd.f32 %v1651, 1.0
    %v1653 = vmul.f32 %v1652, %v1638
    %v1654 = vand.u32 2147483647, %v1638
    %vm1655 = vcmp.lt.f32.partialorder %v1654, 0.0004427343
    %v1656 = vsel %vm1655, %v1653, %v1650
    %v1657 = vadd.f32 %v1629, %v1647
    %v1658 = vadd.f32 %v1630, %v1656
    %v1659 = vsub.f32 %v1657, 0.6931472
    %v1660 = vsub.f32 %v1658, 0.6931472
    %v1661 = vld [vmem:[#allocation13 + $0x528] sm:$0x1]
    %v1662 = vld [vmem:[#allocation13 + $0x508] sm:$0xff]
    %v1663 = vld [vmem:[#allocation13 + $0x510] sm:$0xff]
    %v1664 = vld [vmem:[#allocation13 + $0x518] sm:$0xff]
    %v1665 = vld [vmem:[#allocation13 + $0x520] sm:$0xff]
    %v1667 = vsel %vm715, %v1517, 0
    %1669 = vmatpush.msra.mxu0 0.0
    %1670 = vmatpush.msra.mxu0 0.0
    %1671 = vmatpush.msra.mxu0 0.0
    %1672 = vmatpush.msra.mxu0 0.0
    %1673 = vmatpush.msra.mxu0 0.0
    %1674 = vmatpush.msra.mxu0 0.0
    %1675 = vmatpush.msra.mxu0 0.0
    %1676 = vmatpush.msra.mxu0 0.0
    %1677 = vmatpush.msra.mxu0 0.0
    %1678 = vmatpush.msra.mxu0 0.0
    %1679 = vmatpush.msra.mxu0 0.0
    %1680 = vmatpush.msra.mxu0 0.0
    %1681 = vmatpush.msra.mxu0 %v1665
    %1682 = vmatpush.msra.mxu0 %v1664
    %1683 = vmatpush.msra.mxu0 %v1663
    %1684 = vmatpush.msra.mxu0 %v1662
    %1685 = vmatmul.f32.gmra.mxu0 %v1667
    %v1686 = vpop.f32.mrf.mxu0
    %v1687 = vadd.f32 0.0, %v1686
    %1688 = vdwg.mxu0
    %v1689 = vperm.slane %v1661, 0
    %v1690 = vadd.f32 %v1689, %v1687
    %v1691 = vmax.f32 %v1690, 0.0
    %v1692 = vand.u32 2147483647, %v1690
    %v1693 = vsub.f32 0.0, %v1692
    %v1694 = vmul.f32 %v1693, 1.442695
    %v1695 = vpow.pop %v1694
    %v1696 = vadd.f32 %v1695, 1.0
    %v1697 = vlog2.pop %v1696
    %v1698 = vmul.f32 %v1697, 0.6931472
    %v1699 = vmul.f32 -0.5, %v1695
    %v1700 = vadd.f32 %v1699, 1.0
    %v1701 = vmul.f32 %v1700, %v1695
    %v1702 = vand.u32 2147483647, %v1695
    %vm1703 = vcmp.lt.f32.partialorder %v1702, 0.0004427343
    %v1704 = vsel %vm1703, %v1701, %v1698
    %v1705 = vadd.f32 %v1691, %v1704
    %v1706 = vsub.f32 %v1705, 0.6931472
    %v1707 = vld [vmem:[#allocation13 + $0x570] sm:$0x1]
    %v1708 = vld [vmem:[#allocation13 + $0x530] sm:$0xff]
    %v1709 = vld [vmem:[#allocation13 + $0x538] sm:$0xff]
    %v1710 = vld [vmem:[#allocation13 + $0x540] sm:$0xff]
    %v1711 = vld [vmem:[#allocation13 + $0x548] sm:$0xff]
    %v1712 = vld [vmem:[#allocation13 + $0x550] sm:$0xff]
    %v1713 = vld [vmem:[#allocation13 + $0x558] sm:$0xff]
    %v1714 = vld [vmem:[#allocation13 + $0x560] sm:$0xff]
    %v1715 = vld [vmem:[#allocation13 + $0x568] sm:$0xff]
    %v1717 = vsel %vm252, %v1706, 0
    %1719 = vmatpush.msra.mxu0 0.0
    %1720 = vmatpush.msra.mxu0 0.0
    %1721 = vmatpush.msra.mxu0 0.0
    %1722 = vmatpush.msra.mxu0 0.0
    %1723 = vmatpush.msra.mxu0 0.0
    %1724 = vmatpush.msra.mxu0 0.0
    %1725 = vmatpush.msra.mxu0 0.0
    %1726 = vmatpush.msra.mxu0 0.0
    %1727 = vmatpush.msra.mxu0 %v1715
    %1728 = vmatpush.msra.mxu0 %v1714
    %1729 = vmatpush.msra.mxu0 %v1713
    %1730 = vmatpush.msra.mxu0 %v1712
    %1731 = vmatpush.msra.mxu0 %v1711
    %1732 = vmatpush.msra.mxu0 %v1710
    %1733 = vmatpush.msra.mxu0 %v1709
    %1734 = vmatpush.msra.mxu0 %v1708
    %1735 = vmatmul.f32.gmra.mxu0 %v1717
    %v1736 = vpop.f32.mrf.mxu0
    %v1737 = vadd.f32 0.0, %v1736
    %1738 = vdwg.mxu0
    %v1739 = vperm.slane %v1707, 0
    %v1740 = vadd.f32 %v1739, %v1737
    %v1741 = vmax.f32 %v1740, 0.0
    %v1742 = vand.u32 2147483647, %v1740
    %v1743 = vsub.f32 0.0, %v1742
    %v1744 = vmul.f32 %v1743, 1.442695
    %v1745 = vpow.pop %v1744
    %v1746 = vadd.f32 %v1745, 1.0
    %v1747 = vlog2.pop %v1746
    %v1748 = vmul.f32 %v1747, 0.6931472
    %v1749 = vmul.f32 -0.5, %v1745
    %v1750 = vadd.f32 %v1749, 1.0
    %v1751 = vmul.f32 %v1750, %v1745
    %v1752 = vand.u32 2147483647, %v1745
    %vm1753 = vcmp.lt.f32.partialorder %v1752, 0.0004427343
    %v1754 = vsel %vm1753, %v1751, %v1748
    %v1755 = vadd.f32 %v1741, %v1754
    %v1756 = vsub.f32 %v1755, 0.6931472
    %v1757 = vld [vmem:[#allocation13 + $0x598] sm:$0x1]
    %v1758 = vld [vmem:[#allocation13 + $0x578] sm:$0xff]
    %v1759 = vld [vmem:[#allocation13 + $0x580] sm:$0xff]
    %v1760 = vld [vmem:[#allocation13 + $0x588] sm:$0xff]
    %v1761 = vld [vmem:[#allocation13 + $0x590] sm:$0xff]
    %v1763 = vsel %vm715, %v1518, 0
    %1765 = vmatpush.msra.mxu0 0.0
    %1766 = vmatpush.msra.mxu0 0.0
    %1767 = vmatpush.msra.mxu0 0.0
    %1768 = vmatpush.msra.mxu0 0.0
    %1769 = vmatpush.msra.mxu0 0.0
    %1770 = vmatpush.msra.mxu0 0.0
    %1771 = vmatpush.msra.mxu0 0.0
    %1772 = vmatpush.msra.mxu0 0.0
    %1773 = vmatpush.msra.mxu0 0.0
    %1774 = vmatpush.msra.mxu0 0.0
    %1775 = vmatpush.msra.mxu0 0.0
    %1776 = vmatpush.msra.mxu0 0.0
    %1777 = vmatpush.msra.mxu0 %v1761
    %1778 = vmatpush.msra.mxu0 %v1760
    %1779 = vmatpush.msra.mxu0 %v1759
    %1780 = vmatpush.msra.mxu0 %v1758
    %1781 = vmatmul.f32.gmra.mxu0 %v1763
    %v1782 = vpop.f32.mrf.mxu0
    %v1783 = vadd.f32 0.0, %v1782
    %1784 = vdwg.mxu0
    %v1785 = vperm.slane %v1757, 0
    %v1786 = vadd.f32 %v1785, %v1783
    %v1787 = vmax.f32 %v1786, 0.0
    %v1788 = vand.u32 2147483647, %v1786
    %v1789 = vsub.f32 0.0, %v1788
    %v1790 = vmul.f32 %v1789, 1.442695
    %v1791 = vpow.pop %v1790
    %v1792 = vadd.f32 %v1791, 1.0
    %v1793 = vlog2.pop %v1792
    %v1794 = vmul.f32 %v1793, 0.6931472
    %v1795 = vmul.f32 -0.5, %v1791
    %v1796 = vadd.f32 %v1795, 1.0
    %v1797 = vmul.f32 %v1796, %v1791
    %v1798 = vand.u32 2147483647, %v1791
    %vm1799 = vcmp.lt.f32.partialorder %v1798, 0.0004427343
    %v1800 = vsel %vm1799, %v1797, %v1794
    %v1801 = vadd.f32 %v1787, %v1800
    %v1802 = vsub.f32 %v1801, 0.6931472
    %v1803 = vld [vmem:[#allocation13 + $0x5e0] sm:$0x1]
    %v1804 = vld [vmem:[#allocation13 + $0x5a0] sm:$0xff]
    %v1805 = vld [vmem:[#allocation13 + $0x5a8] sm:$0xff]
    %v1806 = vld [vmem:[#allocation13 + $0x5b0] sm:$0xff]
    %v1807 = vld [vmem:[#allocation13 + $0x5b8] sm:$0xff]
    %v1808 = vld [vmem:[#allocation13 + $0x5c0] sm:$0xff]
    %v1809 = vld [vmem:[#allocation13 + $0x5c8] sm:$0xff]
    %v1810 = vld [vmem:[#allocation13 + $0x5d0] sm:$0xff]
    %v1811 = vld [vmem:[#allocation13 + $0x5d8] sm:$0xff]
    %v1813 = vsel %vm252, %v1802, 0
    %1815 = vmatpush.msra.mxu0 0.0
    %1816 = vmatpush.msra.mxu0 0.0
    %1817 = vmatpush.msra.mxu0 0.0
    %1818 = vmatpush.msra.mxu0 0.0
    %1819 = vmatpush.msra.mxu0 0.0
    %1820 = vmatpush.msra.mxu0 0.0
    %1821 = vmatpush.msra.mxu0 0.0
    %1822 = vmatpush.msra.mxu0 0.0
    %1823 = vmatpush.msra.mxu0 %v1811
    %1824 = vmatpush.msra.mxu0 %v1810
    %1825 = vmatpush.msra.mxu0 %v1809
    %1826 = vmatpush.msra.mxu0 %v1808
    %1827 = vmatpush.msra.mxu0 %v1807
    %1828 = vmatpush.msra.mxu0 %v1806
    %1829 = vmatpush.msra.mxu0 %v1805
    %1830 = vmatpush.msra.mxu0 %v1804
    %1831 = vmatmul.f32.gmra.mxu0 %v1813
    %v1832 = vpop.f32.mrf.mxu0
    %v1833 = vadd.f32 0.0, %v1832
    %1834 = vdwg.mxu0
    %v1835 = vperm.slane %v1803, 0
    %v1836 = vadd.f32 %v1835, %v1833
    %v1837 = vmax.f32 %v1836, 0.0
    %v1838 = vand.u32 2147483647, %v1836
    %v1839 = vsub.f32 0.0, %v1838
    %v1840 = vmul.f32 %v1839, 1.442695
    %v1841 = vpow.pop %v1840
    %v1842 = vadd.f32 %v1841, 1.0
    %v1843 = vlog2.pop %v1842
    %v1844 = vmul.f32 %v1843, 0.6931472
    %v1845 = vmul.f32 -0.5, %v1841
    %v1846 = vadd.f32 %v1845, 1.0
    %v1847 = vmul.f32 %v1846, %v1841
    %v1848 = vand.u32 2147483647, %v1841
    %vm1849 = vcmp.lt.f32.partialorder %v1848, 0.0004427343
    %v1850 = vsel %vm1849, %v1847, %v1844
    %v1851 = vadd.f32 %v1837, %v1850
    %v1852 = vsub.f32 %v1851, 0.6931472
    %v1854 = vsel %vm608, %v1852, 0
    %1856 = vmatpush.msra.mxu0 0.0
    %1857 = vmatpush.msra.mxu0 0.0
    %1858 = vmatpush.msra.mxu0 0.0
    %1859 = vmatpush.msra.mxu0 0.0
    %1860 = vmatpush.msra.mxu0 0.0
    %1861 = vmatpush.msra.mxu0 0.0
    %1862 = vmatpush.msra.mxu0 0.0
    %1863 = vmatpush.msra.mxu0 0.0
    %1864 = vmatpush.msra.mxu0 0.0
    %1865 = vmatpush.msra.mxu0 0.0
    %1866 = vmatpush.msra.mxu0 0.0
    %1867 = vmatpush.msra.mxu0 0.0
    %1868 = vmatpush.msra.mxu0 0.0
    %1869 = vmatpush.msra.mxu0 0.0
    %1870 = vmatpush.msra.mxu0 0.0
    %1871 = vmatpush.msra.mxu0 %v1854
    %1872 = vmatmul.f32.gmra.mxu0 %v606
    %v1873 = vpop.f32.mrf.mxu0
    %v1874 = vadd.f32 0.0, %v1873
    %1875 = vdwg.mxu0
    %1876 = vmatpush.msra.mxu0 0.0
    %1877 = vmatpush.msra.mxu0 0.0
    %1878 = vmatpush.msra.mxu0 0.0
    %1879 = vmatpush.msra.mxu0 0.0
    %1880 = vmatpush.msra.mxu0 0.0
    %1881 = vmatpush.msra.mxu0 0.0
    %1882 = vmatpush.msra.mxu0 0.0
    %1883 = vmatpush.msra.mxu0 0.0
    %1884 = vmatpush.msra.mxu0 0.0
    %1885 = vmatpush.msra.mxu0 0.0
    %1886 = vmatpush.msra.mxu0 0.0
    %1887 = vmatpush.msra.mxu0 0.0
    %1888 = vmatpush.msra.mxu0 0.0
    %1889 = vmatpush.msra.mxu0 0.0
    %1890 = vmatpush.msra.mxu0 0.0
    %1891 = vmatpush.msra.mxu0 %v1854
    %1892 = vmatmul.f32.gmra.mxu0 %v633
    %v1893 = vpop.f32.mrf.mxu0
    %v1894 = vadd.f32 0.0, %v1893
    %1895 = vmatmul.f32.gmra.mxu0 %v636
    %v1896 = vpop.f32.mrf.mxu0
    %v1897 = vadd.f32 0.0, %v1896
    %1898 = vdwg.mxu0
    %v1899 = vpack.c.bf16 %v1756, %v1756
    %v1901 = vsel %vm670, %v1899, 0
    %1903 = vmatpush.bf16.msra.mxu0 0
    %1904 = vmatpush.bf16.msra.mxu0 0
    %1905 = vmatpush.bf16.msra.mxu0 0
    %1906 = vmatpush.bf16.msra.mxu0 0
    %1907 = vmatpush.bf16.msra.mxu0 0
    %1908 = vmatpush.bf16.msra.mxu0 0
    %1909 = vmatpush.bf16.msra.mxu0 0
    %1910 = vmatpush.bf16.msra.mxu0 %v1901
    %1911 = vmatmul.bf16.gmra.mxu0 %v668
    %v1912 = vpop.f32.mrf.mxu0
    %v1913 = vadd.f32 0.0, %v1912
    %v1914 = vpop.f32.mrf.mxu0
    %v1915 = vadd.f32 0.0, %v1914
    %1916 = vdwg.mxu0
    %1917 = vmatpush.bf16.msra.mxu0 0
    %1918 = vmatpush.bf16.msra.mxu0 0
    %1919 = vmatpush.bf16.msra.mxu0 0
    %1920 = vmatpush.bf16.msra.mxu0 0
    %1921 = vmatpush.bf16.msra.mxu0 0
    %1922 = vmatpush.bf16.msra.mxu0 0
    %1923 = vmatpush.bf16.msra.mxu0 0
    %1924 = vmatpush.bf16.msra.mxu0 %v1901
    %1925 = vmatmul.bf16.gmra.mxu0 %v694
    %v1926 = vpop.f32.mrf.mxu0
    %v1927 = vadd.f32 0.0, %v1926
    %v1928 = vpop.f32.mrf.mxu0
    %v1929 = vadd.f32 0.0, %v1928
    %1930 = vdwg.mxu0
    %v1931 = vld [vmem:[#allocation13 + $0x668] sm:$0x1]
    %v1932 = vld [vmem:[#allocation13 + $0x5e8] sm:$0xff]
    %v1933 = vld [vmem:[#allocation13 + $0x5f0] sm:$0xff]
    %v1934 = vld [vmem:[#allocation13 + $0x5f8] sm:$0xff]
    %v1935 = vld [vmem:[#allocation13 + $0x600] sm:$0xff]
    %v1937 = vsel %vm715, %v1913, 0
    %v1940 = vsel %vm715, %v1915, 0
    %1942 = vmatpush.msra.mxu0 0.0
    %1943 = vmatpush.msra.mxu0 0.0
    %1944 = vmatpush.msra.mxu0 0.0
    %1945 = vmatpush.msra.mxu0 0.0
    %1946 = vmatpush.msra.mxu0 0.0
    %1947 = vmatpush.msra.mxu0 0.0
    %1948 = vmatpush.msra.mxu0 0.0
    %1949 = vmatpush.msra.mxu0 0.0
    %1950 = vmatpush.msra.mxu0 0.0
    %1951 = vmatpush.msra.mxu0 0.0
    %1952 = vmatpush.msra.mxu0 0.0
    %1953 = vmatpush.msra.mxu0 0.0
    %1954 = vmatpush.msra.mxu0 %v1935
    %1955 = vmatpush.msra.mxu0 %v1934
    %1956 = vmatpush.msra.mxu0 %v1933
    %1957 = vmatpush.msra.mxu0 %v1932
    %1958 = vmatmul.f32.gmra.mxu0 %v1937
    %v1959 = vpop.f32.mrf.mxu0
    %v1960 = vadd.f32 0.0, %v1959
    %1961 = vmatmul.f32.gmra.mxu0 %v1940
    %v1962 = vpop.f32.mrf.mxu0
    %v1963 = vadd.f32 0.0, %v1962
    %1964 = vdwg.mxu0
    %v1965 = vperm.slane %v1931, 0
    %v1966 = vadd.f32 %v1965, %v1960
    %v1967 = vadd.f32 %v1965, %v1963
    %v1968 = vld [vmem:[#allocation13 + $0x608] sm:$0xff]
    %v1969 = vld [vmem:[#allocation13 + $0x610] sm:$0xff]
    %v1970 = vld [vmem:[#allocation13 + $0x618] sm:$0xff]
    %v1971 = vld [vmem:[#allocation13 + $0x620] sm:$0xff]
    %v1973 = vsel %vm715, %v1927, 0
    %v1976 = vsel %vm715, %v1929, 0
    %1978 = vmatpush.msra.mxu0 0.0
    %1979 = vmatpush.msra.mxu0 0.0
    %1980 = vmatpush.msra.mxu0 0.0
    %1981 = vmatpush.msra.mxu0 0.0
    %1982 = vmatpush.msra.mxu0 0.0
    %1983 = vmatpush.msra.mxu0 0.0
    %1984 = vmatpush.msra.mxu0 0.0
    %1985 = vmatpush.msra.mxu0 0.0
    %1986 = vmatpush.msra.mxu0 0.0
    %1987 = vmatpush.msra.mxu0 0.0
    %1988 = vmatpush.msra.mxu0 0.0
    %1989 = vmatpush.msra.mxu0 0.0
    %1990 = vmatpush.msra.mxu0 %v1971
    %1991 = vmatpush.msra.mxu0 %v1970
    %1992 = vmatpush.msra.mxu0 %v1969
    %1993 = vmatpush.msra.mxu0 %v1968
    %1994 = vmatmul.f32.gmra.mxu0 %v1973
    %v1995 = vpop.f32.mrf.mxu0
    %v1996 = vadd.f32 0.0, %v1995
    %1997 = vmatmul.f32.gmra.mxu0 %v1976
    %v1998 = vpop.f32.mrf.mxu0
    %v1999 = vadd.f32 0.0, %v1998
    %2000 = vdwg.mxu0
    %v2001 = vadd.f32 %v1966, %v1996
    %v2002 = vadd.f32 %v1967, %v1999
    %v2003 = vld [vmem:[#allocation13 + $0x628] sm:$0xff]
    %v2004 = vld [vmem:[#allocation13 + $0x630] sm:$0xff]
    %v2005 = vld [vmem:[#allocation13 + $0x638] sm:$0xff]
    %v2006 = vld [vmem:[#allocation13 + $0x640] sm:$0xff]
    %v2008 = vsel %vm715, %v1659, 0
    %v2011 = vsel %vm715, %v1660, 0
    %2013 = vmatpush.msra.mxu0 0.0
    %2014 = vmatpush.msra.mxu0 0.0
    %2015 = vmatpush.msra.mxu0 0.0
    %2016 = vmatpush.msra.mxu0 0.0
    %2017 = vmatpush.msra.mxu0 0.0
    %2018 = vmatpush.msra.mxu0 0.0
    %2019 = vmatpush.msra.mxu0 0.0
    %2020 = vmatpush.msra.mxu0 0.0
    %2021 = vmatpush.msra.mxu0 0.0
    %2022 = vmatpush.msra.mxu0 0.0
    %2023 = vmatpush.msra.mxu0 0.0
    %2024 = vmatpush.msra.mxu0 0.0
    %2025 = vmatpush.msra.mxu0 %v2006
    %2026 = vmatpush.msra.mxu0 %v2005
    %2027 = vmatpush.msra.mxu0 %v2004
    %2028 = vmatpush.msra.mxu0 %v2003
    %2029 = vmatmul.f32.gmra.mxu0 %v2008
    %v2030 = vpop.f32.mrf.mxu0
    %v2031 = vadd.f32 0.0, %v2030
    %2032 = vmatmul.f32.gmra.mxu0 %v2011
    %v2033 = vpop.f32.mrf.mxu0
    %v2034 = vadd.f32 0.0, %v2033
    %2035 = vdwg.mxu0
    %v2036 = vadd.f32 %v2001, %v2031
    %v2037 = vadd.f32 %v2002, %v2034
    %v2038 = vld [vmem:[#allocation13 + $0x648] sm:$0xff]
    %v2039 = vld [vmem:[#allocation13 + $0x650] sm:$0xff]
    %v2040 = vld [vmem:[#allocation13 + $0x658] sm:$0xff]
    %v2041 = vld [vmem:[#allocation13 + $0x660] sm:$0xff]
    %v2043 = vsel %vm715, %v1894, 0
    %v2046 = vsel %vm715, %v1897, 0
    %2048 = vmatpush.msra.mxu0 0.0
    %2049 = vmatpush.msra.mxu0 0.0
    %2050 = vmatpush.msra.mxu0 0.0
    %2051 = vmatpush.msra.mxu0 0.0
    %2052 = vmatpush.msra.mxu0 0.0
    %2053 = vmatpush.msra.mxu0 0.0
    %2054 = vmatpush.msra.mxu0 0.0
    %2055 = vmatpush.msra.mxu0 0.0
    %2056 = vmatpush.msra.mxu0 0.0
    %2057 = vmatpush.msra.mxu0 0.0
    %2058 = vmatpush.msra.mxu0 0.0
    %2059 = vmatpush.msra.mxu0 0.0
    %2060 = vmatpush.msra.mxu0 %v2041
    %2061 = vmatpush.msra.mxu0 %v2040
    %2062 = vmatpush.msra.mxu0 %v2039
    %2063 = vmatpush.msra.mxu0 %v2038
    %2064 = vmatmul.f32.gmra.mxu0 %v2043
    %v2065 = vpop.f32.mrf.mxu0
    %v2066 = vadd.f32 0.0, %v2065
    %2067 = vmatmul.f32.gmra.mxu0 %v2046
    %v2068 = vpop.f32.mrf.mxu0
    %v2069 = vadd.f32 0.0, %v2068
    %2070 = vdwg.mxu0
    %v2071 = vadd.f32 %v2036, %v2066
    %v2072 = vadd.f32 %v2037, %v2069
    %v2073 = vmax.f32 %v2071, 0.0
    %v2074 = vmax.f32 %v2072, 0.0
    %v2075 = vand.u32 2147483647, %v2071
    %v2076 = vand.u32 2147483647, %v2072
    %v2077 = vsub.f32 0.0, %v2075
    %v2078 = vsub.f32 0.0, %v2076
    %v2079 = vmul.f32 %v2077, 1.442695
    %v2080 = vpow.pop %v2079
    %v2081 = vmul.f32 %v2078, 1.442695
    %v2082 = vpow.pop %v2081
    %v2083 = vadd.f32 %v2080, 1.0
    %v2084 = vlog2.pop %v2083
    %v2085 = vmul.f32 %v2084, 0.6931472
    %v2086 = vmul.f32 -0.5, %v2080
    %v2087 = vadd.f32 %v2086, 1.0
    %v2088 = vmul.f32 %v2087, %v2080
    %v2089 = vand.u32 2147483647, %v2080
    %vm2090 = vcmp.lt.f32.partialorder %v2089, 0.0004427343
    %v2091 = vsel %vm2090, %v2088, %v2085
    %v2092 = vadd.f32 %v2082, 1.0
    %v2093 = vlog2.pop %v2092
    %v2094 = vmul.f32 %v2093, 0.6931472
    %v2095 = vmul.f32 -0.5, %v2082
    %v2096 = vadd.f32 %v2095, 1.0
    %v2097 = vmul.f32 %v2096, %v2082
    %v2098 = vand.u32 2147483647, %v2082
    %vm2099 = vcmp.lt.f32.partialorder %v2098, 0.0004427343
    %v2100 = vsel %vm2099, %v2097, %v2094
    %v2101 = vadd.f32 %v2073, %v2091
    %v2102 = vadd.f32 %v2074, %v2100
    %v2103 = vsub.f32 %v2101, 0.6931472
    %v2104 = vsub.f32 %v2102, 0.6931472
    %v2105 = vld [vmem:[#allocation13 + $0x6b0] sm:$0x1]
    %v2106 = vld [vmem:[#allocation13 + $0x670] sm:$0xff]
    %v2107 = vld [vmem:[#allocation13 + $0x678] sm:$0xff]
    %v2108 = vld [vmem:[#allocation13 + $0x680] sm:$0xff]
    %v2109 = vld [vmem:[#allocation13 + $0x688] sm:$0xff]
    %v2110 = vld [vmem:[#allocation13 + $0x690] sm:$0xff]
    %v2111 = vld [vmem:[#allocation13 + $0x698] sm:$0xff]
    %v2112 = vld [vmem:[#allocation13 + $0x6a0] sm:$0xff]
    %v2113 = vld [vmem:[#allocation13 + $0x6a8] sm:$0xff]
    %v2115 = vsel %vm252, %v2103, 0
    %v2118 = vsel %vm252, %v2104, 0
    %2120 = vmatpush.msra.mxu0 0.0
    %2121 = vmatpush.msra.mxu0 0.0
    %2122 = vmatpush.msra.mxu0 0.0
    %2123 = vmatpush.msra.mxu0 0.0
    %2124 = vmatpush.msra.mxu0 0.0
    %2125 = vmatpush.msra.mxu0 0.0
    %2126 = vmatpush.msra.mxu0 0.0
    %2127 = vmatpush.msra.mxu0 0.0
    %2128 = vmatpush.msra.mxu0 %v2113
    %2129 = vmatpush.msra.mxu0 %v2112
    %2130 = vmatpush.msra.mxu0 %v2111
    %2131 = vmatpush.msra.mxu0 %v2110
    %2132 = vmatpush.msra.mxu0 %v2109
    %2133 = vmatpush.msra.mxu0 %v2108
    %2134 = vmatpush.msra.mxu0 %v2107
    %2135 = vmatpush.msra.mxu0 %v2106
    %2136 = vmatmul.f32.gmra.mxu0 %v2115
    %v2137 = vpop.f32.mrf.mxu0
    %v2138 = vadd.f32 0.0, %v2137
    %2139 = vmatmul.f32.gmra.mxu0 %v2118
    %v2140 = vpop.f32.mrf.mxu0
    %v2141 = vadd.f32 0.0, %v2140
    %2142 = vdwg.mxu0
    %v2143 = vperm.slane %v2105, 0
    %v2144 = vadd.f32 %v2143, %v2138
    %v2145 = vadd.f32 %v2143, %v2141
    %v2146 = vmax.f32 %v2144, 0.0
    %v2147 = vmax.f32 %v2145, 0.0
    %v2148 = vand.u32 2147483647, %v2144
    %v2149 = vand.u32 2147483647, %v2145
    %v2150 = vsub.f32 0.0, %v2148
    %v2151 = vsub.f32 0.0, %v2149
    %v2152 = vmul.f32 %v2150, 1.442695
    %v2153 = vpow.pop %v2152
    %v2154 = vmul.f32 %v2151, 1.442695
    %v2155 = vpow.pop %v2154
    %v2156 = vadd.f32 %v2153, 1.0
    %v2157 = vlog2.pop %v2156
    %v2158 = vmul.f32 %v2157, 0.6931472
    %v2159 = vmul.f32 -0.5, %v2153
    %v2160 = vadd.f32 %v2159, 1.0
    %v2161 = vmul.f32 %v2160, %v2153
    %v2162 = vand.u32 2147483647, %v2153
    %vm2163 = vcmp.lt.f32.partialorder %v2162, 0.0004427343
    %v2164 = vsel %vm2163, %v2161, %v2158
    %v2165 = vadd.f32 %v2155, 1.0
    %v2166 = vlog2.pop %v2165
    %v2167 = vmul.f32 %v2166, 0.6931472
    %v2168 = vmul.f32 -0.5, %v2155
    %v2169 = vadd.f32 %v2168, 1.0
    %v2170 = vmul.f32 %v2169, %v2155
    %v2171 = vand.u32 2147483647, %v2155
    %vm2172 = vcmp.lt.f32.partialorder %v2171, 0.0004427343
    %v2173 = vsel %vm2172, %v2170, %v2167
    %v2174 = vadd.f32 %v2146, %v2164
    %v2175 = vadd.f32 %v2147, %v2173
    %v2176 = vsub.f32 %v2174, 0.6931472
    %v2177 = vsub.f32 %v2175, 0.6931472
    %v2178 = vld [vmem:[#allocation13 + $0x6f8] sm:$0x1]
    %v2179 = vld [vmem:[#allocation13 + $0x6b8] sm:$0xff]
    %v2180 = vld [vmem:[#allocation13 + $0x6c0] sm:$0xff]
    %v2181 = vld [vmem:[#allocation13 + $0x6c8] sm:$0xff]
    %v2182 = vld [vmem:[#allocation13 + $0x6d0] sm:$0xff]
    %v2183 = vld [vmem:[#allocation13 + $0x6d8] sm:$0xff]
    %v2184 = vld [vmem:[#allocation13 + $0x6e0] sm:$0xff]
    %v2185 = vld [vmem:[#allocation13 + $0x6e8] sm:$0xff]
    %v2186 = vld [vmem:[#allocation13 + $0x6f0] sm:$0xff]
    %v2188 = vsel %vm252, %v2176, 0
    %v2191 = vsel %vm252, %v2177, 0
    %2193 = vmatpush.msra.mxu0 0.0
    %2194 = vmatpush.msra.mxu0 0.0
    %2195 = vmatpush.msra.mxu0 0.0
    %2196 = vmatpush.msra.mxu0 0.0
    %2197 = vmatpush.msra.mxu0 0.0
    %2198 = vmatpush.msra.mxu0 0.0
    %2199 = vmatpush.msra.mxu0 0.0
    %2200 = vmatpush.msra.mxu0 0.0
    %2201 = vmatpush.msra.mxu0 %v2186
    %2202 = vmatpush.msra.mxu0 %v2185
    %2203 = vmatpush.msra.mxu0 %v2184
    %2204 = vmatpush.msra.mxu0 %v2183
    %2205 = vmatpush.msra.mxu0 %v2182
    %2206 = vmatpush.msra.mxu0 %v2181
    %2207 = vmatpush.msra.mxu0 %v2180
    %2208 = vmatpush.msra.mxu0 %v2179
    %2209 = vmatmul.f32.gmra.mxu0 %v2188
    %v2210 = vpop.f32.mrf.mxu0
    %v2211 = vadd.f32 0.0, %v2210
    %2212 = vmatmul.f32.gmra.mxu0 %v2191
    %v2213 = vpop.f32.mrf.mxu0
    %v2214 = vadd.f32 0.0, %v2213
    %2215 = vdwg.mxu0
    %v2216 = vperm.slane %v2178, 0
    %v2217 = vadd.f32 %v2216, %v2211
    %v2218 = vadd.f32 %v2216, %v2214
    %v2219 = vmax.f32 %v2217, 0.0
    %v2220 = vmax.f32 %v2218, 0.0
    %v2221 = vand.u32 2147483647, %v2217
    %v2222 = vand.u32 2147483647, %v2218
    %v2223 = vsub.f32 0.0, %v2221
    %v2224 = vsub.f32 0.0, %v2222
    %v2225 = vmul.f32 %v2223, 1.442695
    %v2226 = vpow.pop %v2225
    %v2227 = vmul.f32 %v2224, 1.442695
    %v2228 = vpow.pop %v2227
    %v2229 = vadd.f32 %v2226, 1.0
    %v2230 = vlog2.pop %v2229
    %v2231 = vmul.f32 %v2230, 0.6931472
    %v2232 = vmul.f32 -0.5, %v2226
    %v2233 = vadd.f32 %v2232, 1.0
    %v2234 = vmul.f32 %v2233, %v2226
    %v2235 = vand.u32 2147483647, %v2226
    %vm2236 = vcmp.lt.f32.partialorder %v2235, 0.0004427343
    %v2237 = vsel %vm2236, %v2234, %v2231
    %v2238 = vadd.f32 %v2228, 1.0
    %v2239 = vlog2.pop %v2238
    %v2240 = vmul.f32 %v2239, 0.6931472
    %v2241 = vmul.f32 -0.5, %v2228
    %v2242 = vadd.f32 %v2241, 1.0
    %v2243 = vmul.f32 %v2242, %v2228
    %v2244 = vand.u32 2147483647, %v2228
    %vm2245 = vcmp.lt.f32.partialorder %v2244, 0.0004427343
    %v2246 = vsel %vm2245, %v2243, %v2240
    %v2247 = vadd.f32 %v2219, %v2237
    %v2248 = vadd.f32 %v2220, %v2246
    %v2249 = vsub.f32 %v2247, 0.6931472
    %v2250 = vsub.f32 %v2248, 0.6931472
    %v2251 = vpack.c.bf16 %v2250, %v2249
    %2252 = vmatpush.bf16.msra.mxu0 0
    %2253 = vmatpush.bf16.msra.mxu0 0
    %2254 = vmatpush.bf16.msra.mxu0 0
    %2255 = vmatpush.bf16.msra.mxu0 0
    %2256 = vmatpush.bf16.msra.mxu0 0
    %2257 = vmatpush.bf16.msra.mxu0 0
    %2258 = vmatpush.bf16.msra.mxu0 0
    %2259 = vmatpush.bf16.msra.mxu0 %v2251
    %2260 = vmatmul.bf16.gmra.mxu0 %v1033
    %v2261 = vpop.f32.mrf.mxu0
    %v2262 = vadd.f32 0.0, %v2261
    %v2263 = vpop.f32.mrf.mxu0
    %2264 = vdwg.mxu0
    %v2265 = vmul.f32 %v2262, %v1051
    %v2266 = vld [vmem:[#allocation13 + $0x760] sm:$0x1]
    %v2267 = vld [vmem:[#allocation13 + $0x700] sm:$0xff]
    %v2268 = vld [vmem:[#allocation13 + $0x708] sm:$0xff]
    %v2269 = vld [vmem:[#allocation13 + $0x710] sm:$0xff]
    %v2270 = vld [vmem:[#allocation13 + $0x718] sm:$0xff]
    %v2272 = vsel %vm715, %v1756, 0
    %2274 = vmatpush.msra.mxu0 0.0
    %2275 = vmatpush.msra.mxu0 0.0
    %2276 = vmatpush.msra.mxu0 0.0
    %2277 = vmatpush.msra.mxu0 0.0
    %2278 = vmatpush.msra.mxu0 0.0
    %2279 = vmatpush.msra.mxu0 0.0
    %2280 = vmatpush.msra.mxu0 0.0
    %2281 = vmatpush.msra.mxu0 0.0
    %2282 = vmatpush.msra.mxu0 0.0
    %2283 = vmatpush.msra.mxu0 0.0
    %2284 = vmatpush.msra.mxu0 0.0
    %2285 = vmatpush.msra.mxu0 0.0
    %2286 = vmatpush.msra.mxu0 %v2270
    %2287 = vmatpush.msra.mxu0 %v2269
    %2288 = vmatpush.msra.mxu0 %v2268
    %2289 = vmatpush.msra.mxu0 %v2267
    %2290 = vmatmul.f32.gmra.mxu0 %v2272
    %v2291 = vpop.f32.mrf.mxu0
    %v2292 = vadd.f32 0.0, %v2291
    %2293 = vdwg.mxu0
    %v2294 = vperm.slane %v2266, 0
    %v2295 = vadd.f32 %v2294, %v2292
    %v2296 = vld [vmem:[#allocation13 + $0x720] sm:$0xff]
    %v2297 = vld [vmem:[#allocation13 + $0x728] sm:$0xff]
    %v2298 = vld [vmem:[#allocation13 + $0x730] sm:$0xff]
    %v2299 = vld [vmem:[#allocation13 + $0x738] sm:$0xff]
    %v2301 = vsel %vm715, %v2265, 0
    %2303 = vmatpush.msra.mxu0 0.0
    %2304 = vmatpush.msra.mxu0 0.0
    %2305 = vmatpush.msra.mxu0 0.0
    %2306 = vmatpush.msra.mxu0 0.0
    %2307 = vmatpush.msra.mxu0 0.0
    %2308 = vmatpush.msra.mxu0 0.0
    %2309 = vmatpush.msra.mxu0 0.0
    %2310 = vmatpush.msra.mxu0 0.0
    %2311 = vmatpush.msra.mxu0 0.0
    %2312 = vmatpush.msra.mxu0 0.0
    %2313 = vmatpush.msra.mxu0 0.0
    %2314 = vmatpush.msra.mxu0 0.0
    %2315 = vmatpush.msra.mxu0 %v2299
    %2316 = vmatpush.msra.mxu0 %v2298
    %2317 = vmatpush.msra.mxu0 %v2297
    %2318 = vmatpush.msra.mxu0 %v2296
    %2319 = vmatmul.f32.gmra.mxu0 %v2301
    %v2320 = vpop.f32.mrf.mxu0
    %v2321 = vadd.f32 0.0, %v2320
    %2322 = vdwg.mxu0
    %v2323 = vadd.f32 %v2295, %v2321
    %v2324 = vld [vmem:[#allocation13 + $0x740] sm:$0xff]
    %v2325 = vld [vmem:[#allocation13 + $0x748] sm:$0xff]
    %v2326 = vld [vmem:[#allocation13 + $0x750] sm:$0xff]
    %v2327 = vld [vmem:[#allocation13 + $0x758] sm:$0xff]
    %v2329 = vsel %vm715, %v1874, 0
    %2331 = vmatpush.msra.mxu0 0.0
    %2332 = vmatpush.msra.mxu0 0.0
    %2333 = vmatpush.msra.mxu0 0.0
    %2334 = vmatpush.msra.mxu0 0.0
    %2335 = vmatpush.msra.mxu0 0.0
    %2336 = vmatpush.msra.mxu0 0.0
    %2337 = vmatpush.msra.mxu0 0.0
    %2338 = vmatpush.msra.mxu0 0.0
    %2339 = vmatpush.msra.mxu0 0.0
    %2340 = vmatpush.msra.mxu0 0.0
    %2341 = vmatpush.msra.mxu0 0.0
    %2342 = vmatpush.msra.mxu0 0.0
    %2343 = vmatpush.msra.mxu0 %v2327
    %2344 = vmatpush.msra.mxu0 %v2326
    %2345 = vmatpush.msra.mxu0 %v2325
    %2346 = vmatpush.msra.mxu0 %v2324
    %2347 = vmatmul.f32.gmra.mxu0 %v2329
    %v2348 = vpop.f32.mrf.mxu0
    %v2349 = vadd.f32 0.0, %v2348
    %2350 = vdwg.mxu0
    %v2351 = vadd.f32 %v2323, %v2349
    %v2352 = vmax.f32 %v2351, 0.0
    %v2353 = vand.u32 2147483647, %v2351
    %v2354 = vsub.f32 0.0, %v2353
    %v2355 = vmul.f32 %v2354, 1.442695
    %v2356 = vpow.pop %v2355
    %v2357 = vadd.f32 %v2356, 1.0
    %v2358 = vlog2.pop %v2357
    %v2359 = vmul.f32 %v2358, 0.6931472
    %v2360 = vmul.f32 -0.5, %v2356
    %v2361 = vadd.f32 %v2360, 1.0
    %v2362 = vmul.f32 %v2361, %v2356
    %v2363 = vand.u32 2147483647, %v2356
    %vm2364 = vcmp.lt.f32.partialorder %v2363, 0.0004427343
    %v2365 = vsel %vm2364, %v2362, %v2359
    %v2366 = vadd.f32 %v2352, %v2365
    %v2367 = vsub.f32 %v2366, 0.6931472
    %v2368 = vld [vmem:[#allocation13 + $0x7a8] sm:$0x1]
    %v2369 = vld [vmem:[#allocation13 + $0x768] sm:$0xff]
    %v2370 = vld [vmem:[#allocation13 + $0x770] sm:$0xff]
    %v2371 = vld [vmem:[#allocation13 + $0x778] sm:$0xff]
    %v2372 = vld [vmem:[#allocation13 + $0x780] sm:$0xff]
    %v2373 = vld [vmem:[#allocation13 + $0x788] sm:$0xff]
    %v2374 = vld [vmem:[#allocation13 + $0x790] sm:$0xff]
    %v2375 = vld [vmem:[#allocation13 + $0x798] sm:$0xff]
    %v2376 = vld [vmem:[#allocation13 + $0x7a0] sm:$0xff]
    %v2378 = vsel %vm252, %v2367, 0
    %2380 = vmatpush.msra.mxu0 0.0
    %2381 = vmatpush.msra.mxu0 0.0
    %2382 = vmatpush.msra.mxu0 0.0
    %2383 = vmatpush.msra.mxu0 0.0
    %2384 = vmatpush.msra.mxu0 0.0
    %2385 = vmatpush.msra.mxu0 0.0
    %2386 = vmatpush.msra.mxu0 0.0
    %2387 = vmatpush.msra.mxu0 0.0
    %2388 = vmatpush.msra.mxu0 %v2376
    %2389 = vmatpush.msra.mxu0 %v2375
    %2390 = vmatpush.msra.mxu0 %v2374
    %2391 = vmatpush.msra.mxu0 %v2373
    %2392 = vmatpush.msra.mxu0 %v2372
    %2393 = vmatpush.msra.mxu0 %v2371
    %2394 = vmatpush.msra.mxu0 %v2370
    %2395 = vmatpush.msra.mxu0 %v2369
    %2396 = vmatmul.f32.gmra.mxu0 %v2378
    %v2397 = vpop.f32.mrf.mxu0
    %v2398 = vadd.f32 0.0, %v2397
    %2399 = vdwg.mxu0
    %v2400 = vperm.slane %v2368, 0
    %v2401 = vadd.f32 %v2400, %v2398
    %v2402 = vmax.f32 %v2401, 0.0
    %v2403 = vand.u32 2147483647, %v2401
    %v2404 = vsub.f32 0.0, %v2403
    %v2405 = vmul.f32 %v2404, 1.442695
    %v2406 = vpow.pop %v2405
    %v2407 = vadd.f32 %v2406, 1.0
    %v2408 = vlog2.pop %v2407
    %v2409 = vmul.f32 %v2408, 0.6931472
    %v2410 = vmul.f32 -0.5, %v2406
    %v2411 = vadd.f32 %v2410, 1.0
    %v2412 = vmul.f32 %v2411, %v2406
    %v2413 = vand.u32 2147483647, %v2406
    %vm2414 = vcmp.lt.f32.partialorder %v2413, 0.0004427343
    %v2415 = vsel %vm2414, %v2412, %v2409
    %v2416 = vadd.f32 %v2402, %v2415
    %v2417 = vsub.f32 %v2416, 0.6931472
    %v2418 = vld [vmem:[#allocation13 + $0x7f0] sm:$0x1]
    %v2419 = vld [vmem:[#allocation13 + $0x7b0] sm:$0xff]
    %v2420 = vld [vmem:[#allocation13 + $0x7b8] sm:$0xff]
    %v2421 = vld [vmem:[#allocation13 + $0x7c0] sm:$0xff]
    %v2422 = vld [vmem:[#allocation13 + $0x7c8] sm:$0xff]
    %v2423 = vld [vmem:[#allocation13 + $0x7d0] sm:$0xff]
    %v2424 = vld [vmem:[#allocation13 + $0x7d8] sm:$0xff]
    %v2425 = vld [vmem:[#allocation13 + $0x7e0] sm:$0xff]
    %v2426 = vld [vmem:[#allocation13 + $0x7e8] sm:$0xff]
    %v2428 = vsel %vm252, %v2417, 0
    %2430 = vmatpush.msra.mxu0 0.0
    %2431 = vmatpush.msra.mxu0 0.0
    %2432 = vmatpush.msra.mxu0 0.0
    %2433 = vmatpush.msra.mxu0 0.0
    %2434 = vmatpush.msra.mxu0 0.0
    %2435 = vmatpush.msra.mxu0 0.0
    %2436 = vmatpush.msra.mxu0 0.0
    %2437 = vmatpush.msra.mxu0 0.0
    %2438 = vmatpush.msra.mxu0 %v2426
    %2439 = vmatpush.msra.mxu0 %v2425
    %2440 = vmatpush.msra.mxu0 %v2424
    %2441 = vmatpush.msra.mxu0 %v2423
    %2442 = vmatpush.msra.mxu0 %v2422
    %2443 = vmatpush.msra.mxu0 %v2421
    %2444 = vmatpush.msra.mxu0 %v2420
    %2445 = vmatpush.msra.mxu0 %v2419
    %2446 = vmatmul.f32.gmra.mxu0 %v2428
    %v2447 = vpop.f32.mrf.mxu0
    %v2448 = vadd.f32 0.0, %v2447
    %2449 = vdwg.mxu0
    %v2450 = vperm.slane %v2418, 0
    %v2451 = vadd.f32 %v2450, %v2448
    %v2452 = vmax.f32 %v2451, 0.0
    %v2453 = vand.u32 2147483647, %v2451
    %v2454 = vsub.f32 0.0, %v2453
    %v2455 = vmul.f32 %v2454, 1.442695
    %v2456 = vpow.pop %v2455
    %v2457 = vadd.f32 %v2456, 1.0
    %v2458 = vlog2.pop %v2457
    %v2459 = vmul.f32 %v2458, 0.6931472
    %v2460 = vmul.f32 -0.5, %v2456
    %v2461 = vadd.f32 %v2460, 1.0
    %v2462 = vmul.f32 %v2461, %v2456
    %v2463 = vand.u32 2147483647, %v2456
    %vm2464 = vcmp.lt.f32.partialorder %v2463, 0.0004427343
    %v2465 = vsel %vm2464, %v2462, %v2459
    %v2466 = vadd.f32 %v2452, %v2465
    %v2467 = vsub.f32 %v2466, 0.6931472
    %2468 = vmatpush.msra.mxu0 0.0
    %2469 = vmatpush.msra.mxu0 0.0
    %2470 = vmatpush.msra.mxu0 0.0
    %2471 = vmatpush.msra.mxu0 0.0
    %2472 = vmatpush.msra.mxu0 0.0
    %2473 = vmatpush.msra.mxu0 0.0
    %2474 = vmatpush.msra.mxu0 0.0
    %2475 = vmatpush.msra.mxu0 0.0
    %2476 = vmatpush.msra.mxu0 0.0
    %2477 = vmatpush.msra.mxu0 0.0
    %2478 = vmatpush.msra.mxu0 0.0
    %2479 = vmatpush.msra.mxu0 0.0
    %2480 = vmatpush.msra.mxu0 0.0
    %2481 = vmatpush.msra.mxu0 0.0
    %2482 = vmatpush.msra.mxu0 %v2250
    %2483 = vmatpush.msra.mxu0 %v2249
    %2484 = vmatmul.f32.gmra.mxu0 %v1257
    %v2485 = vpop.f32.mrf.mxu0
    %v2486 = vadd.f32 0.0, %v2485
    %2487 = vdwg.mxu0
    %v2488 = vmul.f32 %v2486, %v1282
    %2489 = vmatpush.msra.mxu0 0.0
    %2490 = vmatpush.msra.mxu0 0.0
    %2491 = vmatpush.msra.mxu0 0.0
    %2492 = vmatpush.msra.mxu0 0.0
    %2493 = vmatpush.msra.mxu0 0.0
    %2494 = vmatpush.msra.mxu0 0.0
    %2495 = vmatpush.msra.mxu0 0.0
    %2496 = vmatpush.msra.mxu0 0.0
    %2497 = vmatpush.msra.mxu0 0.0
    %2498 = vmatpush.msra.mxu0 0.0
    %2499 = vmatpush.msra.mxu0 0.0
    %2500 = vmatpush.msra.mxu0 0.0
    %2501 = vmatpush.msra.mxu0 0.0
    %2502 = vmatpush.msra.mxu0 0.0
    %2503 = vmatpush.msra.mxu0 0.0
    %2504 = vmatpush.msra.mxu0 %v2467
    %2505 = vmatmul.f32.gmra.mxu0 %v1286
    %v2506 = vpop.f32.mrf.mxu0
    %v2507 = vadd.f32 0.0, %v2506
    %2508 = vdwg.mxu0
    %v2509 = vmul.f32 %v2507, %v1311
    %v2510 = vld [vmem:[#allocation13 + $0x858] sm:$0x1]
    %v2511 = vld [vmem:[#allocation13 + $0x7f8] sm:$0xff]
    %v2512 = vld [vmem:[#allocation13 + $0x800] sm:$0xff]
    %v2513 = vld [vmem:[#allocation13 + $0x808] sm:$0xff]
    %v2514 = vld [vmem:[#allocation13 + $0x810] sm:$0xff]
    %v2515 = vsel %vm715, %v1852, 0
    %2517 = vmatpush.msra.mxu0 0.0
    %2518 = vmatpush.msra.mxu0 0.0
    %2519 = vmatpush.msra.mxu0 0.0
    %2520 = vmatpush.msra.mxu0 0.0
    %2521 = vmatpush.msra.mxu0 0.0
    %2522 = vmatpush.msra.mxu0 0.0
    %2523 = vmatpush.msra.mxu0 0.0
    %2524 = vmatpush.msra.mxu0 0.0
    %2525 = vmatpush.msra.mxu0 0.0
    %2526 = vmatpush.msra.mxu0 0.0
    %2527 = vmatpush.msra.mxu0 0.0
    %2528 = vmatpush.msra.mxu0 0.0
    %2529 = vmatpush.msra.mxu0 %v2514
    %2530 = vmatpush.msra.mxu0 %v2513
    %2531 = vmatpush.msra.mxu0 %v2512
    %2532 = vmatpush.msra.mxu0 %v2511
    %2533 = vmatmul.f32.gmra.mxu0 %v2515
    %v2534 = vpop.f32.mrf.mxu0
    %v2535 = vadd.f32 0.0, %v2534
    %2536 = vdwg.mxu0
    %v2537 = vperm.slane %v2510, 0
    %v2538 = vadd.f32 %v2537, %v2535
    %v2539 = vld [vmem:[#allocation13 + $0x818] sm:$0xff]
    %v2540 = vld [vmem:[#allocation13 + $0x820] sm:$0xff]
    %v2541 = vld [vmem:[#allocation13 + $0x828] sm:$0xff]
    %v2542 = vld [vmem:[#allocation13 + $0x830] sm:$0xff]
    %v2544 = vsel %vm715, %v2488, 0
    %2546 = vmatpush.msra.mxu0 0.0
    %2547 = vmatpush.msra.mxu0 0.0
    %2548 = vmatpush.msra.mxu0 0.0
    %2549 = vmatpush.msra.mxu0 0.0
    %2550 = vmatpush.msra.mxu0 0.0
    %2551 = vmatpush.msra.mxu0 0.0
    %2552 = vmatpush.msra.mxu0 0.0
    %2553 = vmatpush.msra.mxu0 0.0
    %2554 = vmatpush.msra.mxu0 0.0
    %2555 = vmatpush.msra.mxu0 0.0
    %2556 = vmatpush.msra.mxu0 0.0
    %2557 = vmatpush.msra.mxu0 0.0
    %2558 = vmatpush.msra.mxu0 %v2542
    %2559 = vmatpush.msra.mxu0 %v2541
    %2560 = vmatpush.msra.mxu0 %v2540
    %2561 = vmatpush.msra.mxu0 %v2539
    %2562 = vmatmul.f32.gmra.mxu0 %v2544
    %v2563 = vpop.f32.mrf.mxu0
    %v2564 = vadd.f32 0.0, %v2563
    %2565 = vdwg.mxu0
    %v2566 = vadd.f32 %v2538, %v2564
    %v2567 = vld [vmem:[#allocation13 + $0x838] sm:$0xff]
    %v2568 = vld [vmem:[#allocation13 + $0x840] sm:$0xff]
    %v2569 = vld [vmem:[#allocation13 + $0x848] sm:$0xff]
    %v2570 = vld [vmem:[#allocation13 + $0x850] sm:$0xff]
    %v2572 = vsel %vm715, %v2509, 0
    %2574 = vmatpush.msra.mxu0 0.0
    %2575 = vmatpush.msra.mxu0 0.0
    %2576 = vmatpush.msra.mxu0 0.0
    %2577 = vmatpush.msra.mxu0 0.0
    %2578 = vmatpush.msra.mxu0 0.0
    %2579 = vmatpush.msra.mxu0 0.0
    %2580 = vmatpush.msra.mxu0 0.0
    %2581 = vmatpush.msra.mxu0 0.0
    %2582 = vmatpush.msra.mxu0 0.0
    %2583 = vmatpush.msra.mxu0 0.0
    %2584 = vmatpush.msra.mxu0 0.0
    %2585 = vmatpush.msra.mxu0 0.0
    %2586 = vmatpush.msra.mxu0 %v2570
    %2587 = vmatpush.msra.mxu0 %v2569
    %2588 = vmatpush.msra.mxu0 %v2568
    %2589 = vmatpush.msra.mxu0 %v2567
    %2590 = vmatmul.f32.gmra.mxu0 %v2572
    %v2591 = vpop.f32.mrf.mxu0
    %v2592 = vadd.f32 0.0, %v2591
    %2593 = vdwg.mxu0
    %v2594 = vadd.f32 %v2566, %v2592
    %v2595 = vmax.f32 %v2594, 0.0
    %v2596 = vand.u32 2147483647, %v2594
    %v2597 = vsub.f32 0.0, %v2596
    %v2598 = vmul.f32 %v2597, 1.442695
    %v2599 = vpow.pop %v2598
    %v2600 = vadd.f32 %v2599, 1.0
    %v2601 = vlog2.pop %v2600
    %v2602 = vmul.f32 %v2601, 0.6931472
    %v2603 = vmul.f32 -0.5, %v2599
    %v2604 = vadd.f32 %v2603, 1.0
    %v2605 = vmul.f32 %v2604, %v2599
    %v2606 = vand.u32 2147483647, %v2599
    %vm2607 = vcmp.lt.f32.partialorder %v2606, 0.0004427343
    %v2608 = vsel %vm2607, %v2605, %v2602
    %v2609 = vadd.f32 %v2595, %v2608
    %v2610 = vsub.f32 %v2609, 0.6931472
    %v2611 = vld [vmem:[#allocation13 + $0x8a0] sm:$0x1]
    %v2612 = vld [vmem:[#allocation13 + $0x860] sm:$0xff]
    %v2613 = vld [vmem:[#allocation13 + $0x868] sm:$0xff]
    %v2614 = vld [vmem:[#allocation13 + $0x870] sm:$0xff]
    %v2615 = vld [vmem:[#allocation13 + $0x878] sm:$0xff]
    %v2616 = vld [vmem:[#allocation13 + $0x880] sm:$0xff]
    %v2617 = vld [vmem:[#allocation13 + $0x888] sm:$0xff]
    %v2618 = vld [vmem:[#allocation13 + $0x890] sm:$0xff]
    %v2619 = vld [vmem:[#allocation13 + $0x898] sm:$0xff]
    %v2621 = vsel %vm252, %v2610, 0
    %2623 = vmatpush.msra.mxu0 0.0
    %2624 = vmatpush.msra.mxu0 0.0
    %2625 = vmatpush.msra.mxu0 0.0
    %2626 = vmatpush.msra.mxu0 0.0
    %2627 = vmatpush.msra.mxu0 0.0
    %2628 = vmatpush.msra.mxu0 0.0
    %2629 = vmatpush.msra.mxu0 0.0
    %2630 = vmatpush.msra.mxu0 0.0
    %2631 = vmatpush.msra.mxu0 %v2619
    %2632 = vmatpush.msra.mxu0 %v2618
    %2633 = vmatpush.msra.mxu0 %v2617
    %2634 = vmatpush.msra.mxu0 %v2616
    %2635 = vmatpush.msra.mxu0 %v2615
    %2636 = vmatpush.msra.mxu0 %v2614
    %2637 = vmatpush.msra.mxu0 %v2613
    %2638 = vmatpush.msra.mxu0 %v2612
    %2639 = vmatmul.f32.gmra.mxu0 %v2621
    %v2640 = vpop.f32.mrf.mxu0
    %v2641 = vadd.f32 0.0, %v2640
    %2642 = vdwg.mxu0
    %v2643 = vperm.slane %v2611, 0
    %v2644 = vadd.f32 %v2643, %v2641
    %v2645 = vmax.f32 %v2644, 0.0
    %v2646 = vand.u32 2147483647, %v2644
    %v2647 = vsub.f32 0.0, %v2646
    %v2648 = vmul.f32 %v2647, 1.442695
    %v2649 = vpow.pop %v2648
    %v2650 = vadd.f32 %v2649, 1.0
    %v2651 = vlog2.pop %v2650
    %v2652 = vmul.f32 %v2651, 0.6931472
    %v2653 = vmul.f32 -0.5, %v2649
    %v2654 = vadd.f32 %v2653, 1.0
    %v2655 = vmul.f32 %v2654, %v2649
    %v2656 = vand.u32 2147483647, %v2649
    %vm2657 = vcmp.lt.f32.partialorder %v2656, 0.0004427343
    %v2658 = vsel %vm2657, %v2655, %v2652
    %v2659 = vadd.f32 %v2645, %v2658
    %v2660 = vsub.f32 %v2659, 0.6931472
    %v2661 = vld [vmem:[#allocation13 + $0x8e8] sm:$0x1]
    %v2662 = vld [vmem:[#allocation13 + $0x8a8] sm:$0xff]
    %v2663 = vld [vmem:[#allocation13 + $0x8b0] sm:$0xff]
    %v2664 = vld [vmem:[#allocation13 + $0x8b8] sm:$0xff]
    %v2665 = vld [vmem:[#allocation13 + $0x8c0] sm:$0xff]
    %v2666 = vld [vmem:[#allocation13 + $0x8c8] sm:$0xff]
    %v2667 = vld [vmem:[#allocation13 + $0x8d0] sm:$0xff]
    %v2668 = vld [vmem:[#allocation13 + $0x8d8] sm:$0xff]
    %v2669 = vld [vmem:[#allocation13 + $0x8e0] sm:$0xff]
    %v2671 = vsel %vm252, %v2660, 0
    %2673 = vmatpush.msra.mxu0 0.0
    %2674 = vmatpush.msra.mxu0 0.0
    %2675 = vmatpush.msra.mxu0 0.0
    %2676 = vmatpush.msra.mxu0 0.0
    %2677 = vmatpush.msra.mxu0 0.0
    %2678 = vmatpush.msra.mxu0 0.0
    %2679 = vmatpush.msra.mxu0 0.0
    %2680 = vmatpush.msra.mxu0 0.0
    %2681 = vmatpush.msra.mxu0 %v2669
    %2682 = vmatpush.msra.mxu0 %v2668
    %2683 = vmatpush.msra.mxu0 %v2667
    %2684 = vmatpush.msra.mxu0 %v2666
    %2685 = vmatpush.msra.mxu0 %v2665
    %2686 = vmatpush.msra.mxu0 %v2664
    %2687 = vmatpush.msra.mxu0 %v2663
    %2688 = vmatpush.msra.mxu0 %v2662
    %2689 = vmatmul.f32.gmra.mxu0 %v2671
    %v2690 = vpop.f32.mrf.mxu0
    %v2691 = vadd.f32 0.0, %v2690
    %2692 = vdwg.mxu0
    %v2693 = vperm.slane %v2661, 0
    %v2694 = vadd.f32 %v2693, %v2691
    %v2695 = vmax.f32 %v2694, 0.0
    %v2696 = vand.u32 2147483647, %v2694
    %v2697 = vsub.f32 0.0, %v2696
    %v2698 = vmul.f32 %v2697, 1.442695
    %v2699 = vpow.pop %v2698
    %v2700 = vadd.f32 %v2699, 1.0
    %v2701 = vlog2.pop %v2700
    %v2702 = vmul.f32 %v2701, 0.6931472
    %v2703 = vmul.f32 -0.5, %v2699
    %v2704 = vadd.f32 %v2703, 1.0
    %v2705 = vmul.f32 %v2704, %v2699
    %v2706 = vand.u32 2147483647, %v2699
    %vm2707 = vcmp.lt.f32.partialorder %v2706, 0.0004427343
    %v2708 = vsel %vm2707, %v2705, %v2702
    %v2709 = vadd.f32 %v2695, %v2708
    %v2710 = vsub.f32 %v2709, 0.6931472
    %v2711 = vadd.f32 %v2249, %v1515
    %v2712 = vadd.f32 %v2250, %v1516
    %v2713 = vadd.f32 %v2467, %v1517
    %v2714 = vadd.f32 %v2710, %v1518
    %v2715 = vld [vmem:[#allocation13 + $0x910] sm:$0x1]
    %v2716 = vld [vmem:[#allocation13 + $0x8f0] sm:$0xff]
    %v2717 = vld [vmem:[#allocation13 + $0x8f8] sm:$0xff]
    %v2718 = vld [vmem:[#allocation13 + $0x900] sm:$0xff]
    %v2719 = vld [vmem:[#allocation13 + $0x908] sm:$0xff]
    %v2721 = vsel %vm715, %v2711, 0
    %v2724 = vsel %vm715, %v2712, 0
    %2726 = vmatpush.msra.mxu0 0.0
    %2727 = vmatpush.msra.mxu0 0.0
    %2728 = vmatpush.msra.mxu0 0.0
    %2729 = vmatpush.msra.mxu0 0.0
    %2730 = vmatpush.msra.mxu0 0.0
    %2731 = vmatpush.msra.mxu0 0.0
    %2732 = vmatpush.msra.mxu0 0.0
    %2733 = vmatpush.msra.mxu0 0.0
    %2734 = vmatpush.msra.mxu0 0.0
    %2735 = vmatpush.msra.mxu0 0.0
    %2736 = vmatpush.msra.mxu0 0.0
    %2737 = vmatpush.msra.mxu0 0.0
    %2738 = vmatpush.msra.mxu0 %v2719
    %2739 = vmatpush.msra.mxu0 %v2718
    %2740 = vmatpush.msra.mxu0 %v2717
    %2741 = vmatpush.msra.mxu0 %v2716
    %2742 = vmatmul.f32.gmra.mxu0 %v2721
    %v2743 = vpop.f32.mrf.mxu0
    %v2744 = vadd.f32 0.0, %v2743
    %2745 = vmatmul.f32.gmra.mxu0 %v2724
    %v2746 = vpop.f32.mrf.mxu0
    %v2747 = vadd.f32 0.0, %v2746
    %2748 = vdwg.mxu0
    %v2749 = vperm.slane %v2715, 0
    %v2750 = vadd.f32 %v2749, %v2744
    %v2751 = vadd.f32 %v2749, %v2747
    %v2752 = vmax.f32 %v2750, 0.0
    %v2753 = vmax.f32 %v2751, 0.0
    %v2754 = vand.u32 2147483647, %v2750
    %v2755 = vand.u32 2147483647, %v2751
    %v2756 = vsub.f32 0.0, %v2754
    %v2757 = vsub.f32 0.0, %v2755
    %v2758 = vmul.f32 %v2756, 1.442695
    %v2759 = vpow.pop %v2758
    %v2760 = vmul.f32 %v2757, 1.442695
    %v2761 = vpow.pop %v2760
    %v2762 = vadd.f32 %v2759, 1.0
    %v2763 = vlog2.pop %v2762
    %v2764 = vmul.f32 %v2763, 0.6931472
    %v2765 = vmul.f32 -0.5, %v2759
    %v2766 = vadd.f32 %v2765, 1.0
    %v2767 = vmul.f32 %v2766, %v2759
    %v2768 = vand.u32 2147483647, %v2759
    %vm2769 = vcmp.lt.f32.partialorder %v2768, 0.0004427343
    %v2770 = vsel %vm2769, %v2767, %v2764
    %v2771 = vadd.f32 %v2761, 1.0
    %v2772 = vlog2.pop %v2771
    %v2773 = vmul.f32 %v2772, 0.6931472
    %v2774 = vmul.f32 -0.5, %v2761
    %v2775 = vadd.f32 %v2774, 1.0
    %v2776 = vmul.f32 %v2775, %v2761
    %v2777 = vand.u32 2147483647, %v2761
    %vm2778 = vcmp.lt.f32.partialorder %v2777, 0.0004427343
    %v2779 = vsel %vm2778, %v2776, %v2773
    %v2780 = vadd.f32 %v2752, %v2770
    %v2781 = vadd.f32 %v2753, %v2779
    %v2782 = vsub.f32 %v2780, 0.6931472
    %v2783 = vsub.f32 %v2781, 0.6931472
    %v2784 = vld [vmem:[#allocation13 + $0x958] sm:$0x1]
    %v2785 = vld [vmem:[#allocation13 + $0x918] sm:$0xff]
    %v2786 = vld [vmem:[#allocation13 + $0x920] sm:$0xff]
    %v2787 = vld [vmem:[#allocation13 + $0x928] sm:$0xff]
    %v2788 = vld [vmem:[#allocation13 + $0x930] sm:$0xff]
    %v2789 = vld [vmem:[#allocation13 + $0x938] sm:$0xff]
    %v2790 = vld [vmem:[#allocation13 + $0x940] sm:$0xff]
    %v2791 = vld [vmem:[#allocation13 + $0x948] sm:$0xff]
    %v2792 = vld [vmem:[#allocation13 + $0x950] sm:$0xff]
    %v2794 = vsel %vm252, %v2782, 0
    %v2797 = vsel %vm252, %v2783, 0
    %2799 = vmatpush.msra.mxu0 0.0
    %2800 = vmatpush.msra.mxu0 0.0
    %2801 = vmatpush.msra.mxu0 0.0
    %2802 = vmatpush.msra.mxu0 0.0
    %2803 = vmatpush.msra.mxu0 0.0
    %2804 = vmatpush.msra.mxu0 0.0
    %2805 = vmatpush.msra.mxu0 0.0
    %2806 = vmatpush.msra.mxu0 0.0
    %2807 = vmatpush.msra.mxu0 %v2792
    %2808 = vmatpush.msra.mxu0 %v2791
    %2809 = vmatpush.msra.mxu0 %v2790
    %2810 = vmatpush.msra.mxu0 %v2789
    %2811 = vmatpush.msra.mxu0 %v2788
    %2812 = vmatpush.msra.mxu0 %v2787
    %2813 = vmatpush.msra.mxu0 %v2786
    %2814 = vmatpush.msra.mxu0 %v2785
    %2815 = vmatmul.f32.gmra.mxu0 %v2794
    %v2816 = vpop.f32.mrf.mxu0
    %v2817 = vadd.f32 0.0, %v2816
    %2818 = vmatmul.f32.gmra.mxu0 %v2797
    %v2819 = vpop.f32.mrf.mxu0
    %v2820 = vadd.f32 0.0, %v2819
    %2821 = vdwg.mxu0
    %v2822 = vperm.slane %v2784, 0
    %v2823 = vadd.f32 %v2822, %v2817
    %v2824 = vadd.f32 %v2822, %v2820
    %v2825 = vmax.f32 %v2823, 0.0
    %v2826 = vmax.f32 %v2824, 0.0
    %v2827 = vand.u32 2147483647, %v2823
    %v2828 = vand.u32 2147483647, %v2824
    %v2829 = vsub.f32 0.0, %v2827
    %v2830 = vsub.f32 0.0, %v2828
    %v2831 = vmul.f32 %v2829, 1.442695
    %v2832 = vpow.pop %v2831
    %v2833 = vmul.f32 %v2830, 1.442695
    %v2834 = vpow.pop %v2833
    %v2835 = vadd.f32 %v2832, 1.0
    %v2836 = vlog2.pop %v2835
    %v2837 = vmul.f32 %v2836, 0.6931472
    %v2838 = vmul.f32 -0.5, %v2832
    %v2839 = vadd.f32 %v2838, 1.0
    %v2840 = vmul.f32 %v2839, %v2832
    %v2841 = vand.u32 2147483647, %v2832
    %vm2842 = vcmp.lt.f32.partialorder %v2841, 0.0004427343
    %v2843 = vsel %vm2842, %v2840, %v2837
    %v2844 = vadd.f32 %v2834, 1.0
    %v2845 = vlog2.pop %v2844
    %v2846 = vmul.f32 %v2845, 0.6931472
    %v2847 = vmul.f32 -0.5, %v2834
    %v2848 = vadd.f32 %v2847, 1.0
    %v2849 = vmul.f32 %v2848, %v2834
    %v2850 = vand.u32 2147483647, %v2834
    %vm2851 = vcmp.lt.f32.partialorder %v2850, 0.0004427343
    %v2852 = vsel %vm2851, %v2849, %v2846
    %v2853 = vadd.f32 %v2825, %v2843
    %v2854 = vadd.f32 %v2826, %v2852
    %v2855 = vsub.f32 %v2853, 0.6931472
    %v2856 = vsub.f32 %v2854, 0.6931472
    %v2857 = vld [vmem:[#allocation13 + $0x980] sm:$0x1]
    %v2858 = vld [vmem:[#allocation13 + $0x960] sm:$0xff]
    %v2859 = vld [vmem:[#allocation13 + $0x968] sm:$0xff]
    %v2860 = vld [vmem:[#allocation13 + $0x970] sm:$0xff]
    %v2861 = vld [vmem:[#allocation13 + $0x978] sm:$0xff]
    %v2863 = vsel %vm715, %v2713, 0
    %2865 = vmatpush.msra.mxu0 0.0
    %2866 = vmatpush.msra.mxu0 0.0
    %2867 = vmatpush.msra.mxu0 0.0
    %2868 = vmatpush.msra.mxu0 0.0
    %2869 = vmatpush.msra.mxu0 0.0
    %2870 = vmatpush.msra.mxu0 0.0
    %2871 = vmatpush.msra.mxu0 0.0
    %2872 = vmatpush.msra.mxu0 0.0
    %2873 = vmatpush.msra.mxu0 0.0
    %2874 = vmatpush.msra.mxu0 0.0
    %2875 = vmatpush.msra.mxu0 0.0
    %2876 = vmatpush.msra.mxu0 0.0
    %2877 = vmatpush.msra.mxu0 %v2861
    %2878 = vmatpush.msra.mxu0 %v2860
    %2879 = vmatpush.msra.mxu0 %v2859
    %2880 = vmatpush.msra.mxu0 %v2858
    %2881 = vmatmul.f32.gmra.mxu0 %v2863
    %v2882 = vpop.f32.mrf.mxu0
    %v2883 = vadd.f32 0.0, %v2882
    %2884 = vdwg.mxu0
    %v2885 = vperm.slane %v2857, 0
    %v2886 = vadd.f32 %v2885, %v2883
    %v2887 = vmax.f32 %v2886, 0.0
    %v2888 = vand.u32 2147483647, %v2886
    %v2889 = vsub.f32 0.0, %v2888
    %v2890 = vmul.f32 %v2889, 1.442695
    %v2891 = vpow.pop %v2890
    %v2892 = vadd.f32 %v2891, 1.0
    %v2893 = vlog2.pop %v2892
    %v2894 = vmul.f32 %v2893, 0.6931472
    %v2895 = vmul.f32 -0.5, %v2891
    %v2896 = vadd.f32 %v2895, 1.0
    %v2897 = vmul.f32 %v2896, %v2891
    %v2898 = vand.u32 2147483647, %v2891
    %vm2899 = vcmp.lt.f32.partialorder %v2898, 0.0004427343
    %v2900 = vsel %vm2899, %v2897, %v2894
    %v2901 = vadd.f32 %v2887, %v2900
    %v2902 = vsub.f32 %v2901, 0.6931472
    %v2903 = vld [vmem:[#allocation13 + $0x9c8] sm:$0x1]
    %v2904 = vld [vmem:[#allocation13 + $0x988] sm:$0xff]
    %v2905 = vld [vmem:[#allocation13 + $0x990] sm:$0xff]
    %v2906 = vld [vmem:[#allocation13 + $0x998] sm:$0xff]
    %v2907 = vld [vmem:[#allocation13 + $0x9a0] sm:$0xff]
    %v2908 = vld [vmem:[#allocation13 + $0x9a8] sm:$0xff]
    %v2909 = vld [vmem:[#allocation13 + $0x9b0] sm:$0xff]
    %v2910 = vld [vmem:[#allocation13 + $0x9b8] sm:$0xff]
    %v2911 = vld [vmem:[#allocation13 + $0x9c0] sm:$0xff]
    %v2913 = vsel %vm252, %v2902, 0
    %2915 = vmatpush.msra.mxu0 0.0
    %2916 = vmatpush.msra.mxu0 0.0
    %2917 = vmatpush.msra.mxu0 0.0
    %2918 = vmatpush.msra.mxu0 0.0
    %2919 = vmatpush.msra.mxu0 0.0
    %2920 = vmatpush.msra.mxu0 0.0
    %2921 = vmatpush.msra.mxu0 0.0
    %2922 = vmatpush.msra.mxu0 0.0
    %2923 = vmatpush.msra.mxu0 %v2911
    %2924 = vmatpush.msra.mxu0 %v2910
    %2925 = vmatpush.msra.mxu0 %v2909
    %2926 = vmatpush.msra.mxu0 %v2908
    %2927 = vmatpush.msra.mxu0 %v2907
    %2928 = vmatpush.msra.mxu0 %v2906
    %2929 = vmatpush.msra.mxu0 %v2905
    %2930 = vmatpush.msra.mxu0 %v2904
    %2931 = vmatmul.f32.gmra.mxu0 %v2913
    %v2932 = vpop.f32.mrf.mxu0
    %v2933 = vadd.f32 0.0, %v2932
    %2934 = vdwg.mxu0
    %v2935 = vperm.slane %v2903, 0
    %v2936 = vadd.f32 %v2935, %v2933
    %v2937 = vmax.f32 %v2936, 0.0
    %v2938 = vand.u32 2147483647, %v2936
    %v2939 = vsub.f32 0.0, %v2938
    %v2940 = vmul.f32 %v2939, 1.442695
    %v2941 = vpow.pop %v2940
    %v2942 = vadd.f32 %v2941, 1.0
    %v2943 = vlog2.pop %v2942
    %v2944 = vmul.f32 %v2943, 0.6931472
    %v2945 = vmul.f32 -0.5, %v2941
    %v2946 = vadd.f32 %v2945, 1.0
    %v2947 = vmul.f32 %v2946, %v2941
    %v2948 = vand.u32 2147483647, %v2941
    %vm2949 = vcmp.lt.f32.partialorder %v2948, 0.0004427343
    %v2950 = vsel %vm2949, %v2947, %v2944
    %v2951 = vadd.f32 %v2937, %v2950
    %v2952 = vsub.f32 %v2951, 0.6931472
    %v2953 = vld [vmem:[#allocation13 + $0x9f0] sm:$0x1]
    %v2954 = vld [vmem:[#allocation13 + $0x9d0] sm:$0xff]
    %v2955 = vld [vmem:[#allocation13 + $0x9d8] sm:$0xff]
    %v2956 = vld [vmem:[#allocation13 + $0x9e0] sm:$0xff]
    %v2957 = vld [vmem:[#allocation13 + $0x9e8] sm:$0xff]
    %v2959 = vsel %vm715, %v2714, 0
    %2961 = vmatpush.msra.mxu0 0.0
    %2962 = vmatpush.msra.mxu0 0.0
    %2963 = vmatpush.msra.mxu0 0.0
    %2964 = vmatpush.msra.mxu0 0.0
    %2965 = vmatpush.msra.mxu0 0.0
    %2966 = vmatpush.msra.mxu0 0.0
    %2967 = vmatpush.msra.mxu0 0.0
    %2968 = vmatpush.msra.mxu0 0.0
    %2969 = vmatpush.msra.mxu0 0.0
    %2970 = vmatpush.msra.mxu0 0.0
    %2971 = vmatpush.msra.mxu0 0.0
    %2972 = vmatpush.msra.mxu0 0.0
    %2973 = vmatpush.msra.mxu0 %v2957
    %2974 = vmatpush.msra.mxu0 %v2956
    %2975 = vmatpush.msra.mxu0 %v2955
    %2976 = vmatpush.msra.mxu0 %v2954
    %2977 = vmatmul.f32.gmra.mxu0 %v2959
    %v2978 = vpop.f32.mrf.mxu0
    %v2979 = vadd.f32 0.0, %v2978
    %2980 = vdwg.mxu0
    %v2981 = vperm.slane %v2953, 0
    %v2982 = vadd.f32 %v2981, %v2979
    %v2983 = vmax.f32 %v2982, 0.0
    %v2984 = vand.u32 2147483647, %v2982
    %v2985 = vsub.f32 0.0, %v2984
    %v2986 = vmul.f32 %v2985, 1.442695
    %v2987 = vpow.pop %v2986
    %v2988 = vadd.f32 %v2987, 1.0
    %v2989 = vlog2.pop %v2988
    %v2990 = vmul.f32 %v2989, 0.6931472
    %v2991 = vmul.f32 -0.5, %v2987
    %v2992 = vadd.f32 %v2991, 1.0
    %v2993 = vmul.f32 %v2992, %v2987
    %v2994 = vand.u32 2147483647, %v2987
    %vm2995 = vcmp.lt.f32.partialorder %v2994, 0.0004427343
    %v2996 = vsel %vm2995, %v2993, %v2990
    %v2997 = vadd.f32 %v2983, %v2996
    %v2998 = vsub.f32 %v2997, 0.6931472
    %v2999 = vld [vmem:[#allocation13 + $0xa38] sm:$0x1]
    %v3000 = vld [vmem:[#allocation13 + $0x9f8] sm:$0xff]
    %v3001 = vld [vmem:[#allocation13 + $0xa00] sm:$0xff]
    %v3002 = vld [vmem:[#allocation13 + $0xa08] sm:$0xff]
    %v3003 = vld [vmem:[#allocation13 + $0xa10] sm:$0xff]
    %v3004 = vld [vmem:[#allocation13 + $0xa18] sm:$0xff]
    %v3005 = vld [vmem:[#allocation13 + $0xa20] sm:$0xff]
    %v3006 = vld [vmem:[#allocation13 + $0xa28] sm:$0xff]
    %v3007 = vld [vmem:[#allocation13 + $0xa30] sm:$0xff]
    %v3009 = vsel %vm252, %v2998, 0
    %3011 = vmatpush.msra.mxu0 0.0
    %3012 = vmatpush.msra.mxu0 0.0
    %3013 = vmatpush.msra.mxu0 0.0
    %3014 = vmatpush.msra.mxu0 0.0
    %3015 = vmatpush.msra.mxu0 0.0
    %3016 = vmatpush.msra.mxu0 0.0
    %3017 = vmatpush.msra.mxu0 0.0
    %3018 = vmatpush.msra.mxu0 0.0
    %3019 = vmatpush.msra.mxu0 %v3007
    %3020 = vmatpush.msra.mxu0 %v3006
    %3021 = vmatpush.msra.mxu0 %v3005
    %3022 = vmatpush.msra.mxu0 %v3004
    %3023 = vmatpush.msra.mxu0 %v3003
    %3024 = vmatpush.msra.mxu0 %v3002
    %3025 = vmatpush.msra.mxu0 %v3001
    %3026 = vmatpush.msra.mxu0 %v3000
    %3027 = vmatmul.f32.gmra.mxu0 %v3009
    %v3028 = vpop.f32.mrf.mxu0
    %v3029 = vadd.f32 0.0, %v3028
    %3030 = vdwg.mxu0
    %v3031 = vperm.slane %v2999, 0
    %v3032 = vadd.f32 %v3031, %v3029
    %v3033 = vmax.f32 %v3032, 0.0
    %v3034 = vand.u32 2147483647, %v3032
    %v3035 = vsub.f32 0.0, %v3034
    %v3036 = vmul.f32 %v3035, 1.442695
    %v3037 = vpow.pop %v3036
    %v3038 = vadd.f32 %v3037, 1.0
    %v3039 = vlog2.pop %v3038
    %v3040 = vmul.f32 %v3039, 0.6931472
    %v3041 = vmul.f32 -0.5, %v3037
    %v3042 = vadd.f32 %v3041, 1.0
    %v3043 = vmul.f32 %v3042, %v3037
    %v3044 = vand.u32 2147483647, %v3037
    %vm3045 = vcmp.lt.f32.partialorder %v3044, 0.0004427343
    %v3046 = vsel %vm3045, %v3043, %v3040
    %v3047 = vadd.f32 %v3033, %v3046
    %v3048 = vsub.f32 %v3047, 0.6931472
    %v3050 = vsel %vm608, %v3048, 0
    %3052 = vmatpush.msra.mxu0 0.0
    %3053 = vmatpush.msra.mxu0 0.0
    %3054 = vmatpush.msra.mxu0 0.0
    %3055 = vmatpush.msra.mxu0 0.0
    %3056 = vmatpush.msra.mxu0 0.0
    %3057 = vmatpush.msra.mxu0 0.0
    %3058 = vmatpush.msra.mxu0 0.0
    %3059 = vmatpush.msra.mxu0 0.0
    %3060 = vmatpush.msra.mxu0 0.0
    %3061 = vmatpush.msra.mxu0 0.0
    %3062 = vmatpush.msra.mxu0 0.0
    %3063 = vmatpush.msra.mxu0 0.0
    %3064 = vmatpush.msra.mxu0 0.0
    %3065 = vmatpush.msra.mxu0 0.0
    %3066 = vmatpush.msra.mxu0 0.0
    %3067 = vmatpush.msra.mxu0 %v3050
    %3068 = vmatmul.f32.gmra.mxu0 %v606
    %v3069 = vpop.f32.mrf.mxu0
    %v3070 = vadd.f32 0.0, %v3069
    %3071 = vdwg.mxu0
    %3072 = vmatpush.msra.mxu0 0.0
    %3073 = vmatpush.msra.mxu0 0.0
    %3074 = vmatpush.msra.mxu0 0.0
    %3075 = vmatpush.msra.mxu0 0.0
    %3076 = vmatpush.msra.mxu0 0.0
    %3077 = vmatpush.msra.mxu0 0.0
    %3078 = vmatpush.msra.mxu0 0.0
    %3079 = vmatpush.msra.mxu0 0.0
    %3080 = vmatpush.msra.mxu0 0.0
    %3081 = vmatpush.msra.mxu0 0.0
    %3082 = vmatpush.msra.mxu0 0.0
    %3083 = vmatpush.msra.mxu0 0.0
    %3084 = vmatpush.msra.mxu0 0.0
    %3085 = vmatpush.msra.mxu0 0.0
    %3086 = vmatpush.msra.mxu0 0.0
    %3087 = vmatpush.msra.mxu0 %v3050
    %3088 = vmatmul.f32.gmra.mxu0 %v633
    %v3089 = vpop.f32.mrf.mxu0
    %v3090 = vadd.f32 0.0, %v3089
    %3091 = vmatmul.f32.gmra.mxu0 %v636
    %v3092 = vpop.f32.mrf.mxu0
    %v3093 = vadd.f32 0.0, %v3092
    %3094 = vdwg.mxu0
    %v3095 = vpack.c.bf16 %v2952, %v2952
    %v3097 = vsel %vm670, %v3095, 0
    %3099 = vmatpush.bf16.msra.mxu0 0
    %3100 = vmatpush.bf16.msra.mxu0 0
    %3101 = vmatpush.bf16.msra.mxu0 0
    %3102 = vmatpush.bf16.msra.mxu0 0
    %3103 = vmatpush.bf16.msra.mxu0 0
    %3104 = vmatpush.bf16.msra.mxu0 0
    %3105 = vmatpush.bf16.msra.mxu0 0
    %3106 = vmatpush.bf16.msra.mxu0 %v3097
    %3107 = vmatmul.bf16.gmra.mxu0 %v668
    %v3108 = vpop.f32.mrf.mxu0
    %v3109 = vadd.f32 0.0, %v3108
    %v3110 = vpop.f32.mrf.mxu0
    %v3111 = vadd.f32 0.0, %v3110
    %3112 = vdwg.mxu0
    %3113 = vmatpush.bf16.msra.mxu0 0
    %3114 = vmatpush.bf16.msra.mxu0 0
    %3115 = vmatpush.bf16.msra.mxu0 0
    %3116 = vmatpush.bf16.msra.mxu0 0
    %3117 = vmatpush.bf16.msra.mxu0 0
    %3118 = vmatpush.bf16.msra.mxu0 0
    %3119 = vmatpush.bf16.msra.mxu0 0
    %3120 = vmatpush.bf16.msra.mxu0 %v3097
    %3121 = vmatmul.bf16.gmra.mxu0 %v694
    %v3122 = vpop.f32.mrf.mxu0
    %v3123 = vadd.f32 0.0, %v3122
    %v3124 = vpop.f32.mrf.mxu0
    %v3125 = vadd.f32 0.0, %v3124
    %3126 = vdwg.mxu0
    %v3127 = vld [vmem:[#allocation13 + $0xac0] sm:$0x1]
    %v3128 = vld [vmem:[#allocation13 + $0xa40] sm:$0xff]
    %v3129 = vld [vmem:[#allocation13 + $0xa48] sm:$0xff]
    %v3130 = vld [vmem:[#allocation13 + $0xa50] sm:$0xff]
    %v3131 = vld [vmem:[#allocation13 + $0xa58] sm:$0xff]
    %v3133 = vsel %vm715, %v3109, 0
    %v3136 = vsel %vm715, %v3111, 0
    %3138 = vmatpush.msra.mxu0 0.0
    %3139 = vmatpush.msra.mxu0 0.0
    %3140 = vmatpush.msra.mxu0 0.0
    %3141 = vmatpush.msra.mxu0 0.0
    %3142 = vmatpush.msra.mxu0 0.0
    %3143 = vmatpush.msra.mxu0 0.0
    %3144 = vmatpush.msra.mxu0 0.0
    %3145 = vmatpush.msra.mxu0 0.0
    %3146 = vmatpush.msra.mxu0 0.0
    %3147 = vmatpush.msra.mxu0 0.0
    %3148 = vmatpush.msra.mxu0 0.0
    %3149 = vmatpush.msra.mxu0 0.0
    %3150 = vmatpush.msra.mxu0 %v3131
    %3151 = vmatpush.msra.mxu0 %v3130
    %3152 = vmatpush.msra.mxu0 %v3129
    %3153 = vmatpush.msra.mxu0 %v3128
    %3154 = vmatmul.f32.gmra.mxu0 %v3133
    %v3155 = vpop.f32.mrf.mxu0
    %v3156 = vadd.f32 0.0, %v3155
    %3157 = vmatmul.f32.gmra.mxu0 %v3136
    %v3158 = vpop.f32.mrf.mxu0
    %v3159 = vadd.f32 0.0, %v3158
    %3160 = vdwg.mxu0
    %v3161 = vperm.slane %v3127, 0
    %v3162 = vadd.f32 %v3161, %v3156
    %v3163 = vadd.f32 %v3161, %v3159
    %v3164 = vld [vmem:[#allocation13 + $0xa60] sm:$0xff]
    %v3165 = vld [vmem:[#allocation13 + $0xa68] sm:$0xff]
    %v3166 = vld [vmem:[#allocation13 + $0xa70] sm:$0xff]
    %v3167 = vld [vmem:[#allocation13 + $0xa78] sm:$0xff]
    %v3169 = vsel %vm715, %v3123, 0
    %v3172 = vsel %vm715, %v3125, 0
    %3174 = vmatpush.msra.mxu0 0.0
    %3175 = vmatpush.msra.mxu0 0.0
    %3176 = vmatpush.msra.mxu0 0.0
    %3177 = vmatpush.msra.mxu0 0.0
    %3178 = vmatpush.msra.mxu0 0.0
    %3179 = vmatpush.msra.mxu0 0.0
    %3180 = vmatpush.msra.mxu0 0.0
    %3181 = vmatpush.msra.mxu0 0.0
    %3182 = vmatpush.msra.mxu0 0.0
    %3183 = vmatpush.msra.mxu0 0.0
    %3184 = vmatpush.msra.mxu0 0.0
    %3185 = vmatpush.msra.mxu0 0.0
    %3186 = vmatpush.msra.mxu0 %v3167
    %3187 = vmatpush.msra.mxu0 %v3166
    %3188 = vmatpush.msra.mxu0 %v3165
    %3189 = vmatpush.msra.mxu0 %v3164
    %3190 = vmatmul.f32.gmra.mxu0 %v3169
    %v3191 = vpop.f32.mrf.mxu0
    %v3192 = vadd.f32 0.0, %v3191
    %3193 = vmatmul.f32.gmra.mxu0 %v3172
    %v3194 = vpop.f32.mrf.mxu0
    %v3195 = vadd.f32 0.0, %v3194
    %3196 = vdwg.mxu0
    %v3197 = vadd.f32 %v3162, %v3192
    %v3198 = vadd.f32 %v3163, %v3195
    %v3199 = vld [vmem:[#allocation13 + $0xa80] sm:$0xff]
    %v3200 = vld [vmem:[#allocation13 + $0xa88] sm:$0xff]
    %v3201 = vld [vmem:[#allocation13 + $0xa90] sm:$0xff]
    %v3202 = vld [vmem:[#allocation13 + $0xa98] sm:$0xff]
    %v3204 = vsel %vm715, %v2855, 0
    %v3207 = vsel %vm715, %v2856, 0
    %3209 = vmatpush.msra.mxu0 0.0
    %3210 = vmatpush.msra.mxu0 0.0
    %3211 = vmatpush.msra.mxu0 0.0
    %3212 = vmatpush.msra.mxu0 0.0
    %3213 = vmatpush.msra.mxu0 0.0
    %3214 = vmatpush.msra.mxu0 0.0
    %3215 = vmatpush.msra.mxu0 0.0
    %3216 = vmatpush.msra.mxu0 0.0
    %3217 = vmatpush.msra.mxu0 0.0
    %3218 = vmatpush.msra.mxu0 0.0
    %3219 = vmatpush.msra.mxu0 0.0
    %3220 = vmatpush.msra.mxu0 0.0
    %3221 = vmatpush.msra.mxu0 %v3202
    %3222 = vmatpush.msra.mxu0 %v3201
    %3223 = vmatpush.msra.mxu0 %v3200
    %3224 = vmatpush.msra.mxu0 %v3199
    %3225 = vmatmul.f32.gmra.mxu0 %v3204
    %v3226 = vpop.f32.mrf.mxu0
    %v3227 = vadd.f32 0.0, %v3226
    %3228 = vmatmul.f32.gmra.mxu0 %v3207
    %v3229 = vpop.f32.mrf.mxu0
    %v3230 = vadd.f32 0.0, %v3229
    %3231 = vdwg.mxu0
    %v3232 = vadd.f32 %v3197, %v3227
    %v3233 = vadd.f32 %v3198, %v3230
    %v3234 = vld [vmem:[#allocation13 + $0xaa0] sm:$0xff]
    %v3235 = vld [vmem:[#allocation13 + $0xaa8] sm:$0xff]
    %v3236 = vld [vmem:[#allocation13 + $0xab0] sm:$0xff]
    %v3237 = vld [vmem:[#allocation13 + $0xab8] sm:$0xff]
    %v3239 = vsel %vm715, %v3090, 0
    %v3242 = vsel %vm715, %v3093, 0
    %3244 = vmatpush.msra.mxu0 0.0
    %3245 = vmatpush.msra.mxu0 0.0
    %3246 = vmatpush.msra.mxu0 0.0
    %3247 = vmatpush.msra.mxu0 0.0
    %3248 = vmatpush.msra.mxu0 0.0
    %3249 = vmatpush.msra.mxu0 0.0
    %3250 = vmatpush.msra.mxu0 0.0
    %3251 = vmatpush.msra.mxu0 0.0
    %3252 = vmatpush.msra.mxu0 0.0
    %3253 = vmatpush.msra.mxu0 0.0
    %3254 = vmatpush.msra.mxu0 0.0
    %3255 = vmatpush.msra.mxu0 0.0
    %3256 = vmatpush.msra.mxu0 %v3237
    %3257 = vmatpush.msra.mxu0 %v3236
    %3258 = vmatpush.msra.mxu0 %v3235
    %3259 = vmatpush.msra.mxu0 %v3234
    %3260 = vmatmul.f32.gmra.mxu0 %v3239
    %v3261 = vpop.f32.mrf.mxu0
    %v3262 = vadd.f32 0.0, %v3261
    %3263 = vmatmul.f32.gmra.mxu0 %v3242
    %v3264 = vpop.f32.mrf.mxu0
    %v3265 = vadd.f32 0.0, %v3264
    %3266 = vdwg.mxu0
    %v3267 = vadd.f32 %v3232, %v3262
    %v3268 = vadd.f32 %v3233, %v3265
    %v3269 = vmax.f32 %v3267, 0.0
    %v3270 = vmax.f32 %v3268, 0.0
    %v3271 = vand.u32 2147483647, %v3267
    %v3272 = vand.u32 2147483647, %v3268
    %v3273 = vsub.f32 0.0, %v3271
    %v3274 = vsub.f32 0.0, %v3272
    %v3275 = vmul.f32 %v3273, 1.442695
    %v3276 = vpow.pop %v3275
    %v3277 = vmul.f32 %v3274, 1.442695
    %v3278 = vpow.pop %v3277
    %v3279 = vadd.f32 %v3276, 1.0
    %v3280 = vlog2.pop %v3279
    %v3281 = vmul.f32 %v3280, 0.6931472
    %v3282 = vmul.f32 -0.5, %v3276
    %v3283 = vadd.f32 %v3282, 1.0
    %v3284 = vmul.f32 %v3283, %v3276
    %v3285 = vand.u32 2147483647, %v3276
    %vm3286 = vcmp.lt.f32.partialorder %v3285, 0.0004427343
    %v3287 = vsel %vm3286, %v3284, %v3281
    %v3288 = vadd.f32 %v3278, 1.0
    %v3289 = vlog2.pop %v3288
    %v3290 = vmul.f32 %v3289, 0.6931472
    %v3291 = vmul.f32 -0.5, %v3278
    %v3292 = vadd.f32 %v3291, 1.0
    %v3293 = vmul.f32 %v3292, %v3278
    %v3294 = vand.u32 2147483647, %v3278
    %vm3295 = vcmp.lt.f32.partialorder %v3294, 0.0004427343
    %v3296 = vsel %vm3295, %v3293, %v3290
    %v3297 = vadd.f32 %v3269, %v3287
    %v3298 = vadd.f32 %v3270, %v3296
    %v3299 = vsub.f32 %v3297, 0.6931472
    %v3300 = vsub.f32 %v3298, 0.6931472
    %v3301 = vld [vmem:[#allocation13 + $0xb08] sm:$0x1]
    %v3302 = vld [vmem:[#allocation13 + $0xac8] sm:$0xff]
    %v3303 = vld [vmem:[#allocation13 + $0xad0] sm:$0xff]
    %v3304 = vld [vmem:[#allocation13 + $0xad8] sm:$0xff]
    %v3305 = vld [vmem:[#allocation13 + $0xae0] sm:$0xff]
    %v3306 = vld [vmem:[#allocation13 + $0xae8] sm:$0xff]
    %v3307 = vld [vmem:[#allocation13 + $0xaf0] sm:$0xff]
    %v3308 = vld [vmem:[#allocation13 + $0xaf8] sm:$0xff]
    %v3309 = vld [vmem:[#allocation13 + $0xb00] sm:$0xff]
    %v3311 = vsel %vm252, %v3299, 0
    %v3314 = vsel %vm252, %v3300, 0
    %3316 = vmatpush.msra.mxu0 0.0
    %3317 = vmatpush.msra.mxu0 0.0
    %3318 = vmatpush.msra.mxu0 0.0
    %3319 = vmatpush.msra.mxu0 0.0
    %3320 = vmatpush.msra.mxu0 0.0
    %3321 = vmatpush.msra.mxu0 0.0
    %3322 = vmatpush.msra.mxu0 0.0
    %3323 = vmatpush.msra.mxu0 0.0
    %3324 = vmatpush.msra.mxu0 %v3309
    %3325 = vmatpush.msra.mxu0 %v3308
    %3326 = vmatpush.msra.mxu0 %v3307
    %3327 = vmatpush.msra.mxu0 %v3306
    %3328 = vmatpush.msra.mxu0 %v3305
    %3329 = vmatpush.msra.mxu0 %v3304
    %3330 = vmatpush.msra.mxu0 %v3303
    %3331 = vmatpush.msra.mxu0 %v3302
    %3332 = vmatmul.f32.gmra.mxu0 %v3311
    %v3333 = vpop.f32.mrf.mxu0
    %v3334 = vadd.f32 0.0, %v3333
    %3335 = vmatmul.f32.gmra.mxu0 %v3314
    %v3336 = vpop.f32.mrf.mxu0
    %v3337 = vadd.f32 0.0, %v3336
    %3338 = vdwg.mxu0
    %v3339 = vperm.slane %v3301, 0
    %v3340 = vadd.f32 %v3339, %v3334
    %v3341 = vadd.f32 %v3339, %v3337
    %v3342 = vmax.f32 %v3340, 0.0
    %v3343 = vmax.f32 %v3341, 0.0
    %v3344 = vand.u32 2147483647, %v3340
    %v3345 = vand.u32 2147483647, %v3341
    %v3346 = vsub.f32 0.0, %v3344
    %v3347 = vsub.f32 0.0, %v3345
    %v3348 = vmul.f32 %v3346, 1.442695
    %v3349 = vpow.pop %v3348
    %v3350 = vmul.f32 %v3347, 1.442695
    %v3351 = vpow.pop %v3350
    %v3352 = vadd.f32 %v3349, 1.0
    %v3353 = vlog2.pop %v3352
    %v3354 = vmul.f32 %v3353, 0.6931472
    %v3355 = vmul.f32 -0.5, %v3349
    %v3356 = vadd.f32 %v3355, 1.0
    %v3357 = vmul.f32 %v3356, %v3349
    %v3358 = vand.u32 2147483647, %v3349
    %vm3359 = vcmp.lt.f32.partialorder %v3358, 0.0004427343
    %v3360 = vsel %vm3359, %v3357, %v3354
    %v3361 = vadd.f32 %v3351, 1.0
    %v3362 = vlog2.pop %v3361
    %v3363 = vmul.f32 %v3362, 0.6931472
    %v3364 = vmul.f32 -0.5, %v3351
    %v3365 = vadd.f32 %v3364, 1.0
    %v3366 = vmul.f32 %v3365, %v3351
    %v3367 = vand.u32 2147483647, %v3351
    %vm3368 = vcmp.lt.f32.partialorder %v3367, 0.0004427343
    %v3369 = vsel %vm3368, %v3366, %v3363
    %v3370 = vadd.f32 %v3342, %v3360
    %v3371 = vadd.f32 %v3343, %v3369
    %v3372 = vsub.f32 %v3370, 0.6931472
    %v3373 = vsub.f32 %v3371, 0.6931472
    %v3374 = vld [vmem:[#allocation13 + $0xb50] sm:$0x1]
    %v3375 = vld [vmem:[#allocation13 + $0xb10] sm:$0xff]
    %v3376 = vld [vmem:[#allocation13 + $0xb18] sm:$0xff]
    %v3377 = vld [vmem:[#allocation13 + $0xb20] sm:$0xff]
    %v3378 = vld [vmem:[#allocation13 + $0xb28] sm:$0xff]
    %v3379 = vld [vmem:[#allocation13 + $0xb30] sm:$0xff]
    %v3380 = vld [vmem:[#allocation13 + $0xb38] sm:$0xff]
    %v3381 = vld [vmem:[#allocation13 + $0xb40] sm:$0xff]
    %v3382 = vld [vmem:[#allocation13 + $0xb48] sm:$0xff]
    %v3384 = vsel %vm252, %v3372, 0
    %v3387 = vsel %vm252, %v3373, 0
    %3389 = vmatpush.msra.mxu0 0.0
    %3390 = vmatpush.msra.mxu0 0.0
    %3391 = vmatpush.msra.mxu0 0.0
    %3392 = vmatpush.msra.mxu0 0.0
    %3393 = vmatpush.msra.mxu0 0.0
    %3394 = vmatpush.msra.mxu0 0.0
    %3395 = vmatpush.msra.mxu0 0.0
    %3396 = vmatpush.msra.mxu0 0.0
    %3397 = vmatpush.msra.mxu0 %v3382
    %3398 = vmatpush.msra.mxu0 %v3381
    %3399 = vmatpush.msra.mxu0 %v3380
    %3400 = vmatpush.msra.mxu0 %v3379
    %3401 = vmatpush.msra.mxu0 %v3378
    %3402 = vmatpush.msra.mxu0 %v3377
    %3403 = vmatpush.msra.mxu0 %v3376
    %3404 = vmatpush.msra.mxu0 %v3375
    %3405 = vmatmul.f32.gmra.mxu0 %v3384
    %v3406 = vpop.f32.mrf.mxu0
    %v3407 = vadd.f32 0.0, %v3406
    %3408 = vmatmul.f32.gmra.mxu0 %v3387
    %v3409 = vpop.f32.mrf.mxu0
    %v3410 = vadd.f32 0.0, %v3409
    %3411 = vdwg.mxu0
    %v3412 = vperm.slane %v3374, 0
    %v3413 = vadd.f32 %v3412, %v3407
    %v3414 = vadd.f32 %v3412, %v3410
    %v3415 = vmax.f32 %v3413, 0.0
    %v3416 = vmax.f32 %v3414, 0.0
    %v3417 = vand.u32 2147483647, %v3413
    %v3418 = vand.u32 2147483647, %v3414
    %v3419 = vsub.f32 0.0, %v3417
    %v3420 = vsub.f32 0.0, %v3418
    %v3421 = vmul.f32 %v3419, 1.442695
    %v3422 = vpow.pop %v3421
    %v3423 = vmul.f32 %v3420, 1.442695
    %v3424 = vpow.pop %v3423
    %v3425 = vadd.f32 %v3422, 1.0
    %v3426 = vlog2.pop %v3425
    %v3427 = vmul.f32 %v3426, 0.6931472
    %v3428 = vmul.f32 -0.5, %v3422
    %v3429 = vadd.f32 %v3428, 1.0
    %v3430 = vmul.f32 %v3429, %v3422
    %v3431 = vand.u32 2147483647, %v3422
    %vm3432 = vcmp.lt.f32.partialorder %v3431, 0.0004427343
    %v3433 = vsel %vm3432, %v3430, %v3427
    %v3434 = vadd.f32 %v3424, 1.0
    %v3435 = vlog2.pop %v3434
    %v3436 = vmul.f32 %v3435, 0.6931472
    %v3437 = vmul.f32 -0.5, %v3424
    %v3438 = vadd.f32 %v3437, 1.0
    %v3439 = vmul.f32 %v3438, %v3424
    %v3440 = vand.u32 2147483647, %v3424
    %vm3441 = vcmp.lt.f32.partialorder %v3440, 0.0004427343
    %v3442 = vsel %vm3441, %v3439, %v3436
    %v3443 = vadd.f32 %v3415, %v3433
    %v3444 = vadd.f32 %v3416, %v3442
    %v3445 = vsub.f32 %v3443, 0.6931472
    %v3446 = vsub.f32 %v3444, 0.6931472
    %v3447 = vpack.c.bf16 %v3446, %v3445
    %3448 = vmatpush.bf16.msra.mxu0 0
    %3449 = vmatpush.bf16.msra.mxu0 0
    %3450 = vmatpush.bf16.msra.mxu0 0
    %3451 = vmatpush.bf16.msra.mxu0 0
    %3452 = vmatpush.bf16.msra.mxu0 0
    %3453 = vmatpush.bf16.msra.mxu0 0
    %3454 = vmatpush.bf16.msra.mxu0 0
    %3455 = vmatpush.bf16.msra.mxu0 %v3447
    %3456 = vmatmul.bf16.gmra.mxu0 %v1033
    %v3457 = vpop.f32.mrf.mxu0
    %v3458 = vadd.f32 0.0, %v3457
    %v3459 = vpop.f32.mrf.mxu0
    %3460 = vdwg.mxu0
    %v3461 = vmul.f32 %v3458, %v1051
    %v3462 = vld [vmem:[#allocation13 + $0xbb8] sm:$0x1]
    %v3463 = vld [vmem:[#allocation13 + $0xb58] sm:$0xff]
    %v3464 = vld [vmem:[#allocation13 + $0xb60] sm:$0xff]
    %v3465 = vld [vmem:[#allocation13 + $0xb68] sm:$0xff]
    %v3466 = vld [vmem:[#allocation13 + $0xb70] sm:$0xff]
    %v3468 = vsel %vm715, %v2952, 0
    %3470 = vmatpush.msra.mxu0 0.0
    %3471 = vmatpush.msra.mxu0 0.0
    %3472 = vmatpush.msra.mxu0 0.0
    %3473 = vmatpush.msra.mxu0 0.0
    %3474 = vmatpush.msra.mxu0 0.0
    %3475 = vmatpush.msra.mxu0 0.0
    %3476 = vmatpush.msra.mxu0 0.0
    %3477 = vmatpush.msra.mxu0 0.0
    %3478 = vmatpush.msra.mxu0 0.0
    %3479 = vmatpush.msra.mxu0 0.0
    %3480 = vmatpush.msra.mxu0 0.0
    %3481 = vmatpush.msra.mxu0 0.0
    %3482 = vmatpush.msra.mxu0 %v3466
    %3483 = vmatpush.msra.mxu0 %v3465
    %3484 = vmatpush.msra.mxu0 %v3464
    %3485 = vmatpush.msra.mxu0 %v3463
    %3486 = vmatmul.f32.gmra.mxu0 %v3468
    %v3487 = vpop.f32.mrf.mxu0
    %v3488 = vadd.f32 0.0, %v3487
    %3489 = vdwg.mxu0
    %v3490 = vperm.slane %v3462, 0
    %v3491 = vadd.f32 %v3490, %v3488
    %v3492 = vld [vmem:[#allocation13 + $0xb78] sm:$0xff]
    %v3493 = vld [vmem:[#allocation13 + $0xb80] sm:$0xff]
    %v3494 = vld [vmem:[#allocation13 + $0xb88] sm:$0xff]
    %v3495 = vld [vmem:[#allocation13 + $0xb90] sm:$0xff]
    %v3497 = vsel %vm715, %v3461, 0
    %3499 = vmatpush.msra.mxu0 0.0
    %3500 = vmatpush.msra.mxu0 0.0
    %3501 = vmatpush.msra.mxu0 0.0
    %3502 = vmatpush.msra.mxu0 0.0
    %3503 = vmatpush.msra.mxu0 0.0
    %3504 = vmatpush.msra.mxu0 0.0
    %3505 = vmatpush.msra.mxu0 0.0
    %3506 = vmatpush.msra.mxu0 0.0
    %3507 = vmatpush.msra.mxu0 0.0
    %3508 = vmatpush.msra.mxu0 0.0
    %3509 = vmatpush.msra.mxu0 0.0
    %3510 = vmatpush.msra.mxu0 0.0
    %3511 = vmatpush.msra.mxu0 %v3495
    %3512 = vmatpush.msra.mxu0 %v3494
    %3513 = vmatpush.msra.mxu0 %v3493
    %3514 = vmatpush.msra.mxu0 %v3492
    %3515 = vmatmul.f32.gmra.mxu0 %v3497
    %v3516 = vpop.f32.mrf.mxu0
    %v3517 = vadd.f32 0.0, %v3516
    %3518 = vdwg.mxu0
    %v3519 = vadd.f32 %v3491, %v3517
    %v3520 = vld [vmem:[#allocation13 + $0xb98] sm:$0xff]
    %v3521 = vld [vmem:[#allocation13 + $0xba0] sm:$0xff]
    %v3522 = vld [vmem:[#allocation13 + $0xba8] sm:$0xff]
    %v3523 = vld [vmem:[#allocation13 + $0xbb0] sm:$0xff]
    %v3525 = vsel %vm715, %v3070, 0
    %3527 = vmatpush.msra.mxu0 0.0
    %3528 = vmatpush.msra.mxu0 0.0
    %3529 = vmatpush.msra.mxu0 0.0
    %3530 = vmatpush.msra.mxu0 0.0
    %3531 = vmatpush.msra.mxu0 0.0
    %3532 = vmatpush.msra.mxu0 0.0
    %3533 = vmatpush.msra.mxu0 0.0
    %3534 = vmatpush.msra.mxu0 0.0
    %3535 = vmatpush.msra.mxu0 0.0
    %3536 = vmatpush.msra.mxu0 0.0
    %3537 = vmatpush.msra.mxu0 0.0
    %3538 = vmatpush.msra.mxu0 0.0
    %3539 = vmatpush.msra.mxu0 %v3523
    %3540 = vmatpush.msra.mxu0 %v3522
    %3541 = vmatpush.msra.mxu0 %v3521
    %3542 = vmatpush.msra.mxu0 %v3520
    %3543 = vmatmul.f32.gmra.mxu0 %v3525
    %v3544 = vpop.f32.mrf.mxu0
    %v3545 = vadd.f32 0.0, %v3544
    %3546 = vdwg.mxu0
    %v3547 = vadd.f32 %v3519, %v3545
    %v3548 = vmax.f32 %v3547, 0.0
    %v3549 = vand.u32 2147483647, %v3547
    %v3550 = vsub.f32 0.0, %v3549
    %v3551 = vmul.f32 %v3550, 1.442695
    %v3552 = vpow.pop %v3551
    %v3553 = vadd.f32 %v3552, 1.0
    %v3554 = vlog2.pop %v3553
    %v3555 = vmul.f32 %v3554, 0.6931472
    %v3556 = vmul.f32 -0.5, %v3552
    %v3557 = vadd.f32 %v3556, 1.0
    %v3558 = vmul.f32 %v3557, %v3552
    %v3559 = vand.u32 2147483647, %v3552
    %vm3560 = vcmp.lt.f32.partialorder %v3559, 0.0004427343
    %v3561 = vsel %vm3560, %v3558, %v3555
    %v3562 = vadd.f32 %v3548, %v3561
    %v3563 = vsub.f32 %v3562, 0.6931472
    %v3564 = vld [vmem:[#allocation13 + $0xc00] sm:$0x1]
    %v3565 = vld [vmem:[#allocation13 + $0xbc0] sm:$0xff]
    %v3566 = vld [vmem:[#allocation13 + $0xbc8] sm:$0xff]
    %v3567 = vld [vmem:[#allocation13 + $0xbd0] sm:$0xff]
    %v3568 = vld [vmem:[#allocation13 + $0xbd8] sm:$0xff]
    %v3569 = vld [vmem:[#allocation13 + $0xbe0] sm:$0xff]
    %v3570 = vld [vmem:[#allocation13 + $0xbe8] sm:$0xff]
    %v3571 = vld [vmem:[#allocation13 + $0xbf0] sm:$0xff]
    %v3572 = vld [vmem:[#allocation13 + $0xbf8] sm:$0xff]
    %v3574 = vsel %vm252, %v3563, 0
    %3576 = vmatpush.msra.mxu0 0.0
    %3577 = vmatpush.msra.mxu0 0.0
    %3578 = vmatpush.msra.mxu0 0.0
    %3579 = vmatpush.msra.mxu0 0.0
    %3580 = vmatpush.msra.mxu0 0.0
    %3581 = vmatpush.msra.mxu0 0.0
    %3582 = vmatpush.msra.mxu0 0.0
    %3583 = vmatpush.msra.mxu0 0.0
    %3584 = vmatpush.msra.mxu0 %v3572
    %3585 = vmatpush.msra.mxu0 %v3571
    %3586 = vmatpush.msra.mxu0 %v3570
    %3587 = vmatpush.msra.mxu0 %v3569
    %3588 = vmatpush.msra.mxu0 %v3568
    %3589 = vmatpush.msra.mxu0 %v3567
    %3590 = vmatpush.msra.mxu0 %v3566
    %3591 = vmatpush.msra.mxu0 %v3565
    %3592 = vmatmul.f32.gmra.mxu0 %v3574
    %v3593 = vpop.f32.mrf.mxu0
    %v3594 = vadd.f32 0.0, %v3593
    %3595 = vdwg.mxu0
    %v3596 = vperm.slane %v3564, 0
    %v3597 = vadd.f32 %v3596, %v3594
    %v3598 = vmax.f32 %v3597, 0.0
    %v3599 = vand.u32 2147483647, %v3597
    %v3600 = vsub.f32 0.0, %v3599
    %v3601 = vmul.f32 %v3600, 1.442695
    %v3602 = vpow.pop %v3601
    %v3603 = vadd.f32 %v3602, 1.0
    %v3604 = vlog2.pop %v3603
    %v3605 = vmul.f32 %v3604, 0.6931472
    %v3606 = vmul.f32 -0.5, %v3602
    %v3607 = vadd.f32 %v3606, 1.0
    %v3608 = vmul.f32 %v3607, %v3602
    %v3609 = vand.u32 2147483647, %v3602
    %vm3610 = vcmp.lt.f32.partialorder %v3609, 0.0004427343
    %v3611 = vsel %vm3610, %v3608, %v3605
    %v3612 = vadd.f32 %v3598, %v3611
    %v3613 = vsub.f32 %v3612, 0.6931472
    %v3614 = vld [vmem:[#allocation13 + $0xc48] sm:$0x1]
    %v3615 = vld [vmem:[#allocation13 + $0xc08] sm:$0xff]
    %v3616 = vld [vmem:[#allocation13 + $0xc10] sm:$0xff]
    %v3617 = vld [vmem:[#allocation13 + $0xc18] sm:$0xff]
    %v3618 = vld [vmem:[#allocation13 + $0xc20] sm:$0xff]
    %v3619 = vld [vmem:[#allocation13 + $0xc28] sm:$0xff]
    %v3620 = vld [vmem:[#allocation13 + $0xc30] sm:$0xff]
    %v3621 = vld [vmem:[#allocation13 + $0xc38] sm:$0xff]
    %v3622 = vld [vmem:[#allocation13 + $0xc40] sm:$0xff]
    %v3624 = vsel %vm252, %v3613, 0
    %3626 = vmatpush.msra.mxu0 0.0
    %3627 = vmatpush.msra.mxu0 0.0
    %3628 = vmatpush.msra.mxu0 0.0
    %3629 = vmatpush.msra.mxu0 0.0
    %3630 = vmatpush.msra.mxu0 0.0
    %3631 = vmatpush.msra.mxu0 0.0
    %3632 = vmatpush.msra.mxu0 0.0
    %3633 = vmatpush.msra.mxu0 0.0
    %3634 = vmatpush.msra.mxu0 %v3622
    %3635 = vmatpush.msra.mxu0 %v3621
    %3636 = vmatpush.msra.mxu0 %v3620
    %3637 = vmatpush.msra.mxu0 %v3619
    %3638 = vmatpush.msra.mxu0 %v3618
    %3639 = vmatpush.msra.mxu0 %v3617
    %3640 = vmatpush.msra.mxu0 %v3616
    %3641 = vmatpush.msra.mxu0 %v3615
    %3642 = vmatmul.f32.gmra.mxu0 %v3624
    %v3643 = vpop.f32.mrf.mxu0
    %v3644 = vadd.f32 0.0, %v3643
    %3645 = vdwg.mxu0
    %v3646 = vperm.slane %v3614, 0
    %v3647 = vadd.f32 %v3646, %v3644
    %v3648 = vmax.f32 %v3647, 0.0
    %v3649 = vand.u32 2147483647, %v3647
    %v3650 = vsub.f32 0.0, %v3649
    %v3651 = vmul.f32 %v3650, 1.442695
    %v3652 = vpow.pop %v3651
    %v3653 = vadd.f32 %v3652, 1.0
    %v3654 = vlog2.pop %v3653
    %v3655 = vmul.f32 %v3654, 0.6931472
    %v3656 = vmul.f32 -0.5, %v3652
    %v3657 = vadd.f32 %v3656, 1.0
    %v3658 = vmul.f32 %v3657, %v3652
    %v3659 = vand.u32 2147483647, %v3652
    %vm3660 = vcmp.lt.f32.partialorder %v3659, 0.0004427343
    %v3661 = vsel %vm3660, %v3658, %v3655
    %v3662 = vadd.f32 %v3648, %v3661
    %v3663 = vsub.f32 %v3662, 0.6931472
    %3664 = vmatpush.msra.mxu0 0.0
    %3665 = vmatpush.msra.mxu0 0.0
    %3666 = vmatpush.msra.mxu0 0.0
    %3667 = vmatpush.msra.mxu0 0.0
    %3668 = vmatpush.msra.mxu0 0.0
    %3669 = vmatpush.msra.mxu0 0.0
    %3670 = vmatpush.msra.mxu0 0.0
    %3671 = vmatpush.msra.mxu0 0.0
    %3672 = vmatpush.msra.mxu0 0.0
    %3673 = vmatpush.msra.mxu0 0.0
    %3674 = vmatpush.msra.mxu0 0.0
    %3675 = vmatpush.msra.mxu0 0.0
    %3676 = vmatpush.msra.mxu0 0.0
    %3677 = vmatpush.msra.mxu0 0.0
    %3678 = vmatpush.msra.mxu0 %v3446
    %3679 = vmatpush.msra.mxu0 %v3445
    %3680 = vmatmul.f32.gmra.mxu0 %v1257
    %v3681 = vpop.f32.mrf.mxu0
    %v3682 = vadd.f32 0.0, %v3681
    %3683 = vdwg.mxu0
    %v3684 = vmul.f32 %v3682, %v1282
    %3685 = vmatpush.msra.mxu0 0.0
    %3686 = vmatpush.msra.mxu0 0.0
    %3687 = vmatpush.msra.mxu0 0.0
    %3688 = vmatpush.msra.mxu0 0.0
    %3689 = vmatpush.msra.mxu0 0.0
    %3690 = vmatpush.msra.mxu0 0.0
    %3691 = vmatpush.msra.mxu0 0.0
    %3692 = vmatpush.msra.mxu0 0.0
    %3693 = vmatpush.msra.mxu0 0.0
    %3694 = vmatpush.msra.mxu0 0.0
    %3695 = vmatpush.msra.mxu0 0.0
    %3696 = vmatpush.msra.mxu0 0.0
    %3697 = vmatpush.msra.mxu0 0.0
    %3698 = vmatpush.msra.mxu0 0.0
    %3699 = vmatpush.msra.mxu0 0.0
    %3700 = vmatpush.msra.mxu0 %v3663
    %3701 = vmatmul.f32.gmra.mxu0 %v1286
    %v3702 = vpop.f32.mrf.mxu0
    %v3703 = vadd.f32 0.0, %v3702
    %3704 = vdwg.mxu0
    %v3705 = vmul.f32 %v3703, %v1311
    %v3706 = vld [vmem:[#allocation13 + $0xcb0] sm:$0x1]
    %v3707 = vld [vmem:[#allocation13 + $0xc50] sm:$0xff]
    %v3708 = vld [vmem:[#allocation13 + $0xc58] sm:$0xff]
    %v3709 = vld [vmem:[#allocation13 + $0xc60] sm:$0xff]
    %v3710 = vld [vmem:[#allocation13 + $0xc68] sm:$0xff]
    %v3711 = vsel %vm715, %v3048, 0
    %3713 = vmatpush.msra.mxu0 0.0
    %3714 = vmatpush.msra.mxu0 0.0
    %3715 = vmatpush.msra.mxu0 0.0
    %3716 = vmatpush.msra.mxu0 0.0
    %3717 = vmatpush.msra.mxu0 0.0
    %3718 = vmatpush.msra.mxu0 0.0
    %3719 = vmatpush.msra.mxu0 0.0
    %3720 = vmatpush.msra.mxu0 0.0
    %3721 = vmatpush.msra.mxu0 0.0
    %3722 = vmatpush.msra.mxu0 0.0
    %3723 = vmatpush.msra.mxu0 0.0
    %3724 = vmatpush.msra.mxu0 0.0
    %3725 = vmatpush.msra.mxu0 %v3710
    %3726 = vmatpush.msra.mxu0 %v3709
    %3727 = vmatpush.msra.mxu0 %v3708
    %3728 = vmatpush.msra.mxu0 %v3707
    %3729 = vmatmul.f32.gmra.mxu0 %v3711
    %v3730 = vpop.f32.mrf.mxu0
    %v3731 = vadd.f32 0.0, %v3730
    %3732 = vdwg.mxu0
    %v3733 = vperm.slane %v3706, 0
    %v3734 = vadd.f32 %v3733, %v3731
    %v3735 = vld [vmem:[#allocation13 + $0xc70] sm:$0xff]
    %v3736 = vld [vmem:[#allocation13 + $0xc78] sm:$0xff]
    %v3737 = vld [vmem:[#allocation13 + $0xc80] sm:$0xff]
    %v3738 = vld [vmem:[#allocation13 + $0xc88] sm:$0xff]
    %v3740 = vsel %vm715, %v3684, 0
    %3742 = vmatpush.msra.mxu0 0.0
    %3743 = vmatpush.msra.mxu0 0.0
    %3744 = vmatpush.msra.mxu0 0.0
    %3745 = vmatpush.msra.mxu0 0.0
    %3746 = vmatpush.msra.mxu0 0.0
    %3747 = vmatpush.msra.mxu0 0.0
    %3748 = vmatpush.msra.mxu0 0.0
    %3749 = vmatpush.msra.mxu0 0.0
    %3750 = vmatpush.msra.mxu0 0.0
    %3751 = vmatpush.msra.mxu0 0.0
    %3752 = vmatpush.msra.mxu0 0.0
    %3753 = vmatpush.msra.mxu0 0.0
    %3754 = vmatpush.msra.mxu0 %v3738
    %3755 = vmatpush.msra.mxu0 %v3737
    %3756 = vmatpush.msra.mxu0 %v3736
    %3757 = vmatpush.msra.mxu0 %v3735
    %3758 = vmatmul.f32.gmra.mxu0 %v3740
    %v3759 = vpop.f32.mrf.mxu0
    %v3760 = vadd.f32 0.0, %v3759
    %3761 = vdwg.mxu0
    %v3762 = vadd.f32 %v3734, %v3760
    %v3763 = vld [vmem:[#allocation13 + $0xc90] sm:$0xff]
    %v3764 = vld [vmem:[#allocation13 + $0xc98] sm:$0xff]
    %v3765 = vld [vmem:[#allocation13 + $0xca0] sm:$0xff]
    %v3766 = vld [vmem:[#allocation13 + $0xca8] sm:$0xff]
    %v3768 = vsel %vm715, %v3705, 0
    %3770 = vmatpush.msra.mxu0 0.0
    %3771 = vmatpush.msra.mxu0 0.0
    %3772 = vmatpush.msra.mxu0 0.0
    %3773 = vmatpush.msra.mxu0 0.0
    %3774 = vmatpush.msra.mxu0 0.0
    %3775 = vmatpush.msra.mxu0 0.0
    %3776 = vmatpush.msra.mxu0 0.0
    %3777 = vmatpush.msra.mxu0 0.0
    %3778 = vmatpush.msra.mxu0 0.0
    %3779 = vmatpush.msra.mxu0 0.0
    %3780 = vmatpush.msra.mxu0 0.0
    %3781 = vmatpush.msra.mxu0 0.0
    %3782 = vmatpush.msra.mxu0 %v3766
    %3783 = vmatpush.msra.mxu0 %v3765
    %3784 = vmatpush.msra.mxu0 %v3764
    %3785 = vmatpush.msra.mxu0 %v3763
    %3786 = vmatmul.f32.gmra.mxu0 %v3768
    %v3787 = vpop.f32.mrf.mxu0
    %v3788 = vadd.f32 0.0, %v3787
    %3789 = vdwg.mxu0
    %v3790 = vadd.f32 %v3762, %v3788
    %v3791 = vmax.f32 %v3790, 0.0
    %v3792 = vand.u32 2147483647, %v3790
    %v3793 = vsub.f32 0.0, %v3792
    %v3794 = vmul.f32 %v3793, 1.442695
    %v3795 = vpow.pop %v3794
    %v3796 = vadd.f32 %v3795, 1.0
    %v3797 = vlog2.pop %v3796
    %v3798 = vmul.f32 %v3797, 0.6931472
    %v3799 = vmul.f32 -0.5, %v3795
    %v3800 = vadd.f32 %v3799, 1.0
    %v3801 = vmul.f32 %v3800, %v3795
    %v3802 = vand.u32 2147483647, %v3795
    %vm3803 = vcmp.lt.f32.partialorder %v3802, 0.0004427343
    %v3804 = vsel %vm3803, %v3801, %v3798
    %v3805 = vadd.f32 %v3791, %v3804
    %v3806 = vsub.f32 %v3805, 0.6931472
    %v3807 = vld [vmem:[#allocation13 + $0xcf8] sm:$0x1]
    %v3808 = vld [vmem:[#allocation13 + $0xcb8] sm:$0xff]
    %v3809 = vld [vmem:[#allocation13 + $0xcc0] sm:$0xff]
    %v3810 = vld [vmem:[#allocation13 + $0xcc8] sm:$0xff]
    %v3811 = vld [vmem:[#allocation13 + $0xcd0] sm:$0xff]
    %v3812 = vld [vmem:[#allocation13 + $0xcd8] sm:$0xff]
    %v3813 = vld [vmem:[#allocation13 + $0xce0] sm:$0xff]
    %v3814 = vld [vmem:[#allocation13 + $0xce8] sm:$0xff]
    %v3815 = vld [vmem:[#allocation13 + $0xcf0] sm:$0xff]
    %v3817 = vsel %vm252, %v3806, 0
    %3819 = vmatpush.msra.mxu0 0.0
    %3820 = vmatpush.msra.mxu0 0.0
    %3821 = vmatpush.msra.mxu0 0.0
    %3822 = vmatpush.msra.mxu0 0.0
    %3823 = vmatpush.msra.mxu0 0.0
    %3824 = vmatpush.msra.mxu0 0.0
    %3825 = vmatpush.msra.mxu0 0.0
    %3826 = vmatpush.msra.mxu0 0.0
    %3827 = vmatpush.msra.mxu0 %v3815
    %3828 = vmatpush.msra.mxu0 %v3814
    %3829 = vmatpush.msra.mxu0 %v3813
    %3830 = vmatpush.msra.mxu0 %v3812
    %3831 = vmatpush.msra.mxu0 %v3811
    %3832 = vmatpush.msra.mxu0 %v3810
    %3833 = vmatpush.msra.mxu0 %v3809
    %3834 = vmatpush.msra.mxu0 %v3808
    %3835 = vmatmul.f32.gmra.mxu0 %v3817
    %v3836 = vpop.f32.mrf.mxu0
    %v3837 = vadd.f32 0.0, %v3836
    %3838 = vdwg.mxu0
    %v3839 = vperm.slane %v3807, 0
    %v3840 = vadd.f32 %v3839, %v3837
    %v3841 = vmax.f32 %v3840, 0.0
    %v3842 = vand.u32 2147483647, %v3840
    %v3843 = vsub.f32 0.0, %v3842
    %v3844 = vmul.f32 %v3843, 1.442695
    %v3845 = vpow.pop %v3844
    %v3846 = vadd.f32 %v3845, 1.0
    %v3847 = vlog2.pop %v3846
    %v3848 = vmul.f32 %v3847, 0.6931472
    %v3849 = vmul.f32 -0.5, %v3845
    %v3850 = vadd.f32 %v3849, 1.0
    %v3851 = vmul.f32 %v3850, %v3845
    %v3852 = vand.u32 2147483647, %v3845
    %vm3853 = vcmp.lt.f32.partialorder %v3852, 0.0004427343
    %v3854 = vsel %vm3853, %v3851, %v3848
    %v3855 = vadd.f32 %v3841, %v3854
    %v3856 = vsub.f32 %v3855, 0.6931472
    %v3857 = vld [vmem:[#allocation13 + $0xd40] sm:$0x1]
    %v3858 = vld [vmem:[#allocation13 + $0xd00] sm:$0xff]
    %v3859 = vld [vmem:[#allocation13 + $0xd08] sm:$0xff]
    %v3860 = vld [vmem:[#allocation13 + $0xd10] sm:$0xff]
    %v3861 = vld [vmem:[#allocation13 + $0xd18] sm:$0xff]
    %v3862 = vld [vmem:[#allocation13 + $0xd20] sm:$0xff]
    %v3863 = vld [vmem:[#allocation13 + $0xd28] sm:$0xff]
    %v3864 = vld [vmem:[#allocation13 + $0xd30] sm:$0xff]
    %v3865 = vld [vmem:[#allocation13 + $0xd38] sm:$0xff]
    %v3867 = vsel %vm252, %v3856, 0
    %3869 = vmatpush.msra.mxu0 0.0
    %3870 = vmatpush.msra.mxu0 0.0
    %3871 = vmatpush.msra.mxu0 0.0
    %3872 = vmatpush.msra.mxu0 0.0
    %3873 = vmatpush.msra.mxu0 0.0
    %3874 = vmatpush.msra.mxu0 0.0
    %3875 = vmatpush.msra.mxu0 0.0
    %3876 = vmatpush.msra.mxu0 0.0
    %3877 = vmatpush.msra.mxu0 %v3865
    %3878 = vmatpush.msra.mxu0 %v3864
    %3879 = vmatpush.msra.mxu0 %v3863
    %3880 = vmatpush.msra.mxu0 %v3862
    %3881 = vmatpush.msra.mxu0 %v3861
    %3882 = vmatpush.msra.mxu0 %v3860
    %3883 = vmatpush.msra.mxu0 %v3859
    %3884 = vmatpush.msra.mxu0 %v3858
    %3885 = vmatmul.f32.gmra.mxu0 %v3867
    %v3886 = vpop.f32.mrf.mxu0
    %v3887 = vadd.f32 0.0, %v3886
    %3888 = vdwg.mxu0
    %v3889 = vperm.slane %v3857, 0
    %v3890 = vadd.f32 %v3889, %v3887
    %v3891 = vmax.f32 %v3890, 0.0
    %v3892 = vand.u32 2147483647, %v3890
    %v3893 = vsub.f32 0.0, %v3892
    %v3894 = vmul.f32 %v3893, 1.442695
    %v3895 = vpow.pop %v3894
    %v3896 = vadd.f32 %v3895, 1.0
    %v3897 = vlog2.pop %v3896
    %v3898 = vmul.f32 %v3897, 0.6931472
    %v3899 = vmul.f32 -0.5, %v3895
    %v3900 = vadd.f32 %v3899, 1.0
    %v3901 = vmul.f32 %v3900, %v3895
    %v3902 = vand.u32 2147483647, %v3895
    %vm3903 = vcmp.lt.f32.partialorder %v3902, 0.0004427343
    %v3904 = vsel %vm3903, %v3901, %v3898
    %v3905 = vadd.f32 %v3891, %v3904
    %v3906 = vsub.f32 %v3905, 0.6931472
    %v3907 = vadd.f32 %v3445, %v2711
    %v3908 = vadd.f32 %v3446, %v2712
    %v3909 = vadd.f32 %v3663, %v2713
    %v3910 = vadd.f32 %v3906, %v2714
    %v3911 = vld [vmem:[#allocation13 + $0xd88] sm:$0xff]
    %v3912 = vld [vmem:[#allocation13 + $0xd90] sm:$0xff]
    %v3913 = vld [vmem:[#allocation13 + $0xd98] sm:$0xff]
    %v3914 = vld [vmem:[#allocation13 + $0xda0] sm:$0xff]
    %v3915 = vld [vmem:[#allocation13 + $0xda8] sm:$0x1]
    %v3916 = vld [vmem:[#allocation13 + $0xd48] sm:$0xff]
    %v3917 = vld [vmem:[#allocation13 + $0xd50] sm:$0xff]
    %v3918 = vld [vmem:[#allocation13 + $0xd58] sm:$0xff]
    %v3919 = vld [vmem:[#allocation13 + $0xd60] sm:$0xff]
    %v3920 = vld [vmem:[#allocation13 + $0xd68] sm:$0xff]
    %v3921 = vld [vmem:[#allocation13 + $0xd70] sm:$0xff]
    %v3922 = vld [vmem:[#allocation13 + $0xd78] sm:$0xff]
    %v3923 = vld [vmem:[#allocation13 + $0xd80] sm:$0xff]
    %v3925 = vsel %vm715, 0.0, 0
    %3927 = vmatpush.msra.mxu0 0.0
    %3928 = vmatpush.msra.mxu0 0.0
    %3929 = vmatpush.msra.mxu0 0.0
    %3930 = vmatpush.msra.mxu0 0.0
    %3931 = vmatpush.msra.mxu0 0.0
    %3932 = vmatpush.msra.mxu0 0.0
    %3933 = vmatpush.msra.mxu0 0.0
    %3934 = vmatpush.msra.mxu0 0.0
    %3935 = vmatpush.msra.mxu0 0.0
    %3936 = vmatpush.msra.mxu0 0.0
    %3937 = vmatpush.msra.mxu0 0.0
    %3938 = vmatpush.msra.mxu0 0.0
    %3939 = vmatpush.msra.mxu0 %v3923
    %3940 = vmatpush.msra.mxu0 %v3922
    %3941 = vmatpush.msra.mxu0 %v3921
    %3942 = vmatpush.msra.mxu0 %v3920
    %3943 = vmatmul.f32.gmra.mxu0 %v3925
    %v3944 = vpop.f32.mrf.mxu0
    %v3945 = vadd.f32 0.0, %v3944
    %3946 = vdwg.mxu0
    %3947 = vmatpush.msra.mxu0 0.0
    %3948 = vmatpush.msra.mxu0 0.0
    %3949 = vmatpush.msra.mxu0 0.0
    %3950 = vmatpush.msra.mxu0 0.0
    %3951 = vmatpush.msra.mxu0 0.0
    %3952 = vmatpush.msra.mxu0 0.0
    %3953 = vmatpush.msra.mxu0 0.0
    %3954 = vmatpush.msra.mxu0 0.0
    %3955 = vmatpush.msra.mxu0 0.0
    %3956 = vmatpush.msra.mxu0 0.0
    %3957 = vmatpush.msra.mxu0 0.0
    %3958 = vmatpush.msra.mxu0 0.0
    %3959 = vmatpush.msra.mxu0 %v3919
    %3960 = vmatpush.msra.mxu0 %v3918
    %3961 = vmatpush.msra.mxu0 %v3917
    %3962 = vmatpush.msra.mxu0 %v3916
    %3963 = vmatmul.f32.gmra.mxu0 %v3925
    %v3964 = vpop.f32.mrf.mxu0
    %v3965 = vadd.f32 %v3945, %v3964
    %3966 = vdwg.mxu0
    %3967 = vmatpush.msra.mxu0 0.0
    %3968 = vmatpush.msra.mxu0 0.0
    %3969 = vmatpush.msra.mxu0 0.0
    %3970 = vmatpush.msra.mxu0 0.0
    %3971 = vmatpush.msra.mxu0 0.0
    %3972 = vmatpush.msra.mxu0 0.0
    %3973 = vmatpush.msra.mxu0 0.0
    %3974 = vmatpush.msra.mxu0 0.0
    %3975 = vmatpush.msra.mxu0 0.0
    %3976 = vmatpush.msra.mxu0 0.0
    %3977 = vmatpush.msra.mxu0 0.0
    %3978 = vmatpush.msra.mxu0 0.0
    %3979 = vmatpush.msra.mxu0 %v3914
    %3980 = vmatpush.msra.mxu0 %v3913
    %3981 = vmatpush.msra.mxu0 %v3912
    %3982 = vmatpush.msra.mxu0 %v3911
    %3983 = vmatmul.f32.gmra.mxu0 %v3925
    %v3984 = vpop.f32.mrf.mxu0
    %v3985 = vadd.f32 0.0, %v3984
    %3986 = vdwg.mxu0
    %v3987 = vadd.f32 %v3965, %v3985
    %v3988 = vperm.slane %v3915, 0
    %v3989 = vadd.f32 %v3987, %v3988
    %v3990 = vxor.u32 %v3989, 2147483648
    %v3991 = vmul.f32 %v3990, 1.442695
    %v3992 = vpow.pop %v3991
    %v3993 = vadd.f32 %v3992, 1.0
    %v3994 = vrcp.pop %v3993
    %v3995 = vmul.f32 %v3993, %v3994
    %v3996 = vsub.f32 1.0, %v3995
    %v3997 = vmul.f32 %v3994, %v3996
    %v3998 = vadd.f32 %v3994, %v3997
    %vm3999 = vweird.f32 %v3993
    %vm4000 = vweird.f32 %v3994
    %vm4001 = vmor %vm3999, %vm4000
    %v4002 = vsel %vm4001, %v3994, %v3998
    %v4003 = vand.u32 2147483647, %v3993
    %vm4004 = vcmp.eq.f32.partialorder %v4003, 8.507059e+37
    %v4005 = vand.u32 %v3993, 2147483648
    %v4006 = vor.u32 1.1754944e-38, %v4005
    %v4007 = vsel %vm4004, %v4006, %v4002
    %v4008 = vmul.f32 1.0, %v4007
    %v4009 = vtanh.pop %v3989
    %v4010 = vmul.f32 %v4008, 0.0
    %4012 = vrot.lane.b32.xlu0 %v4009, 64
    %v4013 = vpop.permute.xlu0 %4012
    %v4015 = vmul.f32 %v4008, %v4013
    %4017 = vrot.lane.b32.xlu0 %v4015, 32
    %v4018 = vpop.permute.xlu0 %4017
    %v4020 = vadd.f32 %v4010, %v4018
    %v4021 = vtanh.pop %v4020
    %4023 = vrot.lane.b32.xlu0 %v4021, 64
    %v4024 = vpop.permute.xlu0 %4023
    %v4026 = vmul.f32 %v4008, %v4024
    %4028 = vrot.lane.b32.xlu0 %v4026, 32
    %v4029 = vpop.permute.xlu0 %4028
    %v4030 = vsel %vm608, %v4029, 0
    %4032 = vmatpush.msra.mxu0 0.0
    %4033 = vmatpush.msra.mxu0 0.0
    %4034 = vmatpush.msra.mxu0 0.0
    %4035 = vmatpush.msra.mxu0 0.0
    %4036 = vmatpush.msra.mxu0 0.0
    %4037 = vmatpush.msra.mxu0 0.0
    %4038 = vmatpush.msra.mxu0 0.0
    %4039 = vmatpush.msra.mxu0 0.0
    %4040 = vmatpush.msra.mxu0 0.0
    %4041 = vmatpush.msra.mxu0 0.0
    %4042 = vmatpush.msra.mxu0 0.0
    %4043 = vmatpush.msra.mxu0 0.0
    %4044 = vmatpush.msra.mxu0 0.0
    %4045 = vmatpush.msra.mxu0 0.0
    %4046 = vmatpush.msra.mxu0 0.0
    %4047 = vmatpush.msra.mxu0 %v4030
    %4048 = vmatmul.f32.gmra.mxu0 %v606
    %v4049 = vpop.f32.mrf.mxu0
    %v4050 = vadd.f32 0.0, %v4049
    %4051 = vdwg.mxu0
    %v4052 = vmul.f32 %v3909, %v4050
    %v4053 = vsel %vm715, %v4052, 0.0
    %4054 = vadd.xlane.f32.xlu0 %v4053
    %v4055 = vpop.xlane.xlu0 %4054
    %v4056 = vmul.f32 %v4055, %v155
    %v4057 = vsub.f32 1.0, %v155
    %v4058 = vmul.f32 %v4057, -1e+30
    %v4059 = vadd.f32 %v4056, %v4058
    %v4060 = vsel %vm604, %v4059, -inf
    %v4061 = vrot.slane %v4060, 4
    %v4062 = vmax.f32 %v4060, %v4061
    %v4063 = vrot.slane %v4062, 2
    %v4064 = vmax.f32 %v4062, %v4063
    %v4065 = vrot.slane %v4064, 1
    %v4066 = vmax.f32 %v4064, %v4065
    %v4067 = vmul.f32 %v155, %v4066
    %v4068 = vsel %vm604, %v4067, 0.0
    %4069 = vadd.xlane.f32.xlu0 %v4068
    %v4070 = vpop.xlane.xlu0 %4069
    %v4071 = vsub.f32 %v4055, %v4070
    %v4072 = vmul.f32 %v4071, 1.442695
    %v4073 = vpow.pop %v4072
    %4074 = vmatpush.msra.mxu0 0.0
    %4075 = vmatpush.msra.mxu0 0.0
    %4076 = vmatpush.msra.mxu0 0.0
    %4077 = vmatpush.msra.mxu0 0.0
    %4078 = vmatpush.msra.mxu0 0.0
    %4079 = vmatpush.msra.mxu0 0.0
    %4080 = vmatpush.msra.mxu0 0.0
    %4081 = vmatpush.msra.mxu0 0.0
    %4082 = vmatpush.msra.mxu0 0.0
    %4083 = vmatpush.msra.mxu0 0.0
    %4084 = vmatpush.msra.mxu0 0.0
    %4085 = vmatpush.msra.mxu0 0.0
    %4086 = vmatpush.msra.mxu0 0.0
    %4087 = vmatpush.msra.mxu0 0.0
    %4088 = vmatpush.msra.mxu0 0.0
    %4089 = vmatpush.msra.mxu0 %v4073
    %4090 = vmatmul.f32.gmra.mxu0 %v1286
    %v4091 = vpop.f32.mrf.mxu0
    %v4092 = vadd.f32 0.0, %v4091
    %4093 = vdwg.mxu0
    %v4094 = vmax.f32 %v4092, 1e-30
    %v4096 = vsel %vm608, %v4094, 0
    %4098 = vmatpush.msra.mxu0 0.0
    %4099 = vmatpush.msra.mxu0 0.0
    %4100 = vmatpush.msra.mxu0 0.0
    %4101 = vmatpush.msra.mxu0 0.0
    %4102 = vmatpush.msra.mxu0 0.0
    %4103 = vmatpush.msra.mxu0 0.0
    %4104 = vmatpush.msra.mxu0 0.0
    %4105 = vmatpush.msra.mxu0 0.0
    %4106 = vmatpush.msra.mxu0 0.0
    %4107 = vmatpush.msra.mxu0 0.0
    %4108 = vmatpush.msra.mxu0 0.0
    %4109 = vmatpush.msra.mxu0 0.0
    %4110 = vmatpush.msra.mxu0 0.0
    %4111 = vmatpush.msra.mxu0 0.0
    %4112 = vmatpush.msra.mxu0 0.0
    %4113 = vmatpush.msra.mxu0 %v4096
    %4114 = vmatmul.f32.gmra.mxu0 %v606
    %v4115 = vpop.f32.mrf.mxu0
    %v4116 = vadd.f32 0.0, %v4115
    %4117 = vdwg.mxu0
    %v4118 = vrcp.pop %v4116
    %v4119 = vmul.f32 %v4116, %v4118
    %v4120 = vsub.f32 1.0, %v4119
    %v4121 = vmul.f32 %v4118, %v4120
    %v4122 = vadd.f32 %v4118, %v4121
    %vm4123 = vweird.f32 %v4116
    %vm4124 = vweird.f32 %v4118
    %vm4125 = vmor %vm4123, %vm4124
    %v4126 = vsel %vm4125, %v4118, %v4122
    %v4127 = vand.u32 2147483647, %v4116
    %vm4128 = vcmp.eq.f32.partialorder %v4127, 8.507059e+37
    %v4129 = vand.u32 %v4116, 2147483648
    %v4130 = vor.u32 1.1754944e-38, %v4129
    %v4131 = vsel %vm4128, %v4130, %v4126
    %v4132 = vmul.f32 %v4073, %v4131
    %4134 = vset.pattern.permute.xlu0 0
    %4135 = vperm.xlu0 %4134, %v4132
    %v4136 = vpop.permute.xlu0 %4135
    %v4138 = vmul.f32 %v3909, %v4136
    %4139 = vmatpush.msra.mxu0 0.0
    %4140 = vmatpush.msra.mxu0 0.0
    %4141 = vmatpush.msra.mxu0 0.0
    %4142 = vmatpush.msra.mxu0 0.0
    %4143 = vmatpush.msra.mxu0 0.0
    %4144 = vmatpush.msra.mxu0 0.0
    %4145 = vmatpush.msra.mxu0 0.0
    %4146 = vmatpush.msra.mxu0 0.0
    %4147 = vmatpush.msra.mxu0 0.0
    %4148 = vmatpush.msra.mxu0 0.0
    %4149 = vmatpush.msra.mxu0 0.0
    %4150 = vmatpush.msra.mxu0 0.0
    %4151 = vmatpush.msra.mxu0 0.0
    %4152 = vmatpush.msra.mxu0 0.0
    %4153 = vmatpush.msra.mxu0 0.0
    %4154 = vmatpush.msra.mxu0 %v4138
    %4155 = vmatmul.f32.gmra.mxu0 %v1286
    %v4156 = vpop.f32.mrf.mxu0
    %v4157 = vadd.f32 0.0, %v4156
    %4158 = vdwg.mxu0
    %v4160 = vsel %vm715, %v4157, 0
    %4162 = vmatpush.msra.mxu0 0.0
    %4163 = vmatpush.msra.mxu0 0.0
    %4164 = vmatpush.msra.mxu0 0.0
    %4165 = vmatpush.msra.mxu0 0.0
    %4166 = vmatpush.msra.mxu0 0.0
    %4167 = vmatpush.msra.mxu0 0.0
    %4168 = vmatpush.msra.mxu0 0.0
    %4169 = vmatpush.msra.mxu0 0.0
    %4170 = vmatpush.msra.mxu0 0.0
    %4171 = vmatpush.msra.mxu0 0.0
    %4172 = vmatpush.msra.mxu0 0.0
    %4173 = vmatpush.msra.mxu0 0.0
    %4174 = vmatpush.msra.mxu0 %v3923
    %4175 = vmatpush.msra.mxu0 %v3922
    %4176 = vmatpush.msra.mxu0 %v3921
    %4177 = vmatpush.msra.mxu0 %v3920
    %4178 = vmatmul.f32.gmra.mxu0 %v4160
    %v4179 = vpop.f32.mrf.mxu0
    %v4180 = vadd.f32 0.0, %v4179
    %4181 = vdwg.mxu0
    %v4182 = vsel %vm715, %v4029, 0
    %4184 = vmatpush.msra.mxu0 0.0
    %4185 = vmatpush.msra.mxu0 0.0
    %4186 = vmatpush.msra.mxu0 0.0
    %4187 = vmatpush.msra.mxu0 0.0
    %4188 = vmatpush.msra.mxu0 0.0
    %4189 = vmatpush.msra.mxu0 0.0
    %4190 = vmatpush.msra.mxu0 0.0
    %4191 = vmatpush.msra.mxu0 0.0
    %4192 = vmatpush.msra.mxu0 0.0
    %4193 = vmatpush.msra.mxu0 0.0
    %4194 = vmatpush.msra.mxu0 0.0
    %4195 = vmatpush.msra.mxu0 0.0
    %4196 = vmatpush.msra.mxu0 %v3919
    %4197 = vmatpush.msra.mxu0 %v3918
    %4198 = vmatpush.msra.mxu0 %v3917
    %4199 = vmatpush.msra.mxu0 %v3916
    %4200 = vmatmul.f32.gmra.mxu0 %v4182
    %v4201 = vpop.f32.mrf.mxu0
    %v4202 = vadd.f32 %v4180, %v4201
    %4203 = vdwg.mxu0
    %4204 = vmatpush.msra.mxu0 0.0
    %4205 = vmatpush.msra.mxu0 0.0
    %4206 = vmatpush.msra.mxu0 0.0
    %4207 = vmatpush.msra.mxu0 0.0
    %4208 = vmatpush.msra.mxu0 0.0
    %4209 = vmatpush.msra.mxu0 0.0
    %4210 = vmatpush.msra.mxu0 0.0
    %4211 = vmatpush.msra.mxu0 0.0
    %4212 = vmatpush.msra.mxu0 0.0
    %4213 = vmatpush.msra.mxu0 0.0
    %4214 = vmatpush.msra.mxu0 0.0
    %4215 = vmatpush.msra.mxu0 0.0
    %4216 = vmatpush.msra.mxu0 %v3914
    %4217 = vmatpush.msra.mxu0 %v3913
    %4218 = vmatpush.msra.mxu0 %v3912
    %4219 = vmatpush.msra.mxu0 %v3911
    %4220 = vmatmul.f32.gmra.mxu0 %v4182
    %v4221 = vpop.f32.mrf.mxu0
    %v4222 = vadd.f32 0.0, %v4221
    %4223 = vdwg.mxu0
    %v4224 = vadd.f32 %v4202, %v4222
    %v4225 = vadd.f32 %v4224, %v3988
    %v4226 = vxor.u32 %v4225, 2147483648
    %v4227 = vmul.f32 %v4226, 1.442695
    %v4228 = vpow.pop %v4227
    %v4229 = vadd.f32 %v4228, 1.0
    %v4230 = vrcp.pop %v4229
    %v4231 = vmul.f32 %v4229, %v4230
    %v4232 = vsub.f32 1.0, %v4231
    %v4233 = vmul.f32 %v4230, %v4232
    %v4234 = vadd.f32 %v4230, %v4233
    %vm4235 = vweird.f32 %v4229
    %vm4236 = vweird.f32 %v4230
    %vm4237 = vmor %vm4235, %vm4236
    %v4238 = vsel %vm4237, %v4230, %v4234
    %v4239 = vand.u32 2147483647, %v4229
    %vm4240 = vcmp.eq.f32.partialorder %v4239, 8.507059e+37
    %v4241 = vand.u32 %v4229, 2147483648
    %v4242 = vor.u32 1.1754944e-38, %v4241
    %v4243 = vsel %vm4240, %v4242, %v4238
    %v4244 = vmul.f32 1.0, %v4243
    %v4245 = vtanh.pop %v4225
    %v4246 = vmul.f32 %v4244, %v4020
    %4248 = vrot.lane.b32.xlu0 %v4245, 64
    %v4249 = vpop.permute.xlu0 %4248
    %v4251 = vmul.f32 %v4244, %v4249
    %4253 = vrot.lane.b32.xlu0 %v4251, 32
    %v4254 = vpop.permute.xlu0 %4253
    %v4256 = vadd.f32 %v4246, %v4254
    %v4257 = vtanh.pop %v4256
    %4259 = vrot.lane.b32.xlu0 %v4257, 64
    %v4260 = vpop.permute.xlu0 %4259
    %v4262 = vmul.f32 %v4244, %v4260
    %4264 = vrot.lane.b32.xlu0 %v4262, 32
    %v4265 = vpop.permute.xlu0 %4264
    %v4266 = vsel %vm608, %v4265, 0
    %4268 = vmatpush.msra.mxu0 0.0
    %4269 = vmatpush.msra.mxu0 0.0
    %4270 = vmatpush.msra.mxu0 0.0
    %4271 = vmatpush.msra.mxu0 0.0
    %4272 = vmatpush.msra.mxu0 0.0
    %4273 = vmatpush.msra.mxu0 0.0
    %4274 = vmatpush.msra.mxu0 0.0
    %4275 = vmatpush.msra.mxu0 0.0
    %4276 = vmatpush.msra.mxu0 0.0
    %4277 = vmatpush.msra.mxu0 0.0
    %4278 = vmatpush.msra.mxu0 0.0
    %4279 = vmatpush.msra.mxu0 0.0
    %4280 = vmatpush.msra.mxu0 0.0
    %4281 = vmatpush.msra.mxu0 0.0
    %4282 = vmatpush.msra.mxu0 0.0
    %4283 = vmatpush.msra.mxu0 %v4266
    %4284 = vmatmul.f32.gmra.mxu0 %v606
    %v4285 = vpop.f32.mrf.mxu0
    %v4286 = vadd.f32 0.0, %v4285
    %4287 = vdwg.mxu0
    %v4288 = vmul.f32 %v3909, %v4286
    %v4289 = vsel %vm715, %v4288, 0.0
    %4290 = vadd.xlane.f32.xlu0 %v4289
    %v4291 = vpop.xlane.xlu0 %4290
    %v4292 = vmul.f32 %v4291, %v155
    %v4293 = vadd.f32 %v4292, %v4058
    %v4294 = vsel %vm604, %v4293, -inf
    %v4295 = vrot.slane %v4294, 4
    %v4296 = vmax.f32 %v4294, %v4295
    %v4297 = vrot.slane %v4296, 2
    %v4298 = vmax.f32 %v4296, %v4297
    %v4299 = vrot.slane %v4298, 1
    %v4300 = vmax.f32 %v4298, %v4299
    %v4301 = vmul.f32 %v155, %v4300
    %v4302 = vsel %vm604, %v4301, 0.0
    %4303 = vadd.xlane.f32.xlu0 %v4302
    %v4304 = vpop.xlane.xlu0 %4303
    %v4305 = vsub.f32 %v4291, %v4304
    %v4306 = vmul.f32 %v4305, 1.442695
    %v4307 = vpow.pop %v4306
    %4308 = vmatpush.msra.mxu0 0.0
    %4309 = vmatpush.msra.mxu0 0.0
    %4310 = vmatpush.msra.mxu0 0.0
    %4311 = vmatpush.msra.mxu0 0.0
    %4312 = vmatpush.msra.mxu0 0.0
    %4313 = vmatpush.msra.mxu0 0.0
    %4314 = vmatpush.msra.mxu0 0.0
    %4315 = vmatpush.msra.mxu0 0.0
    %4316 = vmatpush.msra.mxu0 0.0
    %4317 = vmatpush.msra.mxu0 0.0
    %4318 = vmatpush.msra.mxu0 0.0
    %4319 = vmatpush.msra.mxu0 0.0
    %4320 = vmatpush.msra.mxu0 0.0
    %4321 = vmatpush.msra.mxu0 0.0
    %4322 = vmatpush.msra.mxu0 0.0
    %4323 = vmatpush.msra.mxu0 %v4307
    %4324 = vmatmul.f32.gmra.mxu0 %v1286
    %v4325 = vpop.f32.mrf.mxu0
    %v4326 = vadd.f32 0.0, %v4325
    %4327 = vdwg.mxu0
    %v4328 = vmax.f32 %v4326, 1e-30
    %v4330 = vsel %vm608, %v4328, 0
    %4332 = vmatpush.msra.mxu0 0.0
    %4333 = vmatpush.msra.mxu0 0.0
    %4334 = vmatpush.msra.mxu0 0.0
    %4335 = vmatpush.msra.mxu0 0.0
    %4336 = vmatpush.msra.mxu0 0.0
    %4337 = vmatpush.msra.mxu0 0.0
    %4338 = vmatpush.msra.mxu0 0.0
    %4339 = vmatpush.msra.mxu0 0.0
    %4340 = vmatpush.msra.mxu0 0.0
    %4341 = vmatpush.msra.mxu0 0.0
    %4342 = vmatpush.msra.mxu0 0.0
    %4343 = vmatpush.msra.mxu0 0.0
    %4344 = vmatpush.msra.mxu0 0.0
    %4345 = vmatpush.msra.mxu0 0.0
    %4346 = vmatpush.msra.mxu0 0.0
    %4347 = vmatpush.msra.mxu0 %v4330
    %4348 = vmatmul.f32.gmra.mxu0 %v606
    %v4349 = vpop.f32.mrf.mxu0
    %v4350 = vadd.f32 0.0, %v4349
    %4351 = vdwg.mxu0
    %v4352 = vrcp.pop %v4350
    %v4353 = vmul.f32 %v4350, %v4352
    %v4354 = vsub.f32 1.0, %v4353
    %v4355 = vmul.f32 %v4352, %v4354
    %v4356 = vadd.f32 %v4352, %v4355
    %vm4357 = vweird.f32 %v4350
    %vm4358 = vweird.f32 %v4352
    %vm4359 = vmor %vm4357, %vm4358
    %v4360 = vsel %vm4359, %v4352, %v4356
    %v4361 = vand.u32 2147483647, %v4350
    %vm4362 = vcmp.eq.f32.partialorder %v4361, 8.507059e+37
    %v4363 = vand.u32 %v4350, 2147483648
    %v4364 = vor.u32 1.1754944e-38, %v4363
    %v4365 = vsel %vm4362, %v4364, %v4360
    %v4366 = vmul.f32 %v4307, %v4365
    %4368 = vset.pattern.permute.xlu0 0
    %4369 = vperm.xlu0 %4368, %v4366
    %v4370 = vpop.permute.xlu0 %4369
    %v4372 = vmul.f32 %v3909, %v4370
    %4373 = vmatpush.msra.mxu0 0.0
    %4374 = vmatpush.msra.mxu0 0.0
    %4375 = vmatpush.msra.mxu0 0.0
    %4376 = vmatpush.msra.mxu0 0.0
    %4377 = vmatpush.msra.mxu0 0.0
    %4378 = vmatpush.msra.mxu0 0.0
    %4379 = vmatpush.msra.mxu0 0.0
    %4380 = vmatpush.msra.mxu0 0.0
    %4381 = vmatpush.msra.mxu0 0.0
    %4382 = vmatpush.msra.mxu0 0.0
    %4383 = vmatpush.msra.mxu0 0.0
    %4384 = vmatpush.msra.mxu0 0.0
    %4385 = vmatpush.msra.mxu0 0.0
    %4386 = vmatpush.msra.mxu0 0.0
    %4387 = vmatpush.msra.mxu0 0.0
    %4388 = vmatpush.msra.mxu0 %v4372
    %4389 = vmatmul.f32.gmra.mxu0 %v1286
    %v4390 = vpop.f32.mrf.mxu0
    %v4391 = vadd.f32 0.0, %v4390
    %4392 = vdwg.mxu0
    %v4393 = vld [vmem:[#allocation13 + $0xdf0] sm:$0xff]
    %v4394 = vld [vmem:[#allocation13 + $0xdf8] sm:$0xff]
    %v4395 = vld [vmem:[#allocation13 + $0xe00] sm:$0xff]
    %v4396 = vld [vmem:[#allocation13 + $0xe08] sm:$0xff]
    %v4397 = vld [vmem:[#allocation13 + $0xe10] sm:$0x1]
    %v4398 = vld [vmem:[#allocation13 + $0xdb0] sm:$0xff]
    %v4399 = vld [vmem:[#allocation13 + $0xdb8] sm:$0xff]
    %v4400 = vld [vmem:[#allocation13 + $0xdc0] sm:$0xff]
    %v4401 = vld [vmem:[#allocation13 + $0xdc8] sm:$0xff]
    %v4402 = vld [vmem:[#allocation13 + $0xdd0] sm:$0xff]
    %v4403 = vld [vmem:[#allocation13 + $0xdd8] sm:$0xff]
    %v4404 = vld [vmem:[#allocation13 + $0xde0] sm:$0xff]
    %v4405 = vld [vmem:[#allocation13 + $0xde8] sm:$0xff]
    %4406 = vmatpush.msra.mxu0 0.0
    %4407 = vmatpush.msra.mxu0 0.0
    %4408 = vmatpush.msra.mxu0 0.0
    %4409 = vmatpush.msra.mxu0 0.0
    %4410 = vmatpush.msra.mxu0 0.0
    %4411 = vmatpush.msra.mxu0 0.0
    %4412 = vmatpush.msra.mxu0 0.0
    %4413 = vmatpush.msra.mxu0 0.0
    %4414 = vmatpush.msra.mxu0 0.0
    %4415 = vmatpush.msra.mxu0 0.0
    %4416 = vmatpush.msra.mxu0 0.0
    %4417 = vmatpush.msra.mxu0 0.0
    %4418 = vmatpush.msra.mxu0 %v4405
    %4419 = vmatpush.msra.mxu0 %v4404
    %4420 = vmatpush.msra.mxu0 %v4403
    %4421 = vmatpush.msra.mxu0 %v4402
    %4422 = vmatmul.f32.gmra.mxu0 %v3925
    %v4423 = vpop.f32.mrf.mxu0
    %v4424 = vadd.f32 0.0, %v4423
    %4425 = vdwg.mxu0
    %4426 = vmatpush.msra.mxu0 0.0
    %4427 = vmatpush.msra.mxu0 0.0
    %4428 = vmatpush.msra.mxu0 0.0
    %4429 = vmatpush.msra.mxu0 0.0
    %4430 = vmatpush.msra.mxu0 0.0
    %4431 = vmatpush.msra.mxu0 0.0
    %4432 = vmatpush.msra.mxu0 0.0
    %4433 = vmatpush.msra.mxu0 0.0
    %4434 = vmatpush.msra.mxu0 0.0
    %4435 = vmatpush.msra.mxu0 0.0
    %4436 = vmatpush.msra.mxu0 0.0
    %4437 = vmatpush.msra.mxu0 0.0
    %4438 = vmatpush.msra.mxu0 %v4401
    %4439 = vmatpush.msra.mxu0 %v4400
    %4440 = vmatpush.msra.mxu0 %v4399
    %4441 = vmatpush.msra.mxu0 %v4398
    %4442 = vmatmul.f32.gmra.mxu0 %v3925
    %v4443 = vpop.f32.mrf.mxu0
    %v4444 = vadd.f32 %v4424, %v4443
    %4445 = vdwg.mxu0
    %4446 = vmatpush.msra.mxu0 0.0
    %4447 = vmatpush.msra.mxu0 0.0
    %4448 = vmatpush.msra.mxu0 0.0
    %4449 = vmatpush.msra.mxu0 0.0
    %4450 = vmatpush.msra.mxu0 0.0
    %4451 = vmatpush.msra.mxu0 0.0
    %4452 = vmatpush.msra.mxu0 0.0
    %4453 = vmatpush.msra.mxu0 0.0
    %4454 = vmatpush.msra.mxu0 0.0
    %4455 = vmatpush.msra.mxu0 0.0
    %4456 = vmatpush.msra.mxu0 0.0
    %4457 = vmatpush.msra.mxu0 0.0
    %4458 = vmatpush.msra.mxu0 %v4396
    %4459 = vmatpush.msra.mxu0 %v4395
    %4460 = vmatpush.msra.mxu0 %v4394
    %4461 = vmatpush.msra.mxu0 %v4393
    %4462 = vmatmul.f32.gmra.mxu0 %v3925
    %v4463 = vpop.f32.mrf.mxu0
    %v4464 = vadd.f32 0.0, %v4463
    %4465 = vdwg.mxu0
    %v4466 = vadd.f32 %v4444, %v4464
    %v4467 = vperm.slane %v4397, 0
    %v4468 = vadd.f32 %v4466, %v4467
    %v4469 = vxor.u32 %v4468, 2147483648
    %v4470 = vmul.f32 %v4469, 1.442695
    %v4471 = vpow.pop %v4470
    %v4472 = vadd.f32 %v4471, 1.0
    %v4473 = vrcp.pop %v4472
    %v4474 = vmul.f32 %v4472, %v4473
    %v4475 = vsub.f32 1.0, %v4474
    %v4476 = vmul.f32 %v4473, %v4475
    %v4477 = vadd.f32 %v4473, %v4476
    %vm4478 = vweird.f32 %v4472
    %vm4479 = vweird.f32 %v4473
    %vm4480 = vmor %vm4478, %vm4479
    %v4481 = vsel %vm4480, %v4473, %v4477
    %v4482 = vand.u32 2147483647, %v4472
    %vm4483 = vcmp.eq.f32.partialorder %v4482, 8.507059e+37
    %v4484 = vand.u32 %v4472, 2147483648
    %v4485 = vor.u32 1.1754944e-38, %v4484
    %v4486 = vsel %vm4483, %v4485, %v4481
    %v4487 = vmul.f32 1.0, %v4486
    %v4488 = vtanh.pop %v4468
    %v4489 = vmul.f32 %v4487, 0.0
    %4491 = vrot.lane.b32.xlu0 %v4488, 64
    %v4492 = vpop.permute.xlu0 %4491
    %v4494 = vmul.f32 %v4487, %v4492
    %4496 = vrot.lane.b32.xlu0 %v4494, 32
    %v4497 = vpop.permute.xlu0 %4496
    %v4499 = vadd.f32 %v4489, %v4497
    %v4500 = vtanh.pop %v4499
    %4502 = vrot.lane.b32.xlu0 %v4500, 64
    %v4503 = vpop.permute.xlu0 %4502
    %v4505 = vmul.f32 %v4487, %v4503
    %4507 = vrot.lane.b32.xlu0 %v4505, 32
    %v4508 = vpop.permute.xlu0 %4507
    %v4509 = vsel %vm608, %v4508, 0
    %4511 = vmatpush.msra.mxu0 0.0
    %4512 = vmatpush.msra.mxu0 0.0
    %4513 = vmatpush.msra.mxu0 0.0
    %4514 = vmatpush.msra.mxu0 0.0
    %4515 = vmatpush.msra.mxu0 0.0
    %4516 = vmatpush.msra.mxu0 0.0
    %4517 = vmatpush.msra.mxu0 0.0
    %4518 = vmatpush.msra.mxu0 0.0
    %4519 = vmatpush.msra.mxu0 0.0
    %4520 = vmatpush.msra.mxu0 0.0
    %4521 = vmatpush.msra.mxu0 0.0
    %4522 = vmatpush.msra.mxu0 0.0
    %4523 = vmatpush.msra.mxu0 0.0
    %4524 = vmatpush.msra.mxu0 0.0
    %4525 = vmatpush.msra.mxu0 0.0
    %4526 = vmatpush.msra.mxu0 %v4509
    %4527 = vmatmul.f32.gmra.mxu0 %v633
    %v4528 = vpop.f32.mrf.mxu0
    %v4529 = vadd.f32 0.0, %v4528
    %4530 = vmatmul.f32.gmra.mxu0 %v636
    %v4531 = vpop.f32.mrf.mxu0
    %v4532 = vadd.f32 0.0, %v4531
    %4533 = vdwg.mxu0
    %v4534 = vmul.f32 %v3907, %v4529
    %v4535 = vmul.f32 %v3908, %v4532
    %v4536 = vsel %vm715, %v4534, 0.0
    %4537 = vadd.xlane.f32.xlu0 %v4536
    %v4538 = vpop.xlane.xlu0 %4537
    %v4539 = vsel %vm715, %v4535, 0.0
    %4540 = vadd.xlane.f32.xlu0 %v4539
    %v4541 = vpop.xlane.xlu0 %4540
    %v4542 = vmul.f32 %v4538, %v156
    %v4543 = vmul.f32 %v4541, %v157
    %v4544 = vsub.f32 1.0, %v156
    %v4545 = vsub.f32 1.0, %v157
    %v4546 = vmul.f32 %v4544, -1e+30
    %v4547 = vmul.f32 %v4545, -1e+30
    %v4548 = vadd.f32 %v4542, %v4546
    %v4549 = vadd.f32 %v4543, %v4547
    %v4550 = vsel %vm604, %v4548, -inf
    %v4551 = vsel %vm604, %v4549, -inf
    %v4552 = vmax.f32 %v4550, %v4551
    %v4553 = vrot.slane %v4552, 4
    %v4554 = vmax.f32 %v4552, %v4553
    %v4555 = vrot.slane %v4554, 2
    %v4556 = vmax.f32 %v4554, %v4555
    %v4557 = vrot.slane %v4556, 1
    %v4558 = vmax.f32 %v4556, %v4557
    %v4559 = vmul.f32 %v156, %v4558
    %v4560 = vmul.f32 %v157, %v4558
    %v4561 = vsel %vm604, %v4559, 0.0
    %4562 = vadd.xlane.f32.xlu0 %v4561
    %v4563 = vpop.xlane.xlu0 %4562
    %v4564 = vsel %vm604, %v4560, 0.0
    %4565 = vadd.xlane.f32.xlu0 %v4564
    %v4566 = vpop.xlane.xlu0 %4565
    %v4567 = vsub.f32 %v4538, %v4563
    %v4568 = vsub.f32 %v4541, %v4566
    %v4569 = vmul.f32 %v4567, 1.442695
    %v4570 = vpow.pop %v4569
    %v4571 = vmul.f32 %v4568, 1.442695
    %v4572 = vpow.pop %v4571
    %4573 = vmatpush.msra.mxu0 0.0
    %4574 = vmatpush.msra.mxu0 0.0
    %4575 = vmatpush.msra.mxu0 0.0
    %4576 = vmatpush.msra.mxu0 0.0
    %4577 = vmatpush.msra.mxu0 0.0
    %4578 = vmatpush.msra.mxu0 0.0
    %4579 = vmatpush.msra.mxu0 0.0
    %4580 = vmatpush.msra.mxu0 0.0
    %4581 = vmatpush.msra.mxu0 0.0
    %4582 = vmatpush.msra.mxu0 0.0
    %4583 = vmatpush.msra.mxu0 0.0
    %4584 = vmatpush.msra.mxu0 0.0
    %4585 = vmatpush.msra.mxu0 0.0
    %4586 = vmatpush.msra.mxu0 0.0
    %4587 = vmatpush.msra.mxu0 %v4572
    %4588 = vmatpush.msra.mxu0 %v4570
    %4589 = vmatmul.f32.gmra.mxu0 %v1257
    %v4590 = vpop.f32.mrf.mxu0
    %v4591 = vadd.f32 0.0, %v4590
    %4592 = vdwg.mxu0
    %v4593 = vmax.f32 %v4591, 1e-30
    %v4595 = vsel %vm608, %v4593, 0
    %4597 = vmatpush.msra.mxu0 0.0
    %4598 = vmatpush.msra.mxu0 0.0
    %4599 = vmatpush.msra.mxu0 0.0
    %4600 = vmatpush.msra.mxu0 0.0
    %4601 = vmatpush.msra.mxu0 0.0
    %4602 = vmatpush.msra.mxu0 0.0
    %4603 = vmatpush.msra.mxu0 0.0
    %4604 = vmatpush.msra.mxu0 0.0
    %4605 = vmatpush.msra.mxu0 0.0
    %4606 = vmatpush.msra.mxu0 0.0
    %4607 = vmatpush.msra.mxu0 0.0
    %4608 = vmatpush.msra.mxu0 0.0
    %4609 = vmatpush.msra.mxu0 0.0
    %4610 = vmatpush.msra.mxu0 0.0
    %4611 = vmatpush.msra.mxu0 0.0
    %4612 = vmatpush.msra.mxu0 %v4595
    %4613 = vmatmul.f32.gmra.mxu0 %v633
    %v4614 = vpop.f32.mrf.mxu0
    %v4615 = vadd.f32 0.0, %v4614
    %4616 = vmatmul.f32.gmra.mxu0 %v636
    %v4617 = vpop.f32.mrf.mxu0
    %v4618 = vadd.f32 0.0, %v4617
    %4619 = vdwg.mxu0
    %v4620 = vrcp.pop %v4615
    %v4621 = vmul.f32 %v4615, %v4620
    %v4622 = vsub.f32 1.0, %v4621
    %v4623 = vmul.f32 %v4620, %v4622
    %v4624 = vadd.f32 %v4620, %v4623
    %vm4625 = vweird.f32 %v4615
    %vm4626 = vweird.f32 %v4620
    %vm4627 = vmor %vm4625, %vm4626
    %v4628 = vsel %vm4627, %v4620, %v4624
    %v4629 = vand.u32 2147483647, %v4615
    %vm4630 = vcmp.eq.f32.partialorder %v4629, 8.507059e+37
    %v4631 = vand.u32 %v4615, 2147483648
    %v4632 = vor.u32 1.1754944e-38, %v4631
    %v4633 = vsel %vm4630, %v4632, %v4628
    %v4634 = vmul.f32 %v4570, %v4633
    %v4635 = vrcp.pop %v4618
    %v4636 = vmul.f32 %v4618, %v4635
    %v4637 = vsub.f32 1.0, %v4636
    %v4638 = vmul.f32 %v4635, %v4637
    %v4639 = vadd.f32 %v4635, %v4638
    %vm4640 = vweird.f32 %v4618
    %vm4641 = vweird.f32 %v4635
    %vm4642 = vmor %vm4640, %vm4641
    %v4643 = vsel %vm4642, %v4635, %v4639
    %v4644 = vand.u32 2147483647, %v4618
    %vm4645 = vcmp.eq.f32.partialorder %v4644, 8.507059e+37
    %v4646 = vand.u32 %v4618, 2147483648
    %v4647 = vor.u32 1.1754944e-38, %v4646
    %v4648 = vsel %vm4645, %v4647, %v4643
    %v4649 = vmul.f32 %v4572, %v4648
    %4651 = vset.pattern.permute.xlu0 0
    %4652 = vperm.xlu0 %4651, %v4634
    %v4653 = vpop.permute.xlu0 %4652
    %4656 = vset.pattern.permute.xlu0 0
    %4657 = vperm.xlu0 %4656, %v4649
    %v4658 = vpop.permute.xlu0 %4657
    %v4660 = vmul.f32 %v3907, %v4653
    %v4661 = vmul.f32 %v3908, %v4658
    %4662 = vmatpush.msra.mxu0 0.0
    %4663 = vmatpush.msra.mxu0 0.0
    %4664 = vmatpush.msra.mxu0 0.0
    %4665 = vmatpush.msra.mxu0 0.0
    %4666 = vmatpush.msra.mxu0 0.0
    %4667 = vmatpush.msra.mxu0 0.0
    %4668 = vmatpush.msra.mxu0 0.0
    %4669 = vmatpush.msra.mxu0 0.0
    %4670 = vmatpush.msra.mxu0 0.0
    %4671 = vmatpush.msra.mxu0 0.0
    %4672 = vmatpush.msra.mxu0 0.0
    %4673 = vmatpush.msra.mxu0 0.0
    %4674 = vmatpush.msra.mxu0 0.0
    %4675 = vmatpush.msra.mxu0 0.0
    %4676 = vmatpush.msra.mxu0 %v4661
    %4677 = vmatpush.msra.mxu0 %v4660
    %4678 = vmatmul.f32.gmra.mxu0 %v1257
    %v4679 = vpop.f32.mrf.mxu0
    %v4680 = vadd.f32 0.0, %v4679
    %4681 = vdwg.mxu0
    %v4683 = vsel %vm715, %v4680, 0
    %4685 = vmatpush.msra.mxu0 0.0
    %4686 = vmatpush.msra.mxu0 0.0
    %4687 = vmatpush.msra.mxu0 0.0
    %4688 = vmatpush.msra.mxu0 0.0
    %4689 = vmatpush.msra.mxu0 0.0
    %4690 = vmatpush.msra.mxu0 0.0
    %4691 = vmatpush.msra.mxu0 0.0
    %4692 = vmatpush.msra.mxu0 0.0
    %4693 = vmatpush.msra.mxu0 0.0
    %4694 = vmatpush.msra.mxu0 0.0
    %4695 = vmatpush.msra.mxu0 0.0
    %4696 = vmatpush.msra.mxu0 0.0
    %4697 = vmatpush.msra.mxu0 %v4405
    %4698 = vmatpush.msra.mxu0 %v4404
    %4699 = vmatpush.msra.mxu0 %v4403
    %4700 = vmatpush.msra.mxu0 %v4402
    %4701 = vmatmul.f32.gmra.mxu0 %v4683
    %v4702 = vpop.f32.mrf.mxu0
    %v4703 = vadd.f32 0.0, %v4702
    %4704 = vdwg.mxu0
    %v4705 = vsel %vm715, %v4508, 0
    %4707 = vmatpush.msra.mxu0 0.0
    %4708 = vmatpush.msra.mxu0 0.0
    %4709 = vmatpush.msra.mxu0 0.0
    %4710 = vmatpush.msra.mxu0 0.0
    %4711 = vmatpush.msra.mxu0 0.0
    %4712 = vmatpush.msra.mxu0 0.0
    %4713 = vmatpush.msra.mxu0 0.0
    %4714 = vmatpush.msra.mxu0 0.0
    %4715 = vmatpush.msra.mxu0 0.0
    %4716 = vmatpush.msra.mxu0 0.0
    %4717 = vmatpush.msra.mxu0 0.0
    %4718 = vmatpush.msra.mxu0 0.0
    %4719 = vmatpush.msra.mxu0 %v4401
    %4720 = vmatpush.msra.mxu0 %v4400
    %4721 = vmatpush.msra.mxu0 %v4399
    %4722 = vmatpush.msra.mxu0 %v4398
    %4723 = vmatmul.f32.gmra.mxu0 %v4705
    %v4724 = vpop.f32.mrf.mxu0
    %v4725 = vadd.f32 %v4703, %v4724
    %4726 = vdwg.mxu0
    %4727 = vmatpush.msra.mxu0 0.0
    %4728 = vmatpush.msra.mxu0 0.0
    %4729 = vmatpush.msra.mxu0 0.0
    %4730 = vmatpush.msra.mxu0 0.0
    %4731 = vmatpush.msra.mxu0 0.0
    %4732 = vmatpush.msra.mxu0 0.0
    %4733 = vmatpush.msra.mxu0 0.0
    %4734 = vmatpush.msra.mxu0 0.0
    %4735 = vmatpush.msra.mxu0 0.0
    %4736 = vmatpush.msra.mxu0 0.0
    %4737 = vmatpush.msra.mxu0 0.0
    %4738 = vmatpush.msra.mxu0 0.0
    %4739 = vmatpush.msra.mxu0 %v4396
    %4740 = vmatpush.msra.mxu0 %v4395
    %4741 = vmatpush.msra.mxu0 %v4394
    %4742 = vmatpush.msra.mxu0 %v4393
    %4743 = vmatmul.f32.gmra.mxu0 %v4705
    %v4744 = vpop.f32.mrf.mxu0
    %v4745 = vadd.f32 0.0, %v4744
    %4746 = vdwg.mxu0
    %v4747 = vadd.f32 %v4725, %v4745
    %v4748 = vadd.f32 %v4747, %v4467
    %v4749 = vxor.u32 %v4748, 2147483648
    %v4750 = vmul.f32 %v4749, 1.442695
    %v4751 = vpow.pop %v4750
    %v4752 = vadd.f32 %v4751, 1.0
    %v4753 = vrcp.pop %v4752
    %v4754 = vmul.f32 %v4752, %v4753
    %v4755 = vsub.f32 1.0, %v4754
    %v4756 = vmul.f32 %v4753, %v4755
    %v4757 = vadd.f32 %v4753, %v4756
    %vm4758 = vweird.f32 %v4752
    %vm4759 = vweird.f32 %v4753
    %vm4760 = vmor %vm4758, %vm4759
    %v4761 = vsel %vm4760, %v4753, %v4757
    %v4762 = vand.u32 2147483647, %v4752
    %vm4763 = vcmp.eq.f32.partialorder %v4762, 8.507059e+37
    %v4764 = vand.u32 %v4752, 2147483648
    %v4765 = vor.u32 1.1754944e-38, %v4764
    %v4766 = vsel %vm4763, %v4765, %v4761
    %v4767 = vmul.f32 1.0, %v4766
    %v4768 = vtanh.pop %v4748
    %v4769 = vmul.f32 %v4767, %v4499
    %4771 = vrot.lane.b32.xlu0 %v4768, 64
    %v4772 = vpop.permute.xlu0 %4771
    %v4774 = vmul.f32 %v4767, %v4772
    %4776 = vrot.lane.b32.xlu0 %v4774, 32
    %v4777 = vpop.permute.xlu0 %4776
    %v4779 = vadd.f32 %v4769, %v4777
    %v4780 = vtanh.pop %v4779
    %4782 = vrot.lane.b32.xlu0 %v4780, 64
    %v4783 = vpop.permute.xlu0 %4782
    %v4785 = vmul.f32 %v4767, %v4783
    %4787 = vrot.lane.b32.xlu0 %v4785, 32
    %v4788 = vpop.permute.xlu0 %4787
    %v4789 = vsel %vm608, %v4788, 0
    %4791 = vmatpush.msra.mxu0 0.0
    %4792 = vmatpush.msra.mxu0 0.0
    %4793 = vmatpush.msra.mxu0 0.0
    %4794 = vmatpush.msra.mxu0 0.0
    %4795 = vmatpush.msra.mxu0 0.0
    %4796 = vmatpush.msra.mxu0 0.0
    %4797 = vmatpush.msra.mxu0 0.0
    %4798 = vmatpush.msra.mxu0 0.0
    %4799 = vmatpush.msra.mxu0 0.0
    %4800 = vmatpush.msra.mxu0 0.0
    %4801 = vmatpush.msra.mxu0 0.0
    %4802 = vmatpush.msra.mxu0 0.0
    %4803 = vmatpush.msra.mxu0 0.0
    %4804 = vmatpush.msra.mxu0 0.0
    %4805 = vmatpush.msra.mxu0 0.0
    %4806 = vmatpush.msra.mxu0 %v4789
    %4807 = vmatmul.f32.gmra.mxu0 %v633
    %v4808 = vpop.f32.mrf.mxu0
    %v4809 = vadd.f32 0.0, %v4808
    %4810 = vmatmul.f32.gmra.mxu0 %v636
    %v4811 = vpop.f32.mrf.mxu0
    %v4812 = vadd.f32 0.0, %v4811
    %4813 = vdwg.mxu0
    %v4814 = vmul.f32 %v3907, %v4809
    %v4815 = vmul.f32 %v3908, %v4812
    %v4816 = vsel %vm715, %v4814, 0.0
    %4817 = vadd.xlane.f32.xlu0 %v4816
    %v4818 = vpop.xlane.xlu0 %4817
    %v4819 = vsel %vm715, %v4815, 0.0
    %4820 = vadd.xlane.f32.xlu0 %v4819
    %v4821 = vpop.xlane.xlu0 %4820
    %v4822 = vmul.f32 %v4818, %v156
    %v4823 = vmul.f32 %v4821, %v157
    %v4824 = vadd.f32 %v4822, %v4546
    %v4825 = vadd.f32 %v4823, %v4547
    %v4826 = vsel %vm604, %v4824, -inf
    %v4827 = vsel %vm604, %v4825, -inf
    %v4828 = vmax.f32 %v4826, %v4827
    %v4829 = vrot.slane %v4828, 4
    %v4830 = vmax.f32 %v4828, %v4829
    %v4831 = vrot.slane %v4830, 2
    %v4832 = vmax.f32 %v4830, %v4831
    %v4833 = vrot.slane %v4832, 1
    %v4834 = vmax.f32 %v4832, %v4833
    %v4835 = vmul.f32 %v156, %v4834
    %v4836 = vmul.f32 %v157, %v4834
    %v4837 = vsel %vm604, %v4835, 0.0
    %4838 = vadd.xlane.f32.xlu0 %v4837
    %v4839 = vpop.xlane.xlu0 %4838
    %v4840 = vsel %vm604, %v4836, 0.0
    %4841 = vadd.xlane.f32.xlu0 %v4840
    %v4842 = vpop.xlane.xlu0 %4841
    %v4843 = vsub.f32 %v4818, %v4839
    %v4844 = vsub.f32 %v4821, %v4842
    %v4845 = vmul.f32 %v4843, 1.442695
    %v4846 = vpow.pop %v4845
    %v4847 = vmul.f32 %v4844, 1.442695
    %v4848 = vpow.pop %v4847
    %4849 = vmatpush.msra.mxu0 0.0
    %4850 = vmatpush.msra.mxu0 0.0
    %4851 = vmatpush.msra.mxu0 0.0
    %4852 = vmatpush.msra.mxu0 0.0
    %4853 = vmatpush.msra.mxu0 0.0
    %4854 = vmatpush.msra.mxu0 0.0
    %4855 = vmatpush.msra.mxu0 0.0
    %4856 = vmatpush.msra.mxu0 0.0
    %4857 = vmatpush.msra.mxu0 0.0
    %4858 = vmatpush.msra.mxu0 0.0
    %4859 = vmatpush.msra.mxu0 0.0
    %4860 = vmatpush.msra.mxu0 0.0
    %4861 = vmatpush.msra.mxu0 0.0
    %4862 = vmatpush.msra.mxu0 0.0
    %4863 = vmatpush.msra.mxu0 %v4848
    %4864 = vmatpush.msra.mxu0 %v4846
    %4865 = vmatmul.f32.gmra.mxu0 %v1257
    %v4866 = vpop.f32.mrf.mxu0
    %v4867 = vadd.f32 0.0, %v4866
    %4868 = vdwg.mxu0
    %v4869 = vmax.f32 %v4867, 1e-30
    %v4871 = vsel %vm608, %v4869, 0
    %4873 = vmatpush.msra.mxu0 0.0
    %4874 = vmatpush.msra.mxu0 0.0
    %4875 = vmatpush.msra.mxu0 0.0
    %4876 = vmatpush.msra.mxu0 0.0
    %4877 = vmatpush.msra.mxu0 0.0
    %4878 = vmatpush.msra.mxu0 0.0
    %4879 = vmatpush.msra.mxu0 0.0
    %4880 = vmatpush.msra.mxu0 0.0
    %4881 = vmatpush.msra.mxu0 0.0
    %4882 = vmatpush.msra.mxu0 0.0
    %4883 = vmatpush.msra.mxu0 0.0
    %4884 = vmatpush.msra.mxu0 0.0
    %4885 = vmatpush.msra.mxu0 0.0
    %4886 = vmatpush.msra.mxu0 0.0
    %4887 = vmatpush.msra.mxu0 0.0
    %4888 = vmatpush.msra.mxu0 %v4871
    %4889 = vmatmul.f32.gmra.mxu0 %v633
    %v4890 = vpop.f32.mrf.mxu0
    %v4891 = vadd.f32 0.0, %v4890
    %4892 = vmatmul.f32.gmra.mxu0 %v636
    %v4893 = vpop.f32.mrf.mxu0
    %v4894 = vadd.f32 0.0, %v4893
    %4895 = vdwg.mxu0
    %v4896 = vrcp.pop %v4891
    %v4897 = vmul.f32 %v4891, %v4896
    %v4898 = vsub.f32 1.0, %v4897
    %v4899 = vmul.f32 %v4896, %v4898
    %v4900 = vadd.f32 %v4896, %v4899
    %vm4901 = vweird.f32 %v4891
    %vm4902 = vweird.f32 %v4896
    %vm4903 = vmor %vm4901, %vm4902
    %v4904 = vsel %vm4903, %v4896, %v4900
    %v4905 = vand.u32 2147483647, %v4891
    %vm4906 = vcmp.eq.f32.partialorder %v4905, 8.507059e+37
    %v4907 = vand.u32 %v4891, 2147483648
    %v4908 = vor.u32 1.1754944e-38, %v4907
    %v4909 = vsel %vm4906, %v4908, %v4904
    %v4910 = vmul.f32 %v4846, %v4909
    %v4911 = vrcp.pop %v4894
    %v4912 = vmul.f32 %v4894, %v4911
    %v4913 = vsub.f32 1.0, %v4912
    %v4914 = vmul.f32 %v4911, %v4913
    %v4915 = vadd.f32 %v4911, %v4914
    %vm4916 = vweird.f32 %v4894
    %vm4917 = vweird.f32 %v4911
    %vm4918 = vmor %vm4916, %vm4917
    %v4919 = vsel %vm4918, %v4911, %v4915
    %v4920 = vand.u32 2147483647, %v4894
    %vm4921 = vcmp.eq.f32.partialorder %v4920, 8.507059e+37
    %v4922 = vand.u32 %v4894, 2147483648
    %v4923 = vor.u32 1.1754944e-38, %v4922
    %v4924 = vsel %vm4921, %v4923, %v4919
    %v4925 = vmul.f32 %v4848, %v4924
    %4927 = vset.pattern.permute.xlu0 0
    %4928 = vperm.xlu0 %4927, %v4910
    %v4929 = vpop.permute.xlu0 %4928
    %4932 = vset.pattern.permute.xlu0 0
    %4933 = vperm.xlu0 %4932, %v4925
    %v4934 = vpop.permute.xlu0 %4933
    %v4936 = vmul.f32 %v3907, %v4929
    %v4937 = vmul.f32 %v3908, %v4934
    %4938 = vmatpush.msra.mxu0 0.0
    %4939 = vmatpush.msra.mxu0 0.0
    %4940 = vmatpush.msra.mxu0 0.0
    %4941 = vmatpush.msra.mxu0 0.0
    %4942 = vmatpush.msra.mxu0 0.0
    %4943 = vmatpush.msra.mxu0 0.0
    %4944 = vmatpush.msra.mxu0 0.0
    %4945 = vmatpush.msra.mxu0 0.0
    %4946 = vmatpush.msra.mxu0 0.0
    %4947 = vmatpush.msra.mxu0 0.0
    %4948 = vmatpush.msra.mxu0 0.0
    %4949 = vmatpush.msra.mxu0 0.0
    %4950 = vmatpush.msra.mxu0 0.0
    %4951 = vmatpush.msra.mxu0 0.0
    %4952 = vmatpush.msra.mxu0 %v4937
    %4953 = vmatpush.msra.mxu0 %v4936
    %4954 = vmatmul.f32.gmra.mxu0 %v1257
    %v4955 = vpop.f32.mrf.mxu0
    %v4956 = vadd.f32 0.0, %v4955
    %4957 = vdwg.mxu0
    %v4958 = vld [vmem:[#allocation13 + $0xeb8] sm:$0x1]
    %v4959 = vld [vmem:[#allocation13 + $0xe18] sm:$0xff]
    %v4960 = vld [vmem:[#allocation13 + $0xe20] sm:$0xff]
    %v4961 = vld [vmem:[#allocation13 + $0xe28] sm:$0xff]
    %v4962 = vld [vmem:[#allocation13 + $0xe30] sm:$0xff]
    %v4963 = vsel %vm715, %v4265, 0
    %4965 = vmatpush.msra.mxu0 0.0
    %4966 = vmatpush.msra.mxu0 0.0
    %4967 = vmatpush.msra.mxu0 0.0
    %4968 = vmatpush.msra.mxu0 0.0
    %4969 = vmatpush.msra.mxu0 0.0
    %4970 = vmatpush.msra.mxu0 0.0
    %4971 = vmatpush.msra.mxu0 0.0
    %4972 = vmatpush.msra.mxu0 0.0
    %4973 = vmatpush.msra.mxu0 0.0
    %4974 = vmatpush.msra.mxu0 0.0
    %4975 = vmatpush.msra.mxu0 0.0
    %4976 = vmatpush.msra.mxu0 0.0
    %4977 = vmatpush.msra.mxu0 %v4962
    %4978 = vmatpush.msra.mxu0 %v4961
    %4979 = vmatpush.msra.mxu0 %v4960
    %4980 = vmatpush.msra.mxu0 %v4959
    %4981 = vmatmul.f32.gmra.mxu0 %v4963
    %v4982 = vpop.f32.mrf.mxu0
    %v4983 = vadd.f32 0.0, %v4982
    %4984 = vdwg.mxu0
    %v4985 = vperm.slane %v4958, 0
    %v4986 = vadd.f32 %v4985, %v4983
    %v4987 = vld [vmem:[#allocation13 + $0xe38] sm:$0xff]
    %v4988 = vld [vmem:[#allocation13 + $0xe40] sm:$0xff]
    %v4989 = vld [vmem:[#allocation13 + $0xe48] sm:$0xff]
    %v4990 = vld [vmem:[#allocation13 + $0xe50] sm:$0xff]
    %v4992 = vsel %vm715, %v4391, 0
    %4994 = vmatpush.msra.mxu0 0.0
    %4995 = vmatpush.msra.mxu0 0.0
    %4996 = vmatpush.msra.mxu0 0.0
    %4997 = vmatpush.msra.mxu0 0.0
    %4998 = vmatpush.msra.mxu0 0.0
    %4999 = vmatpush.msra.mxu0 0.0
    %5000 = vmatpush.msra.mxu0 0.0
    %5001 = vmatpush.msra.mxu0 0.0
    %5002 = vmatpush.msra.mxu0 0.0
    %5003 = vmatpush.msra.mxu0 0.0
    %5004 = vmatpush.msra.mxu0 0.0
    %5005 = vmatpush.msra.mxu0 0.0
    %5006 = vmatpush.msra.mxu0 %v4990
    %5007 = vmatpush.msra.mxu0 %v4989
    %5008 = vmatpush.msra.mxu0 %v4988
    %5009 = vmatpush.msra.mxu0 %v4987
    %5010 = vmatmul.f32.gmra.mxu0 %v4992
    %v5011 = vpop.f32.mrf.mxu0
    %v5012 = vadd.f32 0.0, %v5011
    %5013 = vdwg.mxu0
    %v5014 = vadd.f32 %v4986, %v5012
    %v5015 = vld [vmem:[#allocation13 + $0xe58] sm:$0xff]
    %v5016 = vld [vmem:[#allocation13 + $0xe60] sm:$0xff]
    %v5017 = vld [vmem:[#allocation13 + $0xe68] sm:$0xff]
    %v5018 = vld [vmem:[#allocation13 + $0xe70] sm:$0xff]
    %v5019 = vsel %vm715, %v4788, 0
    %5021 = vmatpush.msra.mxu0 0.0
    %5022 = vmatpush.msra.mxu0 0.0
    %5023 = vmatpush.msra.mxu0 0.0
    %5024 = vmatpush.msra.mxu0 0.0
    %5025 = vmatpush.msra.mxu0 0.0
    %5026 = vmatpush.msra.mxu0 0.0
    %5027 = vmatpush.msra.mxu0 0.0
    %5028 = vmatpush.msra.mxu0 0.0
    %5029 = vmatpush.msra.mxu0 0.0
    %5030 = vmatpush.msra.mxu0 0.0
    %5031 = vmatpush.msra.mxu0 0.0
    %5032 = vmatpush.msra.mxu0 0.0
    %5033 = vmatpush.msra.mxu0 %v5018
    %5034 = vmatpush.msra.mxu0 %v5017
    %5035 = vmatpush.msra.mxu0 %v5016
    %5036 = vmatpush.msra.mxu0 %v5015
    %5037 = vmatmul.f32.gmra.mxu0 %v5019
    %v5038 = vpop.f32.mrf.mxu0
    %v5039 = vadd.f32 0.0, %v5038
    %5040 = vdwg.mxu0
    %v5041 = vadd.f32 %v5014, %v5039
    %v5042 = vld [vmem:[#allocation13 + $0xe78] sm:$0xff]
    %v5043 = vld [vmem:[#allocation13 + $0xe80] sm:$0xff]
    %v5044 = vld [vmem:[#allocation13 + $0xe88] sm:$0xff]
    %v5045 = vld [vmem:[#allocation13 + $0xe90] sm:$0xff]
    %v5047 = vsel %vm715, %v4956, 0
    %5049 = vmatpush.msra.mxu0 0.0
    %5050 = vmatpush.msra.mxu0 0.0
    %5051 = vmatpush.msra.mxu0 0.0
    %5052 = vmatpush.msra.mxu0 0.0
    %5053 = vmatpush.msra.mxu0 0.0
    %5054 = vmatpush.msra.mxu0 0.0
    %5055 = vmatpush.msra.mxu0 0.0
    %5056 = vmatpush.msra.mxu0 0.0
    %5057 = vmatpush.msra.mxu0 0.0
    %5058 = vmatpush.msra.mxu0 0.0
    %5059 = vmatpush.msra.mxu0 0.0
    %5060 = vmatpush.msra.mxu0 0.0
    %5061 = vmatpush.msra.mxu0 %v5045
    %5062 = vmatpush.msra.mxu0 %v5044
    %5063 = vmatpush.msra.mxu0 %v5043
    %5064 = vmatpush.msra.mxu0 %v5042
    %5065 = vmatmul.f32.gmra.mxu0 %v5047
    %v5066 = vpop.f32.mrf.mxu0
    %v5067 = vadd.f32 0.0, %v5066
    %5068 = vdwg.mxu0
    %v5069 = vadd.f32 %v5041, %v5067
    %v5070 = vld [vmem:[#allocation13 + $0xe98] sm:$0xff]
    %v5071 = vld [vmem:[#allocation13 + $0xea0] sm:$0xff]
    %v5072 = vld [vmem:[#allocation13 + $0xea8] sm:$0xff]
    %v5073 = vld [vmem:[#allocation13 + $0xeb0] sm:$0xff]
    %v5075 = vsel %vm715, %v3910, 0
    %5077 = vmatpush.msra.mxu0 0.0
    %5078 = vmatpush.msra.mxu0 0.0
    %5079 = vmatpush.msra.mxu0 0.0
    %5080 = vmatpush.msra.mxu0 0.0
    %5081 = vmatpush.msra.mxu0 0.0
    %5082 = vmatpush.msra.mxu0 0.0
    %5083 = vmatpush.msra.mxu0 0.0
    %5084 = vmatpush.msra.mxu0 0.0
    %5085 = vmatpush.msra.mxu0 0.0
    %5086 = vmatpush.msra.mxu0 0.0
    %5087 = vmatpush.msra.mxu0 0.0
    %5088 = vmatpush.msra.mxu0 0.0
    %5089 = vmatpush.msra.mxu0 %v5073
    %5090 = vmatpush.msra.mxu0 %v5072
    %5091 = vmatpush.msra.mxu0 %v5071
    %5092 = vmatpush.msra.mxu0 %v5070
    %5093 = vmatmul.f32.gmra.mxu0 %v5075
    %v5094 = vpop.f32.mrf.mxu0
    %v5095 = vadd.f32 0.0, %v5094
    %5096 = vdwg.mxu0
    %v5097 = vadd.f32 %v5069, %v5095
    %v5098 = vmax.f32 %v5097, 0.0
    %v5099 = vand.u32 2147483647, %v5097
    %v5100 = vsub.f32 0.0, %v5099
    %v5101 = vmul.f32 %v5100, 1.442695
    %v5102 = vpow.pop %v5101
    %v5103 = vadd.f32 %v5102, 1.0
    %v5104 = vlog2.pop %v5103
    %v5105 = vmul.f32 %v5104, 0.6931472
    %v5106 = vmul.f32 -0.5, %v5102
    %v5107 = vadd.f32 %v5106, 1.0
    %v5108 = vmul.f32 %v5107, %v5102
    %v5109 = vand.u32 2147483647, %v5102
    %vm5110 = vcmp.lt.f32.partialorder %v5109, 0.0004427343
    %v5111 = vsel %vm5110, %v5108, %v5105
    %v5112 = vadd.f32 %v5098, %v5111
    %v5113 = vsub.f32 %v5112, 0.6931472
    %v5114 = vld [vmem:[#allocation13 + $0xee0] sm:$0x1]
    %v5115 = vld [vmem:[#allocation13 + $0xec0] sm:$0xff]
    %v5116 = vld [vmem:[#allocation13 + $0xec8] sm:$0xff]
    %v5117 = vld [vmem:[#allocation13 + $0xed0] sm:$0xff]
    %v5118 = vld [vmem:[#allocation13 + $0xed8] sm:$0xff]
    %v5120 = vsel %vm715, %v5113, 0
    %5122 = vmatpush.msra.mxu0 0.0
    %5123 = vmatpush.msra.mxu0 0.0
    %5124 = vmatpush.msra.mxu0 0.0
    %5125 = vmatpush.msra.mxu0 0.0
    %5126 = vmatpush.msra.mxu0 0.0
    %5127 = vmatpush.msra.mxu0 0.0
    %5128 = vmatpush.msra.mxu0 0.0
    %5129 = vmatpush.msra.mxu0 0.0
    %5130 = vmatpush.msra.mxu0 0.0
    %5131 = vmatpush.msra.mxu0 0.0
    %5132 = vmatpush.msra.mxu0 0.0
    %5133 = vmatpush.msra.mxu0 0.0
    %5134 = vmatpush.msra.mxu0 %v5118
    %5135 = vmatpush.msra.mxu0 %v5117
    %5136 = vmatpush.msra.mxu0 %v5116
    %5137 = vmatpush.msra.mxu0 %v5115
    %5138 = vmatmul.f32.gmra.mxu0 %v5120
    %v5139 = vpop.f32.mrf.mxu0
    %v5140 = vadd.f32 0.0, %v5139
    %5141 = vdwg.mxu0
    %v5142 = vperm.slane %v5114, 0
    %v5143 = vadd.f32 %v5142, %v5140
    %v5144 = vmax.f32 %v5143, 0.0
    %v5145 = vand.u32 2147483647, %v5143
    %v5146 = vsub.f32 0.0, %v5145
    %v5147 = vmul.f32 %v5146, 1.442695
    %v5148 = vpow.pop %v5147
    %v5149 = vadd.f32 %v5148, 1.0
    %v5150 = vlog2.pop %v5149
    %v5151 = vmul.f32 %v5150, 0.6931472
    %v5152 = vmul.f32 -0.5, %v5148
    %v5153 = vadd.f32 %v5152, 1.0
    %v5154 = vmul.f32 %v5153, %v5148
    %v5155 = vand.u32 2147483647, %v5148
    %vm5156 = vcmp.lt.f32.partialorder %v5155, 0.0004427343
    %v5157 = vsel %vm5156, %v5154, %v5151
    %v5158 = vadd.f32 %v5144, %v5157
    %v5159 = vsub.f32 %v5158, 0.6931472
    %v5160 = vld [vmem:[#allocation13 + $0xef8] sm:$0x1]
    %v5161 = vld [vmem:[#allocation13 + $0xee8] sm:$0xff]
    %v5162 = vld [vmem:[#allocation13 + $0xef0] sm:$0xff]
    %v5164 = vsel %vm360, %v5159, 0
    %5166 = vmatpush.msra.mxu0 0.0
    %5167 = vmatpush.msra.mxu0 0.0
    %5168 = vmatpush.msra.mxu0 0.0
    %5169 = vmatpush.msra.mxu0 0.0
    %5170 = vmatpush.msra.mxu0 0.0
    %5171 = vmatpush.msra.mxu0 0.0
    %5172 = vmatpush.msra.mxu0 0.0
    %5173 = vmatpush.msra.mxu0 0.0
    %5174 = vmatpush.msra.mxu0 0.0
    %5175 = vmatpush.msra.mxu0 0.0
    %5176 = vmatpush.msra.mxu0 0.0
    %5177 = vmatpush.msra.mxu0 0.0
    %5178 = vmatpush.msra.mxu0 0.0
    %5179 = vmatpush.msra.mxu0 0.0
    %5180 = vmatpush.msra.mxu0 %v5162
    %5181 = vmatpush.msra.mxu0 %v5161
    %5182 = vmatmul.f32.gmra.mxu0 %v5164
    %v5183 = vpop.f32.mrf.mxu0
    %v5184 = vadd.f32 0.0, %v5183
    %5185 = vdwg.mxu0
    %v5186 = vperm.slane %v5160, 0
    %v5187 = vadd.f32 %v5186, %v5184
    %5188 = vst [vmem:[#allocation14] sm:$0x3] %v5187
    // Predicated region
    $region90: #{megnet_rl_forward.1} parent=1 // pred_check
      _
    $region91: #{megnet_rl_forward.1} parent=1 // pred_check_branch
      %5190 = sbr.rel (0) target = $region93
    $region92: #{megnet_rl_forward.1} parent=1 // pred_region
      %5192 = vsyncadd [#allocation4], 0
      %s5194 = sshll.u32 [#allocation14], 4
      %s5195 = int_to_ptr.vmem [resolvable:$true] %s5194
      %s5196 = sshll.u32 %s15, 4
      %s5197 = int_to_ptr.hbm [resolvable:$true] %s5196
      %5199 = dma.vmem_to_hbm [thread:$0]  %s5195, 32, %s5197, [#allocation4]
    $region93: #{megnet_rl_forward.1} parent=1 // pred_fallthru
      _
    // Predicated region
    $region94: #{megnet_rl_forward.1} parent=1 // pred_check
      _
    $region95: #{megnet_rl_forward.1} parent=1 // pred_check_branch
      %5201 = sbr.rel (0) target = $region97
    $region96: #{megnet_rl_forward.1} parent=1 // pred_region
      %5203 = dma.done [#allocation4], 32
    $region97: #{megnet_rl_forward.1} parent=1 // pred_fallthru
      _
    %5204 = vsyncpa [#allocation3], 1
    %5205 = vsyncpa [#allocation6], 1
    %5206 = vsyncpa [#allocation9], 1
    %5207 = vsyncpa [#allocation12], 1
    %5208 = vsyncpa [#allocation4], 1

</llo_original>
